<compile_context>
chip_gen: v7x
topology: tpu7x:2x2x1
jax: 0.10.0
libtpu: 0.0.40
codegen_flags: <defaults>
</compile_context>

<pallas_src>
import math
import jax
import jax.numpy as jnp
from jax.experimental import pallas as pl
from jax.experimental.pallas import tpu as pltpu

# ---- FlowNet hyper-parameters (module defaults) -----------------------------
FACTOR = 4                      # SqueezeLayer(factor); C -> C * factor**3
C_IN = 1
C_SQ = C_IN * FACTOR ** 3       # 64 channels after squeeze
N_MAIN = 8 - 4                  # K[0] - after_splitOff_flowStep[0]
N_COND = 4                      # after_splitOff_flowStep[0]
C_SPLIT = C_SQ // 2             # 32 (Split: num_channels_split)
HALF_MAIN = C_SQ // 2           # 32
HALF_COND = C_SPLIT // 2        # 16
HID = 64                        # coupling subnet hidden width (1x1x1 convs)
FEAT = 16                       # RRDB_nf
LANES = 128
KMAX = 64                       # max K of any packed weight (slab lane width)
S_TILE_MAX = 4096               # v7x-safe (64 MiB VMEM); v6e/v5e could go larger
LOG2PI = math.log(2.0 * math.pi)


def _log_sigmoid(x):
    # log(sigmoid(x)) = min(x, 0) - log1p(exp(-|x|))  (numerically safe)
    return jnp.minimum(x, 0.0) - jnp.log1p(jnp.exp(-jnp.abs(x)))


# =============================================================================
# Single fused kernel:
#   4x (actnorm⊕invconv -> Affine coupling) -> Split -> encoder
#   -> 4x conditional step -> conditional diagonal-Gaussian prior logp
# Layout: (C, S_tile) — channels on sublanes, pixels on lanes (lane-dense).
# All weights live in one bf16 slab + one f32 bias slab, carved with static
# ref slices (row offsets are multiples of 16 -> tile-aligned).
# =============================================================================
def _make_flow_kernel(s_valid, s_tile, w_off, b_off):
    f32 = jnp.float32
    bf16 = jnp.bfloat16

    def kernel(x_ref, w_ref, b_ref, y1_ref, z1_ref, ld_ref, cat_ref):
        def W(name):                       # (M, K) bf16 weight view
            off, m, k = w_off[name]
            return w_ref[off:off + m, 0:k]

        def Bv(name):                      # (M, 1) f32 bias view
            off, m = b_off[name]
            return b_ref[off:off + m, :]

        def mm(name, x):                   # W @ x + b, f32 accumulate
            return jnp.dot(W(name), x, preferred_element_type=f32) + Bv(name)

        # lane-validity mask (applied ONCE at the end)
        lane = jax.lax.broadcasted_iota(jnp.int32, (1, s_tile), 1)
        valid = (pl.program_id(1) * s_tile + lane) < s_valid

        z = x_ref[0].astype(f32)                       # (C_SQ, S_tile)
        ld32 = jnp.zeros((HALF_MAIN, s_tile), f32)     # main couplings + prior
        ld16 = jnp.zeros((HALF_COND, s_tile), f32)     # cond couplings

        # ---- 4 main FlowSteps (actnorm folded into the 1x1x1 invconv) -------
        for k in range(N_MAIN):
            z = mm(f"m{k}_conv", z.astype(bf16))       # (64, S)
            za, zb = z[:HALF_MAIN], z[HALF_MAIN:]
            h = jnp.maximum(mm(f"m{k}_w1", za.astype(bf16)), 0.0)
            h = jnp.maximum(mm(f"m{k}_w2", h.astype(bf16)), 0.0)
            head = mm(f"m{k}_w3", h.astype(bf16))      # (64,S) = [shift|scale+2]
            shift, pre = head[:HALF_MAIN], head[HALF_MAIN:]
            log_scale = _log_sigmoid(pre)
            zb = (zb + shift) * jnp.exp(log_scale)
            ld32 = ld32 + log_scale
            z = jnp.concatenate([za, zb], axis=0)      # sublane-aligned (32|32)

        # ---- Split(num_channels_split=C//2): y1 kept, a1 split off ----------
        y1 = z[:C_SPLIT]
        a1 = z[C_SPLIT:]
        y1_ref[0] = y1.astype(y1_ref.dtype)

        # ---- conditioning encoder on y1
        # TODO(synk): reference ConditionalFlow uses an RRDB(nb=[3,3], nf=16)
        # 3x3-conv encoder; approximated by a per-pixel (1x1x1) 3-layer stack
        # with LeakyReLU(0.2) since the RRDB source is not provided.
        t = mm("e1", y1.astype(bf16)); t = jnp.where(t > 0, t, 0.2 * t)
        t = mm("e2", t.astype(bf16));  t = jnp.where(t > 0, t, 0.2 * t)
        feat = mm("e3", t.astype(bf16))                # (FEAT, S)
        cat_ref[HALF_COND:, :] = feat.astype(bf16)     # feat written once

        # ---- 4 conditional FlowSteps on a1 (conditioned on feat) ------------
        zc = a1
        for k in range(N_COND):
            zc = mm(f"c{k}_conv", zc.astype(bf16))     # (32, S)
            za, zb = zc[:HALF_COND], zc[HALF_COND:]
            cat_ref[:HALF_COND, :] = za.astype(bf16)   # [za | feat] in scratch
            h = jnp.maximum(mm(f"c{k}_w1", cat_ref[...]), 0.0)
            h = jnp.maximum(mm(f"c{k}_w2", h.astype(bf16)), 0.0)
            head = mm(f"c{k}_w3", h.astype(bf16))      # (32,S) = [shift|scale+2]
            shift, pre = head[:HALF_COND], head[HALF_COND:]
            log_scale = _log_sigmoid(pre)
            zb = (zb + shift) * jnp.exp(log_scale)
            ld16 = ld16 + log_scale
            zc = jnp.concatenate([za, zb], axis=0)     # sublane-aligned (16|16)

        # ---- conditional diagonal-Gaussian prior logp ------------------------
        ph = mm("prior", cat_ref[HALF_COND:, :])       # (64,S) = [mean|logs]
        mean, plogs = ph[:C_SPLIT], ph[C_SPLIT:]
        plogs = jnp.clip(plogs, -20.0, 20.0)           # guard exp(-2*plogs)
        logp = -0.5 * (LOG2PI + 2.0 * plogs
                       + (zc - mean) ** 2 * jnp.exp(-2.0 * plogs))
        ld32 = ld32 + logp

        z1_ref[0] = zc.astype(z1_ref.dtype)
        # single masked reduction pair (valid lanes only)
        ld = (jnp.sum(jnp.where(valid, ld32, 0.0))
              + jnp.sum(jnp.where(valid, ld16, 0.0)))
        ld_ref[...] = jnp.full((1, 1, 1, LANES), ld, dtype=f32)

    return kernel


def flownet_fused(x_pad, wslab, bslab, w_off, b_off, *, s_valid, s_tile,
                  out_dtype=jnp.float32):
    """x_pad: (B, C_SQ, S_pad) f32, pixels padded to a multiple of s_tile."""
    B, C, S_pad = x_pad.shape
    nt = S_pad // s_tile
    kernel = _make_flow_kernel(s_valid, s_tile, w_off, b_off)

    y1, z1, ld = pl.pallas_call(
        kernel,
        grid_spec=pltpu.PrefetchScalarGridSpec(
            num_scalar_prefetch=0,
            grid=(B, nt),
            in_specs=[
                pl.BlockSpec((1, C, s_tile), lambda b, t: (b, 0, t)),
                pl.BlockSpec(wslab.shape, lambda b, t: (0, 0)),   # bf16 weight slab
                pl.BlockSpec(bslab.shape, lambda b, t: (0, 0)),   # f32 bias slab
            ],
            out_specs=(
                pl.BlockSpec((1, C_SPLIT, s_tile), lambda b, t: (b, 0, t)),
                pl.BlockSpec((1, C_SPLIT, s_tile), lambda b, t: (b, 0, t)),
                pl.BlockSpec((1, 1, 1, LANES), lambda b, t: (b, t, 0, 0)),
            ),
            scratch_shapes=[pltpu.VMEM((HALF_COND + FEAT, s_tile), jnp.bfloat16)],
        ),
        out_shape=(
            jax.ShapeDtypeStruct((B, C_SPLIT, S_pad), out_dtype),
            jax.ShapeDtypeStruct((B, C_SPLIT, S_pad), out_dtype),
            jax.ShapeDtypeStruct((B, nt, 1, LANES), jnp.float32),
        ),
        compiler_params=pltpu.CompilerParams(
            dimension_semantics=("parallel", "parallel")),
    )(x_pad, wslab, bslab)
    # per-(batch, S-tile) data-dependent logdet partials -> per-batch sums
    return y1, z1, jnp.sum(ld[:, :, 0, 0], axis=1)


# =============================================================================
# Parameter init (deterministic, synthetic) + host-side fold/merge/pack + glue
# =============================================================================
def init_params(key):
    keys = jax.random.split(key, 64)
    ki = iter(keys)

    def rnd(shape, scale=0.05):
        return (scale * jax.random.normal(next(ki), shape)).astype(jnp.float32)

    def ortho_stack(n, c):
        ws, lds = [], []
        for _ in range(n):
            q, _ = jnp.linalg.qr(jax.random.normal(next(ki), (c, c), dtype=jnp.float32))
            ws.append(q)
            lds.append(jnp.linalg.slogdet(q)[1])   # log|det W| (constant, JAX glue)
        return jnp.stack(ws).astype(jnp.float32), jnp.stack(lds).astype(jnp.float32)

    p = {}
    # ---- main flow steps (actNorm3d / invconv / affine coupling, 1x1x1 convs)
    # weight convention: (out_channels, in_channels), applied as W @ z
    p["an_logs"] = rnd((N_MAIN, C_SQ))
    p["an_bias"] = rnd((N_MAIN, C_SQ))
    p["winv"], p["winv_ld"] = ortho_stack(N_MAIN, C_SQ)
    p["w1"] = rnd((N_MAIN, HID, HALF_MAIN))
    p["b1"] = jnp.zeros((N_MAIN, HID), jnp.float32)
    p["w2"] = rnd((N_MAIN, HID, HID))
    p["b2"] = jnp.zeros((N_MAIN, HID), jnp.float32)
    p["w3_shift"] = rnd((N_MAIN, HALF_MAIN, HID), 0.01)
    p["b3_shift"] = jnp.zeros((N_MAIN, HALF_MAIN), jnp.float32)
    p["w3_scale"] = rnd((N_MAIN, HALF_MAIN, HID), 0.01)
    p["b3_scale"] = jnp.zeros((N_MAIN, HALF_MAIN), jnp.float32)
    # ---- conditioning encoder (RRDB approximation)
    p["enc_w1"] = rnd((FEAT, C_SPLIT))
    p["enc_b1"] = jnp.zeros((FEAT,), jnp.float32)
    p["enc_w2"] = rnd((FEAT, FEAT))
    p["enc_b2"] = jnp.zeros((FEAT,), jnp.float32)
    p["enc_w3"] = rnd((FEAT, FEAT))
    p["enc_b3"] = jnp.zeros((FEAT,), jnp.float32)
    # ---- conditional flow steps (on C_SPLIT=32 channels)
    p["c_logs"] = rnd((N_COND, C_SPLIT))
    p["c_bias"] = rnd((N_COND, C_SPLIT))
    p["c_winv"], p["c_winv_ld"] = ortho_stack(N_COND, C_SPLIT)
    p["c_w1_za"] = rnd((N_COND, HID, HALF_COND))
    p["c_w1_feat"] = rnd((N_COND, HID, FEAT))
    p["c_b1"] = jnp.zeros((N_COND, HID), jnp.float32)
    p["c_w2"] = rnd((N_COND, HID, HID))
    p["c_b2"] = jnp.zeros((N_COND, HID), jnp.float32)
    p["c_w3_shift"] = rnd((N_COND, HALF_COND, HID), 0.01)
    p["c_b3_shift"] = jnp.zeros((N_COND, HALF_COND), jnp.float32)
    p["c_w3_scale"] = rnd((N_COND, HALF_COND, HID), 0.01)
    p["c_b3_scale"] = jnp.zeros((N_COND, HALF_COND), jnp.float32)
    # ---- conditional Gaussian prior head
    p["prior_wm"] = rnd((C_SPLIT, FEAT), 0.01)
    p["prior_bm"] = jnp.zeros((C_SPLIT,), jnp.float32)
    p["prior_wl"] = rnd((C_SPLIT, FEAT), 0.01)
    p["prior_bl"] = jnp.zeros((C_SPLIT,), jnp.float32)
    return p


def _fold_and_merge(p):
    """Host-side folding/merging into per-op (W, b) pairs (all f32).

    * actnorm folded into invconv:  W' = W @ diag(exp(logs)), b' = W @ (exp(logs)*bias)
    * shift/scale heads concatenated along output rows, '+2' folded into bias
    * cond first layer's za/feat weights concatenated along K
    * prior mean/logs heads concatenated along output rows
    """
    mats, vecs = {}, {}
    s = jnp.exp(p["an_logs"])
    for k in range(N_MAIN):
        W = p["winv"][k]
        mats[f"m{k}_conv"] = W * s[k][None, :]
        vecs[f"m{k}_conv"] = W @ (s[k] * p["an_bias"][k])
        mats[f"m{k}_w1"] = p["w1"][k];  vecs[f"m{k}_w1"] = p["b1"][k]
        mats[f"m{k}_w2"] = p["w2"][k];  vecs[f"m{k}_w2"] = p["b2"][k]
        mats[f"m{k}_w3"] = jnp.concatenate([p["w3_shift"][k], p["w3_scale"][k]], 0)
        vecs[f"m{k}_w3"] = jnp.concatenate([p["b3_shift"][k], p["b3_scale"][k] + 2.0], 0)
    mats["e1"] = p["enc_w1"]; vecs["e1"] = p["enc_b1"]
    mats["e2"] = p["enc_w2"]; vecs["e2"] = p["enc_b2"]
    mats["e3"] = p["enc_w3"]; vecs["e3"] = p["enc_b3"]
    cs = jnp.exp(p["c_logs"])
    for k in range(N_COND):
        W = p["c_winv"][k]
        mats[f"c{k}_conv"] = W * cs[k][None, :]
        vecs[f"c{k}_conv"] = W @ (cs[k] * p["c_bias"][k])
        mats[f"c{k}_w1"] = jnp.concatenate([p["c_w1_za"][k], p["c_w1_feat"][k]], 1)
        vecs[f"c{k}_w1"] = p["c_b1"][k]
        mats[f"c{k}_w2"] = p["c_w2"][k]; vecs[f"c{k}_w2"] = p["c_b2"][k]
        mats[f"c{k}_w3"] = jnp.concatenate([p["c_w3_shift"][k], p["c_w3_scale"][k]], 0)
        vecs[f"c{k}_w3"] = jnp.concatenate([p["c_b3_shift"][k], p["c_b3_scale"][k] + 2.0], 0)
    mats["prior"] = jnp.concatenate([p["prior_wm"], p["prior_wl"]], 0)
    vecs["prior"] = jnp.concatenate([p["prior_bm"], p["prior_bl"]], 0)
    return mats, vecs


def _pack_slabs(mats, vecs):
    """Pack all weights into one bf16 (ROWS, KMAX) slab and all biases into one
    f32 (ROWS, 1) slab; return static row offsets for in-kernel carving."""
    w_parts, b_parts = [], []
    w_off, b_off = {}, {}
    wr = br = 0
    for name in mats:
        m = jnp.asarray(mats[name], jnp.float32)
        M, K = int(m.shape[0]), int(m.shape[1])
        w_off[name] = (wr, M, K)
        w_parts.append(jnp.pad(m, ((0, 0), (0, KMAX - K))).astype(jnp.bfloat16))
        wr += M
        v = jnp.asarray(vecs[name], jnp.float32).reshape(-1, 1)
        b_off[name] = (br, int(v.shape[0]))
        b_parts.append(v)
        br += int(v.shape[0])
    wslab = jnp.concatenate(w_parts, axis=0)   # (WR, KMAX) bf16
    bslab = jnp.concatenate(b_parts, axis=0)   # (BR, 1)    f32
    return wslab, bslab, w_off, b_off


def flownet_forward(hr, params, *, out_dtype=jnp.float32):
    """FlowNet.forward(hr, reverse=False): returns (z, logdet, z1, z2=None)."""
    B, C0, T, H, W = hr.shape
    f = FACTOR
    # SqueezeLayer(factor): 3-D space-to-channel squeeze, C -> C * f**3 (glue)
    x = hr.reshape(B, C0, T // f, f, H // f, f, W // f, f)
    x = x.transpose(0, 1, 3, 5, 7, 2, 4, 6)
    Tq, Hq, Wq = T // f, H // f, W // f
    S = Tq * Hq * Wq
    x = x.reshape(B, C0 * f ** 3, S).astype(jnp.float32)

    # pixels on lanes; pad to a multiple of the S tile (>=128 lanes)
    s_pad0 = -(-S // LANES) * LANES
    s_tile = min(s_pad0, S_TILE_MAX)
    S_pad = -(-s_pad0 // s_tile) * s_tile
    x = jnp.pad(x, ((0, 0), (0, 0), (0, S_pad - S)))
    # TODO(synk): on single-TC v5e/v6e at toy sizes, folding the batch into the
    # lane axis (one grid step, per-batch lane masks) would remove a serial
    # grid iteration; kept grid=(B, S-tiles) "parallel" for v7x's 2 TCs.

    mats, vecs = _fold_and_merge(params)
    wslab, bslab, w_off, b_off = _pack_slabs(mats, vecs)
    y1, z1, ld_data = flownet_fused(x, wslab, bslab, w_off, b_off,
                                    s_valid=S, s_tile=s_tile, out_dtype=out_dtype)

    # data-independent logdet terms hoisted out of the kernel:
    #   pixels * sum(actnorm logs) + pixels * log|det W|  (main + cond steps)
    ld_const = S * (jnp.sum(params["an_logs"]) + jnp.sum(params["winv_ld"])
                    + jnp.sum(params["c_logs"]) + jnp.sum(params["c_winv_ld"]))
    logdet = ld_data + ld_const

    # back to NCDHW, dropping lane padding
    z_out = y1[:, :, :S].reshape(B, C_SPLIT, Tq, Hq, Wq)
    z1_out = z1[:, :, :S].reshape(B, C_SPLIT, Tq, Hq, Wq)
    return z_out, logdet, z1_out, None


if __name__ == "__main__":
    key = jax.random.PRNGKey(0)
    pkey, xkey = jax.random.split(key)
    params = init_params(pkey)
    # hr: (B=2, C=1, T=4, H=16, W=16) -> after squeeze(4): (2, 64, 1, 4, 4)
    hr = jax.random.normal(xkey, (2, 1, 4, 16, 16), dtype=jnp.float32)

    fwd = jax.jit(flownet_forward)
    z, logdet, z1, z2 = fwd(hr, params)
    jax.block_until_ready((z, logdet, z1))

    assert z.shape == (2, C_SPLIT, 1, 4, 4)
    assert z1.shape == (2, C_SPLIT, 1, 4, 4)
    assert logdet.shape == (2,)
    assert z2 is None
    assert bool(jnp.all(jnp.isfinite(z))) and bool(jnp.all(jnp.isfinite(z1)))
    assert bool(jnp.all(jnp.isfinite(logdet)))
    print("KERNEL_OK")
</pallas_src>

<mosaic_0001>
module attributes {stable_mosaic.version = 11 : i64} {
  func.func @kernel(%arg0: i32, %arg1: i32, %arg2: memref<1x64x128xf32, #tpu.memory_space<vmem>>, %arg3: memref<1904x64xbf16, #tpu.memory_space<vmem>>, %arg4: memref<1904x1xf32, #tpu.memory_space<vmem>>, %arg5: memref<1x32x128xf32, #tpu.memory_space<vmem>>, %arg6: memref<1x32x128xf32, #tpu.memory_space<vmem>>, %arg7: memref<1x1x1x128xf32, #tpu.memory_space<vmem>>, %arg8: memref<32x128xbf16, #tpu.memory_space<vmem>>) attributes {dimension_semantics = [#tpu.dimension_semantics<parallel>, #tpu.dimension_semantics<parallel>], iteration_bounds = array<i64: 2, 1>, scalar_prefetch = 0 : i64, scratch_operands = 1 : i64, tpu.core_type = #tpu.core_type<tc>, window_params = [{transform_indices = @transform_0, window_bounds = array<i64: 1, 64, 128>}, {pipeline_mode = #tpu.pipeline_mode<synchronous>, transform_indices = @transform_1, window_bounds = array<i64: 1904, 64>}, {pipeline_mode = #tpu.pipeline_mode<synchronous>, transform_indices = @transform_2, window_bounds = array<i64: 1904, 1>}, {transform_indices = @transform_3, window_bounds = array<i64: 1, 32, 128>}, {transform_indices = @transform_4, window_bounds = array<i64: 1, 32, 128>}, {transform_indices = @transform_5, window_bounds = array<i64: 1, 1, 1, 128>}]} {
    %0 = tpu.iota {dimensions = array<i32: 1>} : vector<1x128xi32>
    %c128_i32 = arith.constant 128 : i32
    %1 = arith.muli %arg1, %c128_i32 : i32
    %2 = vector.broadcast %1 : i32 to vector<1x128xi32>
    %3 = arith.addi %2, %0 : vector<1x128xi32>
    %c16_i32 = arith.constant 16 : i32
    %4 = vector.broadcast %c16_i32 : i32 to vector<1x128xi32>
    %5 = arith.cmpi slt, %3, %4 : vector<1x128xi32>
    %c0 = arith.constant 0 : index
    %c0_0 = arith.constant 0 : index
    %c0_1 = arith.constant 0 : index
    %6 = vector.load %arg2[%c0, %c0_0, %c0_1] : memref<1x64x128xf32, #tpu.memory_space<vmem>>, vector<1x64x128xf32>
    %7 = vector.shape_cast %6 : vector<1x64x128xf32> to vector<64x128xf32>
    %cst = arith.constant 0.000000e+00 : f32
    %8 = vector.broadcast %cst : f32 to vector<32x128xf32>
    %cst_2 = arith.constant 0.000000e+00 : f32
    %9 = vector.broadcast %cst_2 : f32 to vector<16x128xf32>
    %10 = arith.truncf %7 : vector<64x128xf32> to vector<64x128xbf16>
    %c0_3 = arith.constant 0 : index
    %c0_4 = arith.constant 0 : index
    %11 = vector.load %arg3[%c0_3, %c0_4] : memref<1904x64xbf16, #tpu.memory_space<vmem>>, vector<64x64xbf16>
    %cst_5 = arith.constant dense<0.000000e+00> : vector<64x128xf32>
    %12 = tpu.matmul %11, %10, %cst_5 {dimension_numbers = #tpu.dot_dimension_numbers<[1], [0], [0], [1], [0, 0, 1, 1], [], []>} : vector<64x64xbf16>, vector<64x128xbf16>, vector<64x128xf32> -> vector<64x128xf32>
    %c0_6 = arith.constant 0 : index
    %c0_7 = arith.constant 0 : index
    %13 = vector.load %arg4[%c0_6, %c0_7] : memref<1904x1xf32, #tpu.memory_space<vmem>>, vector<64x1xf32>
    %14 = vector.broadcast %13 : vector<64x1xf32> to vector<64x128xf32>
    %15 = arith.addf %12, %14 : vector<64x128xf32>
    %16 = vector.extract_strided_slice %15 {offsets = [0, 0], sizes = [32, 128], strides = [1, 1]} : vector<64x128xf32> to vector<32x128xf32>
    %17 = vector.extract_strided_slice %15 {offsets = [32, 0], sizes = [32, 128], strides = [1, 1]} : vector<64x128xf32> to vector<32x128xf32>
    %18 = arith.truncf %16 : vector<32x128xf32> to vector<32x128xbf16>
    %c64 = arith.constant 64 : index
    %c0_8 = arith.constant 0 : index
    %19 = vector.load %arg3[%c64, %c0_8] : memref<1904x64xbf16, #tpu.memory_space<vmem>>, vector<64x32xbf16>
    %cst_9 = arith.constant dense<0.000000e+00> : vector<64x128xf32>
    %20 = tpu.matmul %19, %18, %cst_9 {dimension_numbers = #tpu.dot_dimension_numbers<[1], [0], [0], [1], [0, 0, 1, 1], [], []>} : vector<64x32xbf16>, vector<32x128xbf16>, vector<64x128xf32> -> vector<64x128xf32>
    %c64_10 = arith.constant 64 : index
    %c0_11 = arith.constant 0 : index
    %21 = vector.load %arg4[%c64_10, %c0_11] : memref<1904x1xf32, #tpu.memory_space<vmem>>, vector<64x1xf32>
    %22 = vector.broadcast %21 : vector<64x1xf32> to vector<64x128xf32>
    %23 = arith.addf %20, %22 : vector<64x128xf32>
    %cst_12 = arith.constant 0.000000e+00 : f32
    %24 = vector.broadcast %cst_12 : f32 to vector<64x128xf32>
    %25 = arith.maximumf %23, %24 : vector<64x128xf32>
    %26 = arith.truncf %25 : vector<64x128xf32> to vector<64x128xbf16>
    %c128 = arith.constant 128 : index
    %c0_13 = arith.constant 0 : index
    %27 = vector.load %arg3[%c128, %c0_13] : memref<1904x64xbf16, #tpu.memory_space<vmem>>, vector<64x64xbf16>
    %cst_14 = arith.constant dense<0.000000e+00> : vector<64x128xf32>
    %28 = tpu.matmul %27, %26, %cst_14 {dimension_numbers = #tpu.dot_dimension_numbers<[1], [0], [0], [1], [0, 0, 1, 1], [], []>} : vector<64x64xbf16>, vector<64x128xbf16>, vector<64x128xf32> -> vector<64x128xf32>
    %c128_15 = arith.constant 128 : index
    %c0_16 = arith.constant 0 : index
    %29 = vector.load %arg4[%c128_15, %c0_16] : memref<1904x1xf32, #tpu.memory_space<vmem>>, vector<64x1xf32>
    %30 = vector.broadcast %29 : vector<64x1xf32> to vector<64x128xf32>
    %31 = arith.addf %28, %30 : vector<64x128xf32>
    %cst_17 = arith.constant 0.000000e+00 : f32
    %32 = vector.broadcast %cst_17 : f32 to vector<64x128xf32>
    %33 = arith.maximumf %31, %32 : vector<64x128xf32>
    %34 = arith.truncf %33 : vector<64x128xf32> to vector<64x128xbf16>
    %c192 = arith.constant 192 : index
    %c0_18 = arith.constant 0 : index
    %35 = vector.load %arg3[%c192, %c0_18] : memref<1904x64xbf16, #tpu.memory_space<vmem>>, vector<64x64xbf16>
    %cst_19 = arith.constant dense<0.000000e+00> : vector<64x128xf32>
    %36 = tpu.matmul %35, %34, %cst_19 {dimension_numbers = #tpu.dot_dimension_numbers<[1], [0], [0], [1], [0, 0, 1, 1], [], []>} : vector<64x64xbf16>, vector<64x128xbf16>, vector<64x128xf32> -> vector<64x128xf32>
    %c192_20 = arith.constant 192 : index
    %c0_21 = arith.constant 0 : index
    %37 = vector.load %arg4[%c192_20, %c0_21] : memref<1904x1xf32, #tpu.memory_space<vmem>>, vector<64x1xf32>
    %38 = vector.broadcast %37 : vector<64x1xf32> to vector<64x128xf32>
    %39 = arith.addf %36, %38 : vector<64x128xf32>
    %40 = vector.extract_strided_slice %39 {offsets = [0, 0], sizes = [32, 128], strides = [1, 1]} : vector<64x128xf32> to vector<32x128xf32>
    %41 = vector.extract_strided_slice %39 {offsets = [32, 0], sizes = [32, 128], strides = [1, 1]} : vector<64x128xf32> to vector<32x128xf32>
    %cst_22 = arith.constant 0.000000e+00 : f32
    %42 = vector.broadcast %cst_22 : f32 to vector<32x128xf32>
    %43 = arith.minimumf %41, %42 : vector<32x128xf32>
    %44 = math.absf %41 : vector<32x128xf32>
    %cst_23 = arith.constant 0.000000e+00 : f32
    %45 = vector.broadcast %cst_23 : f32 to vector<32x128xf32>
    %46 = arith.subf %45, %44 : vector<32x128xf32>
    %47 = math.exp %46 : vector<32x128xf32>
    %48 = math.log1p %47 : vector<32x128xf32>
    %49 = arith.subf %43, %48 : vector<32x128xf32>
    %50 = arith.addf %17, %40 : vector<32x128xf32>
    %51 = math.exp %49 : vector<32x128xf32>
    %52 = arith.mulf %50, %51 : vector<32x128xf32>
    %53 = arith.addf %8, %49 : vector<32x128xf32>
    %54 = tpu.concatenate %16, %52 in 0 : vector<32x128xf32>, vector<32x128xf32> -> vector<64x128xf32>
    %55 = arith.truncf %54 : vector<64x128xf32> to vector<64x128xbf16>
    %c256 = arith.constant 256 : index
    %c0_24 = arith.constant 0 : index
    %56 = vector.load %arg3[%c256, %c0_24] : memref<1904x64xbf16, #tpu.memory_space<vmem>>, vector<64x64xbf16>
    %cst_25 = arith.constant dense<0.000000e+00> : vector<64x128xf32>
    %57 = tpu.matmul %56, %55, %cst_25 {dimension_numbers = #tpu.dot_dimension_numbers<[1], [0], [0], [1], [0, 0, 1, 1], [], []>} : vector<64x64xbf16>, vector<64x128xbf16>, vector<64x128xf32> -> vector<64x128xf32>
    %c256_26 = arith.constant 256 : index
    %c0_27 = arith.constant 0 : index
    %58 = vector.load %arg4[%c256_26, %c0_27] : memref<1904x1xf32, #tpu.memory_space<vmem>>, vector<64x1xf32>
    %59 = vector.broadcast %58 : vector<64x1xf32> to vector<64x128xf32>
    %60 = arith.addf %57, %59 : vector<64x128xf32>
    %61 = vector.extract_strided_slice %60 {offsets = [0, 0], sizes = [32, 128], strides = [1, 1]} : vector<64x128xf32> to vector<32x128xf32>
    %62 = vector.extract_strided_slice %60 {offsets = [32, 0], sizes = [32, 128], strides = [1, 1]} : vector<64x128xf32> to vector<32x128xf32>
    %63 = arith.truncf %61 : vector<32x128xf32> to vector<32x128xbf16>
    %c320 = arith.constant 320 : index
    %c0_28 = arith.constant 0 : index
    %64 = vector.load %arg3[%c320, %c0_28] : memref<1904x64xbf16, #tpu.memory_space<vmem>>, vector<64x32xbf16>
    %cst_29 = arith.constant dense<0.000000e+00> : vector<64x128xf32>
    %65 = tpu.matmul %64, %63, %cst_29 {dimension_numbers = #tpu.dot_dimension_numbers<[1], [0], [0], [1], [0, 0, 1, 1], [], []>} : vector<64x32xbf16>, vector<32x128xbf16>, vector<64x128xf32> -> vector<64x128xf32>
    %c320_30 = arith.constant 320 : index
    %c0_31 = arith.constant 0 : index
    %66 = vector.load %arg4[%c320_30, %c0_31] : memref<1904x1xf32, #tpu.memory_space<vmem>>, vector<64x1xf32>
    %67 = vector.broadcast %66 : vector<64x1xf32> to vector<64x128xf32>
    %68 = arith.addf %65, %67 : vector<64x128xf32>
    %cst_32 = arith.constant 0.000000e+00 : f32
    %69 = vector.broadcast %cst_32 : f32 to vector<64x128xf32>
    %70 = arith.maximumf %68, %69 : vector<64x128xf32>
    %71 = arith.truncf %70 : vector<64x128xf32> to vector<64x128xbf16>
    %c384 = arith.constant 384 : index
    %c0_33 = arith.constant 0 : index
    %72 = vector.load %arg3[%c384, %c0_33] : memref<1904x64xbf16, #tpu.memory_space<vmem>>, vector<64x64xbf16>
    %cst_34 = arith.constant dense<0.000000e+00> : vector<64x128xf32>
    %73 = tpu.matmul %72, %71, %cst_34 {dimension_numbers = #tpu.dot_dimension_numbers<[1], [0], [0], [1], [0, 0, 1, 1], [], []>} : vector<64x64xbf16>, vector<64x128xbf16>, vector<64x128xf32> -> vector<64x128xf32>
    %c384_35 = arith.constant 384 : index
    %c0_36 = arith.constant 0 : index
    %74 = vector.load %arg4[%c384_35, %c0_36] : memref<1904x1xf32, #tpu.memory_space<vmem>>, vector<64x1xf32>
    %75 = vector.broadcast %74 : vector<64x1xf32> to vector<64x128xf32>
    %76 = arith.addf %73, %75 : vector<64x128xf32>
    %cst_37 = arith.constant 0.000000e+00 : f32
    %77 = vector.broadcast %cst_37 : f32 to vector<64x128xf32>
    %78 = arith.maximumf %76, %77 : vector<64x128xf32>
    %79 = arith.truncf %78 : vector<64x128xf32> to vector<64x128xbf16>
    %c448 = arith.constant 448 : index
    %c0_38 = arith.constant 0 : index
    %80 = vector.load %arg3[%c448, %c0_38] : memref<1904x64xbf16, #tpu.memory_space<vmem>>, vector<64x64xbf16>
    %cst_39 = arith.constant dense<0.000000e+00> : vector<64x128xf32>
    %81 = tpu.matmul %80, %79, %cst_39 {dimension_numbers = #tpu.dot_dimension_numbers<[1], [0], [0], [1], [0, 0, 1, 1], [], []>} : vector<64x64xbf16>, vector<64x128xbf16>, vector<64x128xf32> -> vector<64x128xf32>
    %c448_40 = arith.constant 448 : index
    %c0_41 = arith.constant 0 : index
    %82 = vector.load %arg4[%c448_40, %c0_41] : memref<1904x1xf32, #tpu.memory_space<vmem>>, vector<64x1xf32>
    %83 = vector.broadcast %82 : vector<64x1xf32> to vector<64x128xf32>
    %84 = arith.addf %81, %83 : vector<64x128xf32>
    %85 = vector.extract_strided_slice %84 {offsets = [0, 0], sizes = [32, 128], strides = [1, 1]} : vector<64x128xf32> to vector<32x128xf32>
    %86 = vector.extract_strided_slice %84 {offsets = [32, 0], sizes = [32, 128], strides = [1, 1]} : vector<64x128xf32> to vector<32x128xf32>
    %cst_42 = arith.constant 0.000000e+00 : f32
    %87 = vector.broadcast %cst_42 : f32 to vector<32x128xf32>
    %88 = arith.minimumf %86, %87 : vector<32x128xf32>
    %89 = math.absf %86 : vector<32x128xf32>
    %cst_43 = arith.constant 0.000000e+00 : f32
    %90 = vector.broadcast %cst_43 : f32 to vector<32x128xf32>
    %91 = arith.subf %90, %89 : vector<32x128xf32>
    %92 = math.exp %91 : vector<32x128xf32>
    %93 = math.log1p %92 : vector<32x128xf32>
    %94 = arith.subf %88, %93 : vector<32x128xf32>
    %95 = arith.addf %62, %85 : vector<32x128xf32>
    %96 = math.exp %94 : vector<32x128xf32>
    %97 = arith.mulf %95, %96 : vector<32x128xf32>
    %98 = arith.addf %53, %94 : vector<32x128xf32>
    %99 = tpu.concatenate %61, %97 in 0 : vector<32x128xf32>, vector<32x128xf32> -> vector<64x128xf32>
    %100 = arith.truncf %99 : vector<64x128xf32> to vector<64x128xbf16>
    %c512 = arith.constant 512 : index
    %c0_44 = arith.constant 0 : index
    %101 = vector.load %arg3[%c512, %c0_44] : memref<1904x64xbf16, #tpu.memory_space<vmem>>, vector<64x64xbf16>
    %cst_45 = arith.constant dense<0.000000e+00> : vector<64x128xf32>
    %102 = tpu.matmul %101, %100, %cst_45 {dimension_numbers = #tpu.dot_dimension_numbers<[1], [0], [0], [1], [0, 0, 1, 1], [], []>} : vector<64x64xbf16>, vector<64x128xbf16>, vector<64x128xf32> -> vector<64x128xf32>
    %c512_46 = arith.constant 512 : index
    %c0_47 = arith.constant 0 : index
    %103 = vector.load %arg4[%c512_46, %c0_47] : memref<1904x1xf32, #tpu.memory_space<vmem>>, vector<64x1xf32>
    %104 = vector.broadcast %103 : vector<64x1xf32> to vector<64x128xf32>
    %105 = arith.addf %102, %104 : vector<64x128xf32>
    %106 = vector.extract_strided_slice %105 {offsets = [0, 0], sizes = [32, 128], strides = [1, 1]} : vector<64x128xf32> to vector<32x128xf32>
    %107 = vector.extract_strided_slice %105 {offsets = [32, 0], sizes = [32, 128], strides = [1, 1]} : vector<64x128xf32> to vector<32x128xf32>
    %108 = arith.truncf %106 : vector<32x128xf32> to vector<32x128xbf16>
    %c576 = arith.constant 576 : index
    %c0_48 = arith.constant 0 : index
    %109 = vector.load %arg3[%c576, %c0_48] : memref<1904x64xbf16, #tpu.memory_space<vmem>>, vector<64x32xbf16>
    %cst_49 = arith.constant dense<0.000000e+00> : vector<64x128xf32>
    %110 = tpu.matmul %109, %108, %cst_49 {dimension_numbers = #tpu.dot_dimension_numbers<[1], [0], [0], [1], [0, 0, 1, 1], [], []>} : vector<64x32xbf16>, vector<32x128xbf16>, vector<64x128xf32> -> vector<64x128xf32>
    %c576_50 = arith.constant 576 : index
    %c0_51 = arith.constant 0 : index
    %111 = vector.load %arg4[%c576_50, %c0_51] : memref<1904x1xf32, #tpu.memory_space<vmem>>, vector<64x1xf32>
    %112 = vector.broadcast %111 : vector<64x1xf32> to vector<64x128xf32>
    %113 = arith.addf %110, %112 : vector<64x128xf32>
    %cst_52 = arith.constant 0.000000e+00 : f32
    %114 = vector.broadcast %cst_52 : f32 to vector<64x128xf32>
    %115 = arith.maximumf %113, %114 : vector<64x128xf32>
    %116 = arith.truncf %115 : vector<64x128xf32> to vector<64x128xbf16>
    %c640 = arith.constant 640 : index
    %c0_53 = arith.constant 0 : index
    %117 = vector.load %arg3[%c640, %c0_53] : memref<1904x64xbf16, #tpu.memory_space<vmem>>, vector<64x64xbf16>
    %cst_54 = arith.constant dense<0.000000e+00> : vector<64x128xf32>
    %118 = tpu.matmul %117, %116, %cst_54 {dimension_numbers = #tpu.dot_dimension_numbers<[1], [0], [0], [1], [0, 0, 1, 1], [], []>} : vector<64x64xbf16>, vector<64x128xbf16>, vector<64x128xf32> -> vector<64x128xf32>
    %c640_55 = arith.constant 640 : index
    %c0_56 = arith.constant 0 : index
    %119 = vector.load %arg4[%c640_55, %c0_56] : memref<1904x1xf32, #tpu.memory_space<vmem>>, vector<64x1xf32>
    %120 = vector.broadcast %119 : vector<64x1xf32> to vector<64x128xf32>
    %121 = arith.addf %118, %120 : vector<64x128xf32>
    %cst_57 = arith.constant 0.000000e+00 : f32
    %122 = vector.broadcast %cst_57 : f32 to vector<64x128xf32>
    %123 = arith.maximumf %121, %122 : vector<64x128xf32>
    %124 = arith.truncf %123 : vector<64x128xf32> to vector<64x128xbf16>
    %c704 = arith.constant 704 : index
    %c0_58 = arith.constant 0 : index
    %125 = vector.load %arg3[%c704, %c0_58] : memref<1904x64xbf16, #tpu.memory_space<vmem>>, vector<64x64xbf16>
    %cst_59 = arith.constant dense<0.000000e+00> : vector<64x128xf32>
    %126 = tpu.matmul %125, %124, %cst_59 {dimension_numbers = #tpu.dot_dimension_numbers<[1], [0], [0], [1], [0, 0, 1, 1], [], []>} : vector<64x64xbf16>, vector<64x128xbf16>, vector<64x128xf32> -> vector<64x128xf32>
    %c704_60 = arith.constant 704 : index
    %c0_61 = arith.constant 0 : index
    %127 = vector.load %arg4[%c704_60, %c0_61] : memref<1904x1xf32, #tpu.memory_space<vmem>>, vector<64x1xf32>
    %128 = vector.broadcast %127 : vector<64x1xf32> to vector<64x128xf32>
    %129 = arith.addf %126, %128 : vector<64x128xf32>
    %130 = vector.extract_strided_slice %129 {offsets = [0, 0], sizes = [32, 128], strides = [1, 1]} : vector<64x128xf32> to vector<32x128xf32>
    %131 = vector.extract_strided_slice %129 {offsets = [32, 0], sizes = [32, 128], strides = [1, 1]} : vector<64x128xf32> to vector<32x128xf32>
    %cst_62 = arith.constant 0.000000e+00 : f32
    %132 = vector.broadcast %cst_62 : f32 to vector<32x128xf32>
    %133 = arith.minimumf %131, %132 : vector<32x128xf32>
    %134 = math.absf %131 : vector<32x128xf32>
    %cst_63 = arith.constant 0.000000e+00 : f32
    %135 = vector.broadcast %cst_63 : f32 to vector<32x128xf32>
    %136 = arith.subf %135, %134 : vector<32x128xf32>
    %137 = math.exp %136 : vector<32x128xf32>
    %138 = math.log1p %137 : vector<32x128xf32>
    %139 = arith.subf %133, %138 : vector<32x128xf32>
    %140 = arith.addf %107, %130 : vector<32x128xf32>
    %141 = math.exp %139 : vector<32x128xf32>
    %142 = arith.mulf %140, %141 : vector<32x128xf32>
    %143 = arith.addf %98, %139 : vector<32x128xf32>
    %144 = tpu.concatenate %106, %142 in 0 : vector<32x128xf32>, vector<32x128xf32> -> vector<64x128xf32>
    %145 = arith.truncf %144 : vector<64x128xf32> to vector<64x128xbf16>
    %c768 = arith.constant 768 : index
    %c0_64 = arith.constant 0 : index
    %146 = vector.load %arg3[%c768, %c0_64] : memref<1904x64xbf16, #tpu.memory_space<vmem>>, vector<64x64xbf16>
    %cst_65 = arith.constant dense<0.000000e+00> : vector<64x128xf32>
    %147 = tpu.matmul %146, %145, %cst_65 {dimension_numbers = #tpu.dot_dimension_numbers<[1], [0], [0], [1], [0, 0, 1, 1], [], []>} : vector<64x64xbf16>, vector<64x128xbf16>, vector<64x128xf32> -> vector<64x128xf32>
    %c768_66 = arith.constant 768 : index
    %c0_67 = arith.constant 0 : index
    %148 = vector.load %arg4[%c768_66, %c0_67] : memref<1904x1xf32, #tpu.memory_space<vmem>>, vector<64x1xf32>
    %149 = vector.broadcast %148 : vector<64x1xf32> to vector<64x128xf32>
    %150 = arith.addf %147, %149 : vector<64x128xf32>
    %151 = vector.extract_strided_slice %150 {offsets = [0, 0], sizes = [32, 128], strides = [1, 1]} : vector<64x128xf32> to vector<32x128xf32>
    %152 = vector.extract_strided_slice %150 {offsets = [32, 0], sizes = [32, 128], strides = [1, 1]} : vector<64x128xf32> to vector<32x128xf32>
    %153 = arith.truncf %151 : vector<32x128xf32> to vector<32x128xbf16>
    %c832 = arith.constant 832 : index
    %c0_68 = arith.constant 0 : index
    %154 = vector.load %arg3[%c832, %c0_68] : memref<1904x64xbf16, #tpu.memory_space<vmem>>, vector<64x32xbf16>
    %cst_69 = arith.constant dense<0.000000e+00> : vector<64x128xf32>
    %155 = tpu.matmul %154, %153, %cst_69 {dimension_numbers = #tpu.dot_dimension_numbers<[1], [0], [0], [1], [0, 0, 1, 1], [], []>} : vector<64x32xbf16>, vector<32x128xbf16>, vector<64x128xf32> -> vector<64x128xf32>
    %c832_70 = arith.constant 832 : index
    %c0_71 = arith.constant 0 : index
    %156 = vector.load %arg4[%c832_70, %c0_71] : memref<1904x1xf32, #tpu.memory_space<vmem>>, vector<64x1xf32>
    %157 = vector.broadcast %156 : vector<64x1xf32> to vector<64x128xf32>
    %158 = arith.addf %155, %157 : vector<64x128xf32>
    %cst_72 = arith.constant 0.000000e+00 : f32
    %159 = vector.broadcast %cst_72 : f32 to vector<64x128xf32>
    %160 = arith.maximumf %158, %159 : vector<64x128xf32>
    %161 = arith.truncf %160 : vector<64x128xf32> to vector<64x128xbf16>
    %c896 = arith.constant 896 : index
    %c0_73 = arith.constant 0 : index
    %162 = vector.load %arg3[%c896, %c0_73] : memref<1904x64xbf16, #tpu.memory_space<vmem>>, vector<64x64xbf16>
    %cst_74 = arith.constant dense<0.000000e+00> : vector<64x128xf32>
    %163 = tpu.matmul %162, %161, %cst_74 {dimension_numbers = #tpu.dot_dimension_numbers<[1], [0], [0], [1], [0, 0, 1, 1], [], []>} : vector<64x64xbf16>, vector<64x128xbf16>, vector<64x128xf32> -> vector<64x128xf32>
    %c896_75 = arith.constant 896 : index
    %c0_76 = arith.constant 0 : index
    %164 = vector.load %arg4[%c896_75, %c0_76] : memref<1904x1xf32, #tpu.memory_space<vmem>>, vector<64x1xf32>
    %165 = vector.broadcast %164 : vector<64x1xf32> to vector<64x128xf32>
    %166 = arith.addf %163, %165 : vector<64x128xf32>
    %cst_77 = arith.constant 0.000000e+00 : f32
    %167 = vector.broadcast %cst_77 : f32 to vector<64x128xf32>
    %168 = arith.maximumf %166, %167 : vector<64x128xf32>
    %169 = arith.truncf %168 : vector<64x128xf32> to vector<64x128xbf16>
    %c960 = arith.constant 960 : index
    %c0_78 = arith.constant 0 : index
    %170 = vector.load %arg3[%c960, %c0_78] : memref<1904x64xbf16, #tpu.memory_space<vmem>>, vector<64x64xbf16>
    %cst_79 = arith.constant dense<0.000000e+00> : vector<64x128xf32>
    %171 = tpu.matmul %170, %169, %cst_79 {dimension_numbers = #tpu.dot_dimension_numbers<[1], [0], [0], [1], [0, 0, 1, 1], [], []>} : vector<64x64xbf16>, vector<64x128xbf16>, vector<64x128xf32> -> vector<64x128xf32>
    %c960_80 = arith.constant 960 : index
    %c0_81 = arith.constant 0 : index
    %172 = vector.load %arg4[%c960_80, %c0_81] : memref<1904x1xf32, #tpu.memory_space<vmem>>, vector<64x1xf32>
    %173 = vector.broadcast %172 : vector<64x1xf32> to vector<64x128xf32>
    %174 = arith.addf %171, %173 : vector<64x128xf32>
    %175 = vector.extract_strided_slice %174 {offsets = [0, 0], sizes = [32, 128], strides = [1, 1]} : vector<64x128xf32> to vector<32x128xf32>
    %176 = vector.extract_strided_slice %174 {offsets = [32, 0], sizes = [32, 128], strides = [1, 1]} : vector<64x128xf32> to vector<32x128xf32>
    %cst_82 = arith.constant 0.000000e+00 : f32
    %177 = vector.broadcast %cst_82 : f32 to vector<32x128xf32>
    %178 = arith.minimumf %176, %177 : vector<32x128xf32>
    %179 = math.absf %176 : vector<32x128xf32>
    %cst_83 = arith.constant 0.000000e+00 : f32
    %180 = vector.broadcast %cst_83 : f32 to vector<32x128xf32>
    %181 = arith.subf %180, %179 : vector<32x128xf32>
    %182 = math.exp %181 : vector<32x128xf32>
    %183 = math.log1p %182 : vector<32x128xf32>
    %184 = arith.subf %178, %183 : vector<32x128xf32>
    %185 = arith.addf %152, %175 : vector<32x128xf32>
    %186 = math.exp %184 : vector<32x128xf32>
    %187 = arith.mulf %185, %186 : vector<32x128xf32>
    %188 = arith.addf %143, %184 : vector<32x128xf32>
    %189 = tpu.concatenate %151, %187 in 0 : vector<32x128xf32>, vector<32x128xf32> -> vector<64x128xf32>
    %190 = vector.extract_strided_slice %189 {offsets = [0, 0], sizes = [32, 128], strides = [1, 1]} : vector<64x128xf32> to vector<32x128xf32>
    %191 = vector.extract_strided_slice %189 {offsets = [32, 0], sizes = [32, 128], strides = [1, 1]} : vector<64x128xf32> to vector<32x128xf32>
    %c0_84 = arith.constant 0 : index
    %c0_85 = arith.constant 0 : index
    %c0_86 = arith.constant 0 : index
    %192 = vector.load %arg5[%c0_84, %c0_85, %c0_86] : memref<1x32x128xf32, #tpu.memory_space<vmem>>, vector<1x32x128xf32>
    %193 = vector.shape_cast %192 : vector<1x32x128xf32> to vector<32x128xf32>
    %194 = vector.shape_cast %190 : vector<32x128xf32> to vector<1x32x128xf32>
    tpu.vector_store %arg5[%c0_84, %c0_85, %c0_86], %194 {strides = array<i32>} : memref<1x32x128xf32, #tpu.memory_space<vmem>>, vector<1x32x128xf32>,
    %195 = arith.truncf %190 : vector<32x128xf32> to vector<32x128xbf16>
    %c1024 = arith.constant 1024 : index
    %c0_87 = arith.constant 0 : index
    %196 = vector.load %arg3[%c1024, %c0_87] : memref<1904x64xbf16, #tpu.memory_space<vmem>>, vector<16x32xbf16>
    %cst_88 = arith.constant dense<0.000000e+00> : vector<16x128xf32>
    %197 = tpu.matmul %196, %195, %cst_88 {dimension_numbers = #tpu.dot_dimension_numbers<[1], [0], [0], [1], [0, 0, 1, 1], [], []>} : vector<16x32xbf16>, vector<32x128xbf16>, vector<16x128xf32> -> vector<16x128xf32>
    %c1024_89 = arith.constant 1024 : index
    %c0_90 = arith.constant 0 : index
    %198 = vector.load %arg4[%c1024_89, %c0_90] : memref<1904x1xf32, #tpu.memory_space<vmem>>, vector<16x1xf32>
    %199 = vector.broadcast %198 : vector<16x1xf32> to vector<16x128xf32>
    %200 = arith.addf %197, %199 : vector<16x128xf32>
    %cst_91 = arith.constant 0.000000e+00 : f32
    %201 = vector.broadcast %cst_91 : f32 to vector<16x128xf32>
    %202 = arith.cmpf ogt, %200, %201 : vector<16x128xf32>
    %cst_92 = arith.constant 2.000000e-01 : f32
    %203 = vector.broadcast %cst_92 : f32 to vector<16x128xf32>
    %204 = arith.mulf %203, %200 : vector<16x128xf32>
    %205 = arith.select %202, %200, %204 : vector<16x128xi1>, vector<16x128xf32>
    %206 = arith.truncf %205 : vector<16x128xf32> to vector<16x128xbf16>
    %c1040 = arith.constant 1040 : index
    %c0_93 = arith.constant 0 : index
    %207 = vector.load %arg3[%c1040, %c0_93] : memref<1904x64xbf16, #tpu.memory_space<vmem>>, vector<16x16xbf16>
    %cst_94 = arith.constant dense<0.000000e+00> : vector<16x128xf32>
    %208 = tpu.matmul %207, %206, %cst_94 {dimension_numbers = #tpu.dot_dimension_numbers<[1], [0], [0], [1], [0, 0, 1, 1], [], []>} : vector<16x16xbf16>, vector<16x128xbf16>, vector<16x128xf32> -> vector<16x128xf32>
    %c1040_95 = arith.constant 1040 : index
    %c0_96 = arith.constant 0 : index
    %209 = vector.load %arg4[%c1040_95, %c0_96] : memref<1904x1xf32, #tpu.memory_space<vmem>>, vector<16x1xf32>
    %210 = vector.broadcast %209 : vector<16x1xf32> to vector<16x128xf32>
    %211 = arith.addf %208, %210 : vector<16x128xf32>
    %cst_97 = arith.constant 0.000000e+00 : f32
    %212 = vector.broadcast %cst_97 : f32 to vector<16x128xf32>
    %213 = arith.cmpf ogt, %211, %212 : vector<16x128xf32>
    %cst_98 = arith.constant 2.000000e-01 : f32
    %214 = vector.broadcast %cst_98 : f32 to vector<16x128xf32>
    %215 = arith.mulf %214, %211 : vector<16x128xf32>
    %216 = arith.select %213, %211, %215 : vector<16x128xi1>, vector<16x128xf32>
    %217 = arith.truncf %216 : vector<16x128xf32> to vector<16x128xbf16>
    %c1056 = arith.constant 1056 : index
    %c0_99 = arith.constant 0 : index
    %218 = vector.load %arg3[%c1056, %c0_99] : memref<1904x64xbf16, #tpu.memory_space<vmem>>, vector<16x16xbf16>
    %cst_100 = arith.constant dense<0.000000e+00> : vector<16x128xf32>
    %219 = tpu.matmul %218, %217, %cst_100 {dimension_numbers = #tpu.dot_dimension_numbers<[1], [0], [0], [1], [0, 0, 1, 1], [], []>} : vector<16x16xbf16>, vector<16x128xbf16>, vector<16x128xf32> -> vector<16x128xf32>
    %c1056_101 = arith.constant 1056 : index
    %c0_102 = arith.constant 0 : index
    %220 = vector.load %arg4[%c1056_101, %c0_102] : memref<1904x1xf32, #tpu.memory_space<vmem>>, vector<16x1xf32>
    %221 = vector.broadcast %220 : vector<16x1xf32> to vector<16x128xf32>
    %222 = arith.addf %219, %221 : vector<16x128xf32>
    %223 = arith.truncf %222 : vector<16x128xf32> to vector<16x128xbf16>
    %c16 = arith.constant 16 : index
    %c0_103 = arith.constant 0 : index
    %224 = vector.load %arg8[%c16, %c0_103] : memref<32x128xbf16, #tpu.memory_space<vmem>>, vector<16x128xbf16>
    tpu.vector_store %arg8[%c16, %c0_103], %223 {strides = array<i32>} : memref<32x128xbf16, #tpu.memory_space<vmem>>, vector<16x128xbf16>,
    %225 = arith.truncf %191 : vector<32x128xf32> to vector<32x128xbf16>
    %c1072 = arith.constant 1072 : index
    %c0_104 = arith.constant 0 : index
    %226 = vector.load %arg3[%c1072, %c0_104] : memref<1904x64xbf16, #tpu.memory_space<vmem>>, vector<32x32xbf16>
    %cst_105 = arith.constant dense<0.000000e+00> : vector<32x128xf32>
    %227 = tpu.matmul %226, %225, %cst_105 {dimension_numbers = #tpu.dot_dimension_numbers<[1], [0], [0], [1], [0, 0, 1, 1], [], []>} : vector<32x32xbf16>, vector<32x128xbf16>, vector<32x128xf32> -> vector<32x128xf32>
    %c1072_106 = arith.constant 1072 : index
    %c0_107 = arith.constant 0 : index
    %228 = vector.load %arg4[%c1072_106, %c0_107] : memref<1904x1xf32, #tpu.memory_space<vmem>>, vector<32x1xf32>
    %229 = vector.broadcast %228 : vector<32x1xf32> to vector<32x128xf32>
    %230 = arith.addf %227, %229 : vector<32x128xf32>
    %231 = vector.extract_strided_slice %230 {offsets = [0, 0], sizes = [16, 128], strides = [1, 1]} : vector<32x128xf32> to vector<16x128xf32>
    %232 = vector.extract_strided_slice %230 {offsets = [16, 0], sizes = [16, 128], strides = [1, 1]} : vector<32x128xf32> to vector<16x128xf32>
    %233 = arith.truncf %231 : vector<16x128xf32> to vector<16x128xbf16>
    %c0_108 = arith.constant 0 : index
    %c0_109 = arith.constant 0 : index
    %234 = vector.load %arg8[%c0_108, %c0_109] : memref<32x128xbf16, #tpu.memory_space<vmem>>, vector<16x128xbf16>
    tpu.vector_store %arg8[%c0_108, %c0_109], %233 {strides = array<i32>} : memref<32x128xbf16, #tpu.memory_space<vmem>>, vector<16x128xbf16>,
    %c0_110 = arith.constant 0 : index
    %c0_111 = arith.constant 0 : index
    %235 = vector.load %arg8[%c0_110, %c0_111] : memref<32x128xbf16, #tpu.memory_space<vmem>>, vector<32x128xbf16>
    %c1104 = arith.constant 1104 : index
    %c0_112 = arith.constant 0 : index
    %236 = vector.load %arg3[%c1104, %c0_112] : memref<1904x64xbf16, #tpu.memory_space<vmem>>, vector<64x32xbf16>
    %cst_113 = arith.constant dense<0.000000e+00> : vector<64x128xf32>
    %237 = tpu.matmul %236, %235, %cst_113 {dimension_numbers = #tpu.dot_dimension_numbers<[1], [0], [0], [1], [0, 0, 1, 1], [], []>} : vector<64x32xbf16>, vector<32x128xbf16>, vector<64x128xf32> -> vector<64x128xf32>
    %c1104_114 = arith.constant 1104 : index
    %c0_115 = arith.constant 0 : index
    %238 = vector.load %arg4[%c1104_114, %c0_115] : memref<1904x1xf32, #tpu.memory_space<vmem>>, vector<64x1xf32>
    %239 = vector.broadcast %238 : vector<64x1xf32> to vector<64x128xf32>
    %240 = arith.addf %237, %239 : vector<64x128xf32>
    %cst_116 = arith.constant 0.000000e+00 : f32
    %241 = vector.broadcast %cst_116 : f32 to vector<64x128xf32>
    %242 = arith.maximumf %240, %241 : vector<64x128xf32>
    %243 = arith.truncf %242 : vector<64x128xf32> to vector<64x128xbf16>
    %c1168 = arith.constant 1168 : index
    %c0_117 = arith.constant 0 : index
    %244 = vector.load %arg3[%c1168, %c0_117] : memref<1904x64xbf16, #tpu.memory_space<vmem>>, vector<64x64xbf16>
    %cst_118 = arith.constant dense<0.000000e+00> : vector<64x128xf32>
    %245 = tpu.matmul %244, %243, %cst_118 {dimension_numbers = #tpu.dot_dimension_numbers<[1], [0], [0], [1], [0, 0, 1, 1], [], []>} : vector<64x64xbf16>, vector<64x128xbf16>, vector<64x128xf32> -> vector<64x128xf32>
    %c1168_119 = arith.constant 1168 : index
    %c0_120 = arith.constant 0 : index
    %246 = vector.load %arg4[%c1168_119, %c0_120] : memref<1904x1xf32, #tpu.memory_space<vmem>>, vector<64x1xf32>
    %247 = vector.broadcast %246 : vector<64x1xf32> to vector<64x128xf32>
    %248 = arith.addf %245, %247 : vector<64x128xf32>
    %cst_121 = arith.constant 0.000000e+00 : f32
    %249 = vector.broadcast %cst_121 : f32 to vector<64x128xf32>
    %250 = arith.maximumf %248, %249 : vector<64x128xf32>
    %251 = arith.truncf %250 : vector<64x128xf32> to vector<64x128xbf16>
    %c1232 = arith.constant 1232 : index
    %c0_122 = arith.constant 0 : index
    %252 = vector.load %arg3[%c1232, %c0_122] : memref<1904x64xbf16, #tpu.memory_space<vmem>>, vector<32x64xbf16>
    %cst_123 = arith.constant dense<0.000000e+00> : vector<32x128xf32>
    %253 = tpu.matmul %252, %251, %cst_123 {dimension_numbers = #tpu.dot_dimension_numbers<[1], [0], [0], [1], [0, 0, 1, 1], [], []>} : vector<32x64xbf16>, vector<64x128xbf16>, vector<32x128xf32> -> vector<32x128xf32>
    %c1232_124 = arith.constant 1232 : index
    %c0_125 = arith.constant 0 : index
    %254 = vector.load %arg4[%c1232_124, %c0_125] : memref<1904x1xf32, #tpu.memory_space<vmem>>, vector<32x1xf32>
    %255 = vector.broadcast %254 : vector<32x1xf32> to vector<32x128xf32>
    %256 = arith.addf %253, %255 : vector<32x128xf32>
    %257 = vector.extract_strided_slice %256 {offsets = [0, 0], sizes = [16, 128], strides = [1, 1]} : vector<32x128xf32> to vector<16x128xf32>
    %258 = vector.extract_strided_slice %256 {offsets = [16, 0], sizes = [16, 128], strides = [1, 1]} : vector<32x128xf32> to vector<16x128xf32>
    %cst_126 = arith.constant 0.000000e+00 : f32
    %259 = vector.broadcast %cst_126 : f32 to vector<16x128xf32>
    %260 = arith.minimumf %258, %259 : vector<16x128xf32>
    %261 = math.absf %258 : vector<16x128xf32>
    %cst_127 = arith.constant 0.000000e+00 : f32
    %262 = vector.broadcast %cst_127 : f32 to vector<16x128xf32>
    %263 = arith.subf %262, %261 : vector<16x128xf32>
    %264 = math.exp %263 : vector<16x128xf32>
    %265 = math.log1p %264 : vector<16x128xf32>
    %266 = arith.subf %260, %265 : vector<16x128xf32>
    %267 = arith.addf %232, %257 : vector<16x128xf32>
    %268 = math.exp %266 : vector<16x128xf32>
    %269 = arith.mulf %267, %268 : vector<16x128xf32>
    %270 = arith.addf %9, %266 : vector<16x128xf32>
    %271 = tpu.concatenate %231, %269 in 0 : vector<16x128xf32>, vector<16x128xf32> -> vector<32x128xf32>
    %272 = arith.truncf %271 : vector<32x128xf32> to vector<32x128xbf16>
    %c1264 = arith.constant 1264 : index
    %c0_128 = arith.constant 0 : index
    %273 = vector.load %arg3[%c1264, %c0_128] : memref<1904x64xbf16, #tpu.memory_space<vmem>>, vector<32x32xbf16>
    %cst_129 = arith.constant dense<0.000000e+00> : vector<32x128xf32>
    %274 = tpu.matmul %273, %272, %cst_129 {dimension_numbers = #tpu.dot_dimension_numbers<[1], [0], [0], [1], [0, 0, 1, 1], [], []>} : vector<32x32xbf16>, vector<32x128xbf16>, vector<32x128xf32> -> vector<32x128xf32>
    %c1264_130 = arith.constant 1264 : index
    %c0_131 = arith.constant 0 : index
    %275 = vector.load %arg4[%c1264_130, %c0_131] : memref<1904x1xf32, #tpu.memory_space<vmem>>, vector<32x1xf32>
    %276 = vector.broadcast %275 : vector<32x1xf32> to vector<32x128xf32>
    %277 = arith.addf %274, %276 : vector<32x128xf32>
    %278 = vector.extract_strided_slice %277 {offsets = [0, 0], sizes = [16, 128], strides = [1, 1]} : vector<32x128xf32> to vector<16x128xf32>
    %279 = vector.extract_strided_slice %277 {offsets = [16, 0], sizes = [16, 128], strides = [1, 1]} : vector<32x128xf32> to vector<16x128xf32>
    %280 = arith.truncf %278 : vector<16x128xf32> to vector<16x128xbf16>
    %c0_132 = arith.constant 0 : index
    %c0_133 = arith.constant 0 : index
    %281 = vector.load %arg8[%c0_132, %c0_133] : memref<32x128xbf16, #tpu.memory_space<vmem>>, vector<16x128xbf16>
    tpu.vector_store %arg8[%c0_132, %c0_133], %280 {strides = array<i32>} : memref<32x128xbf16, #tpu.memory_space<vmem>>, vector<16x128xbf16>,
    %c0_134 = arith.constant 0 : index
    %c0_135 = arith.constant 0 : index
    %282 = vector.load %arg8[%c0_134, %c0_135] : memref<32x128xbf16, #tpu.memory_space<vmem>>, vector<32x128xbf16>
    %c1296 = arith.constant 1296 : index
    %c0_136 = arith.constant 0 : index
    %283 = vector.load %arg3[%c1296, %c0_136] : memref<1904x64xbf16, #tpu.memory_space<vmem>>, vector<64x32xbf16>
    %cst_137 = arith.constant dense<0.000000e+00> : vector<64x128xf32>
    %284 = tpu.matmul %283, %282, %cst_137 {dimension_numbers = #tpu.dot_dimension_numbers<[1], [0], [0], [1], [0, 0, 1, 1], [], []>} : vector<64x32xbf16>, vector<32x128xbf16>, vector<64x128xf32> -> vector<64x128xf32>
    %c1296_138 = arith.constant 1296 : index
    %c0_139 = arith.constant 0 : index
    %285 = vector.load %arg4[%c1296_138, %c0_139] : memref<1904x1xf32, #tpu.memory_space<vmem>>, vector<64x1xf32>
    %286 = vector.broadcast %285 : vector<64x1xf32> to vector<64x128xf32>
    %287 = arith.addf %284, %286 : vector<64x128xf32>
    %cst_140 = arith.constant 0.000000e+00 : f32
    %288 = vector.broadcast %cst_140 : f32 to vector<64x128xf32>
    %289 = arith.maximumf %287, %288 : vector<64x128xf32>
    %290 = arith.truncf %289 : vector<64x128xf32> to vector<64x128xbf16>
    %c1360 = arith.constant 1360 : index
    %c0_141 = arith.constant 0 : index
    %291 = vector.load %arg3[%c1360, %c0_141] : memref<1904x64xbf16, #tpu.memory_space<vmem>>, vector<64x64xbf16>
    %cst_142 = arith.constant dense<0.000000e+00> : vector<64x128xf32>
    %292 = tpu.matmul %291, %290, %cst_142 {dimension_numbers = #tpu.dot_dimension_numbers<[1], [0], [0], [1], [0, 0, 1, 1], [], []>} : vector<64x64xbf16>, vector<64x128xbf16>, vector<64x128xf32> -> vector<64x128xf32>
    %c1360_143 = arith.constant 1360 : index
    %c0_144 = arith.constant 0 : index
    %293 = vector.load %arg4[%c1360_143, %c0_144] : memref<1904x1xf32, #tpu.memory_space<vmem>>, vector<64x1xf32>
    %294 = vector.broadcast %293 : vector<64x1xf32> to vector<64x128xf32>
    %295 = arith.addf %292, %294 : vector<64x128xf32>
    %cst_145 = arith.constant 0.000000e+00 : f32
    %296 = vector.broadcast %cst_145 : f32 to vector<64x128xf32>
    %297 = arith.maximumf %295, %296 : vector<64x128xf32>
    %298 = arith.truncf %297 : vector<64x128xf32> to vector<64x128xbf16>
    %c1424 = arith.constant 1424 : index
    %c0_146 = arith.constant 0 : index
    %299 = vector.load %arg3[%c1424, %c0_146] : memref<1904x64xbf16, #tpu.memory_space<vmem>>, vector<32x64xbf16>
    %cst_147 = arith.constant dense<0.000000e+00> : vector<32x128xf32>
    %300 = tpu.matmul %299, %298, %cst_147 {dimension_numbers = #tpu.dot_dimension_numbers<[1], [0], [0], [1], [0, 0, 1, 1], [], []>} : vector<32x64xbf16>, vector<64x128xbf16>, vector<32x128xf32> -> vector<32x128xf32>
    %c1424_148 = arith.constant 1424 : index
    %c0_149 = arith.constant 0 : index
    %301 = vector.load %arg4[%c1424_148, %c0_149] : memref<1904x1xf32, #tpu.memory_space<vmem>>, vector<32x1xf32>
    %302 = vector.broadcast %301 : vector<32x1xf32> to vector<32x128xf32>
    %303 = arith.addf %300, %302 : vector<32x128xf32>
    %304 = vector.extract_strided_slice %303 {offsets = [0, 0], sizes = [16, 128], strides = [1, 1]} : vector<32x128xf32> to vector<16x128xf32>
    %305 = vector.extract_strided_slice %303 {offsets = [16, 0], sizes = [16, 128], strides = [1, 1]} : vector<32x128xf32> to vector<16x128xf32>
    %cst_150 = arith.constant 0.000000e+00 : f32
    %306 = vector.broadcast %cst_150 : f32 to vector<16x128xf32>
    %307 = arith.minimumf %305, %306 : vector<16x128xf32>
    %308 = math.absf %305 : vector<16x128xf32>
    %cst_151 = arith.constant 0.000000e+00 : f32
    %309 = vector.broadcast %cst_151 : f32 to vector<16x128xf32>
    %310 = arith.subf %309, %308 : vector<16x128xf32>
    %311 = math.exp %310 : vector<16x128xf32>
    %312 = math.log1p %311 : vector<16x128xf32>
    %313 = arith.subf %307, %312 : vector<16x128xf32>
    %314 = arith.addf %279, %304 : vector<16x128xf32>
    %315 = math.exp %313 : vector<16x128xf32>
    %316 = arith.mulf %314, %315 : vector<16x128xf32>
    %317 = arith.addf %270, %313 : vector<16x128xf32>
    %318 = tpu.concatenate %278, %316 in 0 : vector<16x128xf32>, vector<16x128xf32> -> vector<32x128xf32>
    %319 = arith.truncf %318 : vector<32x128xf32> to vector<32x128xbf16>
    %c1456 = arith.constant 1456 : index
    %c0_152 = arith.constant 0 : index
    %320 = vector.load %arg3[%c1456, %c0_152] : memref<1904x64xbf16, #tpu.memory_space<vmem>>, vector<32x32xbf16>
    %cst_153 = arith.constant dense<0.000000e+00> : vector<32x128xf32>
    %321 = tpu.matmul %320, %319, %cst_153 {dimension_numbers = #tpu.dot_dimension_numbers<[1], [0], [0], [1], [0, 0, 1, 1], [], []>} : vector<32x32xbf16>, vector<32x128xbf16>, vector<32x128xf32> -> vector<32x128xf32>
    %c1456_154 = arith.constant 1456 : index
    %c0_155 = arith.constant 0 : index
    %322 = vector.load %arg4[%c1456_154, %c0_155] : memref<1904x1xf32, #tpu.memory_space<vmem>>, vector<32x1xf32>
    %323 = vector.broadcast %322 : vector<32x1xf32> to vector<32x128xf32>
    %324 = arith.addf %321, %323 : vector<32x128xf32>
    %325 = vector.extract_strided_slice %324 {offsets = [0, 0], sizes = [16, 128], strides = [1, 1]} : vector<32x128xf32> to vector<16x128xf32>
    %326 = vector.extract_strided_slice %324 {offsets = [16, 0], sizes = [16, 128], strides = [1, 1]} : vector<32x128xf32> to vector<16x128xf32>
    %327 = arith.truncf %325 : vector<16x128xf32> to vector<16x128xbf16>
    %c0_156 = arith.constant 0 : index
    %c0_157 = arith.constant 0 : index
    %328 = vector.load %arg8[%c0_156, %c0_157] : memref<32x128xbf16, #tpu.memory_space<vmem>>, vector<16x128xbf16>
    tpu.vector_store %arg8[%c0_156, %c0_157], %327 {strides = array<i32>} : memref<32x128xbf16, #tpu.memory_space<vmem>>, vector<16x128xbf16>,
    %c0_158 = arith.constant 0 : index
    %c0_159 = arith.constant 0 : index
    %329 = vector.load %arg8[%c0_158, %c0_159] : memref<32x128xbf16, #tpu.memory_space<vmem>>, vector<32x128xbf16>
    %c1488 = arith.constant 1488 : index
    %c0_160 = arith.constant 0 : index
    %330 = vector.load %arg3[%c1488, %c0_160] : memref<1904x64xbf16, #tpu.memory_space<vmem>>, vector<64x32xbf16>
    %cst_161 = arith.constant dense<0.000000e+00> : vector<64x128xf32>
    %331 = tpu.matmul %330, %329, %cst_161 {dimension_numbers = #tpu.dot_dimension_numbers<[1], [0], [0], [1], [0, 0, 1, 1], [], []>} : vector<64x32xbf16>, vector<32x128xbf16>, vector<64x128xf32> -> vector<64x128xf32>
    %c1488_162 = arith.constant 1488 : index
    %c0_163 = arith.constant 0 : index
    %332 = vector.load %arg4[%c1488_162, %c0_163] : memref<1904x1xf32, #tpu.memory_space<vmem>>, vector<64x1xf32>
    %333 = vector.broadcast %332 : vector<64x1xf32> to vector<64x128xf32>
    %334 = arith.addf %331, %333 : vector<64x128xf32>
    %cst_164 = arith.constant 0.000000e+00 : f32
    %335 = vector.broadcast %cst_164 : f32 to vector<64x128xf32>
    %336 = arith.maximumf %334, %335 : vector<64x128xf32>
    %337 = arith.truncf %336 : vector<64x128xf32> to vector<64x128xbf16>
    %c1552 = arith.constant 1552 : index
    %c0_165 = arith.constant 0 : index
    %338 = vector.load %arg3[%c1552, %c0_165] : memref<1904x64xbf16, #tpu.memory_space<vmem>>, vector<64x64xbf16>
    %cst_166 = arith.constant dense<0.000000e+00> : vector<64x128xf32>
    %339 = tpu.matmul %338, %337, %cst_166 {dimension_numbers = #tpu.dot_dimension_numbers<[1], [0], [0], [1], [0, 0, 1, 1], [], []>} : vector<64x64xbf16>, vector<64x128xbf16>, vector<64x128xf32> -> vector<64x128xf32>
    %c1552_167 = arith.constant 1552 : index
    %c0_168 = arith.constant 0 : index
    %340 = vector.load %arg4[%c1552_167, %c0_168] : memref<1904x1xf32, #tpu.memory_space<vmem>>, vector<64x1xf32>
    %341 = vector.broadcast %340 : vector<64x1xf32> to vector<64x128xf32>
    %342 = arith.addf %339, %341 : vector<64x128xf32>
    %cst_169 = arith.constant 0.000000e+00 : f32
    %343 = vector.broadcast %cst_169 : f32 to vector<64x128xf32>
    %344 = arith.maximumf %342, %343 : vector<64x128xf32>
    %345 = arith.truncf %344 : vector<64x128xf32> to vector<64x128xbf16>
    %c1616 = arith.constant 1616 : index
    %c0_170 = arith.constant 0 : index
    %346 = vector.load %arg3[%c1616, %c0_170] : memref<1904x64xbf16, #tpu.memory_space<vmem>>, vector<32x64xbf16>
    %cst_171 = arith.constant dense<0.000000e+00> : vector<32x128xf32>
    %347 = tpu.matmul %346, %345, %cst_171 {dimension_numbers = #tpu.dot_dimension_numbers<[1], [0], [0], [1], [0, 0, 1, 1], [], []>} : vector<32x64xbf16>, vector<64x128xbf16>, vector<32x128xf32> -> vector<32x128xf32>
    %c1616_172 = arith.constant 1616 : index
    %c0_173 = arith.constant 0 : index
    %348 = vector.load %arg4[%c1616_172, %c0_173] : memref<1904x1xf32, #tpu.memory_space<vmem>>, vector<32x1xf32>
    %349 = vector.broadcast %348 : vector<32x1xf32> to vector<32x128xf32>
    %350 = arith.addf %347, %349 : vector<32x128xf32>
    %351 = vector.extract_strided_slice %350 {offsets = [0, 0], sizes = [16, 128], strides = [1, 1]} : vector<32x128xf32> to vector<16x128xf32>
    %352 = vector.extract_strided_slice %350 {offsets = [16, 0], sizes = [16, 128], strides = [1, 1]} : vector<32x128xf32> to vector<16x128xf32>
    %cst_174 = arith.constant 0.000000e+00 : f32
    %353 = vector.broadcast %cst_174 : f32 to vector<16x128xf32>
    %354 = arith.minimumf %352, %353 : vector<16x128xf32>
    %355 = math.absf %352 : vector<16x128xf32>
    %cst_175 = arith.constant 0.000000e+00 : f32
    %356 = vector.broadcast %cst_175 : f32 to vector<16x128xf32>
    %357 = arith.subf %356, %355 : vector<16x128xf32>
    %358 = math.exp %357 : vector<16x128xf32>
    %359 = math.log1p %358 : vector<16x128xf32>
    %360 = arith.subf %354, %359 : vector<16x128xf32>
    %361 = arith.addf %326, %351 : vector<16x128xf32>
    %362 = math.exp %360 : vector<16x128xf32>
    %363 = arith.mulf %361, %362 : vector<16x128xf32>
    %364 = arith.addf %317, %360 : vector<16x128xf32>
    %365 = tpu.concatenate %325, %363 in 0 : vector<16x128xf32>, vector<16x128xf32> -> vector<32x128xf32>
    %366 = arith.truncf %365 : vector<32x128xf32> to vector<32x128xbf16>
    %c1648 = arith.constant 1648 : index
    %c0_176 = arith.constant 0 : index
    %367 = vector.load %arg3[%c1648, %c0_176] : memref<1904x64xbf16, #tpu.memory_space<vmem>>, vector<32x32xbf16>
    %cst_177 = arith.constant dense<0.000000e+00> : vector<32x128xf32>
    %368 = tpu.matmul %367, %366, %cst_177 {dimension_numbers = #tpu.dot_dimension_numbers<[1], [0], [0], [1], [0, 0, 1, 1], [], []>} : vector<32x32xbf16>, vector<32x128xbf16>, vector<32x128xf32> -> vector<32x128xf32>
    %c1648_178 = arith.constant 1648 : index
    %c0_179 = arith.constant 0 : index
    %369 = vector.load %arg4[%c1648_178, %c0_179] : memref<1904x1xf32, #tpu.memory_space<vmem>>, vector<32x1xf32>
    %370 = vector.broadcast %369 : vector<32x1xf32> to vector<32x128xf32>
    %371 = arith.addf %368, %370 : vector<32x128xf32>
    %372 = vector.extract_strided_slice %371 {offsets = [0, 0], sizes = [16, 128], strides = [1, 1]} : vector<32x128xf32> to vector<16x128xf32>
    %373 = vector.extract_strided_slice %371 {offsets = [16, 0], sizes = [16, 128], strides = [1, 1]} : vector<32x128xf32> to vector<16x128xf32>
    %374 = arith.truncf %372 : vector<16x128xf32> to vector<16x128xbf16>
    %c0_180 = arith.constant 0 : index
    %c0_181 = arith.constant 0 : index
    %375 = vector.load %arg8[%c0_180, %c0_181] : memref<32x128xbf16, #tpu.memory_space<vmem>>, vector<16x128xbf16>
    tpu.vector_store %arg8[%c0_180, %c0_181], %374 {strides = array<i32>} : memref<32x128xbf16, #tpu.memory_space<vmem>>, vector<16x128xbf16>,
    %c0_182 = arith.constant 0 : index
    %c0_183 = arith.constant 0 : index
    %376 = vector.load %arg8[%c0_182, %c0_183] : memref<32x128xbf16, #tpu.memory_space<vmem>>, vector<32x128xbf16>
    %c1680 = arith.constant 1680 : index
    %c0_184 = arith.constant 0 : index
    %377 = vector.load %arg3[%c1680, %c0_184] : memref<1904x64xbf16, #tpu.memory_space<vmem>>, vector<64x32xbf16>
    %cst_185 = arith.constant dense<0.000000e+00> : vector<64x128xf32>
    %378 = tpu.matmul %377, %376, %cst_185 {dimension_numbers = #tpu.dot_dimension_numbers<[1], [0], [0], [1], [0, 0, 1, 1], [], []>} : vector<64x32xbf16>, vector<32x128xbf16>, vector<64x128xf32> -> vector<64x128xf32>
    %c1680_186 = arith.constant 1680 : index
    %c0_187 = arith.constant 0 : index
    %379 = vector.load %arg4[%c1680_186, %c0_187] : memref<1904x1xf32, #tpu.memory_space<vmem>>, vector<64x1xf32>
    %380 = vector.broadcast %379 : vector<64x1xf32> to vector<64x128xf32>
    %381 = arith.addf %378, %380 : vector<64x128xf32>
    %cst_188 = arith.constant 0.000000e+00 : f32
    %382 = vector.broadcast %cst_188 : f32 to vector<64x128xf32>
    %383 = arith.maximumf %381, %382 : vector<64x128xf32>
    %384 = arith.truncf %383 : vector<64x128xf32> to vector<64x128xbf16>
    %c1744 = arith.constant 1744 : index
    %c0_189 = arith.constant 0 : index
    %385 = vector.load %arg3[%c1744, %c0_189] : memref<1904x64xbf16, #tpu.memory_space<vmem>>, vector<64x64xbf16>
    %cst_190 = arith.constant dense<0.000000e+00> : vector<64x128xf32>
    %386 = tpu.matmul %385, %384, %cst_190 {dimension_numbers = #tpu.dot_dimension_numbers<[1], [0], [0], [1], [0, 0, 1, 1], [], []>} : vector<64x64xbf16>, vector<64x128xbf16>, vector<64x128xf32> -> vector<64x128xf32>
    %c1744_191 = arith.constant 1744 : index
    %c0_192 = arith.constant 0 : index
    %387 = vector.load %arg4[%c1744_191, %c0_192] : memref<1904x1xf32, #tpu.memory_space<vmem>>, vector<64x1xf32>
    %388 = vector.broadcast %387 : vector<64x1xf32> to vector<64x128xf32>
    %389 = arith.addf %386, %388 : vector<64x128xf32>
    %cst_193 = arith.constant 0.000000e+00 : f32
    %390 = vector.broadcast %cst_193 : f32 to vector<64x128xf32>
    %391 = arith.maximumf %389, %390 : vector<64x128xf32>
    %392 = arith.truncf %391 : vector<64x128xf32> to vector<64x128xbf16>
    %c1808 = arith.constant 1808 : index
    %c0_194 = arith.constant 0 : index
    %393 = vector.load %arg3[%c1808, %c0_194] : memref<1904x64xbf16, #tpu.memory_space<vmem>>, vector<32x64xbf16>
    %cst_195 = arith.constant dense<0.000000e+00> : vector<32x128xf32>
    %394 = tpu.matmul %393, %392, %cst_195 {dimension_numbers = #tpu.dot_dimension_numbers<[1], [0], [0], [1], [0, 0, 1, 1], [], []>} : vector<32x64xbf16>, vector<64x128xbf16>, vector<32x128xf32> -> vector<32x128xf32>
    %c1808_196 = arith.constant 1808 : index
    %c0_197 = arith.constant 0 : index
    %395 = vector.load %arg4[%c1808_196, %c0_197] : memref<1904x1xf32, #tpu.memory_space<vmem>>, vector<32x1xf32>
    %396 = vector.broadcast %395 : vector<32x1xf32> to vector<32x128xf32>
    %397 = arith.addf %394, %396 : vector<32x128xf32>
    %398 = vector.extract_strided_slice %397 {offsets = [0, 0], sizes = [16, 128], strides = [1, 1]} : vector<32x128xf32> to vector<16x128xf32>
    %399 = vector.extract_strided_slice %397 {offsets = [16, 0], sizes = [16, 128], strides = [1, 1]} : vector<32x128xf32> to vector<16x128xf32>
    %cst_198 = arith.constant 0.000000e+00 : f32
    %400 = vector.broadcast %cst_198 : f32 to vector<16x128xf32>
    %401 = arith.minimumf %399, %400 : vector<16x128xf32>
    %402 = math.absf %399 : vector<16x128xf32>
    %cst_199 = arith.constant 0.000000e+00 : f32
    %403 = vector.broadcast %cst_199 : f32 to vector<16x128xf32>
    %404 = arith.subf %403, %402 : vector<16x128xf32>
    %405 = math.exp %404 : vector<16x128xf32>
    %406 = math.log1p %405 : vector<16x128xf32>
    %407 = arith.subf %401, %406 : vector<16x128xf32>
    %408 = arith.addf %373, %398 : vector<16x128xf32>
    %409 = math.exp %407 : vector<16x128xf32>
    %410 = arith.mulf %408, %409 : vector<16x128xf32>
    %411 = arith.addf %364, %407 : vector<16x128xf32>
    %412 = tpu.concatenate %372, %410 in 0 : vector<16x128xf32>, vector<16x128xf32> -> vector<32x128xf32>
    %c16_200 = arith.constant 16 : index
    %c0_201 = arith.constant 0 : index
    %413 = vector.load %arg8[%c16_200, %c0_201] : memref<32x128xbf16, #tpu.memory_space<vmem>>, vector<16x128xbf16>
    %c1840 = arith.constant 1840 : index
    %c0_202 = arith.constant 0 : index
    %414 = vector.load %arg3[%c1840, %c0_202] : memref<1904x64xbf16, #tpu.memory_space<vmem>>, vector<64x16xbf16>
    %cst_203 = arith.constant dense<0.000000e+00> : vector<64x128xf32>
    %415 = tpu.matmul %414, %413, %cst_203 {dimension_numbers = #tpu.dot_dimension_numbers<[1], [0], [0], [1], [0, 0, 1, 1], [], []>} : vector<64x16xbf16>, vector<16x128xbf16>, vector<64x128xf32> -> vector<64x128xf32>
    %c1840_204 = arith.constant 1840 : index
    %c0_205 = arith.constant 0 : index
    %416 = vector.load %arg4[%c1840_204, %c0_205] : memref<1904x1xf32, #tpu.memory_space<vmem>>, vector<64x1xf32>
    %417 = vector.broadcast %416 : vector<64x1xf32> to vector<64x128xf32>
    %418 = arith.addf %415, %417 : vector<64x128xf32>
    %419 = vector.extract_strided_slice %418 {offsets = [0, 0], sizes = [32, 128], strides = [1, 1]} : vector<64x128xf32> to vector<32x128xf32>
    %420 = vector.extract_strided_slice %418 {offsets = [32, 0], sizes = [32, 128], strides = [1, 1]} : vector<64x128xf32> to vector<32x128xf32>
    %cst_206 = arith.constant -2.000000e+01 : f32
    %cst_207 = arith.constant 2.000000e+01 : f32
    %421 = vector.broadcast %cst_206 : f32 to vector<32x128xf32>
    %422 = arith.maximumf %421, %420 : vector<32x128xf32>
    %423 = vector.broadcast %cst_207 : f32 to vector<32x128xf32>
    %424 = arith.minimumf %423, %422 : vector<32x128xf32>
    %cst_208 = arith.constant 2.000000e+00 : f32
    %425 = vector.broadcast %cst_208 : f32 to vector<32x128xf32>
    %426 = arith.mulf %425, %424 : vector<32x128xf32>
    %cst_209 = arith.constant 1.83787704 : f32
    %427 = vector.broadcast %cst_209 : f32 to vector<32x128xf32>
    %428 = arith.addf %427, %426 : vector<32x128xf32>
    %429 = arith.subf %412, %419 : vector<32x128xf32>
    %430 = arith.mulf %429, %429 : vector<32x128xf32>
    %cst_210 = arith.constant -2.000000e+00 : f32
    %431 = vector.broadcast %cst_210 : f32 to vector<32x128xf32>
    %432 = arith.mulf %431, %424 : vector<32x128xf32>
    %433 = math.exp %432 : vector<32x128xf32>
    %434 = arith.mulf %430, %433 : vector<32x128xf32>
    %435 = arith.addf %428, %434 : vector<32x128xf32>
    %cst_211 = arith.constant -5.000000e-01 : f32
    %436 = vector.broadcast %cst_211 : f32 to vector<32x128xf32>
    %437 = arith.mulf %436, %435 : vector<32x128xf32>
    %438 = arith.addf %188, %437 : vector<32x128xf32>
    %c0_212 = arith.constant 0 : index
    %c0_213 = arith.constant 0 : index
    %c0_214 = arith.constant 0 : index
    %439 = vector.load %arg6[%c0_212, %c0_213, %c0_214] : memref<1x32x128xf32, #tpu.memory_space<vmem>>, vector<1x32x128xf32>
    %440 = vector.shape_cast %439 : vector<1x32x128xf32> to vector<32x128xf32>
    %441 = vector.shape_cast %412 : vector<32x128xf32> to vector<1x32x128xf32>
    tpu.vector_store %arg6[%c0_212, %c0_213, %c0_214], %441 {strides = array<i32>} : memref<1x32x128xf32, #tpu.memory_space<vmem>>, vector<1x32x128xf32>,
    %cst_215 = arith.constant 0.000000e+00 : f32
    %442 = vector.shape_cast %5 : vector<1x128xi1> to vector<1x128xi1>
    %443 = vector.broadcast %442 : vector<1x128xi1> to vector<32x128xi1>
    %444 = vector.broadcast %cst_215 : f32 to vector<32x128xf32>
    %445 = arith.select %443, %438, %444 : vector<32x128xi1>, vector<32x128xf32>
    %446 = vector.shape_cast %445 : vector<32x128xf32> to vector<1x32x128xf32>
    %cst_216 = arith.constant dense<0.000000e+00> : vector<1xf32>
    %447 = vector.multi_reduction <add>, %446, %cst_216 [1, 2] : vector<1x32x128xf32> to vector<1xf32>
    %448 = vector.shape_cast %447 : vector<1xf32> to vector<1x1x1xf32>
    %449 = vector.extract %448[0, 0, 0] : f32 from vector<1x1x1xf32>
    %cst_217 = arith.constant 0.000000e+00 : f32
    %450 = vector.shape_cast %5 : vector<1x128xi1> to vector<1x128xi1>
    %451 = vector.broadcast %450 : vector<1x128xi1> to vector<16x128xi1>
    %452 = vector.broadcast %cst_217 : f32 to vector<16x128xf32>
    %453 = arith.select %451, %411, %452 : vector<16x128xi1>, vector<16x128xf32>
    %454 = vector.shape_cast %453 : vector<16x128xf32> to vector<1x16x128xf32>
    %cst_218 = arith.constant dense<0.000000e+00> : vector<1xf32>
    %455 = vector.multi_reduction <add>, %454, %cst_218 [1, 2] : vector<1x16x128xf32> to vector<1xf32>
    %456 = vector.shape_cast %455 : vector<1xf32> to vector<1x1x1xf32>
    %457 = vector.extract %456[0, 0, 0] : f32 from vector<1x1x1xf32>
    %458 = arith.addf %449, %457 : f32
    %459 = vector.broadcast %458 : f32 to vector<1x1x1x128xf32>
    %c0_219 = arith.constant 0 : index
    %c0_220 = arith.constant 0 : index
    %c0_221 = arith.constant 0 : index
    %c0_222 = arith.constant 0 : index
    %460 = vector.load %arg7[%c0_219, %c0_220, %c0_221, %c0_222] : memref<1x1x1x128xf32, #tpu.memory_space<vmem>>, vector<1x1x1x128xf32>
    tpu.vector_store %arg7[%c0_219, %c0_220, %c0_221, %c0_222], %459 {strides = array<i32>} : memref<1x1x1x128xf32, #tpu.memory_space<vmem>>, vector<1x1x1x128xf32>,
    return
  }
  func.func @transform_0(%arg0: i32, %arg1: i32) -> (i32, i32, i32) {
    %c0_i32 = arith.constant 0 : i32
    %c0_i32_0 = arith.constant 0 : i32
    return %arg0, %c0_i32, %arg1 : i32, i32, i32
  }
  func.func @transform_1(%arg0: i32, %arg1: i32) -> (i32, i32) {
    %c0_i32 = arith.constant 0 : i32
    %c0_i32_0 = arith.constant 0 : i32
    %c0_i32_1 = arith.constant 0 : i32
    return %c0_i32, %c0_i32_0 : i32, i32
  }
  func.func @transform_2(%arg0: i32, %arg1: i32) -> (i32, i32) {
    %c0_i32 = arith.constant 0 : i32
    %c0_i32_0 = arith.constant 0 : i32
    %c0_i32_1 = arith.constant 0 : i32
    return %c0_i32, %c0_i32_0 : i32, i32
  }
  func.func @transform_3(%arg0: i32, %arg1: i32) -> (i32, i32, i32) {
    %c0_i32 = arith.constant 0 : i32
    %c0_i32_0 = arith.constant 0 : i32
    return %arg0, %c0_i32, %arg1 : i32, i32, i32
  }
  func.func @transform_4(%arg0: i32, %arg1: i32) -> (i32, i32, i32) {
    %c0_i32 = arith.constant 0 : i32
    %c0_i32_0 = arith.constant 0 : i32
    return %arg0, %c0_i32, %arg1 : i32, i32, i32
  }
  func.func @transform_5(%arg0: i32, %arg1: i32) -> (i32, i32, i32, i32) {
    %c0_i32 = arith.constant 0 : i32
    %c0_i32_0 = arith.constant 0 : i32
    %c0_i32_1 = arith.constant 0 : i32
    return %arg0, %arg1, %c0_i32, %c0_i32_0 : i32, i32, i32, i32
  }
}

</mosaic_0001>

<llo_original>
// kernel: flownet_forward.1
$region0: #{flownet_forward.1}
  #allocation0 [shape = 'u32[]', space=smem, size = 0x4, offset = 0x4, fixed_abs, tag = 'smem constant byte address 0x4 - core index']
  #allocation1 [shape = 'u32[144,128]{1,0:T(1,128)}', space=vmem, size = 0x12000, scoped, tag = 'internal scratch']
  #allocation2 [shape = 'bf16[32,128]{1,0:T(16,128)(2,1)}', space=vmem, size = 0x2000, scoped, tag = 'scratch operand']
  %s0 = inlined_call_operand.vmem [shape: f32[2,64,128], index: 0, kind: input, shape index: {}]
  %s1 = inlined_call_operand.vmem [shape: bf16[1904,64], index: 1, kind: input, shape index: {}]
  %s2 = inlined_call_operand.vmem [shape: f32[1904,1], index: 2, kind: input, shape index: {}]
  %s3 = inlined_call_operand.vmem [shape: f32[2,32,128], index: 3, kind: output, shape index: {0}]
  %s4 = inlined_call_operand.vmem [shape: f32[2,32,128], index: 4, kind: output, shape index: {1}]
  %s5 = inlined_call_operand.vmem [shape: f32[2,1,1,128], index: 5, kind: output, shape index: {2}]
  %6 = xla_tuple %s3, %s4, %s5
  %s7 = sld [smem:[#allocation0]]
  $region61: #{flownet_forward.1} parent=0
    _
  %s9 = ssub.s32 1, %s7
  %s10 = scalar_select 0, %s9, %s7
  loop: start=0, step=1, limit=4
  $region2: #{flownet_forward.1} parent=0 // loop_pre_header
    _
  $region3: #{flownet_forward.1} parent=0 // loop_header
    %s12 = sphi 0, %s16
    %p13 = scmp.ge.s32.totalorder %s12, 4
    %s19 = sphi 0, %s31
    %s20 = sphi 0, %s27
    %s21 = sphi 0, %s19
    %s22 = sphi 0, %s20
    %s23 = sphi 0, %s21
    %s24 = sphi 0, %s22
    %s36 = sphi 0, %s38
    %s39 = sphi 0, %s36
    %s40 = sphi 0, %s39
    %s56 = sphi 0, %s40
    %s60 = sphi 0, %s60
    %s62 = sphi 0, %s60
    %s63 = sphi 0, %s62
    %s77 = sphi 0, %s63
    %s81 = sphi 0, %s81
    %s83 = sphi 0, %s81
    %s84 = sphi 0, %s83
    %s98 = sphi 0, %s84
    %s106 = sphi 0, %s108
    %s109 = sphi 0, %s106
    %s110 = sphi 0, %s109
    %s126 = sphi 0, %s110
    %s134 = sphi 0, %s136
    %s137 = sphi 0, %s134
    %s138 = sphi 0, %s137
    %s154 = sphi 0, %s138
    %s162 = sphi 0, %s164
    %s165 = sphi 0, %s162
    %s166 = sphi 0, %s165
    %s182 = sphi 0, %s166
  $region4: #{flownet_forward.1} parent=0 // loop_header_branch
    %15 = sbr.rel (%p13) target = $region8
  $region5: #{flownet_forward.1} parent=0 // loop_body
    %s17 = ssub.s32 %s12, 1
    %s18 = ssub.s32 %s12, 2
    %s25 = sadd.s32 1, %s20
    %p26 = scmp.ge.s32.totalorder %s25, 1
    %s27 = scalar_select %p26, 0, %s25
    %s28 = sadd.s32 1, %s19
    %s29 = scalar_select %p26, %s28, %s19
    %p30 = scmp.ge.s32.totalorder %s29, 2
    %s31 = scalar_select %p30, 0, %s29
    %s32 = ssub.s32 %s19, %s31
    %s33 = ssub.s32 %s20, %s27
    %s34 = sor.u32 %s32, %s33
    %p35 = scmp.eq.s32.totalorder %s34, 0
    %s37 = sadd.s32 %s36, 1
    %s38 = scalar_select %p35, %s36, %s37
    %p41 = pneg %p35
    %p42 = scmp.eq.s32.totalorder %s12, 1
    %p43 = por %p41, %p42
    %p44 = scmp.ne.s32.totalorder %s36, %s39
    %p45 = scmp.eq.s32.totalorder %s12, 0
    %p46 = por %p44, %p45
    %p47 = scmp.ne.s32.totalorder %s36, %s39
    %p48 = scmp.eq.s32.totalorder %s17, 1
    %p49 = por %p47, %p48
    %p50 = scmp.ne.s32.totalorder %s39, %s40
    %p51 = scmp.eq.s32.totalorder %s17, 0
    %p52 = por %p50, %p51
    %p53 = scmp.ne.s32.totalorder %s39, %s40
    %p54 = scmp.eq.s32.totalorder %s18, 1
    %p55 = por %p53, %p54
    %p57 = scmp.ne.s32.totalorder %s40, %s56
    %p58 = scmp.eq.s32.totalorder %s18, 0
    %p59 = por %p57, %p58
    %s61 = sadd.s32 %s60, 1
    %p64 = scmp.eq.s32.totalorder %s12, 1
    %p65 = scmp.ne.s32.totalorder %s60, %s62
    %p66 = scmp.eq.s32.totalorder %s12, 0
    %p67 = por %p65, %p66
    %p68 = scmp.ne.s32.totalorder %s60, %s62
    %p69 = scmp.eq.s32.totalorder %s17, 1
    %p70 = por %p68, %p69
    %p71 = scmp.ne.s32.totalorder %s62, %s63
    %p72 = scmp.eq.s32.totalorder %s17, 0
    %p73 = por %p71, %p72
    %p74 = scmp.ne.s32.totalorder %s62, %s63
    %p75 = scmp.eq.s32.totalorder %s18, 1
    %p76 = por %p74, %p75
    %p78 = scmp.ne.s32.totalorder %s63, %s77
    %p79 = scmp.eq.s32.totalorder %s18, 0
    %p80 = por %p78, %p79
    %s82 = sadd.s32 %s81, 1
    %p85 = scmp.eq.s32.totalorder %s12, 1
    %p86 = scmp.ne.s32.totalorder %s81, %s83
    %p87 = scmp.eq.s32.totalorder %s12, 0
    %p88 = por %p86, %p87
    %p89 = scmp.ne.s32.totalorder %s81, %s83
    %p90 = scmp.eq.s32.totalorder %s17, 1
    %p91 = por %p89, %p90
    %p92 = scmp.ne.s32.totalorder %s83, %s84
    %p93 = scmp.eq.s32.totalorder %s17, 0
    %p94 = por %p92, %p93
    %p95 = scmp.ne.s32.totalorder %s83, %s84
    %p96 = scmp.eq.s32.totalorder %s18, 1
    %p97 = por %p95, %p96
    %p99 = scmp.ne.s32.totalorder %s84, %s98
    %p100 = scmp.eq.s32.totalorder %s18, 0
    %p101 = por %p99, %p100
    %s102 = ssub.s32 %s19, %s31
    %s103 = ssub.s32 %s20, %s27
    %s104 = sor.u32 %s102, %s103
    %p105 = scmp.eq.s32.totalorder %s104, 0
    %s107 = sadd.s32 %s106, 1
    %s108 = scalar_select %p105, %s106, %s107
    %p111 = pneg %p105
    %p112 = scmp.eq.s32.totalorder %s12, 1
    %p113 = por %p111, %p112
    %p114 = scmp.ne.s32.totalorder %s106, %s109
    %p115 = scmp.eq.s32.totalorder %s12, 0
    %p116 = por %p114, %p115
    %p117 = scmp.ne.s32.totalorder %s106, %s109
    %p118 = scmp.eq.s32.totalorder %s17, 1
    %p119 = por %p117, %p118
    %p120 = scmp.ne.s32.totalorder %s109, %s110
    %p121 = scmp.eq.s32.totalorder %s17, 0
    %p122 = por %p120, %p121
    %p123 = scmp.ne.s32.totalorder %s109, %s110
    %p124 = scmp.eq.s32.totalorder %s18, 1
    %p125 = por %p123, %p124
    %p127 = scmp.ne.s32.totalorder %s110, %s126
    %p128 = scmp.eq.s32.totalorder %s18, 0
    %p129 = por %p127, %p128
    %s130 = ssub.s32 %s19, %s31
    %s131 = ssub.s32 %s20, %s27
    %s132 = sor.u32 %s130, %s131
    %p133 = scmp.eq.s32.totalorder %s132, 0
    %s135 = sadd.s32 %s134, 1
    %s136 = scalar_select %p133, %s134, %s135
    %p139 = pneg %p133
    %p140 = scmp.eq.s32.totalorder %s12, 1
    %p141 = por %p139, %p140
    %p142 = scmp.ne.s32.totalorder %s134, %s137
    %p143 = scmp.eq.s32.totalorder %s12, 0
    %p144 = por %p142, %p143
    %p145 = scmp.ne.s32.totalorder %s134, %s137
    %p146 = scmp.eq.s32.totalorder %s17, 1
    %p147 = por %p145, %p146
    %p148 = scmp.ne.s32.totalorder %s137, %s138
    %p149 = scmp.eq.s32.totalorder %s17, 0
    %p150 = por %p148, %p149
    %p151 = scmp.ne.s32.totalorder %s137, %s138
    %p152 = scmp.eq.s32.totalorder %s18, 1
    %p153 = por %p151, %p152
    %p155 = scmp.ne.s32.totalorder %s138, %s154
    %p156 = scmp.eq.s32.totalorder %s18, 0
    %p157 = por %p155, %p156
    %s158 = ssub.s32 %s19, %s31
    %s159 = ssub.s32 %s20, %s27
    %s160 = sor.u32 %s158, %s159
    %p161 = scmp.eq.s32.totalorder %s160, 0
    %s163 = sadd.s32 %s162, 1
    %s164 = scalar_select %p161, %s162, %s163
    %p167 = pneg %p161
    %p168 = scmp.eq.s32.totalorder %s12, 1
    %p169 = por %p167, %p168
    %p170 = scmp.ne.s32.totalorder %s162, %s165
    %p171 = scmp.eq.s32.totalorder %s12, 0
    %p172 = por %p170, %p171
    %p173 = scmp.ne.s32.totalorder %s162, %s165
    %p174 = scmp.eq.s32.totalorder %s17, 1
    %p175 = por %p173, %p174
    %p176 = scmp.ne.s32.totalorder %s165, %s166
    %p177 = scmp.eq.s32.totalorder %s17, 0
    %p178 = por %p176, %p177
    %p179 = scmp.ne.s32.totalorder %s165, %s166
    %p180 = scmp.eq.s32.totalorder %s18, 1
    %p181 = por %p179, %p180
    %p183 = scmp.ne.s32.totalorder %s166, %s182
    %p184 = scmp.eq.s32.totalorder %s18, 0
    %p185 = por %p183, %p184
    %p186 = scmp.le.s32.totalorder 1, %s12
    %p187 = scmp.lt.s32.totalorder %s12, 3
    %p188 = pnand %p186, %p187
    %p189 = pneg %p188
    // Predicated region
    $region9: #{flownet_forward.1} parent=5 // pred_check
      _
    $region10: #{flownet_forward.1} parent=5 // pred_check_branch
      %191 = sbr.rel (%p188) target = $region12
    $region11: #{flownet_forward.1} parent=5 // pred_region
      %s192 = ssub.s32 %s12, 1
      // Predicated region
      $region13: #{flownet_forward.1} parent=11 // pred_check
        %p193 = pneg %p73
      $region14: #{flownet_forward.1} parent=11 // pred_check_branch
        %195 = sbr.rel (%p193) target = $region16
      $region15: #{flownet_forward.1} parent=11 // pred_region
        _
      $region16: #{flownet_forward.1} parent=11 // pred_fallthru
        _
      // Predicated region
      $region17: #{flownet_forward.1} parent=11 // pred_check
        %p196 = pneg %p94
      $region18: #{flownet_forward.1} parent=11 // pred_check_branch
        %198 = sbr.rel (%p196) target = $region20
      $region19: #{flownet_forward.1} parent=11 // pred_region
        _
      $region20: #{flownet_forward.1} parent=11 // pred_fallthru
        _
    $region12: #{flownet_forward.1} parent=5 // pred_fallthru
      _
    %p199 = scmp.lt.s32.totalorder %s12, 2
    // Predicated region
    $region21: #{flownet_forward.1} parent=5 // pred_check
      %p200 = pneg %p199
    $region22: #{flownet_forward.1} parent=5 // pred_check_branch
      %202 = sbr.rel (%p200) target = $region24
    $region23: #{flownet_forward.1} parent=5 // pred_region
      // Predicated region
      $region25: #{flownet_forward.1} parent=23 // pred_check
        %p203 = pneg %p46
      $region26: #{flownet_forward.1} parent=23 // pred_check_branch
        %205 = sbr.rel (%p203) target = $region28
      $region27: #{flownet_forward.1} parent=23 // pred_region
        %p206 = scmp.lt.s32.totalorder %s19, 1
        %s207 = scalar_select %p206, %s19, 1
        %p208 = scmp.lt.s32.totalorder %s20, 0
        %s209 = scalar_select %p208, %s20, 0
        %s210 = smul.addr %s207, 8
        %s211 = sadd.s32 %s209, %s210
        %s212 = smul.addr %s211, 8
        %s213 = scalar_lea.vmem %s0, %s212
      $region28: #{flownet_forward.1} parent=23 // pred_fallthru
        _
    $region24: #{flownet_forward.1} parent=5 // pred_fallthru
      _
    %p214 = scmp.le.s32.totalorder 1, %s12
    %p215 = scmp.lt.s32.totalorder %s12, 3
    %p216 = pnand %p214, %p215
    %p217 = pneg %p216
    // Predicated region
    $region29: #{flownet_forward.1} parent=5 // pred_check
      _
    $region30: #{flownet_forward.1} parent=5 // pred_check_branch
      %219 = sbr.rel (%p216) target = $region32
    $region31: #{flownet_forward.1} parent=5 // pred_region
      %s220 = ssub.s32 %s12, 1
      %p221 = scmp.lt.s32.totalorder %s21, 1
      %s222 = scalar_select %p221, %s21, 1
      %p223 = scmp.lt.s32.totalorder %s22, 0
      %s224 = scalar_select %p223, %s22, 0
      %s225 = smul.addr %s222, 8
      %s226 = sadd.s32 %s224, %s225
      %s227 = smul.addr %s226, 8
      %s228 = scalar_lea.vmem %s0, %s227
      %p229 = pneg %p52
      %p230 = pneg %p49
      %p231 = pneg %p73
      %p232 = pneg %p70
      %p233 = pneg %p94
      %p234 = pneg %p91
      %p235 = pneg %p122
      %p236 = pneg %p119
      %p237 = scmp.lt.s32.totalorder %s21, 1
      %s238 = scalar_select %p237, %s21, 1
      %p239 = scmp.lt.s32.totalorder %s22, 0
      %s240 = scalar_select %p239, %s22, 0
      %s241 = smul.addr %s238, 4
      %s242 = sadd.s32 %s240, %s241
      %s243 = smul.addr %s242, 8
      %s244 = scalar_lea.vmem %s3, %s243
      %p245 = pneg %p150
      %p246 = pneg %p147
      %p247 = scmp.lt.s32.totalorder %s21, 1
      %s248 = scalar_select %p247, %s21, 1
      %p249 = scmp.lt.s32.totalorder %s22, 0
      %s250 = scalar_select %p249, %s22, 0
      %s251 = smul.addr %s248, 4
      %s252 = sadd.s32 %s250, %s251
      %s253 = smul.addr %s252, 8
      %s254 = scalar_lea.vmem %s4, %s253
      %p255 = pneg %p178
      %p256 = pneg %p175
      %p257 = scmp.lt.s32.totalorder %s21, 1
      %s258 = scalar_select %p257, %s21, 1
      %p259 = scmp.lt.s32.totalorder %s22, 0
      %s260 = scalar_select %p259, %s22, 0
      %s261 = sadd.s32 %s260, %s258
      %s262 = scalar_lea.vmem %s5, %s261
      %p263 = scmp.lt.s32.totalorder %s21, 1
      %s264 = scalar_select %p263, %s21, 1
      %p265 = scmp.lt.s32.totalorder %s22, 0
      %s266 = scalar_select %p265, %s22, 0
      %s267 = smul.addr %s264, 8
      %s268 = sadd.s32 %s266, %s267
      %s269 = smul.addr %s268, 8
      %s270 = scalar_lea.vmem %s0, %s269
      %p271 = scmp.lt.s32.totalorder %s21, 1
      %s272 = scalar_select %p271, %s21, 1
      %p273 = scmp.lt.s32.totalorder %s22, 0
      %s274 = scalar_select %p273, %s22, 0
      %s275 = smul.addr %s272, 4
      %s276 = sadd.s32 %s274, %s275
      %s277 = smul.addr %s276, 8
      %s278 = scalar_lea.vmem %s3, %s277
      %p279 = scmp.lt.s32.totalorder %s21, 1
      %s280 = scalar_select %p279, %s21, 1
      %p281 = scmp.lt.s32.totalorder %s22, 0
      %s282 = scalar_select %p281, %s22, 0
      %s283 = smul.addr %s280, 4
      %s284 = sadd.s32 %s282, %s283
      %s285 = smul.addr %s284, 8
      %s286 = scalar_lea.vmem %s4, %s285
      %p287 = scmp.lt.s32.totalorder %s21, 1
      %s288 = scalar_select %p287, %s21, 1
      %p289 = scmp.lt.s32.totalorder %s22, 0
      %s290 = scalar_select %p289, %s22, 0
      %s291 = sadd.s32 %s290, %s288
      %s292 = scalar_lea.vmem %s5, %s291
      %v294 = vlaneseq
      %v295 = vand.u32 %v294, 127
      %s296 = smul.u32 %s22, 128
      %v297 = vstv %s296
      %v298 = vadd.s32 %v297, %v295
      %vm299 = vcmp.lt.s32.totalorder %v298, 16
      %v300 = vld [vmem:[%s270] sm:$0xff]
      %v301 = vld [vmem:[%s270 + $0x8] sm:$0xff]
      %v302 = vld [vmem:[%s270 + $0x10] sm:$0xff]
      %v303 = vld [vmem:[%s270 + $0x18] sm:$0xff]
      %v304 = vld [vmem:[%s270 + $0x20] sm:$0xff]
      %v305 = vld [vmem:[%s270 + $0x28] sm:$0xff]
      %v306 = vld [vmem:[%s270 + $0x30] sm:$0xff]
      %v307 = vld [vmem:[%s270 + $0x38] sm:$0xff]
      %v308 = vpack.c.bf16 %v301, %v300
      %v309 = vpack.c.bf16 %v303, %v302
      %v310 = vpack.c.bf16 %v305, %v304
      %v311 = vpack.c.bf16 %v307, %v306
      %v312 = vld [vmem:[%s1] sm:$0xf]
      %v313 = vld [vmem:[%s1 + $0x4] sm:$0xf]
      %v314 = vld [vmem:[%s1 + $0x8] sm:$0xf]
      %v315 = vld [vmem:[%s1 + $0xc] sm:$0xf]
      %v316 = vld [vmem:[%s1 + $0x10] sm:$0xf]
      %v317 = vld [vmem:[%s1 + $0x14] sm:$0xf]
      %v318 = vld [vmem:[%s1 + $0x18] sm:$0xf]
      %v319 = vld [vmem:[%s1 + $0x1c] sm:$0xf]
      %v320 = vld [vmem:[%s2] sm:$0xff]
      %v321 = vld [vmem:[%s2 + $0x8] sm:$0xff]
      %v322 = vld [vmem:[%s2 + $0x10] sm:$0xff]
      %v323 = vld [vmem:[%s2 + $0x18] sm:$0xff]
      %v324 = vld [vmem:[%s2 + $0x20] sm:$0xff]
      %v325 = vld [vmem:[%s2 + $0x28] sm:$0xff]
      %v326 = vld [vmem:[%s2 + $0x30] sm:$0xff]
      %v327 = vld [vmem:[%s2 + $0x38] sm:$0xff]
      %329 = vset.pattern.permute.xlu0 0
      %330 = vperm.xlu0 %329, %v320
      %v331 = vpop.permute.xlu0 %330
      %334 = vset.pattern.permute.xlu0 0
      %335 = vperm.xlu0 %334, %v321
      %v336 = vpop.permute.xlu0 %335
      %339 = vset.pattern.permute.xlu0 0
      %340 = vperm.xlu0 %339, %v322
      %v341 = vpop.permute.xlu0 %340
      %344 = vset.pattern.permute.xlu0 0
      %345 = vperm.xlu0 %344, %v323
      %v346 = vpop.permute.xlu0 %345
      %349 = vset.pattern.permute.xlu0 0
      %350 = vperm.xlu0 %349, %v324
      %v351 = vpop.permute.xlu0 %350
      %354 = vset.pattern.permute.xlu0 0
      %355 = vperm.xlu0 %354, %v325
      %v356 = vpop.permute.xlu0 %355
      %359 = vset.pattern.permute.xlu0 0
      %360 = vperm.xlu0 %359, %v326
      %v361 = vpop.permute.xlu0 %360
      %364 = vset.pattern.permute.xlu0 0
      %365 = vperm.xlu0 %364, %v327
      %v366 = vpop.permute.xlu0 %365
      %v376 = vunpack.c.l.b16 %v312
      %v377 = vunpack.c.l.b16 %v313
      %v378 = vunpack.c.l.b16 %v314
      %v379 = vunpack.c.l.b16 %v315
      %v380 = vunpack.c.l.b16 %v316
      %v381 = vunpack.c.l.b16 %v317
      %v382 = vunpack.c.l.b16 %v318
      %v383 = vunpack.c.l.b16 %v319
      %v384 = vpack.c.b16 %v377, %v376
      %v385 = vpack.c.b16 %v379, %v378
      %v386 = vpack.c.b16 %v381, %v380
      %v387 = vpack.c.b16 %v383, %v382
      %vm388 = vcmask 523264
      %v390 = vsel %vm388, %v384, 0
      %v393 = vsel %vm388, %v385, 0
      %v396 = vsel %vm388, %v386, 0
      %v399 = vsel %vm388, %v387, 0
      %401 = vmatprep.subr.bf16.mxu0 0
      %402 = vmatpush1.bf16.msra.mxu0 %v308
      %403 = vmatprep.subr.bf16.mxu0 0
      %404 = vmatpush1.bf16.msra.mxu0 %v309
      %405 = vmatprep.subr.bf16.mxu0 0
      %406 = vmatpush1.bf16.msra.mxu0 %v310
      %407 = vmatprep.subr.bf16.mxu0 0
      %408 = vmatpush1.bf16.msra.mxu0 %v311
      %409 = vmatprep.subr.bf16.mxu0 0
      %410 = vmatpush1.bf16.msra.mxu0 0
      %411 = vmatprep.subr.bf16.mxu0 0
      %412 = vmatpush1.bf16.msra.mxu0 0
      %413 = vmatprep.subr.bf16.mxu0 0
      %414 = vmatpush1.bf16.msra.mxu0 0
      %415 = vmatprep.subr.bf16.mxu0 0
      %416 = vmatpush1.bf16.msra.mxu0 0
      %417 = vmatprep.subr.bf16.mxu0 0
      %418 = vmatpush1.bf16.msra.mxu0 0
      %419 = vmatprep.subr.bf16.mxu0 0
      %420 = vmatpush1.bf16.msra.mxu0 0
      %421 = vmatprep.subr.bf16.mxu0 0
      %422 = vmatpush1.bf16.msra.mxu0 0
      %423 = vmatprep.subr.bf16.mxu0 0
      %424 = vmatpush1.bf16.msra.mxu0 0
      %425 = vmatprep.subr.bf16.mxu0 0
      %426 = vmatpush1.bf16.msra.mxu0 0
      %427 = vmatprep.subr.bf16.mxu0 0
      %428 = vmatpush1.bf16.msra.mxu0 0
      %429 = vmatprep.subr.bf16.mxu0 0
      %430 = vmatpush1.bf16.msra.mxu0 0
      %431 = vmatprep.subr.bf16.mxu0 0
      %432 = vmatpush1.bf16.msra.mxu0 0
      %433 = vmatprep.mubr.bf16.mxu0 0
      %434 = vmatmul.mubr.bf16.gmra.mrb[0].mxu0 %v390
      %v435 = vpop.f32.mrb[0].mxu0
      %v436 = vadd.f32 %v331, %v435
      %v437 = vpop.f32.mrb[0].mxu0
      %v438 = vpop.f32.mrb[0].mxu0
      %v439 = vadd.f32 %v336, %v438
      %v440 = vpop.f32.mrb[0].mxu0
      %441 = vmatprep.mubr.bf16.mxu0 0
      %442 = vmatmul.mubr.bf16.gmra.mrb[0].mxu0 %v393
      %v443 = vpop.f32.mrb[0].mxu0
      %v444 = vadd.f32 %v341, %v443
      %v445 = vpop.f32.mrb[0].mxu0
      %v446 = vpop.f32.mrb[0].mxu0
      %v447 = vadd.f32 %v346, %v446
      %v448 = vpop.f32.mrb[0].mxu0
      %449 = vmatprep.mubr.bf16.mxu0 0
      %450 = vmatmul.mubr.bf16.gmra.mrb[0].mxu0 %v396
      %v451 = vpop.f32.mrb[0].mxu0
      %v452 = vadd.f32 %v351, %v451
      %v453 = vpop.f32.mrb[0].mxu0
      %v454 = vpop.f32.mrb[0].mxu0
      %v455 = vadd.f32 %v356, %v454
      %v456 = vpop.f32.mrb[0].mxu0
      %457 = vmatprep.mubr.bf16.mxu0 0
      %458 = vmatmul.mubr.bf16.gmra.mrb[0].mxu0 %v399
      %v459 = vpop.f32.mrb[0].mxu0
      %v460 = vadd.f32 %v361, %v459
      %v461 = vpop.f32.mrb[0].mxu0
      %v462 = vpop.f32.mrb[0].mxu0
      %v463 = vadd.f32 %v366, %v462
      %v464 = vpop.f32.mrb[0].mxu0
      %465 = vdwg.mxu0
      %v466 = vpack.c.bf16 %v439, %v436
      %v467 = vpack.c.bf16 %v447, %v444
      %v468 = vld [vmem:[%s1 + $0x20] sm:$0xf]
      %v469 = vld [vmem:[%s1 + $0x24] sm:$0xf]
      %v470 = vld [vmem:[%s1 + $0x28] sm:$0xf]
      %v471 = vld [vmem:[%s1 + $0x2c] sm:$0xf]
      %v472 = vld [vmem:[%s1 + $0x30] sm:$0xf]
      %v473 = vld [vmem:[%s1 + $0x34] sm:$0xf]
      %v474 = vld [vmem:[%s1 + $0x38] sm:$0xf]
      %v475 = vld [vmem:[%s1 + $0x3c] sm:$0xf]
      %v476 = vld [vmem:[%s2 + $0x40] sm:$0xff]
      %v477 = vld [vmem:[%s2 + $0x48] sm:$0xff]
      %v478 = vld [vmem:[%s2 + $0x50] sm:$0xff]
      %v479 = vld [vmem:[%s2 + $0x58] sm:$0xff]
      %v480 = vld [vmem:[%s2 + $0x60] sm:$0xff]
      %v481 = vld [vmem:[%s2 + $0x68] sm:$0xff]
      %v482 = vld [vmem:[%s2 + $0x70] sm:$0xff]
      %v483 = vld [vmem:[%s2 + $0x78] sm:$0xff]
      %485 = vset.pattern.permute.xlu0 0
      %486 = vperm.xlu0 %485, %v476
      %v487 = vpop.permute.xlu0 %486
      %490 = vset.pattern.permute.xlu0 0
      %491 = vperm.xlu0 %490, %v477
      %v492 = vpop.permute.xlu0 %491
      %495 = vset.pattern.permute.xlu0 0
      %496 = vperm.xlu0 %495, %v478
      %v497 = vpop.permute.xlu0 %496
      %500 = vset.pattern.permute.xlu0 0
      %501 = vperm.xlu0 %500, %v479
      %v502 = vpop.permute.xlu0 %501
      %505 = vset.pattern.permute.xlu0 0
      %506 = vperm.xlu0 %505, %v480
      %v507 = vpop.permute.xlu0 %506
      %510 = vset.pattern.permute.xlu0 0
      %511 = vperm.xlu0 %510, %v481
      %v512 = vpop.permute.xlu0 %511
      %515 = vset.pattern.permute.xlu0 0
      %516 = vperm.xlu0 %515, %v482
      %v517 = vpop.permute.xlu0 %516
      %520 = vset.pattern.permute.xlu0 0
      %521 = vperm.xlu0 %520, %v483
      %v522 = vpop.permute.xlu0 %521
      %v532 = vunpack.c.l.b16 %v468
      %v533 = vunpack.c.l.b16 %v469
      %v534 = vunpack.c.l.b16 %v470
      %v535 = vunpack.c.l.b16 %v471
      %v536 = vunpack.c.l.b16 %v472
      %v537 = vunpack.c.l.b16 %v473
      %v538 = vunpack.c.l.b16 %v474
      %v539 = vunpack.c.l.b16 %v475
      %v540 = vpack.c.b16 %v533, %v532
      %v541 = vpack.c.b16 %v535, %v534
      %v542 = vpack.c.b16 %v537, %v536
      %v543 = vpack.c.b16 %v539, %v538
      %vm544 = vcmask 261120
      %v546 = vsel %vm544, %v540, 0
      %v549 = vsel %vm544, %v541, 0
      %v552 = vsel %vm544, %v542, 0
      %v555 = vsel %vm544, %v543, 0
      %557 = vmatprep.subr.bf16.mxu0 0
      %558 = vmatpush1.bf16.msra.mxu0 %v466
      %559 = vmatprep.subr.bf16.mxu0 0
      %560 = vmatpush1.bf16.msra.mxu0 %v467
      %561 = vmatprep.subr.bf16.mxu0 0
      %562 = vmatpush1.bf16.msra.mxu0 0
      %563 = vmatprep.subr.bf16.mxu0 0
      %564 = vmatpush1.bf16.msra.mxu0 0
      %565 = vmatprep.subr.bf16.mxu0 0
      %566 = vmatpush1.bf16.msra.mxu0 0
      %567 = vmatprep.subr.bf16.mxu0 0
      %568 = vmatpush1.bf16.msra.mxu0 0
      %569 = vmatprep.subr.bf16.mxu0 0
      %570 = vmatpush1.bf16.msra.mxu0 0
      %571 = vmatprep.subr.bf16.mxu0 0
      %572 = vmatpush1.bf16.msra.mxu0 0
      %573 = vmatprep.subr.bf16.mxu0 0
      %574 = vmatpush1.bf16.msra.mxu0 0
      %575 = vmatprep.subr.bf16.mxu0 0
      %576 = vmatpush1.bf16.msra.mxu0 0
      %577 = vmatprep.subr.bf16.mxu0 0
      %578 = vmatpush1.bf16.msra.mxu0 0
      %579 = vmatprep.subr.bf16.mxu0 0
      %580 = vmatpush1.bf16.msra.mxu0 0
      %581 = vmatprep.subr.bf16.mxu0 0
      %582 = vmatpush1.bf16.msra.mxu0 0
      %583 = vmatprep.subr.bf16.mxu0 0
      %584 = vmatpush1.bf16.msra.mxu0 0
      %585 = vmatprep.subr.bf16.mxu0 0
      %586 = vmatpush1.bf16.msra.mxu0 0
      %587 = vmatprep.subr.bf16.mxu0 0
      %588 = vmatpush1.bf16.msra.mxu0 0
      %589 = vmatprep.mubr.bf16.mxu0 0
      %590 = vmatmul.mubr.bf16.gmra.mrb[0].mxu0 %v546
      %v591 = vpop.f32.mrb[0].mxu0
      %v592 = vadd.f32 %v487, %v591
      %v593 = vpop.f32.mrb[0].mxu0
      %v594 = vpop.f32.mrb[0].mxu0
      %v595 = vadd.f32 %v492, %v594
      %v596 = vpop.f32.mrb[0].mxu0
      %597 = vmatprep.mubr.bf16.mxu0 0
      %598 = vmatmul.mubr.bf16.gmra.mrb[0].mxu0 %v549
      %v599 = vpop.f32.mrb[0].mxu0
      %v600 = vadd.f32 %v497, %v599
      %v601 = vpop.f32.mrb[0].mxu0
      %v602 = vpop.f32.mrb[0].mxu0
      %v603 = vadd.f32 %v502, %v602
      %v604 = vpop.f32.mrb[0].mxu0
      %605 = vmatprep.mubr.bf16.mxu0 0
      %606 = vmatmul.mubr.bf16.gmra.mrb[0].mxu0 %v552
      %v607 = vpop.f32.mrb[0].mxu0
      %v608 = vadd.f32 %v507, %v607
      %v609 = vpop.f32.mrb[0].mxu0
      %v610 = vpop.f32.mrb[0].mxu0
      %v611 = vadd.f32 %v512, %v610
      %v612 = vpop.f32.mrb[0].mxu0
      %613 = vmatprep.mubr.bf16.mxu0 0
      %614 = vmatmul.mubr.bf16.gmra.mrb[0].mxu0 %v555
      %v615 = vpop.f32.mrb[0].mxu0
      %v616 = vadd.f32 %v517, %v615
      %v617 = vpop.f32.mrb[0].mxu0
      %v618 = vpop.f32.mrb[0].mxu0
      %v619 = vadd.f32 %v522, %v618
      %v620 = vpop.f32.mrb[0].mxu0
      %621 = vdwg.mxu0
      %v622 = vmax.f32 %v592, 0.0
      %v623 = vmax.f32 %v595, 0.0
      %v624 = vmax.f32 %v600, 0.0
      %v625 = vmax.f32 %v603, 0.0
      %v626 = vmax.f32 %v608, 0.0
      %v627 = vmax.f32 %v611, 0.0
      %v628 = vmax.f32 %v616, 0.0
      %v629 = vmax.f32 %v619, 0.0
      %v630 = vpack.c.bf16 %v623, %v622
      %v631 = vpack.c.bf16 %v625, %v624
      %v632 = vpack.c.bf16 %v627, %v626
      %v633 = vpack.c.bf16 %v629, %v628
      %v634 = vld [vmem:[%s1 + $0x40] sm:$0xf]
      %v635 = vld [vmem:[%s1 + $0x44] sm:$0xf]
      %v636 = vld [vmem:[%s1 + $0x48] sm:$0xf]
      %v637 = vld [vmem:[%s1 + $0x4c] sm:$0xf]
      %v638 = vld [vmem:[%s1 + $0x50] sm:$0xf]
      %v639 = vld [vmem:[%s1 + $0x54] sm:$0xf]
      %v640 = vld [vmem:[%s1 + $0x58] sm:$0xf]
      %v641 = vld [vmem:[%s1 + $0x5c] sm:$0xf]
      %v642 = vld [vmem:[%s2 + $0x80] sm:$0xff]
      %v643 = vld [vmem:[%s2 + $0x88] sm:$0xff]
      %v644 = vld [vmem:[%s2 + $0x90] sm:$0xff]
      %v645 = vld [vmem:[%s2 + $0x98] sm:$0xff]
      %v646 = vld [vmem:[%s2 + $0xa0] sm:$0xff]
      %v647 = vld [vmem:[%s2 + $0xa8] sm:$0xff]
      %v648 = vld [vmem:[%s2 + $0xb0] sm:$0xff]
      %v649 = vld [vmem:[%s2 + $0xb8] sm:$0xff]
      %651 = vset.pattern.permute.xlu0 0
      %652 = vperm.xlu0 %651, %v642
      %v653 = vpop.permute.xlu0 %652
      %656 = vset.pattern.permute.xlu0 0
      %657 = vperm.xlu0 %656, %v643
      %v658 = vpop.permute.xlu0 %657
      %661 = vset.pattern.permute.xlu0 0
      %662 = vperm.xlu0 %661, %v644
      %v663 = vpop.permute.xlu0 %662
      %666 = vset.pattern.permute.xlu0 0
      %667 = vperm.xlu0 %666, %v645
      %v668 = vpop.permute.xlu0 %667
      %671 = vset.pattern.permute.xlu0 0
      %672 = vperm.xlu0 %671, %v646
      %v673 = vpop.permute.xlu0 %672
      %676 = vset.pattern.permute.xlu0 0
      %677 = vperm.xlu0 %676, %v647
      %v678 = vpop.permute.xlu0 %677
      %681 = vset.pattern.permute.xlu0 0
      %682 = vperm.xlu0 %681, %v648
      %v683 = vpop.permute.xlu0 %682
      %686 = vset.pattern.permute.xlu0 0
      %687 = vperm.xlu0 %686, %v649
      %v688 = vpop.permute.xlu0 %687
      %v698 = vunpack.c.l.b16 %v634
      %v699 = vunpack.c.l.b16 %v635
      %v700 = vunpack.c.l.b16 %v636
      %v701 = vunpack.c.l.b16 %v637
      %v702 = vunpack.c.l.b16 %v638
      %v703 = vunpack.c.l.b16 %v639
      %v704 = vunpack.c.l.b16 %v640
      %v705 = vunpack.c.l.b16 %v641
      %v706 = vpack.c.b16 %v699, %v698
      %v707 = vpack.c.b16 %v701, %v700
      %v708 = vpack.c.b16 %v703, %v702
      %v709 = vpack.c.b16 %v705, %v704
      %v711 = vsel %vm388, %v706, 0
      %v714 = vsel %vm388, %v707, 0
      %v717 = vsel %vm388, %v708, 0
      %v720 = vsel %vm388, %v709, 0
      %722 = vmatprep.subr.bf16.mxu0 0
      %723 = vmatpush1.bf16.msra.mxu0 %v630
      %724 = vmatprep.subr.bf16.mxu0 0
      %725 = vmatpush1.bf16.msra.mxu0 %v631
      %726 = vmatprep.subr.bf16.mxu0 0
      %727 = vmatpush1.bf16.msra.mxu0 %v632
      %728 = vmatprep.subr.bf16.mxu0 0
      %729 = vmatpush1.bf16.msra.mxu0 %v633
      %730 = vmatprep.subr.bf16.mxu0 0
      %731 = vmatpush1.bf16.msra.mxu0 0
      %732 = vmatprep.subr.bf16.mxu0 0
      %733 = vmatpush1.bf16.msra.mxu0 0
      %734 = vmatprep.subr.bf16.mxu0 0
      %735 = vmatpush1.bf16.msra.mxu0 0
      %736 = vmatprep.subr.bf16.mxu0 0
      %737 = vmatpush1.bf16.msra.mxu0 0
      %738 = vmatprep.subr.bf16.mxu0 0
      %739 = vmatpush1.bf16.msra.mxu0 0
      %740 = vmatprep.subr.bf16.mxu0 0
      %741 = vmatpush1.bf16.msra.mxu0 0
      %742 = vmatprep.subr.bf16.mxu0 0
      %743 = vmatpush1.bf16.msra.mxu0 0
      %744 = vmatprep.subr.bf16.mxu0 0
      %745 = vmatpush1.bf16.msra.mxu0 0
      %746 = vmatprep.subr.bf16.mxu0 0
      %747 = vmatpush1.bf16.msra.mxu0 0
      %748 = vmatprep.subr.bf16.mxu0 0
      %749 = vmatpush1.bf16.msra.mxu0 0
      %750 = vmatprep.subr.bf16.mxu0 0
      %751 = vmatpush1.bf16.msra.mxu0 0
      %752 = vmatprep.subr.bf16.mxu0 0
      %753 = vmatpush1.bf16.msra.mxu0 0
      %754 = vmatprep.mubr.bf16.mxu0 0
      %755 = vmatmul.mubr.bf16.gmra.mrb[0].mxu0 %v711
      %v756 = vpop.f32.mrb[0].mxu0
      %v757 = vadd.f32 %v653, %v756
      %v758 = vpop.f32.mrb[0].mxu0
      %v759 = vpop.f32.mrb[0].mxu0
      %v760 = vadd.f32 %v658, %v759
      %v761 = vpop.f32.mrb[0].mxu0
      %762 = vmatprep.mubr.bf16.mxu0 0
      %763 = vmatmul.mubr.bf16.gmra.mrb[0].mxu0 %v714
      %v764 = vpop.f32.mrb[0].mxu0
      %v765 = vadd.f32 %v663, %v764
      %v766 = vpop.f32.mrb[0].mxu0
      %v767 = vpop.f32.mrb[0].mxu0
      %v768 = vadd.f32 %v668, %v767
      %v769 = vpop.f32.mrb[0].mxu0
      %770 = vmatprep.mubr.bf16.mxu0 0
      %771 = vmatmul.mubr.bf16.gmra.mrb[0].mxu0 %v717
      %v772 = vpop.f32.mrb[0].mxu0
      %v773 = vadd.f32 %v673, %v772
      %v774 = vpop.f32.mrb[0].mxu0
      %v775 = vpop.f32.mrb[0].mxu0
      %v776 = vadd.f32 %v678, %v775
      %v777 = vpop.f32.mrb[0].mxu0
      %778 = vmatprep.mubr.bf16.mxu0 0
      %779 = vmatmul.mubr.bf16.gmra.mrb[0].mxu0 %v720
      %v780 = vpop.f32.mrb[0].mxu0
      %v781 = vadd.f32 %v683, %v780
      %v782 = vpop.f32.mrb[0].mxu0
      %v783 = vpop.f32.mrb[0].mxu0
      %v784 = vadd.f32 %v688, %v783
      %v785 = vpop.f32.mrb[0].mxu0
      %786 = vdwg.mxu0
      %v787 = vmax.f32 %v757, 0.0
      %v788 = vmax.f32 %v760, 0.0
      %v789 = vmax.f32 %v765, 0.0
      %v790 = vmax.f32 %v768, 0.0
      %v791 = vmax.f32 %v773, 0.0
      %v792 = vmax.f32 %v776, 0.0
      %v793 = vmax.f32 %v781, 0.0
      %v794 = vmax.f32 %v784, 0.0
      %v795 = vpack.c.bf16 %v788, %v787
      %v796 = vpack.c.bf16 %v790, %v789
      %v797 = vpack.c.bf16 %v792, %v791
      %v798 = vpack.c.bf16 %v794, %v793
      %v799 = vld [vmem:[%s1 + $0x60] sm:$0xf]
      %v800 = vld [vmem:[%s1 + $0x64] sm:$0xf]
      %v801 = vld [vmem:[%s1 + $0x68] sm:$0xf]
      %v802 = vld [vmem:[%s1 + $0x6c] sm:$0xf]
      %v803 = vld [vmem:[%s1 + $0x70] sm:$0xf]
      %v804 = vld [vmem:[%s1 + $0x74] sm:$0xf]
      %v805 = vld [vmem:[%s1 + $0x78] sm:$0xf]
      %v806 = vld [vmem:[%s1 + $0x7c] sm:$0xf]
      %v807 = vld [vmem:[%s2 + $0xc0] sm:$0xff]
      %v808 = vld [vmem:[%s2 + $0xc8] sm:$0xff]
      %v809 = vld [vmem:[%s2 + $0xd0] sm:$0xff]
      %v810 = vld [vmem:[%s2 + $0xd8] sm:$0xff]
      %v811 = vld [vmem:[%s2 + $0xe0] sm:$0xff]
      %v812 = vld [vmem:[%s2 + $0xe8] sm:$0xff]
      %v813 = vld [vmem:[%s2 + $0xf0] sm:$0xff]
      %v814 = vld [vmem:[%s2 + $0xf8] sm:$0xff]
      %816 = vset.pattern.permute.xlu0 0
      %817 = vperm.xlu0 %816, %v807
      %v818 = vpop.permute.xlu0 %817
      %821 = vset.pattern.permute.xlu0 0
      %822 = vperm.xlu0 %821, %v808
      %v823 = vpop.permute.xlu0 %822
      %826 = vset.pattern.permute.xlu0 0
      %827 = vperm.xlu0 %826, %v809
      %v828 = vpop.permute.xlu0 %827
      %831 = vset.pattern.permute.xlu0 0
      %832 = vperm.xlu0 %831, %v810
      %v833 = vpop.permute.xlu0 %832
      %836 = vset.pattern.permute.xlu0 0
      %837 = vperm.xlu0 %836, %v811
      %v838 = vpop.permute.xlu0 %837
      %841 = vset.pattern.permute.xlu0 0
      %842 = vperm.xlu0 %841, %v812
      %v843 = vpop.permute.xlu0 %842
      %846 = vset.pattern.permute.xlu0 0
      %847 = vperm.xlu0 %846, %v813
      %v848 = vpop.permute.xlu0 %847
      %851 = vset.pattern.permute.xlu0 0
      %852 = vperm.xlu0 %851, %v814
      %v853 = vpop.permute.xlu0 %852
      %v863 = vunpack.c.l.b16 %v799
      %v864 = vunpack.c.l.b16 %v800
      %v865 = vunpack.c.l.b16 %v801
      %v866 = vunpack.c.l.b16 %v802
      %v867 = vunpack.c.l.b16 %v803
      %v868 = vunpack.c.l.b16 %v804
      %v869 = vunpack.c.l.b16 %v805
      %v870 = vunpack.c.l.b16 %v806
      %v871 = vpack.c.b16 %v864, %v863
      %v872 = vpack.c.b16 %v866, %v865
      %v873 = vpack.c.b16 %v868, %v867
      %v874 = vpack.c.b16 %v870, %v869
      %v876 = vsel %vm388, %v871, 0
      %v879 = vsel %vm388, %v872, 0
      %v882 = vsel %vm388, %v873, 0
      %v885 = vsel %vm388, %v874, 0
      %887 = vmatprep.subr.bf16.mxu0 0
      %888 = vmatpush1.bf16.msra.mxu0 %v795
      %889 = vmatprep.subr.bf16.mxu0 0
      %890 = vmatpush1.bf16.msra.mxu0 %v796
      %891 = vmatprep.subr.bf16.mxu0 0
      %892 = vmatpush1.bf16.msra.mxu0 %v797
      %893 = vmatprep.subr.bf16.mxu0 0
      %894 = vmatpush1.bf16.msra.mxu0 %v798
      %895 = vmatprep.subr.bf16.mxu0 0
      %896 = vmatpush1.bf16.msra.mxu0 0
      %897 = vmatprep.subr.bf16.mxu0 0
      %898 = vmatpush1.bf16.msra.mxu0 0
      %899 = vmatprep.subr.bf16.mxu0 0
      %900 = vmatpush1.bf16.msra.mxu0 0
      %901 = vmatprep.subr.bf16.mxu0 0
      %902 = vmatpush1.bf16.msra.mxu0 0
      %903 = vmatprep.subr.bf16.mxu0 0
      %904 = vmatpush1.bf16.msra.mxu0 0
      %905 = vmatprep.subr.bf16.mxu0 0
      %906 = vmatpush1.bf16.msra.mxu0 0
      %907 = vmatprep.subr.bf16.mxu0 0
      %908 = vmatpush1.bf16.msra.mxu0 0
      %909 = vmatprep.subr.bf16.mxu0 0
      %910 = vmatpush1.bf16.msra.mxu0 0
      %911 = vmatprep.subr.bf16.mxu0 0
      %912 = vmatpush1.bf16.msra.mxu0 0
      %913 = vmatprep.subr.bf16.mxu0 0
      %914 = vmatpush1.bf16.msra.mxu0 0
      %915 = vmatprep.subr.bf16.mxu0 0
      %916 = vmatpush1.bf16.msra.mxu0 0
      %917 = vmatprep.subr.bf16.mxu0 0
      %918 = vmatpush1.bf16.msra.mxu0 0
      %919 = vmatprep.mubr.bf16.mxu0 0
      %920 = vmatmul.mubr.bf16.gmra.mrb[0].mxu0 %v876
      %v921 = vpop.f32.mrb[0].mxu0
      %v922 = vadd.f32 %v818, %v921
      %v923 = vpop.f32.mrb[0].mxu0
      %v924 = vpop.f32.mrb[0].mxu0
      %v925 = vadd.f32 %v823, %v924
      %v926 = vpop.f32.mrb[0].mxu0
      %927 = vmatprep.mubr.bf16.mxu0 0
      %928 = vmatmul.mubr.bf16.gmra.mrb[0].mxu0 %v879
      %v929 = vpop.f32.mrb[0].mxu0
      %v930 = vadd.f32 %v828, %v929
      %v931 = vpop.f32.mrb[0].mxu0
      %v932 = vpop.f32.mrb[0].mxu0
      %v933 = vadd.f32 %v833, %v932
      %v934 = vpop.f32.mrb[0].mxu0
      %935 = vmatprep.mubr.bf16.mxu0 0
      %936 = vmatmul.mubr.bf16.gmra.mrb[0].mxu0 %v882
      %v937 = vpop.f32.mrb[0].mxu0
      %v938 = vadd.f32 %v838, %v937
      %v939 = vpop.f32.mrb[0].mxu0
      %v940 = vpop.f32.mrb[0].mxu0
      %v941 = vadd.f32 %v843, %v940
      %v942 = vpop.f32.mrb[0].mxu0
      %943 = vmatprep.mubr.bf16.mxu0 0
      %944 = vmatmul.mubr.bf16.gmra.mrb[0].mxu0 %v885
      %v945 = vpop.f32.mrb[0].mxu0
      %v946 = vadd.f32 %v848, %v945
      %v947 = vpop.f32.mrb[0].mxu0
      %v948 = vpop.f32.mrb[0].mxu0
      %v949 = vadd.f32 %v853, %v948
      %v950 = vpop.f32.mrb[0].mxu0
      %951 = vdwg.mxu0
      %v952 = vmin.f32 %v938, 0.0
      %v953 = vmin.f32 %v941, 0.0
      %v954 = vmin.f32 %v946, 0.0
      %v955 = vmin.f32 %v949, 0.0
      %v956 = vand.u32 2147483647, %v938
      %v957 = vand.u32 2147483647, %v941
      %v958 = vand.u32 2147483647, %v946
      %v959 = vand.u32 2147483647, %v949
      %v960 = vsub.f32 0.0, %v956
      %v961 = vsub.f32 0.0, %v957
      %v962 = vsub.f32 0.0, %v958
      %v963 = vsub.f32 0.0, %v959
      %v964 = vmul.f32 %v960, 1.442695
      %v965 = vpow.pop %v964
      %v966 = vmul.f32 %v961, 1.442695
      %v967 = vpow.pop %v966
      %v968 = vmul.f32 %v962, 1.442695
      %v969 = vpow.pop %v968
      %v970 = vmul.f32 %v963, 1.442695
      %v971 = vpow.pop %v970
      %v972 = vadd.f32 %v965, 1.0
      %v973 = vlog2.pop %v972
      %v974 = vmul.f32 %v973, 0.6931472
      %v975 = vmul.f32 -0.5, %v965
      %v976 = vadd.f32 %v975, 1.0
      %v977 = vmul.f32 %v976, %v965
      %v978 = vand.u32 2147483647, %v965
      %vm979 = vcmp.lt.f32.partialorder %v978, 0.0004427343
      %v980 = vsel %vm979, %v977, %v974
      %v981 = vadd.f32 %v967, 1.0
      %v982 = vlog2.pop %v981
      %v983 = vmul.f32 %v982, 0.6931472
      %v984 = vmul.f32 -0.5, %v967
      %v985 = vadd.f32 %v984, 1.0
      %v986 = vmul.f32 %v985, %v967
      %v987 = vand.u32 2147483647, %v967
      %vm988 = vcmp.lt.f32.partialorder %v987, 0.0004427343
      %v989 = vsel %vm988, %v986, %v983
      %v990 = vadd.f32 %v969, 1.0
      %v991 = vlog2.pop %v990
      %v992 = vmul.f32 %v991, 0.6931472
      %v993 = vmul.f32 -0.5, %v969
      %v994 = vadd.f32 %v993, 1.0
      %v995 = vmul.f32 %v994, %v969
      %v996 = vand.u32 2147483647, %v969
      %vm997 = vcmp.lt.f32.partialorder %v996, 0.0004427343
      %v998 = vsel %vm997, %v995, %v992
      %v999 = vadd.f32 %v971, 1.0
      %v1000 = vlog2.pop %v999
      %v1001 = vmul.f32 %v1000, 0.6931472
      %v1002 = vmul.f32 -0.5, %v971
      %v1003 = vadd.f32 %v1002, 1.0
      %v1004 = vmul.f32 %v1003, %v971
      %v1005 = vand.u32 2147483647, %v971
      %vm1006 = vcmp.lt.f32.partialorder %v1005, 0.0004427343
      %v1007 = vsel %vm1006, %v1004, %v1001
      %v1008 = vsub.f32 %v952, %v980
      %v1009 = vsub.f32 %v953, %v989
      %v1010 = vsub.f32 %v954, %v998
      %v1011 = vsub.f32 %v955, %v1007
      %v1012 = vadd.f32 %v452, %v922
      %v1013 = vadd.f32 %v455, %v925
      %v1014 = vadd.f32 %v460, %v930
      %v1015 = vadd.f32 %v463, %v933
      %v1016 = vmul.f32 %v1008, 1.442695
      %v1017 = vpow.pop %v1016
      %v1018 = vmul.f32 %v1009, 1.442695
      %v1019 = vpow.pop %v1018
      %v1020 = vmul.f32 %v1010, 1.442695
      %v1021 = vpow.pop %v1020
      %v1022 = vmul.f32 %v1011, 1.442695
      %v1023 = vpow.pop %v1022
      %v1024 = vmul.f32 %v1012, %v1017
      %v1025 = vmul.f32 %v1013, %v1019
      %v1026 = vmul.f32 %v1014, %v1021
      %v1027 = vmul.f32 %v1015, %v1023
      %v1028 = vadd.f32 %v1008, 0.0
      %v1029 = vadd.f32 %v1009, 0.0
      %v1030 = vadd.f32 %v1010, 0.0
      %v1031 = vadd.f32 %v1011, 0.0
      %v1032 = vpack.c.bf16 %v1025, %v1024
      %v1033 = vpack.c.bf16 %v1027, %v1026
      %v1034 = vld [vmem:[%s1 + $0x80] sm:$0xf]
      %v1035 = vld [vmem:[%s1 + $0x84] sm:$0xf]
      %v1036 = vld [vmem:[%s1 + $0x88] sm:$0xf]
      %v1037 = vld [vmem:[%s1 + $0x8c] sm:$0xf]
      %v1038 = vld [vmem:[%s1 + $0x90] sm:$0xf]
      %v1039 = vld [vmem:[%s1 + $0x94] sm:$0xf]
      %v1040 = vld [vmem:[%s1 + $0x98] sm:$0xf]
      %v1041 = vld [vmem:[%s1 + $0x9c] sm:$0xf]
      %v1042 = vld [vmem:[%s2 + $0x100] sm:$0xff]
      %v1043 = vld [vmem:[%s2 + $0x108] sm:$0xff]
      %v1044 = vld [vmem:[%s2 + $0x110] sm:$0xff]
      %v1045 = vld [vmem:[%s2 + $0x118] sm:$0xff]
      %v1046 = vld [vmem:[%s2 + $0x120] sm:$0xff]
      %v1047 = vld [vmem:[%s2 + $0x128] sm:$0xff]
      %v1048 = vld [vmem:[%s2 + $0x130] sm:$0xff]
      %v1049 = vld [vmem:[%s2 + $0x138] sm:$0xff]
      %1051 = vset.pattern.permute.xlu0 0
      %1052 = vperm.xlu0 %1051, %v1042
      %v1053 = vpop.permute.xlu0 %1052
      %1056 = vset.pattern.permute.xlu0 0
      %1057 = vperm.xlu0 %1056, %v1043
      %v1058 = vpop.permute.xlu0 %1057
      %1061 = vset.pattern.permute.xlu0 0
      %1062 = vperm.xlu0 %1061, %v1044
      %v1063 = vpop.permute.xlu0 %1062
      %1066 = vset.pattern.permute.xlu0 0
      %1067 = vperm.xlu0 %1066, %v1045
      %v1068 = vpop.permute.xlu0 %1067
      %1071 = vset.pattern.permute.xlu0 0
      %1072 = vperm.xlu0 %1071, %v1046
      %v1073 = vpop.permute.xlu0 %1072
      %1076 = vset.pattern.permute.xlu0 0
      %1077 = vperm.xlu0 %1076, %v1047
      %v1078 = vpop.permute.xlu0 %1077
      %1081 = vset.pattern.permute.xlu0 0
      %1082 = vperm.xlu0 %1081, %v1048
      %v1083 = vpop.permute.xlu0 %1082
      %1086 = vset.pattern.permute.xlu0 0
      %1087 = vperm.xlu0 %1086, %v1049
      %v1088 = vpop.permute.xlu0 %1087
      %v1098 = vunpack.c.l.b16 %v1034
      %v1099 = vunpack.c.l.b16 %v1035
      %v1100 = vunpack.c.l.b16 %v1036
      %v1101 = vunpack.c.l.b16 %v1037
      %v1102 = vunpack.c.l.b16 %v1038
      %v1103 = vunpack.c.l.b16 %v1039
      %v1104 = vunpack.c.l.b16 %v1040
      %v1105 = vunpack.c.l.b16 %v1041
      %v1106 = vpack.c.b16 %v1099, %v1098
      %v1107 = vpack.c.b16 %v1101, %v1100
      %v1108 = vpack.c.b16 %v1103, %v1102
      %v1109 = vpack.c.b16 %v1105, %v1104
      %v1111 = vsel %vm388, %v1106, 0
      %v1114 = vsel %vm388, %v1107, 0
      %v1117 = vsel %vm388, %v1108, 0
      %v1120 = vsel %vm388, %v1109, 0
      %1122 = vmatprep.subr.bf16.mxu0 0
      %1123 = vmatpush1.bf16.msra.mxu0 %v466
      %1124 = vmatprep.subr.bf16.mxu0 0
      %1125 = vmatpush1.bf16.msra.mxu0 %v467
      %1126 = vmatprep.subr.bf16.mxu0 0
      %1127 = vmatpush1.bf16.msra.mxu0 %v1032
      %1128 = vmatprep.subr.bf16.mxu0 0
      %1129 = vmatpush1.bf16.msra.mxu0 %v1033
      %1130 = vmatprep.subr.bf16.mxu0 0
      %1131 = vmatpush1.bf16.msra.mxu0 0
      %1132 = vmatprep.subr.bf16.mxu0 0
      %1133 = vmatpush1.bf16.msra.mxu0 0
      %1134 = vmatprep.subr.bf16.mxu0 0
      %1135 = vmatpush1.bf16.msra.mxu0 0
      %1136 = vmatprep.subr.bf16.mxu0 0
      %1137 = vmatpush1.bf16.msra.mxu0 0
      %1138 = vmatprep.subr.bf16.mxu0 0
      %1139 = vmatpush1.bf16.msra.mxu0 0
      %1140 = vmatprep.subr.bf16.mxu0 0
      %1141 = vmatpush1.bf16.msra.mxu0 0
      %1142 = vmatprep.subr.bf16.mxu0 0
      %1143 = vmatpush1.bf16.msra.mxu0 0
      %1144 = vmatprep.subr.bf16.mxu0 0
      %1145 = vmatpush1.bf16.msra.mxu0 0
      %1146 = vmatprep.subr.bf16.mxu0 0
      %1147 = vmatpush1.bf16.msra.mxu0 0
      %1148 = vmatprep.subr.bf16.mxu0 0
      %1149 = vmatpush1.bf16.msra.mxu0 0
      %1150 = vmatprep.subr.bf16.mxu0 0
      %1151 = vmatpush1.bf16.msra.mxu0 0
      %1152 = vmatprep.subr.bf16.mxu0 0
      %1153 = vmatpush1.bf16.msra.mxu0 0
      %1154 = vmatprep.mubr.bf16.mxu0 0
      %1155 = vmatmul.mubr.bf16.gmra.mrb[0].mxu0 %v1111
      %v1156 = vpop.f32.mrb[0].mxu0
      %v1157 = vadd.f32 %v1053, %v1156
      %v1158 = vpop.f32.mrb[0].mxu0
      %v1159 = vpop.f32.mrb[0].mxu0
      %v1160 = vadd.f32 %v1058, %v1159
      %v1161 = vpop.f32.mrb[0].mxu0
      %1162 = vmatprep.mubr.bf16.mxu0 0
      %1163 = vmatmul.mubr.bf16.gmra.mrb[0].mxu0 %v1114
      %v1164 = vpop.f32.mrb[0].mxu0
      %v1165 = vadd.f32 %v1063, %v1164
      %v1166 = vpop.f32.mrb[0].mxu0
      %v1167 = vpop.f32.mrb[0].mxu0
      %v1168 = vadd.f32 %v1068, %v1167
      %v1169 = vpop.f32.mrb[0].mxu0
      %1170 = vmatprep.mubr.bf16.mxu0 0
      %1171 = vmatmul.mubr.bf16.gmra.mrb[0].mxu0 %v1117
      %v1172 = vpop.f32.mrb[0].mxu0
      %v1173 = vadd.f32 %v1073, %v1172
      %v1174 = vpop.f32.mrb[0].mxu0
      %v1175 = vpop.f32.mrb[0].mxu0
      %v1176 = vadd.f32 %v1078, %v1175
      %v1177 = vpop.f32.mrb[0].mxu0
      %1178 = vmatprep.mubr.bf16.mxu0 0
      %1179 = vmatmul.mubr.bf16.gmra.mrb[0].mxu0 %v1120
      %v1180 = vpop.f32.mrb[0].mxu0
      %v1181 = vadd.f32 %v1083, %v1180
      %v1182 = vpop.f32.mrb[0].mxu0
      %v1183 = vpop.f32.mrb[0].mxu0
      %v1184 = vadd.f32 %v1088, %v1183
      %v1185 = vpop.f32.mrb[0].mxu0
      %1186 = vdwg.mxu0
      %v1187 = vpack.c.bf16 %v1160, %v1157
      %v1188 = vpack.c.bf16 %v1168, %v1165
      %v1189 = vld [vmem:[%s1 + $0xa0] sm:$0xf]
      %v1190 = vld [vmem:[%s1 + $0xa4] sm:$0xf]
      %v1191 = vld [vmem:[%s1 + $0xa8] sm:$0xf]
      %v1192 = vld [vmem:[%s1 + $0xac] sm:$0xf]
      %v1193 = vld [vmem:[%s1 + $0xb0] sm:$0xf]
      %v1194 = vld [vmem:[%s1 + $0xb4] sm:$0xf]
      %v1195 = vld [vmem:[%s1 + $0xb8] sm:$0xf]
      %v1196 = vld [vmem:[%s1 + $0xbc] sm:$0xf]
      %v1197 = vld [vmem:[%s2 + $0x140] sm:$0xff]
      %v1198 = vld [vmem:[%s2 + $0x148] sm:$0xff]
      %v1199 = vld [vmem:[%s2 + $0x150] sm:$0xff]
      %v1200 = vld [vmem:[%s2 + $0x158] sm:$0xff]
      %v1201 = vld [vmem:[%s2 + $0x160] sm:$0xff]
      %v1202 = vld [vmem:[%s2 + $0x168] sm:$0xff]
      %v1203 = vld [vmem:[%s2 + $0x170] sm:$0xff]
      %v1204 = vld [vmem:[%s2 + $0x178] sm:$0xff]
      %1206 = vset.pattern.permute.xlu0 0
      %1207 = vperm.xlu0 %1206, %v1197
      %v1208 = vpop.permute.xlu0 %1207
      %1211 = vset.pattern.permute.xlu0 0
      %1212 = vperm.xlu0 %1211, %v1198
      %v1213 = vpop.permute.xlu0 %1212
      %1216 = vset.pattern.permute.xlu0 0
      %1217 = vperm.xlu0 %1216, %v1199
      %v1218 = vpop.permute.xlu0 %1217
      %1221 = vset.pattern.permute.xlu0 0
      %1222 = vperm.xlu0 %1221, %v1200
      %v1223 = vpop.permute.xlu0 %1222
      %1226 = vset.pattern.permute.xlu0 0
      %1227 = vperm.xlu0 %1226, %v1201
      %v1228 = vpop.permute.xlu0 %1227
      %1231 = vset.pattern.permute.xlu0 0
      %1232 = vperm.xlu0 %1231, %v1202
      %v1233 = vpop.permute.xlu0 %1232
      %1236 = vset.pattern.permute.xlu0 0
      %1237 = vperm.xlu0 %1236, %v1203
      %v1238 = vpop.permute.xlu0 %1237
      %1241 = vset.pattern.permute.xlu0 0
      %1242 = vperm.xlu0 %1241, %v1204
      %v1243 = vpop.permute.xlu0 %1242
      %v1253 = vunpack.c.l.b16 %v1189
      %v1254 = vunpack.c.l.b16 %v1190
      %v1255 = vunpack.c.l.b16 %v1191
      %v1256 = vunpack.c.l.b16 %v1192
      %v1257 = vunpack.c.l.b16 %v1193
      %v1258 = vunpack.c.l.b16 %v1194
      %v1259 = vunpack.c.l.b16 %v1195
      %v1260 = vunpack.c.l.b16 %v1196
      %v1261 = vpack.c.b16 %v1254, %v1253
      %v1262 = vpack.c.b16 %v1256, %v1255
      %v1263 = vpack.c.b16 %v1258, %v1257
      %v1264 = vpack.c.b16 %v1260, %v1259
      %v1266 = vsel %vm544, %v1261, 0
      %v1269 = vsel %vm544, %v1262, 0
      %v1272 = vsel %vm544, %v1263, 0
      %v1275 = vsel %vm544, %v1264, 0
      %1277 = vmatprep.subr.bf16.mxu0 0
      %1278 = vmatpush1.bf16.msra.mxu0 %v1187
      %1279 = vmatprep.subr.bf16.mxu0 0
      %1280 = vmatpush1.bf16.msra.mxu0 %v1188
      %1281 = vmatprep.subr.bf16.mxu0 0
      %1282 = vmatpush1.bf16.msra.mxu0 0
      %1283 = vmatprep.subr.bf16.mxu0 0
      %1284 = vmatpush1.bf16.msra.mxu0 0
      %1285 = vmatprep.subr.bf16.mxu0 0
      %1286 = vmatpush1.bf16.msra.mxu0 0
      %1287 = vmatprep.subr.bf16.mxu0 0
      %1288 = vmatpush1.bf16.msra.mxu0 0
      %1289 = vmatprep.subr.bf16.mxu0 0
      %1290 = vmatpush1.bf16.msra.mxu0 0
      %1291 = vmatprep.subr.bf16.mxu0 0
      %1292 = vmatpush1.bf16.msra.mxu0 0
      %1293 = vmatprep.subr.bf16.mxu0 0
      %1294 = vmatpush1.bf16.msra.mxu0 0
      %1295 = vmatprep.subr.bf16.mxu0 0
      %1296 = vmatpush1.bf16.msra.mxu0 0
      %1297 = vmatprep.subr.bf16.mxu0 0
      %1298 = vmatpush1.bf16.msra.mxu0 0
      %1299 = vmatprep.subr.bf16.mxu0 0
      %1300 = vmatpush1.bf16.msra.mxu0 0
      %1301 = vmatprep.subr.bf16.mxu0 0
      %1302 = vmatpush1.bf16.msra.mxu0 0
      %1303 = vmatprep.subr.bf16.mxu0 0
      %1304 = vmatpush1.bf16.msra.mxu0 0
      %1305 = vmatprep.subr.bf16.mxu0 0
      %1306 = vmatpush1.bf16.msra.mxu0 0
      %1307 = vmatprep.subr.bf16.mxu0 0
      %1308 = vmatpush1.bf16.msra.mxu0 0
      %1309 = vmatprep.mubr.bf16.mxu0 0
      %1310 = vmatmul.mubr.bf16.gmra.mrb[0].mxu0 %v1266
      %v1311 = vpop.f32.mrb[0].mxu0
      %v1312 = vadd.f32 %v1208, %v1311
      %v1313 = vpop.f32.mrb[0].mxu0
      %v1314 = vpop.f32.mrb[0].mxu0
      %v1315 = vadd.f32 %v1213, %v1314
      %v1316 = vpop.f32.mrb[0].mxu0
      %1317 = vmatprep.mubr.bf16.mxu0 0
      %1318 = vmatmul.mubr.bf16.gmra.mrb[0].mxu0 %v1269
      %v1319 = vpop.f32.mrb[0].mxu0
      %v1320 = vadd.f32 %v1218, %v1319
      %v1321 = vpop.f32.mrb[0].mxu0
      %v1322 = vpop.f32.mrb[0].mxu0
      %v1323 = vadd.f32 %v1223, %v1322
      %v1324 = vpop.f32.mrb[0].mxu0
      %1325 = vmatprep.mubr.bf16.mxu0 0
      %1326 = vmatmul.mubr.bf16.gmra.mrb[0].mxu0 %v1272
      %v1327 = vpop.f32.mrb[0].mxu0
      %v1328 = vadd.f32 %v1228, %v1327
      %v1329 = vpop.f32.mrb[0].mxu0
      %v1330 = vpop.f32.mrb[0].mxu0
      %v1331 = vadd.f32 %v1233, %v1330
      %v1332 = vpop.f32.mrb[0].mxu0
      %1333 = vmatprep.mubr.bf16.mxu0 0
      %1334 = vmatmul.mubr.bf16.gmra.mrb[0].mxu0 %v1275
      %v1335 = vpop.f32.mrb[0].mxu0
      %v1336 = vadd.f32 %v1238, %v1335
      %v1337 = vpop.f32.mrb[0].mxu0
      %v1338 = vpop.f32.mrb[0].mxu0
      %v1339 = vadd.f32 %v1243, %v1338
      %v1340 = vpop.f32.mrb[0].mxu0
      %1341 = vdwg.mxu0
      %v1342 = vmax.f32 %v1312, 0.0
      %v1343 = vmax.f32 %v1315, 0.0
      %v1344 = vmax.f32 %v1320, 0.0
      %v1345 = vmax.f32 %v1323, 0.0
      %v1346 = vmax.f32 %v1328, 0.0
      %v1347 = vmax.f32 %v1331, 0.0
      %v1348 = vmax.f32 %v1336, 0.0
      %v1349 = vmax.f32 %v1339, 0.0
      %v1350 = vpack.c.bf16 %v1343, %v1342
      %v1351 = vpack.c.bf16 %v1345, %v1344
      %v1352 = vpack.c.bf16 %v1347, %v1346
      %v1353 = vpack.c.bf16 %v1349, %v1348
      %v1354 = vld [vmem:[%s1 + $0xc0] sm:$0xf]
      %v1355 = vld [vmem:[%s1 + $0xc4] sm:$0xf]
      %v1356 = vld [vmem:[%s1 + $0xc8] sm:$0xf]
      %v1357 = vld [vmem:[%s1 + $0xcc] sm:$0xf]
      %v1358 = vld [vmem:[%s1 + $0xd0] sm:$0xf]
      %v1359 = vld [vmem:[%s1 + $0xd4] sm:$0xf]
      %v1360 = vld [vmem:[%s1 + $0xd8] sm:$0xf]
      %v1361 = vld [vmem:[%s1 + $0xdc] sm:$0xf]
      %v1362 = vld [vmem:[%s2 + $0x180] sm:$0xff]
      %v1363 = vld [vmem:[%s2 + $0x188] sm:$0xff]
      %v1364 = vld [vmem:[%s2 + $0x190] sm:$0xff]
      %v1365 = vld [vmem:[%s2 + $0x198] sm:$0xff]
      %v1366 = vld [vmem:[%s2 + $0x1a0] sm:$0xff]
      %v1367 = vld [vmem:[%s2 + $0x1a8] sm:$0xff]
      %v1368 = vld [vmem:[%s2 + $0x1b0] sm:$0xff]
      %v1369 = vld [vmem:[%s2 + $0x1b8] sm:$0xff]
      %1371 = vset.pattern.permute.xlu0 0
      %1372 = vperm.xlu0 %1371, %v1362
      %v1373 = vpop.permute.xlu0 %1372
      %1376 = vset.pattern.permute.xlu0 0
      %1377 = vperm.xlu0 %1376, %v1363
      %v1378 = vpop.permute.xlu0 %1377
      %1381 = vset.pattern.permute.xlu0 0
      %1382 = vperm.xlu0 %1381, %v1364
      %v1383 = vpop.permute.xlu0 %1382
      %1386 = vset.pattern.permute.xlu0 0
      %1387 = vperm.xlu0 %1386, %v1365
      %v1388 = vpop.permute.xlu0 %1387
      %1391 = vset.pattern.permute.xlu0 0
      %1392 = vperm.xlu0 %1391, %v1366
      %v1393 = vpop.permute.xlu0 %1392
      %1396 = vset.pattern.permute.xlu0 0
      %1397 = vperm.xlu0 %1396, %v1367
      %v1398 = vpop.permute.xlu0 %1397
      %1401 = vset.pattern.permute.xlu0 0
      %1402 = vperm.xlu0 %1401, %v1368
      %v1403 = vpop.permute.xlu0 %1402
      %1406 = vset.pattern.permute.xlu0 0
      %1407 = vperm.xlu0 %1406, %v1369
      %v1408 = vpop.permute.xlu0 %1407
      %v1418 = vunpack.c.l.b16 %v1354
      %v1419 = vunpack.c.l.b16 %v1355
      %v1420 = vunpack.c.l.b16 %v1356
      %v1421 = vunpack.c.l.b16 %v1357
      %v1422 = vunpack.c.l.b16 %v1358
      %v1423 = vunpack.c.l.b16 %v1359
      %v1424 = vunpack.c.l.b16 %v1360
      %v1425 = vunpack.c.l.b16 %v1361
      %v1426 = vpack.c.b16 %v1419, %v1418
      %v1427 = vpack.c.b16 %v1421, %v1420
      %v1428 = vpack.c.b16 %v1423, %v1422
      %v1429 = vpack.c.b16 %v1425, %v1424
      %v1431 = vsel %vm388, %v1426, 0
      %v1434 = vsel %vm388, %v1427, 0
      %v1437 = vsel %vm388, %v1428, 0
      %v1440 = vsel %vm388, %v1429, 0
      %1442 = vmatprep.subr.bf16.mxu0 0
      %1443 = vmatpush1.bf16.msra.mxu0 %v1350
      %1444 = vmatprep.subr.bf16.mxu0 0
      %1445 = vmatpush1.bf16.msra.mxu0 %v1351
      %1446 = vmatprep.subr.bf16.mxu0 0
      %1447 = vmatpush1.bf16.msra.mxu0 %v1352
      %1448 = vmatprep.subr.bf16.mxu0 0
      %1449 = vmatpush1.bf16.msra.mxu0 %v1353
      %1450 = vmatprep.subr.bf16.mxu0 0
      %1451 = vmatpush1.bf16.msra.mxu0 0
      %1452 = vmatprep.subr.bf16.mxu0 0
      %1453 = vmatpush1.bf16.msra.mxu0 0
      %1454 = vmatprep.subr.bf16.mxu0 0
      %1455 = vmatpush1.bf16.msra.mxu0 0
      %1456 = vmatprep.subr.bf16.mxu0 0
      %1457 = vmatpush1.bf16.msra.mxu0 0
      %1458 = vmatprep.subr.bf16.mxu0 0
      %1459 = vmatpush1.bf16.msra.mxu0 0
      %1460 = vmatprep.subr.bf16.mxu0 0
      %1461 = vmatpush1.bf16.msra.mxu0 0
      %1462 = vmatprep.subr.bf16.mxu0 0
      %1463 = vmatpush1.bf16.msra.mxu0 0
      %1464 = vmatprep.subr.bf16.mxu0 0
      %1465 = vmatpush1.bf16.msra.mxu0 0
      %1466 = vmatprep.subr.bf16.mxu0 0
      %1467 = vmatpush1.bf16.msra.mxu0 0
      %1468 = vmatprep.subr.bf16.mxu0 0
      %1469 = vmatpush1.bf16.msra.mxu0 0
      %1470 = vmatprep.subr.bf16.mxu0 0
      %1471 = vmatpush1.bf16.msra.mxu0 0
      %1472 = vmatprep.subr.bf16.mxu0 0
      %1473 = vmatpush1.bf16.msra.mxu0 0
      %1474 = vmatprep.mubr.bf16.mxu0 0
      %1475 = vmatmul.mubr.bf16.gmra.mrb[0].mxu0 %v1431
      %v1476 = vpop.f32.mrb[0].mxu0
      %v1477 = vadd.f32 %v1373, %v1476
      %v1478 = vpop.f32.mrb[0].mxu0
      %v1479 = vpop.f32.mrb[0].mxu0
      %v1480 = vadd.f32 %v1378, %v1479
      %v1481 = vpop.f32.mrb[0].mxu0
      %1482 = vmatprep.mubr.bf16.mxu0 0
      %1483 = vmatmul.mubr.bf16.gmra.mrb[0].mxu0 %v1434
      %v1484 = vpop.f32.mrb[0].mxu0
      %v1485 = vadd.f32 %v1383, %v1484
      %v1486 = vpop.f32.mrb[0].mxu0
      %v1487 = vpop.f32.mrb[0].mxu0
      %v1488 = vadd.f32 %v1388, %v1487
      %v1489 = vpop.f32.mrb[0].mxu0
      %1490 = vmatprep.mubr.bf16.mxu0 0
      %1491 = vmatmul.mubr.bf16.gmra.mrb[0].mxu0 %v1437
      %v1492 = vpop.f32.mrb[0].mxu0
      %v1493 = vadd.f32 %v1393, %v1492
      %v1494 = vpop.f32.mrb[0].mxu0
      %v1495 = vpop.f32.mrb[0].mxu0
      %v1496 = vadd.f32 %v1398, %v1495
      %v1497 = vpop.f32.mrb[0].mxu0
      %1498 = vmatprep.mubr.bf16.mxu0 0
      %1499 = vmatmul.mubr.bf16.gmra.mrb[0].mxu0 %v1440
      %v1500 = vpop.f32.mrb[0].mxu0
      %v1501 = vadd.f32 %v1403, %v1500
      %v1502 = vpop.f32.mrb[0].mxu0
      %v1503 = vpop.f32.mrb[0].mxu0
      %v1504 = vadd.f32 %v1408, %v1503
      %v1505 = vpop.f32.mrb[0].mxu0
      %1506 = vdwg.mxu0
      %v1507 = vmax.f32 %v1477, 0.0
      %v1508 = vmax.f32 %v1480, 0.0
      %v1509 = vmax.f32 %v1485, 0.0
      %v1510 = vmax.f32 %v1488, 0.0
      %v1511 = vmax.f32 %v1493, 0.0
      %v1512 = vmax.f32 %v1496, 0.0
      %v1513 = vmax.f32 %v1501, 0.0
      %v1514 = vmax.f32 %v1504, 0.0
      %v1515 = vpack.c.bf16 %v1508, %v1507
      %v1516 = vpack.c.bf16 %v1510, %v1509
      %v1517 = vpack.c.bf16 %v1512, %v1511
      %v1518 = vpack.c.bf16 %v1514, %v1513
      %v1519 = vld [vmem:[%s1 + $0xe0] sm:$0xf]
      %v1520 = vld [vmem:[%s1 + $0xe4] sm:$0xf]
      %v1521 = vld [vmem:[%s1 + $0xe8] sm:$0xf]
      %v1522 = vld [vmem:[%s1 + $0xec] sm:$0xf]
      %v1523 = vld [vmem:[%s1 + $0xf0] sm:$0xf]
      %v1524 = vld [vmem:[%s1 + $0xf4] sm:$0xf]
      %v1525 = vld [vmem:[%s1 + $0xf8] sm:$0xf]
      %v1526 = vld [vmem:[%s1 + $0xfc] sm:$0xf]
      %v1527 = vld [vmem:[%s2 + $0x1c0] sm:$0xff]
      %v1528 = vld [vmem:[%s2 + $0x1c8] sm:$0xff]
      %v1529 = vld [vmem:[%s2 + $0x1d0] sm:$0xff]
      %v1530 = vld [vmem:[%s2 + $0x1d8] sm:$0xff]
      %v1531 = vld [vmem:[%s2 + $0x1e0] sm:$0xff]
      %v1532 = vld [vmem:[%s2 + $0x1e8] sm:$0xff]
      %v1533 = vld [vmem:[%s2 + $0x1f0] sm:$0xff]
      %v1534 = vld [vmem:[%s2 + $0x1f8] sm:$0xff]
      %1536 = vset.pattern.permute.xlu0 0
      %1537 = vperm.xlu0 %1536, %v1527
      %v1538 = vpop.permute.xlu0 %1537
      %1541 = vset.pattern.permute.xlu0 0
      %1542 = vperm.xlu0 %1541, %v1528
      %v1543 = vpop.permute.xlu0 %1542
      %1546 = vset.pattern.permute.xlu0 0
      %1547 = vperm.xlu0 %1546, %v1529
      %v1548 = vpop.permute.xlu0 %1547
      %1551 = vset.pattern.permute.xlu0 0
      %1552 = vperm.xlu0 %1551, %v1530
      %v1553 = vpop.permute.xlu0 %1552
      %1556 = vset.pattern.permute.xlu0 0
      %1557 = vperm.xlu0 %1556, %v1531
      %v1558 = vpop.permute.xlu0 %1557
      %1561 = vset.pattern.permute.xlu0 0
      %1562 = vperm.xlu0 %1561, %v1532
      %v1563 = vpop.permute.xlu0 %1562
      %1566 = vset.pattern.permute.xlu0 0
      %1567 = vperm.xlu0 %1566, %v1533
      %v1568 = vpop.permute.xlu0 %1567
      %1571 = vset.pattern.permute.xlu0 0
      %1572 = vperm.xlu0 %1571, %v1534
      %v1573 = vpop.permute.xlu0 %1572
      %v1583 = vunpack.c.l.b16 %v1519
      %v1584 = vunpack.c.l.b16 %v1520
      %v1585 = vunpack.c.l.b16 %v1521
      %v1586 = vunpack.c.l.b16 %v1522
      %v1587 = vunpack.c.l.b16 %v1523
      %v1588 = vunpack.c.l.b16 %v1524
      %v1589 = vunpack.c.l.b16 %v1525
      %v1590 = vunpack.c.l.b16 %v1526
      %v1591 = vpack.c.b16 %v1584, %v1583
      %v1592 = vpack.c.b16 %v1586, %v1585
      %v1593 = vpack.c.b16 %v1588, %v1587
      %v1594 = vpack.c.b16 %v1590, %v1589
      %v1596 = vsel %vm388, %v1591, 0
      %v1599 = vsel %vm388, %v1592, 0
      %v1602 = vsel %vm388, %v1593, 0
      %v1605 = vsel %vm388, %v1594, 0
      %1607 = vmatprep.subr.bf16.mxu0 0
      %1608 = vmatpush1.bf16.msra.mxu0 %v1515
      %1609 = vmatprep.subr.bf16.mxu0 0
      %1610 = vmatpush1.bf16.msra.mxu0 %v1516
      %1611 = vmatprep.subr.bf16.mxu0 0
      %1612 = vmatpush1.bf16.msra.mxu0 %v1517
      %1613 = vmatprep.subr.bf16.mxu0 0
      %1614 = vmatpush1.bf16.msra.mxu0 %v1518
      %1615 = vmatprep.subr.bf16.mxu0 0
      %1616 = vmatpush1.bf16.msra.mxu0 0
      %1617 = vmatprep.subr.bf16.mxu0 0
      %1618 = vmatpush1.bf16.msra.mxu0 0
      %1619 = vmatprep.subr.bf16.mxu0 0
      %1620 = vmatpush1.bf16.msra.mxu0 0
      %1621 = vmatprep.subr.bf16.mxu0 0
      %1622 = vmatpush1.bf16.msra.mxu0 0
      %1623 = vmatprep.subr.bf16.mxu0 0
      %1624 = vmatpush1.bf16.msra.mxu0 0
      %1625 = vmatprep.subr.bf16.mxu0 0
      %1626 = vmatpush1.bf16.msra.mxu0 0
      %1627 = vmatprep.subr.bf16.mxu0 0
      %1628 = vmatpush1.bf16.msra.mxu0 0
      %1629 = vmatprep.subr.bf16.mxu0 0
      %1630 = vmatpush1.bf16.msra.mxu0 0
      %1631 = vmatprep.subr.bf16.mxu0 0
      %1632 = vmatpush1.bf16.msra.mxu0 0
      %1633 = vmatprep.subr.bf16.mxu0 0
      %1634 = vmatpush1.bf16.msra.mxu0 0
      %1635 = vmatprep.subr.bf16.mxu0 0
      %1636 = vmatpush1.bf16.msra.mxu0 0
      %1637 = vmatprep.subr.bf16.mxu0 0
      %1638 = vmatpush1.bf16.msra.mxu0 0
      %1639 = vmatprep.mubr.bf16.mxu0 0
      %1640 = vmatmul.mubr.bf16.gmra.mrb[0].mxu0 %v1596
      %v1641 = vpop.f32.mrb[0].mxu0
      %v1642 = vadd.f32 %v1538, %v1641
      %v1643 = vpop.f32.mrb[0].mxu0
      %v1644 = vpop.f32.mrb[0].mxu0
      %v1645 = vadd.f32 %v1543, %v1644
      %v1646 = vpop.f32.mrb[0].mxu0
      %1647 = vmatprep.mubr.bf16.mxu0 0
      %1648 = vmatmul.mubr.bf16.gmra.mrb[0].mxu0 %v1599
      %v1649 = vpop.f32.mrb[0].mxu0
      %v1650 = vadd.f32 %v1548, %v1649
      %v1651 = vpop.f32.mrb[0].mxu0
      %v1652 = vpop.f32.mrb[0].mxu0
      %v1653 = vadd.f32 %v1553, %v1652
      %v1654 = vpop.f32.mrb[0].mxu0
      %1655 = vmatprep.mubr.bf16.mxu0 0
      %1656 = vmatmul.mubr.bf16.gmra.mrb[0].mxu0 %v1602
      %v1657 = vpop.f32.mrb[0].mxu0
      %v1658 = vadd.f32 %v1558, %v1657
      %v1659 = vpop.f32.mrb[0].mxu0
      %v1660 = vpop.f32.mrb[0].mxu0
      %v1661 = vadd.f32 %v1563, %v1660
      %v1662 = vpop.f32.mrb[0].mxu0
      %1663 = vmatprep.mubr.bf16.mxu0 0
      %1664 = vmatmul.mubr.bf16.gmra.mrb[0].mxu0 %v1605
      %v1665 = vpop.f32.mrb[0].mxu0
      %v1666 = vadd.f32 %v1568, %v1665
      %v1667 = vpop.f32.mrb[0].mxu0
      %v1668 = vpop.f32.mrb[0].mxu0
      %v1669 = vadd.f32 %v1573, %v1668
      %v1670 = vpop.f32.mrb[0].mxu0
      %1671 = vdwg.mxu0
      %v1672 = vmin.f32 %v1658, 0.0
      %v1673 = vmin.f32 %v1661, 0.0
      %v1674 = vmin.f32 %v1666, 0.0
      %v1675 = vmin.f32 %v1669, 0.0
      %v1676 = vand.u32 2147483647, %v1658
      %v1677 = vand.u32 2147483647, %v1661
      %v1678 = vand.u32 2147483647, %v1666
      %v1679 = vand.u32 2147483647, %v1669
      %v1680 = vsub.f32 0.0, %v1676
      %v1681 = vsub.f32 0.0, %v1677
      %v1682 = vsub.f32 0.0, %v1678
      %v1683 = vsub.f32 0.0, %v1679
      %v1684 = vmul.f32 %v1680, 1.442695
      %v1685 = vpow.pop %v1684
      %v1686 = vmul.f32 %v1681, 1.442695
      %v1687 = vpow.pop %v1686
      %v1688 = vmul.f32 %v1682, 1.442695
      %v1689 = vpow.pop %v1688
      %v1690 = vmul.f32 %v1683, 1.442695
      %v1691 = vpow.pop %v1690
      %v1692 = vadd.f32 %v1685, 1.0
      %v1693 = vlog2.pop %v1692
      %v1694 = vmul.f32 %v1693, 0.6931472
      %v1695 = vmul.f32 -0.5, %v1685
      %v1696 = vadd.f32 %v1695, 1.0
      %v1697 = vmul.f32 %v1696, %v1685
      %v1698 = vand.u32 2147483647, %v1685
      %vm1699 = vcmp.lt.f32.partialorder %v1698, 0.0004427343
      %v1700 = vsel %vm1699, %v1697, %v1694
      %v1701 = vadd.f32 %v1687, 1.0
      %v1702 = vlog2.pop %v1701
      %v1703 = vmul.f32 %v1702, 0.6931472
      %v1704 = vmul.f32 -0.5, %v1687
      %v1705 = vadd.f32 %v1704, 1.0
      %v1706 = vmul.f32 %v1705, %v1687
      %v1707 = vand.u32 2147483647, %v1687
      %vm1708 = vcmp.lt.f32.partialorder %v1707, 0.0004427343
      %v1709 = vsel %vm1708, %v1706, %v1703
      %v1710 = vadd.f32 %v1689, 1.0
      %v1711 = vlog2.pop %v1710
      %v1712 = vmul.f32 %v1711, 0.6931472
      %v1713 = vmul.f32 -0.5, %v1689
      %v1714 = vadd.f32 %v1713, 1.0
      %v1715 = vmul.f32 %v1714, %v1689
      %v1716 = vand.u32 2147483647, %v1689
      %vm1717 = vcmp.lt.f32.partialorder %v1716, 0.0004427343
      %v1718 = vsel %vm1717, %v1715, %v1712
      %v1719 = vadd.f32 %v1691, 1.0
      %v1720 = vlog2.pop %v1719
      %v1721 = vmul.f32 %v1720, 0.6931472
      %v1722 = vmul.f32 -0.5, %v1691
      %v1723 = vadd.f32 %v1722, 1.0
      %v1724 = vmul.f32 %v1723, %v1691
      %v1725 = vand.u32 2147483647, %v1691
      %vm1726 = vcmp.lt.f32.partialorder %v1725, 0.0004427343
      %v1727 = vsel %vm1726, %v1724, %v1721
      %v1728 = vsub.f32 %v1672, %v1700
      %v1729 = vsub.f32 %v1673, %v1709
      %v1730 = vsub.f32 %v1674, %v1718
      %v1731 = vsub.f32 %v1675, %v1727
      %v1732 = vadd.f32 %v1173, %v1642
      %v1733 = vadd.f32 %v1176, %v1645
      %v1734 = vadd.f32 %v1181, %v1650
      %v1735 = vadd.f32 %v1184, %v1653
      %v1736 = vmul.f32 %v1728, 1.442695
      %v1737 = vpow.pop %v1736
      %v1738 = vmul.f32 %v1729, 1.442695
      %v1739 = vpow.pop %v1738
      %v1740 = vmul.f32 %v1730, 1.442695
      %v1741 = vpow.pop %v1740
      %v1742 = vmul.f32 %v1731, 1.442695
      %v1743 = vpow.pop %v1742
      %v1744 = vmul.f32 %v1732, %v1737
      %v1745 = vmul.f32 %v1733, %v1739
      %v1746 = vmul.f32 %v1734, %v1741
      %v1747 = vmul.f32 %v1735, %v1743
      %v1748 = vadd.f32 %v1028, %v1728
      %v1749 = vadd.f32 %v1029, %v1729
      %v1750 = vadd.f32 %v1030, %v1730
      %v1751 = vadd.f32 %v1031, %v1731
      %v1752 = vpack.c.bf16 %v1745, %v1744
      %v1753 = vpack.c.bf16 %v1747, %v1746
      %v1754 = vld [vmem:[%s1 + $0x100] sm:$0xf]
      %v1755 = vld [vmem:[%s1 + $0x104] sm:$0xf]
      %v1756 = vld [vmem:[%s1 + $0x108] sm:$0xf]
      %v1757 = vld [vmem:[%s1 + $0x10c] sm:$0xf]
      %v1758 = vld [vmem:[%s1 + $0x110] sm:$0xf]
      %v1759 = vld [vmem:[%s1 + $0x114] sm:$0xf]
      %v1760 = vld [vmem:[%s1 + $0x118] sm:$0xf]
      %v1761 = vld [vmem:[%s1 + $0x11c] sm:$0xf]
      %v1762 = vld [vmem:[%s2 + $0x200] sm:$0xff]
      %v1763 = vld [vmem:[%s2 + $0x208] sm:$0xff]
      %v1764 = vld [vmem:[%s2 + $0x210] sm:$0xff]
      %v1765 = vld [vmem:[%s2 + $0x218] sm:$0xff]
      %v1766 = vld [vmem:[%s2 + $0x220] sm:$0xff]
      %v1767 = vld [vmem:[%s2 + $0x228] sm:$0xff]
      %v1768 = vld [vmem:[%s2 + $0x230] sm:$0xff]
      %v1769 = vld [vmem:[%s2 + $0x238] sm:$0xff]
      %1771 = vset.pattern.permute.xlu0 0
      %1772 = vperm.xlu0 %1771, %v1762
      %v1773 = vpop.permute.xlu0 %1772
      %1776 = vset.pattern.permute.xlu0 0
      %1777 = vperm.xlu0 %1776, %v1763
      %v1778 = vpop.permute.xlu0 %1777
      %1781 = vset.pattern.permute.xlu0 0
      %1782 = vperm.xlu0 %1781, %v1764
      %v1783 = vpop.permute.xlu0 %1782
      %1786 = vset.pattern.permute.xlu0 0
      %1787 = vperm.xlu0 %1786, %v1765
      %v1788 = vpop.permute.xlu0 %1787
      %1791 = vset.pattern.permute.xlu0 0
      %1792 = vperm.xlu0 %1791, %v1766
      %v1793 = vpop.permute.xlu0 %1792
      %1796 = vset.pattern.permute.xlu0 0
      %1797 = vperm.xlu0 %1796, %v1767
      %v1798 = vpop.permute.xlu0 %1797
      %1801 = vset.pattern.permute.xlu0 0
      %1802 = vperm.xlu0 %1801, %v1768
      %v1803 = vpop.permute.xlu0 %1802
      %1806 = vset.pattern.permute.xlu0 0
      %1807 = vperm.xlu0 %1806, %v1769
      %v1808 = vpop.permute.xlu0 %1807
      %v1818 = vunpack.c.l.b16 %v1754
      %v1819 = vunpack.c.l.b16 %v1755
      %v1820 = vunpack.c.l.b16 %v1756
      %v1821 = vunpack.c.l.b16 %v1757
      %v1822 = vunpack.c.l.b16 %v1758
      %v1823 = vunpack.c.l.b16 %v1759
      %v1824 = vunpack.c.l.b16 %v1760
      %v1825 = vunpack.c.l.b16 %v1761
      %v1826 = vpack.c.b16 %v1819, %v1818
      %v1827 = vpack.c.b16 %v1821, %v1820
      %v1828 = vpack.c.b16 %v1823, %v1822
      %v1829 = vpack.c.b16 %v1825, %v1824
      %v1831 = vsel %vm388, %v1826, 0
      %v1834 = vsel %vm388, %v1827, 0
      %v1837 = vsel %vm388, %v1828, 0
      %v1840 = vsel %vm388, %v1829, 0
      %1842 = vmatprep.subr.bf16.mxu0 0
      %1843 = vmatpush1.bf16.msra.mxu0 %v1187
      %1844 = vmatprep.subr.bf16.mxu0 0
      %1845 = vmatpush1.bf16.msra.mxu0 %v1188
      %1846 = vmatprep.subr.bf16.mxu0 0
      %1847 = vmatpush1.bf16.msra.mxu0 %v1752
      %1848 = vmatprep.subr.bf16.mxu0 0
      %1849 = vmatpush1.bf16.msra.mxu0 %v1753
      %1850 = vmatprep.subr.bf16.mxu0 0
      %1851 = vmatpush1.bf16.msra.mxu0 0
      %1852 = vmatprep.subr.bf16.mxu0 0
      %1853 = vmatpush1.bf16.msra.mxu0 0
      %1854 = vmatprep.subr.bf16.mxu0 0
      %1855 = vmatpush1.bf16.msra.mxu0 0
      %1856 = vmatprep.subr.bf16.mxu0 0
      %1857 = vmatpush1.bf16.msra.mxu0 0
      %1858 = vmatprep.subr.bf16.mxu0 0
      %1859 = vmatpush1.bf16.msra.mxu0 0
      %1860 = vmatprep.subr.bf16.mxu0 0
      %1861 = vmatpush1.bf16.msra.mxu0 0
      %1862 = vmatprep.subr.bf16.mxu0 0
      %1863 = vmatpush1.bf16.msra.mxu0 0
      %1864 = vmatprep.subr.bf16.mxu0 0
      %1865 = vmatpush1.bf16.msra.mxu0 0
      %1866 = vmatprep.subr.bf16.mxu0 0
      %1867 = vmatpush1.bf16.msra.mxu0 0
      %1868 = vmatprep.subr.bf16.mxu0 0
      %1869 = vmatpush1.bf16.msra.mxu0 0
      %1870 = vmatprep.subr.bf16.mxu0 0
      %1871 = vmatpush1.bf16.msra.mxu0 0
      %1872 = vmatprep.subr.bf16.mxu0 0
      %1873 = vmatpush1.bf16.msra.mxu0 0
      %1874 = vmatprep.mubr.bf16.mxu0 0
      %1875 = vmatmul.mubr.bf16.gmra.mrb[0].mxu0 %v1831
      %v1876 = vpop.f32.mrb[0].mxu0
      %v1877 = vadd.f32 %v1773, %v1876
      %v1878 = vpop.f32.mrb[0].mxu0
      %v1879 = vpop.f32.mrb[0].mxu0
      %v1880 = vadd.f32 %v1778, %v1879
      %v1881 = vpop.f32.mrb[0].mxu0
      %1882 = vmatprep.mubr.bf16.mxu0 0
      %1883 = vmatmul.mubr.bf16.gmra.mrb[0].mxu0 %v1834
      %v1884 = vpop.f32.mrb[0].mxu0
      %v1885 = vadd.f32 %v1783, %v1884
      %v1886 = vpop.f32.mrb[0].mxu0
      %v1887 = vpop.f32.mrb[0].mxu0
      %v1888 = vadd.f32 %v1788, %v1887
      %v1889 = vpop.f32.mrb[0].mxu0
      %1890 = vmatprep.mubr.bf16.mxu0 0
      %1891 = vmatmul.mubr.bf16.gmra.mrb[0].mxu0 %v1837
      %v1892 = vpop.f32.mrb[0].mxu0
      %v1893 = vadd.f32 %v1793, %v1892
      %v1894 = vpop.f32.mrb[0].mxu0
      %v1895 = vpop.f32.mrb[0].mxu0
      %v1896 = vadd.f32 %v1798, %v1895
      %v1897 = vpop.f32.mrb[0].mxu0
      %1898 = vmatprep.mubr.bf16.mxu0 0
      %1899 = vmatmul.mubr.bf16.gmra.mrb[0].mxu0 %v1840
      %v1900 = vpop.f32.mrb[0].mxu0
      %v1901 = vadd.f32 %v1803, %v1900
      %v1902 = vpop.f32.mrb[0].mxu0
      %v1903 = vpop.f32.mrb[0].mxu0
      %v1904 = vadd.f32 %v1808, %v1903
      %v1905 = vpop.f32.mrb[0].mxu0
      %1906 = vdwg.mxu0
      %v1907 = vpack.c.bf16 %v1880, %v1877
      %v1908 = vpack.c.bf16 %v1888, %v1885
      %v1909 = vld [vmem:[%s1 + $0x120] sm:$0xf]
      %v1910 = vld [vmem:[%s1 + $0x124] sm:$0xf]
      %v1911 = vld [vmem:[%s1 + $0x128] sm:$0xf]
      %v1912 = vld [vmem:[%s1 + $0x12c] sm:$0xf]
      %v1913 = vld [vmem:[%s1 + $0x130] sm:$0xf]
      %v1914 = vld [vmem:[%s1 + $0x134] sm:$0xf]
      %v1915 = vld [vmem:[%s1 + $0x138] sm:$0xf]
      %v1916 = vld [vmem:[%s1 + $0x13c] sm:$0xf]
      %v1917 = vld [vmem:[%s2 + $0x240] sm:$0xff]
      %v1918 = vld [vmem:[%s2 + $0x248] sm:$0xff]
      %v1919 = vld [vmem:[%s2 + $0x250] sm:$0xff]
      %v1920 = vld [vmem:[%s2 + $0x258] sm:$0xff]
      %v1921 = vld [vmem:[%s2 + $0x260] sm:$0xff]
      %v1922 = vld [vmem:[%s2 + $0x268] sm:$0xff]
      %v1923 = vld [vmem:[%s2 + $0x270] sm:$0xff]
      %v1924 = vld [vmem:[%s2 + $0x278] sm:$0xff]
      %1926 = vset.pattern.permute.xlu0 0
      %1927 = vperm.xlu0 %1926, %v1917
      %v1928 = vpop.permute.xlu0 %1927
      %1931 = vset.pattern.permute.xlu0 0
      %1932 = vperm.xlu0 %1931, %v1918
      %v1933 = vpop.permute.xlu0 %1932
      %1936 = vset.pattern.permute.xlu0 0
      %1937 = vperm.xlu0 %1936, %v1919
      %v1938 = vpop.permute.xlu0 %1937
      %1941 = vset.pattern.permute.xlu0 0
      %1942 = vperm.xlu0 %1941, %v1920
      %v1943 = vpop.permute.xlu0 %1942
      %1946 = vset.pattern.permute.xlu0 0
      %1947 = vperm.xlu0 %1946, %v1921
      %v1948 = vpop.permute.xlu0 %1947
      %1951 = vset.pattern.permute.xlu0 0
      %1952 = vperm.xlu0 %1951, %v1922
      %v1953 = vpop.permute.xlu0 %1952
      %1956 = vset.pattern.permute.xlu0 0
      %1957 = vperm.xlu0 %1956, %v1923
      %v1958 = vpop.permute.xlu0 %1957
      %1961 = vset.pattern.permute.xlu0 0
      %1962 = vperm.xlu0 %1961, %v1924
      %v1963 = vpop.permute.xlu0 %1962
      %v1973 = vunpack.c.l.b16 %v1909
      %v1974 = vunpack.c.l.b16 %v1910
      %v1975 = vunpack.c.l.b16 %v1911
      %v1976 = vunpack.c.l.b16 %v1912
      %v1977 = vunpack.c.l.b16 %v1913
      %v1978 = vunpack.c.l.b16 %v1914
      %v1979 = vunpack.c.l.b16 %v1915
      %v1980 = vunpack.c.l.b16 %v1916
      %v1981 = vpack.c.b16 %v1974, %v1973
      %v1982 = vpack.c.b16 %v1976, %v1975
      %v1983 = vpack.c.b16 %v1978, %v1977
      %v1984 = vpack.c.b16 %v1980, %v1979
      %v1986 = vsel %vm544, %v1981, 0
      %v1989 = vsel %vm544, %v1982, 0
      %v1992 = vsel %vm544, %v1983, 0
      %v1995 = vsel %vm544, %v1984, 0
      %1997 = vmatprep.subr.bf16.mxu0 0
      %1998 = vmatpush1.bf16.msra.mxu0 %v1907
      %1999 = vmatprep.subr.bf16.mxu0 0
      %2000 = vmatpush1.bf16.msra.mxu0 %v1908
      %2001 = vmatprep.subr.bf16.mxu0 0
      %2002 = vmatpush1.bf16.msra.mxu0 0
      %2003 = vmatprep.subr.bf16.mxu0 0
      %2004 = vmatpush1.bf16.msra.mxu0 0
      %2005 = vmatprep.subr.bf16.mxu0 0
      %2006 = vmatpush1.bf16.msra.mxu0 0
      %2007 = vmatprep.subr.bf16.mxu0 0
      %2008 = vmatpush1.bf16.msra.mxu0 0
      %2009 = vmatprep.subr.bf16.mxu0 0
      %2010 = vmatpush1.bf16.msra.mxu0 0
      %2011 = vmatprep.subr.bf16.mxu0 0
      %2012 = vmatpush1.bf16.msra.mxu0 0
      %2013 = vmatprep.subr.bf16.mxu0 0
      %2014 = vmatpush1.bf16.msra.mxu0 0
      %2015 = vmatprep.subr.bf16.mxu0 0
      %2016 = vmatpush1.bf16.msra.mxu0 0
      %2017 = vmatprep.subr.bf16.mxu0 0
      %2018 = vmatpush1.bf16.msra.mxu0 0
      %2019 = vmatprep.subr.bf16.mxu0 0
      %2020 = vmatpush1.bf16.msra.mxu0 0
      %2021 = vmatprep.subr.bf16.mxu0 0
      %2022 = vmatpush1.bf16.msra.mxu0 0
      %2023 = vmatprep.subr.bf16.mxu0 0
      %2024 = vmatpush1.bf16.msra.mxu0 0
      %2025 = vmatprep.subr.bf16.mxu0 0
      %2026 = vmatpush1.bf16.msra.mxu0 0
      %2027 = vmatprep.subr.bf16.mxu0 0
      %2028 = vmatpush1.bf16.msra.mxu0 0
      %2029 = vmatprep.mubr.bf16.mxu0 0
      %2030 = vmatmul.mubr.bf16.gmra.mrb[0].mxu0 %v1986
      %v2031 = vpop.f32.mrb[0].mxu0
      %v2032 = vadd.f32 %v1928, %v2031
      %v2033 = vpop.f32.mrb[0].mxu0
      %v2034 = vpop.f32.mrb[0].mxu0
      %v2035 = vadd.f32 %v1933, %v2034
      %v2036 = vpop.f32.mrb[0].mxu0
      %2037 = vmatprep.mubr.bf16.mxu0 0
      %2038 = vmatmul.mubr.bf16.gmra.mrb[0].mxu0 %v1989
      %v2039 = vpop.f32.mrb[0].mxu0
      %v2040 = vadd.f32 %v1938, %v2039
      %v2041 = vpop.f32.mrb[0].mxu0
      %v2042 = vpop.f32.mrb[0].mxu0
      %v2043 = vadd.f32 %v1943, %v2042
      %v2044 = vpop.f32.mrb[0].mxu0
      %2045 = vmatprep.mubr.bf16.mxu0 0
      %2046 = vmatmul.mubr.bf16.gmra.mrb[0].mxu0 %v1992
      %v2047 = vpop.f32.mrb[0].mxu0
      %v2048 = vadd.f32 %v1948, %v2047
      %v2049 = vpop.f32.mrb[0].mxu0
      %v2050 = vpop.f32.mrb[0].mxu0
      %v2051 = vadd.f32 %v1953, %v2050
      %v2052 = vpop.f32.mrb[0].mxu0
      %2053 = vmatprep.mubr.bf16.mxu0 0
      %2054 = vmatmul.mubr.bf16.gmra.mrb[0].mxu0 %v1995
      %v2055 = vpop.f32.mrb[0].mxu0
      %v2056 = vadd.f32 %v1958, %v2055
      %v2057 = vpop.f32.mrb[0].mxu0
      %v2058 = vpop.f32.mrb[0].mxu0
      %v2059 = vadd.f32 %v1963, %v2058
      %v2060 = vpop.f32.mrb[0].mxu0
      %2061 = vdwg.mxu0
      %v2062 = vmax.f32 %v2032, 0.0
      %v2063 = vmax.f32 %v2035, 0.0
      %v2064 = vmax.f32 %v2040, 0.0
      %v2065 = vmax.f32 %v2043, 0.0
      %v2066 = vmax.f32 %v2048, 0.0
      %v2067 = vmax.f32 %v2051, 0.0
      %v2068 = vmax.f32 %v2056, 0.0
      %v2069 = vmax.f32 %v2059, 0.0
      %v2070 = vpack.c.bf16 %v2063, %v2062
      %v2071 = vpack.c.bf16 %v2065, %v2064
      %v2072 = vpack.c.bf16 %v2067, %v2066
      %v2073 = vpack.c.bf16 %v2069, %v2068
      %v2074 = vld [vmem:[%s1 + $0x140] sm:$0xf]
      %v2075 = vld [vmem:[%s1 + $0x144] sm:$0xf]
      %v2076 = vld [vmem:[%s1 + $0x148] sm:$0xf]
      %v2077 = vld [vmem:[%s1 + $0x14c] sm:$0xf]
      %v2078 = vld [vmem:[%s1 + $0x150] sm:$0xf]
      %v2079 = vld [vmem:[%s1 + $0x154] sm:$0xf]
      %v2080 = vld [vmem:[%s1 + $0x158] sm:$0xf]
      %v2081 = vld [vmem:[%s1 + $0x15c] sm:$0xf]
      %v2082 = vld [vmem:[%s2 + $0x280] sm:$0xff]
      %v2083 = vld [vmem:[%s2 + $0x288] sm:$0xff]
      %v2084 = vld [vmem:[%s2 + $0x290] sm:$0xff]
      %v2085 = vld [vmem:[%s2 + $0x298] sm:$0xff]
      %v2086 = vld [vmem:[%s2 + $0x2a0] sm:$0xff]
      %v2087 = vld [vmem:[%s2 + $0x2a8] sm:$0xff]
      %v2088 = vld [vmem:[%s2 + $0x2b0] sm:$0xff]
      %v2089 = vld [vmem:[%s2 + $0x2b8] sm:$0xff]
      %2091 = vset.pattern.permute.xlu0 0
      %2092 = vperm.xlu0 %2091, %v2082
      %v2093 = vpop.permute.xlu0 %2092
      %2096 = vset.pattern.permute.xlu0 0
      %2097 = vperm.xlu0 %2096, %v2083
      %v2098 = vpop.permute.xlu0 %2097
      %2101 = vset.pattern.permute.xlu0 0
      %2102 = vperm.xlu0 %2101, %v2084
      %v2103 = vpop.permute.xlu0 %2102
      %2106 = vset.pattern.permute.xlu0 0
      %2107 = vperm.xlu0 %2106, %v2085
      %v2108 = vpop.permute.xlu0 %2107
      %2111 = vset.pattern.permute.xlu0 0
      %2112 = vperm.xlu0 %2111, %v2086
      %v2113 = vpop.permute.xlu0 %2112
      %2116 = vset.pattern.permute.xlu0 0
      %2117 = vperm.xlu0 %2116, %v2087
      %v2118 = vpop.permute.xlu0 %2117
      %2121 = vset.pattern.permute.xlu0 0
      %2122 = vperm.xlu0 %2121, %v2088
      %v2123 = vpop.permute.xlu0 %2122
      %2126 = vset.pattern.permute.xlu0 0
      %2127 = vperm.xlu0 %2126, %v2089
      %v2128 = vpop.permute.xlu0 %2127
      %v2138 = vunpack.c.l.b16 %v2074
      %v2139 = vunpack.c.l.b16 %v2075
      %v2140 = vunpack.c.l.b16 %v2076
      %v2141 = vunpack.c.l.b16 %v2077
      %v2142 = vunpack.c.l.b16 %v2078
      %v2143 = vunpack.c.l.b16 %v2079
      %v2144 = vunpack.c.l.b16 %v2080
      %v2145 = vunpack.c.l.b16 %v2081
      %v2146 = vpack.c.b16 %v2139, %v2138
      %v2147 = vpack.c.b16 %v2141, %v2140
      %v2148 = vpack.c.b16 %v2143, %v2142
      %v2149 = vpack.c.b16 %v2145, %v2144
      %v2151 = vsel %vm388, %v2146, 0
      %v2154 = vsel %vm388, %v2147, 0
      %v2157 = vsel %vm388, %v2148, 0
      %v2160 = vsel %vm388, %v2149, 0
      %2162 = vmatprep.subr.bf16.mxu0 0
      %2163 = vmatpush1.bf16.msra.mxu0 %v2070
      %2164 = vmatprep.subr.bf16.mxu0 0
      %2165 = vmatpush1.bf16.msra.mxu0 %v2071
      %2166 = vmatprep.subr.bf16.mxu0 0
      %2167 = vmatpush1.bf16.msra.mxu0 %v2072
      %2168 = vmatprep.subr.bf16.mxu0 0
      %2169 = vmatpush1.bf16.msra.mxu0 %v2073
      %2170 = vmatprep.subr.bf16.mxu0 0
      %2171 = vmatpush1.bf16.msra.mxu0 0
      %2172 = vmatprep.subr.bf16.mxu0 0
      %2173 = vmatpush1.bf16.msra.mxu0 0
      %2174 = vmatprep.subr.bf16.mxu0 0
      %2175 = vmatpush1.bf16.msra.mxu0 0
      %2176 = vmatprep.subr.bf16.mxu0 0
      %2177 = vmatpush1.bf16.msra.mxu0 0
      %2178 = vmatprep.subr.bf16.mxu0 0
      %2179 = vmatpush1.bf16.msra.mxu0 0
      %2180 = vmatprep.subr.bf16.mxu0 0
      %2181 = vmatpush1.bf16.msra.mxu0 0
      %2182 = vmatprep.subr.bf16.mxu0 0
      %2183 = vmatpush1.bf16.msra.mxu0 0
      %2184 = vmatprep.subr.bf16.mxu0 0
      %2185 = vmatpush1.bf16.msra.mxu0 0
      %2186 = vmatprep.subr.bf16.mxu0 0
      %2187 = vmatpush1.bf16.msra.mxu0 0
      %2188 = vmatprep.subr.bf16.mxu0 0
      %2189 = vmatpush1.bf16.msra.mxu0 0
      %2190 = vmatprep.subr.bf16.mxu0 0
      %2191 = vmatpush1.bf16.msra.mxu0 0
      %2192 = vmatprep.subr.bf16.mxu0 0
      %2193 = vmatpush1.bf16.msra.mxu0 0
      %2194 = vmatprep.mubr.bf16.mxu0 0
      %2195 = vmatmul.mubr.bf16.gmra.mrb[0].mxu0 %v2151
      %v2196 = vpop.f32.mrb[0].mxu0
      %v2197 = vadd.f32 %v2093, %v2196
      %v2198 = vpop.f32.mrb[0].mxu0
      %v2199 = vpop.f32.mrb[0].mxu0
      %v2200 = vadd.f32 %v2098, %v2199
      %v2201 = vpop.f32.mrb[0].mxu0
      %2202 = vmatprep.mubr.bf16.mxu0 0
      %2203 = vmatmul.mubr.bf16.gmra.mrb[0].mxu0 %v2154
      %v2204 = vpop.f32.mrb[0].mxu0
      %v2205 = vadd.f32 %v2103, %v2204
      %v2206 = vpop.f32.mrb[0].mxu0
      %v2207 = vpop.f32.mrb[0].mxu0
      %v2208 = vadd.f32 %v2108, %v2207
      %v2209 = vpop.f32.mrb[0].mxu0
      %2210 = vmatprep.mubr.bf16.mxu0 0
      %2211 = vmatmul.mubr.bf16.gmra.mrb[0].mxu0 %v2157
      %v2212 = vpop.f32.mrb[0].mxu0
      %v2213 = vadd.f32 %v2113, %v2212
      %v2214 = vpop.f32.mrb[0].mxu0
      %v2215 = vpop.f32.mrb[0].mxu0
      %v2216 = vadd.f32 %v2118, %v2215
      %v2217 = vpop.f32.mrb[0].mxu0
      %2218 = vmatprep.mubr.bf16.mxu0 0
      %2219 = vmatmul.mubr.bf16.gmra.mrb[0].mxu0 %v2160
      %v2220 = vpop.f32.mrb[0].mxu0
      %v2221 = vadd.f32 %v2123, %v2220
      %v2222 = vpop.f32.mrb[0].mxu0
      %v2223 = vpop.f32.mrb[0].mxu0
      %v2224 = vadd.f32 %v2128, %v2223
      %v2225 = vpop.f32.mrb[0].mxu0
      %2226 = vdwg.mxu0
      %v2227 = vmax.f32 %v2197, 0.0
      %v2228 = vmax.f32 %v2200, 0.0
      %v2229 = vmax.f32 %v2205, 0.0
      %v2230 = vmax.f32 %v2208, 0.0
      %v2231 = vmax.f32 %v2213, 0.0
      %v2232 = vmax.f32 %v2216, 0.0
      %v2233 = vmax.f32 %v2221, 0.0
      %v2234 = vmax.f32 %v2224, 0.0
      %v2235 = vpack.c.bf16 %v2228, %v2227
      %v2236 = vpack.c.bf16 %v2230, %v2229
      %v2237 = vpack.c.bf16 %v2232, %v2231
      %v2238 = vpack.c.bf16 %v2234, %v2233
      %v2239 = vld [vmem:[%s1 + $0x160] sm:$0xf]
      %v2240 = vld [vmem:[%s1 + $0x164] sm:$0xf]
      %v2241 = vld [vmem:[%s1 + $0x168] sm:$0xf]
      %v2242 = vld [vmem:[%s1 + $0x16c] sm:$0xf]
      %v2243 = vld [vmem:[%s1 + $0x170] sm:$0xf]
      %v2244 = vld [vmem:[%s1 + $0x174] sm:$0xf]
      %v2245 = vld [vmem:[%s1 + $0x178] sm:$0xf]
      %v2246 = vld [vmem:[%s1 + $0x17c] sm:$0xf]
      %v2247 = vld [vmem:[%s2 + $0x2c0] sm:$0xff]
      %v2248 = vld [vmem:[%s2 + $0x2c8] sm:$0xff]
      %v2249 = vld [vmem:[%s2 + $0x2d0] sm:$0xff]
      %v2250 = vld [vmem:[%s2 + $0x2d8] sm:$0xff]
      %v2251 = vld [vmem:[%s2 + $0x2e0] sm:$0xff]
      %v2252 = vld [vmem:[%s2 + $0x2e8] sm:$0xff]
      %v2253 = vld [vmem:[%s2 + $0x2f0] sm:$0xff]
      %v2254 = vld [vmem:[%s2 + $0x2f8] sm:$0xff]
      %2256 = vset.pattern.permute.xlu0 0
      %2257 = vperm.xlu0 %2256, %v2247
      %v2258 = vpop.permute.xlu0 %2257
      %2261 = vset.pattern.permute.xlu0 0
      %2262 = vperm.xlu0 %2261, %v2248
      %v2263 = vpop.permute.xlu0 %2262
      %2266 = vset.pattern.permute.xlu0 0
      %2267 = vperm.xlu0 %2266, %v2249
      %v2268 = vpop.permute.xlu0 %2267
      %2271 = vset.pattern.permute.xlu0 0
      %2272 = vperm.xlu0 %2271, %v2250
      %v2273 = vpop.permute.xlu0 %2272
      %2276 = vset.pattern.permute.xlu0 0
      %2277 = vperm.xlu0 %2276, %v2251
      %v2278 = vpop.permute.xlu0 %2277
      %2281 = vset.pattern.permute.xlu0 0
      %2282 = vperm.xlu0 %2281, %v2252
      %v2283 = vpop.permute.xlu0 %2282
      %2286 = vset.pattern.permute.xlu0 0
      %2287 = vperm.xlu0 %2286, %v2253
      %v2288 = vpop.permute.xlu0 %2287
      %2291 = vset.pattern.permute.xlu0 0
      %2292 = vperm.xlu0 %2291, %v2254
      %v2293 = vpop.permute.xlu0 %2292
      %v2303 = vunpack.c.l.b16 %v2239
      %v2304 = vunpack.c.l.b16 %v2240
      %v2305 = vunpack.c.l.b16 %v2241
      %v2306 = vunpack.c.l.b16 %v2242
      %v2307 = vunpack.c.l.b16 %v2243
      %v2308 = vunpack.c.l.b16 %v2244
      %v2309 = vunpack.c.l.b16 %v2245
      %v2310 = vunpack.c.l.b16 %v2246
      %v2311 = vpack.c.b16 %v2304, %v2303
      %v2312 = vpack.c.b16 %v2306, %v2305
      %v2313 = vpack.c.b16 %v2308, %v2307
      %v2314 = vpack.c.b16 %v2310, %v2309
      %v2316 = vsel %vm388, %v2311, 0
      %v2319 = vsel %vm388, %v2312, 0
      %v2322 = vsel %vm388, %v2313, 0
      %v2325 = vsel %vm388, %v2314, 0
      %2327 = vmatprep.subr.bf16.mxu0 0
      %2328 = vmatpush1.bf16.msra.mxu0 %v2235
      %2329 = vmatprep.subr.bf16.mxu0 0
      %2330 = vmatpush1.bf16.msra.mxu0 %v2236
      %2331 = vmatprep.subr.bf16.mxu0 0
      %2332 = vmatpush1.bf16.msra.mxu0 %v2237
      %2333 = vmatprep.subr.bf16.mxu0 0
      %2334 = vmatpush1.bf16.msra.mxu0 %v2238
      %2335 = vmatprep.subr.bf16.mxu0 0
      %2336 = vmatpush1.bf16.msra.mxu0 0
      %2337 = vmatprep.subr.bf16.mxu0 0
      %2338 = vmatpush1.bf16.msra.mxu0 0
      %2339 = vmatprep.subr.bf16.mxu0 0
      %2340 = vmatpush1.bf16.msra.mxu0 0
      %2341 = vmatprep.subr.bf16.mxu0 0
      %2342 = vmatpush1.bf16.msra.mxu0 0
      %2343 = vmatprep.subr.bf16.mxu0 0
      %2344 = vmatpush1.bf16.msra.mxu0 0
      %2345 = vmatprep.subr.bf16.mxu0 0
      %2346 = vmatpush1.bf16.msra.mxu0 0
      %2347 = vmatprep.subr.bf16.mxu0 0
      %2348 = vmatpush1.bf16.msra.mxu0 0
      %2349 = vmatprep.subr.bf16.mxu0 0
      %2350 = vmatpush1.bf16.msra.mxu0 0
      %2351 = vmatprep.subr.bf16.mxu0 0
      %2352 = vmatpush1.bf16.msra.mxu0 0
      %2353 = vmatprep.subr.bf16.mxu0 0
      %2354 = vmatpush1.bf16.msra.mxu0 0
      %2355 = vmatprep.subr.bf16.mxu0 0
      %2356 = vmatpush1.bf16.msra.mxu0 0
      %2357 = vmatprep.subr.bf16.mxu0 0
      %2358 = vmatpush1.bf16.msra.mxu0 0
      %2359 = vmatprep.mubr.bf16.mxu0 0
      %2360 = vmatmul.mubr.bf16.gmra.mrb[0].mxu0 %v2316
      %v2361 = vpop.f32.mrb[0].mxu0
      %v2362 = vadd.f32 %v2258, %v2361
      %v2363 = vpop.f32.mrb[0].mxu0
      %v2364 = vpop.f32.mrb[0].mxu0
      %v2365 = vadd.f32 %v2263, %v2364
      %v2366 = vpop.f32.mrb[0].mxu0
      %2367 = vmatprep.mubr.bf16.mxu0 0
      %2368 = vmatmul.mubr.bf16.gmra.mrb[0].mxu0 %v2319
      %v2369 = vpop.f32.mrb[0].mxu0
      %v2370 = vadd.f32 %v2268, %v2369
      %v2371 = vpop.f32.mrb[0].mxu0
      %v2372 = vpop.f32.mrb[0].mxu0
      %v2373 = vadd.f32 %v2273, %v2372
      %v2374 = vpop.f32.mrb[0].mxu0
      %2375 = vmatprep.mubr.bf16.mxu0 0
      %2376 = vmatmul.mubr.bf16.gmra.mrb[0].mxu0 %v2322
      %v2377 = vpop.f32.mrb[0].mxu0
      %v2378 = vadd.f32 %v2278, %v2377
      %v2379 = vpop.f32.mrb[0].mxu0
      %v2380 = vpop.f32.mrb[0].mxu0
      %v2381 = vadd.f32 %v2283, %v2380
      %v2382 = vpop.f32.mrb[0].mxu0
      %2383 = vmatprep.mubr.bf16.mxu0 0
      %2384 = vmatmul.mubr.bf16.gmra.mrb[0].mxu0 %v2325
      %v2385 = vpop.f32.mrb[0].mxu0
      %v2386 = vadd.f32 %v2288, %v2385
      %v2387 = vpop.f32.mrb[0].mxu0
      %v2388 = vpop.f32.mrb[0].mxu0
      %v2389 = vadd.f32 %v2293, %v2388
      %v2390 = vpop.f32.mrb[0].mxu0
      %2391 = vdwg.mxu0
      %v2392 = vmin.f32 %v2378, 0.0
      %v2393 = vmin.f32 %v2381, 0.0
      %v2394 = vmin.f32 %v2386, 0.0
      %v2395 = vmin.f32 %v2389, 0.0
      %v2396 = vand.u32 2147483647, %v2378
      %v2397 = vand.u32 2147483647, %v2381
      %v2398 = vand.u32 2147483647, %v2386
      %v2399 = vand.u32 2147483647, %v2389
      %v2400 = vsub.f32 0.0, %v2396
      %v2401 = vsub.f32 0.0, %v2397
      %v2402 = vsub.f32 0.0, %v2398
      %v2403 = vsub.f32 0.0, %v2399
      %v2404 = vmul.f32 %v2400, 1.442695
      %v2405 = vpow.pop %v2404
      %v2406 = vmul.f32 %v2401, 1.442695
      %v2407 = vpow.pop %v2406
      %v2408 = vmul.f32 %v2402, 1.442695
      %v2409 = vpow.pop %v2408
      %v2410 = vmul.f32 %v2403, 1.442695
      %v2411 = vpow.pop %v2410
      %v2412 = vadd.f32 %v2405, 1.0
      %v2413 = vlog2.pop %v2412
      %v2414 = vmul.f32 %v2413, 0.6931472
      %v2415 = vmul.f32 -0.5, %v2405
      %v2416 = vadd.f32 %v2415, 1.0
      %v2417 = vmul.f32 %v2416, %v2405
      %v2418 = vand.u32 2147483647, %v2405
      %vm2419 = vcmp.lt.f32.partialorder %v2418, 0.0004427343
      %v2420 = vsel %vm2419, %v2417, %v2414
      %v2421 = vadd.f32 %v2407, 1.0
      %v2422 = vlog2.pop %v2421
      %v2423 = vmul.f32 %v2422, 0.6931472
      %v2424 = vmul.f32 -0.5, %v2407
      %v2425 = vadd.f32 %v2424, 1.0
      %v2426 = vmul.f32 %v2425, %v2407
      %v2427 = vand.u32 2147483647, %v2407
      %vm2428 = vcmp.lt.f32.partialorder %v2427, 0.0004427343
      %v2429 = vsel %vm2428, %v2426, %v2423
      %v2430 = vadd.f32 %v2409, 1.0
      %v2431 = vlog2.pop %v2430
      %v2432 = vmul.f32 %v2431, 0.6931472
      %v2433 = vmul.f32 -0.5, %v2409
      %v2434 = vadd.f32 %v2433, 1.0
      %v2435 = vmul.f32 %v2434, %v2409
      %v2436 = vand.u32 2147483647, %v2409
      %vm2437 = vcmp.lt.f32.partialorder %v2436, 0.0004427343
      %v2438 = vsel %vm2437, %v2435, %v2432
      %v2439 = vadd.f32 %v2411, 1.0
      %v2440 = vlog2.pop %v2439
      %v2441 = vmul.f32 %v2440, 0.6931472
      %v2442 = vmul.f32 -0.5, %v2411
      %v2443 = vadd.f32 %v2442, 1.0
      %v2444 = vmul.f32 %v2443, %v2411
      %v2445 = vand.u32 2147483647, %v2411
      %vm2446 = vcmp.lt.f32.partialorder %v2445, 0.0004427343
      %v2447 = vsel %vm2446, %v2444, %v2441
      %v2448 = vsub.f32 %v2392, %v2420
      %v2449 = vsub.f32 %v2393, %v2429
      %v2450 = vsub.f32 %v2394, %v2438
      %v2451 = vsub.f32 %v2395, %v2447
      %v2452 = vadd.f32 %v1893, %v2362
      %v2453 = vadd.f32 %v1896, %v2365
      %v2454 = vadd.f32 %v1901, %v2370
      %v2455 = vadd.f32 %v1904, %v2373
      %v2456 = vmul.f32 %v2448, 1.442695
      %v2457 = vpow.pop %v2456
      %v2458 = vmul.f32 %v2449, 1.442695
      %v2459 = vpow.pop %v2458
      %v2460 = vmul.f32 %v2450, 1.442695
      %v2461 = vpow.pop %v2460
      %v2462 = vmul.f32 %v2451, 1.442695
      %v2463 = vpow.pop %v2462
      %v2464 = vmul.f32 %v2452, %v2457
      %v2465 = vmul.f32 %v2453, %v2459
      %v2466 = vmul.f32 %v2454, %v2461
      %v2467 = vmul.f32 %v2455, %v2463
      %v2468 = vadd.f32 %v1748, %v2448
      %v2469 = vadd.f32 %v1749, %v2449
      %v2470 = vadd.f32 %v1750, %v2450
      %v2471 = vadd.f32 %v1751, %v2451
      %v2472 = vpack.c.bf16 %v2465, %v2464
      %v2473 = vpack.c.bf16 %v2467, %v2466
      %v2474 = vld [vmem:[%s1 + $0x180] sm:$0xf]
      %v2475 = vld [vmem:[%s1 + $0x184] sm:$0xf]
      %v2476 = vld [vmem:[%s1 + $0x188] sm:$0xf]
      %v2477 = vld [vmem:[%s1 + $0x18c] sm:$0xf]
      %v2478 = vld [vmem:[%s1 + $0x190] sm:$0xf]
      %v2479 = vld [vmem:[%s1 + $0x194] sm:$0xf]
      %v2480 = vld [vmem:[%s1 + $0x198] sm:$0xf]
      %v2481 = vld [vmem:[%s1 + $0x19c] sm:$0xf]
      %v2482 = vld [vmem:[%s2 + $0x300] sm:$0xff]
      %v2483 = vld [vmem:[%s2 + $0x308] sm:$0xff]
      %v2484 = vld [vmem:[%s2 + $0x310] sm:$0xff]
      %v2485 = vld [vmem:[%s2 + $0x318] sm:$0xff]
      %v2486 = vld [vmem:[%s2 + $0x320] sm:$0xff]
      %v2487 = vld [vmem:[%s2 + $0x328] sm:$0xff]
      %v2488 = vld [vmem:[%s2 + $0x330] sm:$0xff]
      %v2489 = vld [vmem:[%s2 + $0x338] sm:$0xff]
      %2491 = vset.pattern.permute.xlu0 0
      %2492 = vperm.xlu0 %2491, %v2482
      %v2493 = vpop.permute.xlu0 %2492
      %2496 = vset.pattern.permute.xlu0 0
      %2497 = vperm.xlu0 %2496, %v2483
      %v2498 = vpop.permute.xlu0 %2497
      %2501 = vset.pattern.permute.xlu0 0
      %2502 = vperm.xlu0 %2501, %v2484
      %v2503 = vpop.permute.xlu0 %2502
      %2506 = vset.pattern.permute.xlu0 0
      %2507 = vperm.xlu0 %2506, %v2485
      %v2508 = vpop.permute.xlu0 %2507
      %2511 = vset.pattern.permute.xlu0 0
      %2512 = vperm.xlu0 %2511, %v2486
      %v2513 = vpop.permute.xlu0 %2512
      %2516 = vset.pattern.permute.xlu0 0
      %2517 = vperm.xlu0 %2516, %v2487
      %v2518 = vpop.permute.xlu0 %2517
      %2521 = vset.pattern.permute.xlu0 0
      %2522 = vperm.xlu0 %2521, %v2488
      %v2523 = vpop.permute.xlu0 %2522
      %2526 = vset.pattern.permute.xlu0 0
      %2527 = vperm.xlu0 %2526, %v2489
      %v2528 = vpop.permute.xlu0 %2527
      %v2538 = vunpack.c.l.b16 %v2474
      %v2539 = vunpack.c.l.b16 %v2475
      %v2540 = vunpack.c.l.b16 %v2476
      %v2541 = vunpack.c.l.b16 %v2477
      %v2542 = vunpack.c.l.b16 %v2478
      %v2543 = vunpack.c.l.b16 %v2479
      %v2544 = vunpack.c.l.b16 %v2480
      %v2545 = vunpack.c.l.b16 %v2481
      %v2546 = vpack.c.b16 %v2539, %v2538
      %v2547 = vpack.c.b16 %v2541, %v2540
      %v2548 = vpack.c.b16 %v2543, %v2542
      %v2549 = vpack.c.b16 %v2545, %v2544
      %v2551 = vsel %vm388, %v2546, 0
      %v2554 = vsel %vm388, %v2547, 0
      %v2557 = vsel %vm388, %v2548, 0
      %v2560 = vsel %vm388, %v2549, 0
      %2562 = vmatprep.subr.bf16.mxu0 0
      %2563 = vmatpush1.bf16.msra.mxu0 %v1907
      %2564 = vmatprep.subr.bf16.mxu0 0
      %2565 = vmatpush1.bf16.msra.mxu0 %v1908
      %2566 = vmatprep.subr.bf16.mxu0 0
      %2567 = vmatpush1.bf16.msra.mxu0 %v2472
      %2568 = vmatprep.subr.bf16.mxu0 0
      %2569 = vmatpush1.bf16.msra.mxu0 %v2473
      %2570 = vmatprep.subr.bf16.mxu0 0
      %2571 = vmatpush1.bf16.msra.mxu0 0
      %2572 = vmatprep.subr.bf16.mxu0 0
      %2573 = vmatpush1.bf16.msra.mxu0 0
      %2574 = vmatprep.subr.bf16.mxu0 0
      %2575 = vmatpush1.bf16.msra.mxu0 0
      %2576 = vmatprep.subr.bf16.mxu0 0
      %2577 = vmatpush1.bf16.msra.mxu0 0
      %2578 = vmatprep.subr.bf16.mxu0 0
      %2579 = vmatpush1.bf16.msra.mxu0 0
      %2580 = vmatprep.subr.bf16.mxu0 0
      %2581 = vmatpush1.bf16.msra.mxu0 0
      %2582 = vmatprep.subr.bf16.mxu0 0
      %2583 = vmatpush1.bf16.msra.mxu0 0
      %2584 = vmatprep.subr.bf16.mxu0 0
      %2585 = vmatpush1.bf16.msra.mxu0 0
      %2586 = vmatprep.subr.bf16.mxu0 0
      %2587 = vmatpush1.bf16.msra.mxu0 0
      %2588 = vmatprep.subr.bf16.mxu0 0
      %2589 = vmatpush1.bf16.msra.mxu0 0
      %2590 = vmatprep.subr.bf16.mxu0 0
      %2591 = vmatpush1.bf16.msra.mxu0 0
      %2592 = vmatprep.subr.bf16.mxu0 0
      %2593 = vmatpush1.bf16.msra.mxu0 0
      %2594 = vmatprep.mubr.bf16.mxu0 0
      %2595 = vmatmul.mubr.bf16.gmra.mrb[0].mxu0 %v2551
      %v2596 = vpop.f32.mrb[0].mxu0
      %v2597 = vadd.f32 %v2493, %v2596
      %v2598 = vpop.f32.mrb[0].mxu0
      %v2599 = vpop.f32.mrb[0].mxu0
      %v2600 = vadd.f32 %v2498, %v2599
      %v2601 = vpop.f32.mrb[0].mxu0
      %2602 = vmatprep.mubr.bf16.mxu0 0
      %2603 = vmatmul.mubr.bf16.gmra.mrb[0].mxu0 %v2554
      %v2604 = vpop.f32.mrb[0].mxu0
      %v2605 = vadd.f32 %v2503, %v2604
      %v2606 = vpop.f32.mrb[0].mxu0
      %v2607 = vpop.f32.mrb[0].mxu0
      %v2608 = vadd.f32 %v2508, %v2607
      %v2609 = vpop.f32.mrb[0].mxu0
      %2610 = vmatprep.mubr.bf16.mxu0 0
      %2611 = vmatmul.mubr.bf16.gmra.mrb[0].mxu0 %v2557
      %v2612 = vpop.f32.mrb[0].mxu0
      %v2613 = vadd.f32 %v2513, %v2612
      %v2614 = vpop.f32.mrb[0].mxu0
      %v2615 = vpop.f32.mrb[0].mxu0
      %v2616 = vadd.f32 %v2518, %v2615
      %v2617 = vpop.f32.mrb[0].mxu0
      %2618 = vmatprep.mubr.bf16.mxu0 0
      %2619 = vmatmul.mubr.bf16.gmra.mrb[0].mxu0 %v2560
      %v2620 = vpop.f32.mrb[0].mxu0
      %v2621 = vadd.f32 %v2523, %v2620
      %v2622 = vpop.f32.mrb[0].mxu0
      %v2623 = vpop.f32.mrb[0].mxu0
      %v2624 = vadd.f32 %v2528, %v2623
      %v2625 = vpop.f32.mrb[0].mxu0
      %2626 = vdwg.mxu0
      %v2627 = vpack.c.bf16 %v2600, %v2597
      %v2628 = vpack.c.bf16 %v2608, %v2605
      %v2629 = vld [vmem:[%s1 + $0x1a0] sm:$0xf]
      %v2630 = vld [vmem:[%s1 + $0x1a4] sm:$0xf]
      %v2631 = vld [vmem:[%s1 + $0x1a8] sm:$0xf]
      %v2632 = vld [vmem:[%s1 + $0x1ac] sm:$0xf]
      %v2633 = vld [vmem:[%s1 + $0x1b0] sm:$0xf]
      %v2634 = vld [vmem:[%s1 + $0x1b4] sm:$0xf]
      %v2635 = vld [vmem:[%s1 + $0x1b8] sm:$0xf]
      %v2636 = vld [vmem:[%s1 + $0x1bc] sm:$0xf]
      %v2637 = vld [vmem:[%s2 + $0x340] sm:$0xff]
      %v2638 = vld [vmem:[%s2 + $0x348] sm:$0xff]
      %v2639 = vld [vmem:[%s2 + $0x350] sm:$0xff]
      %v2640 = vld [vmem:[%s2 + $0x358] sm:$0xff]
      %v2641 = vld [vmem:[%s2 + $0x360] sm:$0xff]
      %v2642 = vld [vmem:[%s2 + $0x368] sm:$0xff]
      %v2643 = vld [vmem:[%s2 + $0x370] sm:$0xff]
      %v2644 = vld [vmem:[%s2 + $0x378] sm:$0xff]
      %2646 = vset.pattern.permute.xlu0 0
      %2647 = vperm.xlu0 %2646, %v2637
      %v2648 = vpop.permute.xlu0 %2647
      %2651 = vset.pattern.permute.xlu0 0
      %2652 = vperm.xlu0 %2651, %v2638
      %v2653 = vpop.permute.xlu0 %2652
      %2656 = vset.pattern.permute.xlu0 0
      %2657 = vperm.xlu0 %2656, %v2639
      %v2658 = vpop.permute.xlu0 %2657
      %2661 = vset.pattern.permute.xlu0 0
      %2662 = vperm.xlu0 %2661, %v2640
      %v2663 = vpop.permute.xlu0 %2662
      %2666 = vset.pattern.permute.xlu0 0
      %2667 = vperm.xlu0 %2666, %v2641
      %v2668 = vpop.permute.xlu0 %2667
      %2671 = vset.pattern.permute.xlu0 0
      %2672 = vperm.xlu0 %2671, %v2642
      %v2673 = vpop.permute.xlu0 %2672
      %2676 = vset.pattern.permute.xlu0 0
      %2677 = vperm.xlu0 %2676, %v2643
      %v2678 = vpop.permute.xlu0 %2677
      %2681 = vset.pattern.permute.xlu0 0
      %2682 = vperm.xlu0 %2681, %v2644
      %v2683 = vpop.permute.xlu0 %2682
      %v2693 = vunpack.c.l.b16 %v2629
      %v2694 = vunpack.c.l.b16 %v2630
      %v2695 = vunpack.c.l.b16 %v2631
      %v2696 = vunpack.c.l.b16 %v2632
      %v2697 = vunpack.c.l.b16 %v2633
      %v2698 = vunpack.c.l.b16 %v2634
      %v2699 = vunpack.c.l.b16 %v2635
      %v2700 = vunpack.c.l.b16 %v2636
      %v2701 = vpack.c.b16 %v2694, %v2693
      %v2702 = vpack.c.b16 %v2696, %v2695
      %v2703 = vpack.c.b16 %v2698, %v2697
      %v2704 = vpack.c.b16 %v2700, %v2699
      %v2706 = vsel %vm544, %v2701, 0
      %v2709 = vsel %vm544, %v2702, 0
      %v2712 = vsel %vm544, %v2703, 0
      %v2715 = vsel %vm544, %v2704, 0
      %2717 = vmatprep.subr.bf16.mxu0 0
      %2718 = vmatpush1.bf16.msra.mxu0 %v2627
      %2719 = vmatprep.subr.bf16.mxu0 0
      %2720 = vmatpush1.bf16.msra.mxu0 %v2628
      %2721 = vmatprep.subr.bf16.mxu0 0
      %2722 = vmatpush1.bf16.msra.mxu0 0
      %2723 = vmatprep.subr.bf16.mxu0 0
      %2724 = vmatpush1.bf16.msra.mxu0 0
      %2725 = vmatprep.subr.bf16.mxu0 0
      %2726 = vmatpush1.bf16.msra.mxu0 0
      %2727 = vmatprep.subr.bf16.mxu0 0
      %2728 = vmatpush1.bf16.msra.mxu0 0
      %2729 = vmatprep.subr.bf16.mxu0 0
      %2730 = vmatpush1.bf16.msra.mxu0 0
      %2731 = vmatprep.subr.bf16.mxu0 0
      %2732 = vmatpush1.bf16.msra.mxu0 0
      %2733 = vmatprep.subr.bf16.mxu0 0
      %2734 = vmatpush1.bf16.msra.mxu0 0
      %2735 = vmatprep.subr.bf16.mxu0 0
      %2736 = vmatpush1.bf16.msra.mxu0 0
      %2737 = vmatprep.subr.bf16.mxu0 0
      %2738 = vmatpush1.bf16.msra.mxu0 0
      %2739 = vmatprep.subr.bf16.mxu0 0
      %2740 = vmatpush1.bf16.msra.mxu0 0
      %2741 = vmatprep.subr.bf16.mxu0 0
      %2742 = vmatpush1.bf16.msra.mxu0 0
      %2743 = vmatprep.subr.bf16.mxu0 0
      %2744 = vmatpush1.bf16.msra.mxu0 0
      %2745 = vmatprep.subr.bf16.mxu0 0
      %2746 = vmatpush1.bf16.msra.mxu0 0
      %2747 = vmatprep.subr.bf16.mxu0 0
      %2748 = vmatpush1.bf16.msra.mxu0 0
      %2749 = vmatprep.mubr.bf16.mxu0 0
      %2750 = vmatmul.mubr.bf16.gmra.mrb[0].mxu0 %v2706
      %v2751 = vpop.f32.mrb[0].mxu0
      %v2752 = vadd.f32 %v2648, %v2751
      %v2753 = vpop.f32.mrb[0].mxu0
      %v2754 = vpop.f32.mrb[0].mxu0
      %v2755 = vadd.f32 %v2653, %v2754
      %v2756 = vpop.f32.mrb[0].mxu0
      %2757 = vmatprep.mubr.bf16.mxu0 0
      %2758 = vmatmul.mubr.bf16.gmra.mrb[0].mxu0 %v2709
      %v2759 = vpop.f32.mrb[0].mxu0
      %v2760 = vadd.f32 %v2658, %v2759
      %v2761 = vpop.f32.mrb[0].mxu0
      %v2762 = vpop.f32.mrb[0].mxu0
      %v2763 = vadd.f32 %v2663, %v2762
      %v2764 = vpop.f32.mrb[0].mxu0
      %2765 = vmatprep.mubr.bf16.mxu0 0
      %2766 = vmatmul.mubr.bf16.gmra.mrb[0].mxu0 %v2712
      %v2767 = vpop.f32.mrb[0].mxu0
      %v2768 = vadd.f32 %v2668, %v2767
      %v2769 = vpop.f32.mrb[0].mxu0
      %v2770 = vpop.f32.mrb[0].mxu0
      %v2771 = vadd.f32 %v2673, %v2770
      %v2772 = vpop.f32.mrb[0].mxu0
      %2773 = vmatprep.mubr.bf16.mxu0 0
      %2774 = vmatmul.mubr.bf16.gmra.mrb[0].mxu0 %v2715
      %v2775 = vpop.f32.mrb[0].mxu0
      %v2776 = vadd.f32 %v2678, %v2775
      %v2777 = vpop.f32.mrb[0].mxu0
      %v2778 = vpop.f32.mrb[0].mxu0
      %v2779 = vadd.f32 %v2683, %v2778
      %v2780 = vpop.f32.mrb[0].mxu0
      %2781 = vdwg.mxu0
      %v2782 = vmax.f32 %v2752, 0.0
      %v2783 = vmax.f32 %v2755, 0.0
      %v2784 = vmax.f32 %v2760, 0.0
      %v2785 = vmax.f32 %v2763, 0.0
      %v2786 = vmax.f32 %v2768, 0.0
      %v2787 = vmax.f32 %v2771, 0.0
      %v2788 = vmax.f32 %v2776, 0.0
      %v2789 = vmax.f32 %v2779, 0.0
      %v2790 = vpack.c.bf16 %v2783, %v2782
      %v2791 = vpack.c.bf16 %v2785, %v2784
      %v2792 = vpack.c.bf16 %v2787, %v2786
      %v2793 = vpack.c.bf16 %v2789, %v2788
      %v2794 = vld [vmem:[%s1 + $0x1c0] sm:$0xf]
      %v2795 = vld [vmem:[%s1 + $0x1c4] sm:$0xf]
      %v2796 = vld [vmem:[%s1 + $0x1c8] sm:$0xf]
      %v2797 = vld [vmem:[%s1 + $0x1cc] sm:$0xf]
      %v2798 = vld [vmem:[%s1 + $0x1d0] sm:$0xf]
      %v2799 = vld [vmem:[%s1 + $0x1d4] sm:$0xf]
      %v2800 = vld [vmem:[%s1 + $0x1d8] sm:$0xf]
      %v2801 = vld [vmem:[%s1 + $0x1dc] sm:$0xf]
      %v2802 = vld [vmem:[%s2 + $0x380] sm:$0xff]
      %v2803 = vld [vmem:[%s2 + $0x388] sm:$0xff]
      %v2804 = vld [vmem:[%s2 + $0x390] sm:$0xff]
      %v2805 = vld [vmem:[%s2 + $0x398] sm:$0xff]
      %v2806 = vld [vmem:[%s2 + $0x3a0] sm:$0xff]
      %v2807 = vld [vmem:[%s2 + $0x3a8] sm:$0xff]
      %v2808 = vld [vmem:[%s2 + $0x3b0] sm:$0xff]
      %v2809 = vld [vmem:[%s2 + $0x3b8] sm:$0xff]
      %2811 = vset.pattern.permute.xlu0 0
      %2812 = vperm.xlu0 %2811, %v2802
      %v2813 = vpop.permute.xlu0 %2812
      %2816 = vset.pattern.permute.xlu0 0
      %2817 = vperm.xlu0 %2816, %v2803
      %v2818 = vpop.permute.xlu0 %2817
      %2821 = vset.pattern.permute.xlu0 0
      %2822 = vperm.xlu0 %2821, %v2804
      %v2823 = vpop.permute.xlu0 %2822
      %2826 = vset.pattern.permute.xlu0 0
      %2827 = vperm.xlu0 %2826, %v2805
      %v2828 = vpop.permute.xlu0 %2827
      %2831 = vset.pattern.permute.xlu0 0
      %2832 = vperm.xlu0 %2831, %v2806
      %v2833 = vpop.permute.xlu0 %2832
      %2836 = vset.pattern.permute.xlu0 0
      %2837 = vperm.xlu0 %2836, %v2807
      %v2838 = vpop.permute.xlu0 %2837
      %2841 = vset.pattern.permute.xlu0 0
      %2842 = vperm.xlu0 %2841, %v2808
      %v2843 = vpop.permute.xlu0 %2842
      %2846 = vset.pattern.permute.xlu0 0
      %2847 = vperm.xlu0 %2846, %v2809
      %v2848 = vpop.permute.xlu0 %2847
      %v2858 = vunpack.c.l.b16 %v2794
      %v2859 = vunpack.c.l.b16 %v2795
      %v2860 = vunpack.c.l.b16 %v2796
      %v2861 = vunpack.c.l.b16 %v2797
      %v2862 = vunpack.c.l.b16 %v2798
      %v2863 = vunpack.c.l.b16 %v2799
      %v2864 = vunpack.c.l.b16 %v2800
      %v2865 = vunpack.c.l.b16 %v2801
      %v2866 = vpack.c.b16 %v2859, %v2858
      %v2867 = vpack.c.b16 %v2861, %v2860
      %v2868 = vpack.c.b16 %v2863, %v2862
      %v2869 = vpack.c.b16 %v2865, %v2864
      %v2871 = vsel %vm388, %v2866, 0
      %v2874 = vsel %vm388, %v2867, 0
      %v2877 = vsel %vm388, %v2868, 0
      %v2880 = vsel %vm388, %v2869, 0
      %2882 = vmatprep.subr.bf16.mxu0 0
      %2883 = vmatpush1.bf16.msra.mxu0 %v2790
      %2884 = vmatprep.subr.bf16.mxu0 0
      %2885 = vmatpush1.bf16.msra.mxu0 %v2791
      %2886 = vmatprep.subr.bf16.mxu0 0
      %2887 = vmatpush1.bf16.msra.mxu0 %v2792
      %2888 = vmatprep.subr.bf16.mxu0 0
      %2889 = vmatpush1.bf16.msra.mxu0 %v2793
      %2890 = vmatprep.subr.bf16.mxu0 0
      %2891 = vmatpush1.bf16.msra.mxu0 0
      %2892 = vmatprep.subr.bf16.mxu0 0
      %2893 = vmatpush1.bf16.msra.mxu0 0
      %2894 = vmatprep.subr.bf16.mxu0 0
      %2895 = vmatpush1.bf16.msra.mxu0 0
      %2896 = vmatprep.subr.bf16.mxu0 0
      %2897 = vmatpush1.bf16.msra.mxu0 0
      %2898 = vmatprep.subr.bf16.mxu0 0
      %2899 = vmatpush1.bf16.msra.mxu0 0
      %2900 = vmatprep.subr.bf16.mxu0 0
      %2901 = vmatpush1.bf16.msra.mxu0 0
      %2902 = vmatprep.subr.bf16.mxu0 0
      %2903 = vmatpush1.bf16.msra.mxu0 0
      %2904 = vmatprep.subr.bf16.mxu0 0
      %2905 = vmatpush1.bf16.msra.mxu0 0
      %2906 = vmatprep.subr.bf16.mxu0 0
      %2907 = vmatpush1.bf16.msra.mxu0 0
      %2908 = vmatprep.subr.bf16.mxu0 0
      %2909 = vmatpush1.bf16.msra.mxu0 0
      %2910 = vmatprep.subr.bf16.mxu0 0
      %2911 = vmatpush1.bf16.msra.mxu0 0
      %2912 = vmatprep.subr.bf16.mxu0 0
      %2913 = vmatpush1.bf16.msra.mxu0 0
      %2914 = vmatprep.mubr.bf16.mxu0 0
      %2915 = vmatmul.mubr.bf16.gmra.mrb[0].mxu0 %v2871
      %v2916 = vpop.f32.mrb[0].mxu0
      %v2917 = vadd.f32 %v2813, %v2916
      %v2918 = vpop.f32.mrb[0].mxu0
      %v2919 = vpop.f32.mrb[0].mxu0
      %v2920 = vadd.f32 %v2818, %v2919
      %v2921 = vpop.f32.mrb[0].mxu0
      %2922 = vmatprep.mubr.bf16.mxu0 0
      %2923 = vmatmul.mubr.bf16.gmra.mrb[0].mxu0 %v2874
      %v2924 = vpop.f32.mrb[0].mxu0
      %v2925 = vadd.f32 %v2823, %v2924
      %v2926 = vpop.f32.mrb[0].mxu0
      %v2927 = vpop.f32.mrb[0].mxu0
      %v2928 = vadd.f32 %v2828, %v2927
      %v2929 = vpop.f32.mrb[0].mxu0
      %2930 = vmatprep.mubr.bf16.mxu0 0
      %2931 = vmatmul.mubr.bf16.gmra.mrb[0].mxu0 %v2877
      %v2932 = vpop.f32.mrb[0].mxu0
      %v2933 = vadd.f32 %v2833, %v2932
      %v2934 = vpop.f32.mrb[0].mxu0
      %v2935 = vpop.f32.mrb[0].mxu0
      %v2936 = vadd.f32 %v2838, %v2935
      %v2937 = vpop.f32.mrb[0].mxu0
      %2938 = vmatprep.mubr.bf16.mxu0 0
      %2939 = vmatmul.mubr.bf16.gmra.mrb[0].mxu0 %v2880
      %v2940 = vpop.f32.mrb[0].mxu0
      %v2941 = vadd.f32 %v2843, %v2940
      %v2942 = vpop.f32.mrb[0].mxu0
      %v2943 = vpop.f32.mrb[0].mxu0
      %v2944 = vadd.f32 %v2848, %v2943
      %v2945 = vpop.f32.mrb[0].mxu0
      %2946 = vdwg.mxu0
      %v2947 = vmax.f32 %v2917, 0.0
      %v2948 = vmax.f32 %v2920, 0.0
      %v2949 = vmax.f32 %v2925, 0.0
      %v2950 = vmax.f32 %v2928, 0.0
      %v2951 = vmax.f32 %v2933, 0.0
      %v2952 = vmax.f32 %v2936, 0.0
      %v2953 = vmax.f32 %v2941, 0.0
      %v2954 = vmax.f32 %v2944, 0.0
      %v2955 = vpack.c.bf16 %v2948, %v2947
      %v2956 = vpack.c.bf16 %v2950, %v2949
      %v2957 = vpack.c.bf16 %v2952, %v2951
      %v2958 = vpack.c.bf16 %v2954, %v2953
      %v2959 = vld [vmem:[%s1 + $0x1e0] sm:$0xf]
      %v2960 = vld [vmem:[%s1 + $0x1e4] sm:$0xf]
      %v2961 = vld [vmem:[%s1 + $0x1e8] sm:$0xf]
      %v2962 = vld [vmem:[%s1 + $0x1ec] sm:$0xf]
      %v2963 = vld [vmem:[%s1 + $0x1f0] sm:$0xf]
      %v2964 = vld [vmem:[%s1 + $0x1f4] sm:$0xf]
      %v2965 = vld [vmem:[%s1 + $0x1f8] sm:$0xf]
      %v2966 = vld [vmem:[%s1 + $0x1fc] sm:$0xf]
      %v2967 = vld [vmem:[%s2 + $0x3c0] sm:$0xff]
      %v2968 = vld [vmem:[%s2 + $0x3c8] sm:$0xff]
      %v2969 = vld [vmem:[%s2 + $0x3d0] sm:$0xff]
      %v2970 = vld [vmem:[%s2 + $0x3d8] sm:$0xff]
      %v2971 = vld [vmem:[%s2 + $0x3e0] sm:$0xff]
      %v2972 = vld [vmem:[%s2 + $0x3e8] sm:$0xff]
      %v2973 = vld [vmem:[%s2 + $0x3f0] sm:$0xff]
      %v2974 = vld [vmem:[%s2 + $0x3f8] sm:$0xff]
      %2976 = vset.pattern.permute.xlu0 0
      %2977 = vperm.xlu0 %2976, %v2967
      %v2978 = vpop.permute.xlu0 %2977
      %2981 = vset.pattern.permute.xlu0 0
      %2982 = vperm.xlu0 %2981, %v2968
      %v2983 = vpop.permute.xlu0 %2982
      %2986 = vset.pattern.permute.xlu0 0
      %2987 = vperm.xlu0 %2986, %v2969
      %v2988 = vpop.permute.xlu0 %2987
      %2991 = vset.pattern.permute.xlu0 0
      %2992 = vperm.xlu0 %2991, %v2970
      %v2993 = vpop.permute.xlu0 %2992
      %2996 = vset.pattern.permute.xlu0 0
      %2997 = vperm.xlu0 %2996, %v2971
      %v2998 = vpop.permute.xlu0 %2997
      %3001 = vset.pattern.permute.xlu0 0
      %3002 = vperm.xlu0 %3001, %v2972
      %v3003 = vpop.permute.xlu0 %3002
      %3006 = vset.pattern.permute.xlu0 0
      %3007 = vperm.xlu0 %3006, %v2973
      %v3008 = vpop.permute.xlu0 %3007
      %3011 = vset.pattern.permute.xlu0 0
      %3012 = vperm.xlu0 %3011, %v2974
      %v3013 = vpop.permute.xlu0 %3012
      %v3023 = vunpack.c.l.b16 %v2959
      %v3024 = vunpack.c.l.b16 %v2960
      %v3025 = vunpack.c.l.b16 %v2961
      %v3026 = vunpack.c.l.b16 %v2962
      %v3027 = vunpack.c.l.b16 %v2963
      %v3028 = vunpack.c.l.b16 %v2964
      %v3029 = vunpack.c.l.b16 %v2965
      %v3030 = vunpack.c.l.b16 %v2966
      %v3031 = vpack.c.b16 %v3024, %v3023
      %v3032 = vpack.c.b16 %v3026, %v3025
      %v3033 = vpack.c.b16 %v3028, %v3027
      %v3034 = vpack.c.b16 %v3030, %v3029
      %v3036 = vsel %vm388, %v3031, 0
      %v3039 = vsel %vm388, %v3032, 0
      %v3042 = vsel %vm388, %v3033, 0
      %v3045 = vsel %vm388, %v3034, 0
      %3047 = vmatprep.subr.bf16.mxu0 0
      %3048 = vmatpush1.bf16.msra.mxu0 %v2955
      %3049 = vmatprep.subr.bf16.mxu0 0
      %3050 = vmatpush1.bf16.msra.mxu0 %v2956
      %3051 = vmatprep.subr.bf16.mxu0 0
      %3052 = vmatpush1.bf16.msra.mxu0 %v2957
      %3053 = vmatprep.subr.bf16.mxu0 0
      %3054 = vmatpush1.bf16.msra.mxu0 %v2958
      %3055 = vmatprep.subr.bf16.mxu0 0
      %3056 = vmatpush1.bf16.msra.mxu0 0
      %3057 = vmatprep.subr.bf16.mxu0 0
      %3058 = vmatpush1.bf16.msra.mxu0 0
      %3059 = vmatprep.subr.bf16.mxu0 0
      %3060 = vmatpush1.bf16.msra.mxu0 0
      %3061 = vmatprep.subr.bf16.mxu0 0
      %3062 = vmatpush1.bf16.msra.mxu0 0
      %3063 = vmatprep.subr.bf16.mxu0 0
      %3064 = vmatpush1.bf16.msra.mxu0 0
      %3065 = vmatprep.subr.bf16.mxu0 0
      %3066 = vmatpush1.bf16.msra.mxu0 0
      %3067 = vmatprep.subr.bf16.mxu0 0
      %3068 = vmatpush1.bf16.msra.mxu0 0
      %3069 = vmatprep.subr.bf16.mxu0 0
      %3070 = vmatpush1.bf16.msra.mxu0 0
      %3071 = vmatprep.subr.bf16.mxu0 0
      %3072 = vmatpush1.bf16.msra.mxu0 0
      %3073 = vmatprep.subr.bf16.mxu0 0
      %3074 = vmatpush1.bf16.msra.mxu0 0
      %3075 = vmatprep.subr.bf16.mxu0 0
      %3076 = vmatpush1.bf16.msra.mxu0 0
      %3077 = vmatprep.subr.bf16.mxu0 0
      %3078 = vmatpush1.bf16.msra.mxu0 0
      %3079 = vmatprep.mubr.bf16.mxu0 0
      %3080 = vmatmul.mubr.bf16.gmra.mrb[0].mxu0 %v3036
      %v3081 = vpop.f32.mrb[0].mxu0
      %v3082 = vadd.f32 %v2978, %v3081
      %v3083 = vpop.f32.mrb[0].mxu0
      %v3084 = vpop.f32.mrb[0].mxu0
      %v3085 = vadd.f32 %v2983, %v3084
      %v3086 = vpop.f32.mrb[0].mxu0
      %3087 = vmatprep.mubr.bf16.mxu0 0
      %3088 = vmatmul.mubr.bf16.gmra.mrb[0].mxu0 %v3039
      %v3089 = vpop.f32.mrb[0].mxu0
      %v3090 = vadd.f32 %v2988, %v3089
      %v3091 = vpop.f32.mrb[0].mxu0
      %v3092 = vpop.f32.mrb[0].mxu0
      %v3093 = vadd.f32 %v2993, %v3092
      %v3094 = vpop.f32.mrb[0].mxu0
      %3095 = vmatprep.mubr.bf16.mxu0 0
      %3096 = vmatmul.mubr.bf16.gmra.mrb[0].mxu0 %v3042
      %v3097 = vpop.f32.mrb[0].mxu0
      %v3098 = vadd.f32 %v2998, %v3097
      %v3099 = vpop.f32.mrb[0].mxu0
      %v3100 = vpop.f32.mrb[0].mxu0
      %v3101 = vadd.f32 %v3003, %v3100
      %v3102 = vpop.f32.mrb[0].mxu0
      %3103 = vmatprep.mubr.bf16.mxu0 0
      %3104 = vmatmul.mubr.bf16.gmra.mrb[0].mxu0 %v3045
      %v3105 = vpop.f32.mrb[0].mxu0
      %v3106 = vadd.f32 %v3008, %v3105
      %v3107 = vpop.f32.mrb[0].mxu0
      %v3108 = vpop.f32.mrb[0].mxu0
      %v3109 = vadd.f32 %v3013, %v3108
      %v3110 = vpop.f32.mrb[0].mxu0
      %3111 = vdwg.mxu0
      %v3112 = vmin.f32 %v3098, 0.0
      %v3113 = vmin.f32 %v3101, 0.0
      %v3114 = vmin.f32 %v3106, 0.0
      %v3115 = vmin.f32 %v3109, 0.0
      %v3116 = vand.u32 2147483647, %v3098
      %v3117 = vand.u32 2147483647, %v3101
      %v3118 = vand.u32 2147483647, %v3106
      %v3119 = vand.u32 2147483647, %v3109
      %v3120 = vsub.f32 0.0, %v3116
      %v3121 = vsub.f32 0.0, %v3117
      %v3122 = vsub.f32 0.0, %v3118
      %v3123 = vsub.f32 0.0, %v3119
      %v3124 = vmul.f32 %v3120, 1.442695
      %v3125 = vpow.pop %v3124
      %v3126 = vmul.f32 %v3121, 1.442695
      %v3127 = vpow.pop %v3126
      %v3128 = vmul.f32 %v3122, 1.442695
      %v3129 = vpow.pop %v3128
      %v3130 = vmul.f32 %v3123, 1.442695
      %v3131 = vpow.pop %v3130
      %v3132 = vadd.f32 %v3125, 1.0
      %v3133 = vlog2.pop %v3132
      %v3134 = vmul.f32 %v3133, 0.6931472
      %v3135 = vmul.f32 -0.5, %v3125
      %v3136 = vadd.f32 %v3135, 1.0
      %v3137 = vmul.f32 %v3136, %v3125
      %v3138 = vand.u32 2147483647, %v3125
      %vm3139 = vcmp.lt.f32.partialorder %v3138, 0.0004427343
      %v3140 = vsel %vm3139, %v3137, %v3134
      %v3141 = vadd.f32 %v3127, 1.0
      %v3142 = vlog2.pop %v3141
      %v3143 = vmul.f32 %v3142, 0.6931472
      %v3144 = vmul.f32 -0.5, %v3127
      %v3145 = vadd.f32 %v3144, 1.0
      %v3146 = vmul.f32 %v3145, %v3127
      %v3147 = vand.u32 2147483647, %v3127
      %vm3148 = vcmp.lt.f32.partialorder %v3147, 0.0004427343
      %v3149 = vsel %vm3148, %v3146, %v3143
      %v3150 = vadd.f32 %v3129, 1.0
      %v3151 = vlog2.pop %v3150
      %v3152 = vmul.f32 %v3151, 0.6931472
      %v3153 = vmul.f32 -0.5, %v3129
      %v3154 = vadd.f32 %v3153, 1.0
      %v3155 = vmul.f32 %v3154, %v3129
      %v3156 = vand.u32 2147483647, %v3129
      %vm3157 = vcmp.lt.f32.partialorder %v3156, 0.0004427343
      %v3158 = vsel %vm3157, %v3155, %v3152
      %v3159 = vadd.f32 %v3131, 1.0
      %v3160 = vlog2.pop %v3159
      %v3161 = vmul.f32 %v3160, 0.6931472
      %v3162 = vmul.f32 -0.5, %v3131
      %v3163 = vadd.f32 %v3162, 1.0
      %v3164 = vmul.f32 %v3163, %v3131
      %v3165 = vand.u32 2147483647, %v3131
      %vm3166 = vcmp.lt.f32.partialorder %v3165, 0.0004427343
      %v3167 = vsel %vm3166, %v3164, %v3161
      %v3168 = vsub.f32 %v3112, %v3140
      %v3169 = vsub.f32 %v3113, %v3149
      %v3170 = vsub.f32 %v3114, %v3158
      %v3171 = vsub.f32 %v3115, %v3167
      %v3172 = vadd.f32 %v2613, %v3082
      %v3173 = vadd.f32 %v2616, %v3085
      %v3174 = vadd.f32 %v2621, %v3090
      %v3175 = vadd.f32 %v2624, %v3093
      %v3176 = vmul.f32 %v3168, 1.442695
      %v3177 = vpow.pop %v3176
      %v3178 = vmul.f32 %v3169, 1.442695
      %v3179 = vpow.pop %v3178
      %v3180 = vmul.f32 %v3170, 1.442695
      %v3181 = vpow.pop %v3180
      %v3182 = vmul.f32 %v3171, 1.442695
      %v3183 = vpow.pop %v3182
      %v3184 = vmul.f32 %v3172, %v3177
      %v3185 = vmul.f32 %v3173, %v3179
      %v3186 = vmul.f32 %v3174, %v3181
      %v3187 = vmul.f32 %v3175, %v3183
      %v3188 = vadd.f32 %v2468, %v3168
      %v3189 = vadd.f32 %v2469, %v3169
      %v3190 = vadd.f32 %v2470, %v3170
      %v3191 = vadd.f32 %v2471, %v3171
      %3192 = vst [vmem:[%s278] sm:$0xff] %v2597
      %3193 = vst [vmem:[%s278 + $0x8] sm:$0xff] %v2600
      %3194 = vst [vmem:[%s278 + $0x10] sm:$0xff] %v2605
      %3195 = vst [vmem:[%s278 + $0x18] sm:$0xff] %v2608
      %v3196 = vld [vmem:[%s1 + $0x200] sm:$0xf]
      %v3197 = vld [vmem:[%s1 + $0x204] sm:$0xf]
      %v3198 = vld [vmem:[%s2 + $0x400] sm:$0xff]
      %v3199 = vld [vmem:[%s2 + $0x408] sm:$0xff]
      %3201 = vset.pattern.permute.xlu0 0
      %3202 = vperm.xlu0 %3201, %v3198
      %v3203 = vpop.permute.xlu0 %3202
      %3206 = vset.pattern.permute.xlu0 0
      %3207 = vperm.xlu0 %3206, %v3199
      %v3208 = vpop.permute.xlu0 %3207
      %v3212 = vunpack.c.l.b16 %v3196
      %v3213 = vunpack.c.l.b16 %v3197
      %v3214 = vpack.c.b16 %v3213, %v3212
      %v3216 = vsel %vm544, %v3214, 0
      %3218 = vmatprep.subr.bf16.mxu0 0
      %3219 = vmatpush1.bf16.msra.mxu0 %v2627
      %3220 = vmatprep.subr.bf16.mxu0 0
      %3221 = vmatpush1.bf16.msra.mxu0 %v2628
      %3222 = vmatprep.subr.bf16.mxu0 0
      %3223 = vmatpush1.bf16.msra.mxu0 0
      %3224 = vmatprep.subr.bf16.mxu0 0
      %3225 = vmatpush1.bf16.msra.mxu0 0
      %3226 = vmatprep.subr.bf16.mxu0 0
      %3227 = vmatpush1.bf16.msra.mxu0 0
      %3228 = vmatprep.subr.bf16.mxu0 0
      %3229 = vmatpush1.bf16.msra.mxu0 0
      %3230 = vmatprep.subr.bf16.mxu0 0
      %3231 = vmatpush1.bf16.msra.mxu0 0
      %3232 = vmatprep.subr.bf16.mxu0 0
      %3233 = vmatpush1.bf16.msra.mxu0 0
      %3234 = vmatprep.subr.bf16.mxu0 0
      %3235 = vmatpush1.bf16.msra.mxu0 0
      %3236 = vmatprep.subr.bf16.mxu0 0
      %3237 = vmatpush1.bf16.msra.mxu0 0
      %3238 = vmatprep.subr.bf16.mxu0 0
      %3239 = vmatpush1.bf16.msra.mxu0 0
      %3240 = vmatprep.subr.bf16.mxu0 0
      %3241 = vmatpush1.bf16.msra.mxu0 0
      %3242 = vmatprep.subr.bf16.mxu0 0
      %3243 = vmatpush1.bf16.msra.mxu0 0
      %3244 = vmatprep.subr.bf16.mxu0 0
      %3245 = vmatpush1.bf16.msra.mxu0 0
      %3246 = vmatprep.subr.bf16.mxu0 0
      %3247 = vmatpush1.bf16.msra.mxu0 0
      %3248 = vmatprep.subr.bf16.mxu0 0
      %3249 = vmatpush1.bf16.msra.mxu0 0
      %3250 = vmatprep.mubr.bf16.mxu0 0
      %3251 = vmatmul.mubr.bf16.gmra.mrb[0].mxu0 %v3216
      %v3252 = vpop.f32.mrb[0].mxu0
      %v3253 = vadd.f32 %v3203, %v3252
      %v3254 = vpop.f32.mrb[0].mxu0
      %v3255 = vpop.f32.mrb[0].mxu0
      %v3256 = vadd.f32 %v3208, %v3255
      %v3257 = vpop.f32.mrb[0].mxu0
      %3258 = vdwg.mxu0
      %vm3259 = vcmp.gt.f32.partialorder %v3253, 0.0
      %vm3260 = vcmp.gt.f32.partialorder %v3256, 0.0
      %v3261 = vmul.f32 %v3253, 0.2
      %v3262 = vmul.f32 %v3256, 0.2
      %v3263 = vsel %vm3259, %v3253, %v3261
      %v3264 = vsel %vm3260, %v3256, %v3262
      %v3265 = vpack.c.bf16 %v3264, %v3263
      %v3266 = vld [vmem:[%s1 + $0x208] sm:$0xf]
      %v3267 = vld [vmem:[%s1 + $0x20c] sm:$0xf]
      %v3268 = vld [vmem:[%s2 + $0x410] sm:$0xff]
      %v3269 = vld [vmem:[%s2 + $0x418] sm:$0xff]
      %3271 = vset.pattern.permute.xlu0 0
      %3272 = vperm.xlu0 %3271, %v3268
      %v3273 = vpop.permute.xlu0 %3272
      %3276 = vset.pattern.permute.xlu0 0
      %3277 = vperm.xlu0 %3276, %v3269
      %v3278 = vpop.permute.xlu0 %3277
      %v3282 = vunpack.c.l.b16 %v3266
      %v3283 = vunpack.c.l.b16 %v3267
      %v3284 = vpack.c.b16 %v3283, %v3282
      %vm3285 = vcmask 130048
      %v3287 = vsel %vm3285, %v3284, 0
      %3289 = vmatprep.subr.bf16.mxu0 0
      %3290 = vmatpush1.bf16.msra.mxu0 %v3265
      %3291 = vmatprep.subr.bf16.mxu0 0
      %3292 = vmatpush1.bf16.msra.mxu0 0
      %3293 = vmatprep.subr.bf16.mxu0 0
      %3294 = vmatpush1.bf16.msra.mxu0 0
      %3295 = vmatprep.subr.bf16.mxu0 0
      %3296 = vmatpush1.bf16.msra.mxu0 0
      %3297 = vmatprep.subr.bf16.mxu0 0
      %3298 = vmatpush1.bf16.msra.mxu0 0
      %3299 = vmatprep.subr.bf16.mxu0 0
      %3300 = vmatpush1.bf16.msra.mxu0 0
      %3301 = vmatprep.subr.bf16.mxu0 0
      %3302 = vmatpush1.bf16.msra.mxu0 0
      %3303 = vmatprep.subr.bf16.mxu0 0
      %3304 = vmatpush1.bf16.msra.mxu0 0
      %3305 = vmatprep.subr.bf16.mxu0 0
      %3306 = vmatpush1.bf16.msra.mxu0 0
      %3307 = vmatprep.subr.bf16.mxu0 0
      %3308 = vmatpush1.bf16.msra.mxu0 0
      %3309 = vmatprep.subr.bf16.mxu0 0
      %3310 = vmatpush1.bf16.msra.mxu0 0
      %3311 = vmatprep.subr.bf16.mxu0 0
      %3312 = vmatpush1.bf16.msra.mxu0 0
      %3313 = vmatprep.subr.bf16.mxu0 0
      %3314 = vmatpush1.bf16.msra.mxu0 0
      %3315 = vmatprep.subr.bf16.mxu0 0
      %3316 = vmatpush1.bf16.msra.mxu0 0
      %3317 = vmatprep.subr.bf16.mxu0 0
      %3318 = vmatpush1.bf16.msra.mxu0 0
      %3319 = vmatprep.subr.bf16.mxu0 0
      %3320 = vmatpush1.bf16.msra.mxu0 0
      %3321 = vmatprep.mubr.bf16.mxu0 0
      %3322 = vmatmul.mubr.bf16.gmra.mrb[0].mxu0 %v3287
      %v3323 = vpop.f32.mrb[0].mxu0
      %v3324 = vadd.f32 %v3273, %v3323
      %v3325 = vpop.f32.mrb[0].mxu0
      %v3326 = vpop.f32.mrb[0].mxu0
      %v3327 = vadd.f32 %v3278, %v3326
      %v3328 = vpop.f32.mrb[0].mxu0
      %3329 = vdwg.mxu0
      %vm3330 = vcmp.gt.f32.partialorder %v3324, 0.0
      %vm3331 = vcmp.gt.f32.partialorder %v3327, 0.0
      %v3332 = vmul.f32 %v3324, 0.2
      %v3333 = vmul.f32 %v3327, 0.2
      %v3334 = vsel %vm3330, %v3324, %v3332
      %v3335 = vsel %vm3331, %v3327, %v3333
      %v3336 = vpack.c.bf16 %v3335, %v3334
      %v3337 = vld [vmem:[%s1 + $0x210] sm:$0xf]
      %v3338 = vld [vmem:[%s1 + $0x214] sm:$0xf]
      %v3339 = vld [vmem:[%s2 + $0x420] sm:$0xff]
      %v3340 = vld [vmem:[%s2 + $0x428] sm:$0xff]
      %3342 = vset.pattern.permute.xlu0 0
      %3343 = vperm.xlu0 %3342, %v3339
      %v3344 = vpop.permute.xlu0 %3343
      %3347 = vset.pattern.permute.xlu0 0
      %3348 = vperm.xlu0 %3347, %v3340
      %v3349 = vpop.permute.xlu0 %3348
      %v3353 = vunpack.c.l.b16 %v3337
      %v3354 = vunpack.c.l.b16 %v3338
      %v3355 = vpack.c.b16 %v3354, %v3353
      %v3357 = vsel %vm3285, %v3355, 0
      %3359 = vmatprep.subr.bf16.mxu0 0
      %3360 = vmatpush1.bf16.msra.mxu0 %v3336
      %3361 = vmatprep.subr.bf16.mxu0 0
      %3362 = vmatpush1.bf16.msra.mxu0 0
      %3363 = vmatprep.subr.bf16.mxu0 0
      %3364 = vmatpush1.bf16.msra.mxu0 0
      %3365 = vmatprep.subr.bf16.mxu0 0
      %3366 = vmatpush1.bf16.msra.mxu0 0
      %3367 = vmatprep.subr.bf16.mxu0 0
      %3368 = vmatpush1.bf16.msra.mxu0 0
      %3369 = vmatprep.subr.bf16.mxu0 0
      %3370 = vmatpush1.bf16.msra.mxu0 0
      %3371 = vmatprep.subr.bf16.mxu0 0
      %3372 = vmatpush1.bf16.msra.mxu0 0
      %3373 = vmatprep.subr.bf16.mxu0 0
      %3374 = vmatpush1.bf16.msra.mxu0 0
      %3375 = vmatprep.subr.bf16.mxu0 0
      %3376 = vmatpush1.bf16.msra.mxu0 0
      %3377 = vmatprep.subr.bf16.mxu0 0
      %3378 = vmatpush1.bf16.msra.mxu0 0
      %3379 = vmatprep.subr.bf16.mxu0 0
      %3380 = vmatpush1.bf16.msra.mxu0 0
      %3381 = vmatprep.subr.bf16.mxu0 0
      %3382 = vmatpush1.bf16.msra.mxu0 0
      %3383 = vmatprep.subr.bf16.mxu0 0
      %3384 = vmatpush1.bf16.msra.mxu0 0
      %3385 = vmatprep.subr.bf16.mxu0 0
      %3386 = vmatpush1.bf16.msra.mxu0 0
      %3387 = vmatprep.subr.bf16.mxu0 0
      %3388 = vmatpush1.bf16.msra.mxu0 0
      %3389 = vmatprep.subr.bf16.mxu0 0
      %3390 = vmatpush1.bf16.msra.mxu0 0
      %3391 = vmatprep.mubr.bf16.mxu0 0
      %3392 = vmatmul.mubr.bf16.gmra.mrb[0].mxu0 %v3357
      %v3393 = vpop.f32.mrb[0].mxu0
      %v3394 = vadd.f32 %v3344, %v3393
      %v3395 = vpop.f32.mrb[0].mxu0
      %v3396 = vpop.f32.mrb[0].mxu0
      %v3397 = vadd.f32 %v3349, %v3396
      %v3398 = vpop.f32.mrb[0].mxu0
      %3399 = vdwg.mxu0
      %v3400 = vpack.c.bf16 %v3397, %v3394
      %3401 = vst [vmem:[#allocation2 + $0x8] sm:$0xff] %v3400
      %v3402 = vpack.c.bf16 %v3185, %v3184
      %v3403 = vpack.c.bf16 %v3187, %v3186
      %v3404 = vld [vmem:[%s1 + $0x218] sm:$0xf]
      %v3405 = vld [vmem:[%s1 + $0x21c] sm:$0xf]
      %v3406 = vld [vmem:[%s1 + $0x220] sm:$0xf]
      %v3407 = vld [vmem:[%s1 + $0x224] sm:$0xf]
      %v3408 = vld [vmem:[%s2 + $0x430] sm:$0xff]
      %v3409 = vld [vmem:[%s2 + $0x438] sm:$0xff]
      %v3410 = vld [vmem:[%s2 + $0x440] sm:$0xff]
      %v3411 = vld [vmem:[%s2 + $0x448] sm:$0xff]
      %3413 = vset.pattern.permute.xlu0 0
      %3414 = vperm.xlu0 %3413, %v3408
      %v3415 = vpop.permute.xlu0 %3414
      %3418 = vset.pattern.permute.xlu0 0
      %3419 = vperm.xlu0 %3418, %v3409
      %v3420 = vpop.permute.xlu0 %3419
      %3423 = vset.pattern.permute.xlu0 0
      %3424 = vperm.xlu0 %3423, %v3410
      %v3425 = vpop.permute.xlu0 %3424
      %3428 = vset.pattern.permute.xlu0 0
      %3429 = vperm.xlu0 %3428, %v3411
      %v3430 = vpop.permute.xlu0 %3429
      %v3436 = vunpack.c.l.b16 %v3404
      %v3437 = vunpack.c.l.b16 %v3405
      %v3438 = vunpack.c.l.b16 %v3406
      %v3439 = vunpack.c.l.b16 %v3407
      %v3440 = vpack.c.b16 %v3437, %v3436
      %v3441 = vpack.c.b16 %v3439, %v3438
      %v3443 = vsel %vm544, %v3440, 0
      %v3446 = vsel %vm544, %v3441, 0
      %3448 = vmatprep.subr.bf16.mxu0 0
      %3449 = vmatpush1.bf16.msra.mxu0 %v3402
      %3450 = vmatprep.subr.bf16.mxu0 0
      %3451 = vmatpush1.bf16.msra.mxu0 %v3403
      %3452 = vmatprep.subr.bf16.mxu0 0
      %3453 = vmatpush1.bf16.msra.mxu0 0
      %3454 = vmatprep.subr.bf16.mxu0 0
      %3455 = vmatpush1.bf16.msra.mxu0 0
      %3456 = vmatprep.subr.bf16.mxu0 0
      %3457 = vmatpush1.bf16.msra.mxu0 0
      %3458 = vmatprep.subr.bf16.mxu0 0
      %3459 = vmatpush1.bf16.msra.mxu0 0
      %3460 = vmatprep.subr.bf16.mxu0 0
      %3461 = vmatpush1.bf16.msra.mxu0 0
      %3462 = vmatprep.subr.bf16.mxu0 0
      %3463 = vmatpush1.bf16.msra.mxu0 0
      %3464 = vmatprep.subr.bf16.mxu0 0
      %3465 = vmatpush1.bf16.msra.mxu0 0
      %3466 = vmatprep.subr.bf16.mxu0 0
      %3467 = vmatpush1.bf16.msra.mxu0 0
      %3468 = vmatprep.subr.bf16.mxu0 0
      %3469 = vmatpush1.bf16.msra.mxu0 0
      %3470 = vmatprep.subr.bf16.mxu0 0
      %3471 = vmatpush1.bf16.msra.mxu0 0
      %3472 = vmatprep.subr.bf16.mxu0 0
      %3473 = vmatpush1.bf16.msra.mxu0 0
      %3474 = vmatprep.subr.bf16.mxu0 0
      %3475 = vmatpush1.bf16.msra.mxu0 0
      %3476 = vmatprep.subr.bf16.mxu0 0
      %3477 = vmatpush1.bf16.msra.mxu0 0
      %3478 = vmatprep.subr.bf16.mxu0 0
      %3479 = vmatpush1.bf16.msra.mxu0 0
      %3480 = vmatprep.mubr.bf16.mxu0 0
      %3481 = vmatmul.mubr.bf16.gmra.mrb[0].mxu0 %v3443
      %v3482 = vpop.f32.mrb[0].mxu0
      %v3483 = vadd.f32 %v3415, %v3482
      %v3484 = vpop.f32.mrb[0].mxu0
      %v3485 = vpop.f32.mrb[0].mxu0
      %v3486 = vadd.f32 %v3420, %v3485
      %v3487 = vpop.f32.mrb[0].mxu0
      %3488 = vmatprep.mubr.bf16.mxu0 0
      %3489 = vmatmul.mubr.bf16.gmra.mrb[0].mxu0 %v3446
      %v3490 = vpop.f32.mrb[0].mxu0
      %v3491 = vadd.f32 %v3425, %v3490
      %v3492 = vpop.f32.mrb[0].mxu0
      %v3493 = vpop.f32.mrb[0].mxu0
      %v3494 = vadd.f32 %v3430, %v3493
      %v3495 = vpop.f32.mrb[0].mxu0
      %3496 = vdwg.mxu0
      %v3497 = vpack.c.bf16 %v3486, %v3483
      %3498 = vst [vmem:[#allocation2] sm:$0xff] %v3497
      %v3499 = vld [vmem:[#allocation2] sm:$0xff]
      %v3500 = vld [vmem:[#allocation2 + $0x8] sm:$0xff]
      %v3501 = vld [vmem:[%s1 + $0x228] sm:$0xf]
      %v3502 = vld [vmem:[%s1 + $0x22c] sm:$0xf]
      %v3503 = vld [vmem:[%s1 + $0x230] sm:$0xf]
      %v3504 = vld [vmem:[%s1 + $0x234] sm:$0xf]
      %v3505 = vld [vmem:[%s1 + $0x238] sm:$0xf]
      %v3506 = vld [vmem:[%s1 + $0x23c] sm:$0xf]
      %v3507 = vld [vmem:[%s1 + $0x240] sm:$0xf]
      %v3508 = vld [vmem:[%s1 + $0x244] sm:$0xf]
      %v3509 = vld [vmem:[%s2 + $0x450] sm:$0xff]
      %v3510 = vld [vmem:[%s2 + $0x458] sm:$0xff]
      %v3511 = vld [vmem:[%s2 + $0x460] sm:$0xff]
      %v3512 = vld [vmem:[%s2 + $0x468] sm:$0xff]
      %v3513 = vld [vmem:[%s2 + $0x470] sm:$0xff]
      %v3514 = vld [vmem:[%s2 + $0x478] sm:$0xff]
      %v3515 = vld [vmem:[%s2 + $0x480] sm:$0xff]
      %v3516 = vld [vmem:[%s2 + $0x488] sm:$0xff]
      %3518 = vset.pattern.permute.xlu0 0
      %3519 = vperm.xlu0 %3518, %v3509
      %v3520 = vpop.permute.xlu0 %3519
      %3523 = vset.pattern.permute.xlu0 0
      %3524 = vperm.xlu0 %3523, %v3510
      %v3525 = vpop.permute.xlu0 %3524
      %3528 = vset.pattern.permute.xlu0 0
      %3529 = vperm.xlu0 %3528, %v3511
      %v3530 = vpop.permute.xlu0 %3529
      %3533 = vset.pattern.permute.xlu0 0
      %3534 = vperm.xlu0 %3533, %v3512
      %v3535 = vpop.permute.xlu0 %3534
      %3538 = vset.pattern.permute.xlu0 0
      %3539 = vperm.xlu0 %3538, %v3513
      %v3540 = vpop.permute.xlu0 %3539
      %3543 = vset.pattern.permute.xlu0 0
      %3544 = vperm.xlu0 %3543, %v3514
      %v3545 = vpop.permute.xlu0 %3544
      %3548 = vset.pattern.permute.xlu0 0
      %3549 = vperm.xlu0 %3548, %v3515
      %v3550 = vpop.permute.xlu0 %3549
      %3553 = vset.pattern.permute.xlu0 0
      %3554 = vperm.xlu0 %3553, %v3516
      %v3555 = vpop.permute.xlu0 %3554
      %v3565 = vunpack.c.l.b16 %v3501
      %v3566 = vunpack.c.l.b16 %v3502
      %v3567 = vunpack.c.l.b16 %v3503
      %v3568 = vunpack.c.l.b16 %v3504
      %v3569 = vunpack.c.l.b16 %v3505
      %v3570 = vunpack.c.l.b16 %v3506
      %v3571 = vunpack.c.l.b16 %v3507
      %v3572 = vunpack.c.l.b16 %v3508
      %v3573 = vpack.c.b16 %v3566, %v3565
      %v3574 = vpack.c.b16 %v3568, %v3567
      %v3575 = vpack.c.b16 %v3570, %v3569
      %v3576 = vpack.c.b16 %v3572, %v3571
      %v3578 = vsel %vm544, %v3573, 0
      %v3581 = vsel %vm544, %v3574, 0
      %v3584 = vsel %vm544, %v3575, 0
      %v3587 = vsel %vm544, %v3576, 0
      %3589 = vmatprep.subr.bf16.mxu0 0
      %3590 = vmatpush1.bf16.msra.mxu0 %v3499
      %3591 = vmatprep.subr.bf16.mxu0 0
      %3592 = vmatpush1.bf16.msra.mxu0 %v3500
      %3593 = vmatprep.subr.bf16.mxu0 0
      %3594 = vmatpush1.bf16.msra.mxu0 0
      %3595 = vmatprep.subr.bf16.mxu0 0
      %3596 = vmatpush1.bf16.msra.mxu0 0
      %3597 = vmatprep.subr.bf16.mxu0 0
      %3598 = vmatpush1.bf16.msra.mxu0 0
      %3599 = vmatprep.subr.bf16.mxu0 0
      %3600 = vmatpush1.bf16.msra.mxu0 0
      %3601 = vmatprep.subr.bf16.mxu0 0
      %3602 = vmatpush1.bf16.msra.mxu0 0
      %3603 = vmatprep.subr.bf16.mxu0 0
      %3604 = vmatpush1.bf16.msra.mxu0 0
      %3605 = vmatprep.subr.bf16.mxu0 0
      %3606 = vmatpush1.bf16.msra.mxu0 0
      %3607 = vmatprep.subr.bf16.mxu0 0
      %3608 = vmatpush1.bf16.msra.mxu0 0
      %3609 = vmatprep.subr.bf16.mxu0 0
      %3610 = vmatpush1.bf16.msra.mxu0 0
      %3611 = vmatprep.subr.bf16.mxu0 0
      %3612 = vmatpush1.bf16.msra.mxu0 0
      %3613 = vmatprep.subr.bf16.mxu0 0
      %3614 = vmatpush1.bf16.msra.mxu0 0
      %3615 = vmatprep.subr.bf16.mxu0 0
      %3616 = vmatpush1.bf16.msra.mxu0 0
      %3617 = vmatprep.subr.bf16.mxu0 0
      %3618 = vmatpush1.bf16.msra.mxu0 0
      %3619 = vmatprep.subr.bf16.mxu0 0
      %3620 = vmatpush1.bf16.msra.mxu0 0
      %3621 = vmatprep.mubr.bf16.mxu0 0
      %3622 = vmatmul.mubr.bf16.gmra.mrb[0].mxu0 %v3578
      %v3623 = vpop.f32.mrb[0].mxu0
      %v3624 = vadd.f32 %v3520, %v3623
      %v3625 = vpop.f32.mrb[0].mxu0
      %v3626 = vpop.f32.mrb[0].mxu0
      %v3627 = vadd.f32 %v3525, %v3626
      %v3628 = vpop.f32.mrb[0].mxu0
      %3629 = vmatprep.mubr.bf16.mxu0 0
      %3630 = vmatmul.mubr.bf16.gmra.mrb[0].mxu0 %v3581
      %v3631 = vpop.f32.mrb[0].mxu0
      %v3632 = vadd.f32 %v3530, %v3631
      %v3633 = vpop.f32.mrb[0].mxu0
      %v3634 = vpop.f32.mrb[0].mxu0
      %v3635 = vadd.f32 %v3535, %v3634
      %v3636 = vpop.f32.mrb[0].mxu0
      %3637 = vmatprep.mubr.bf16.mxu0 0
      %3638 = vmatmul.mubr.bf16.gmra.mrb[0].mxu0 %v3584
      %v3639 = vpop.f32.mrb[0].mxu0
      %v3640 = vadd.f32 %v3540, %v3639
      %v3641 = vpop.f32.mrb[0].mxu0
      %v3642 = vpop.f32.mrb[0].mxu0
      %v3643 = vadd.f32 %v3545, %v3642
      %v3644 = vpop.f32.mrb[0].mxu0
      %3645 = vmatprep.mubr.bf16.mxu0 0
      %3646 = vmatmul.mubr.bf16.gmra.mrb[0].mxu0 %v3587
      %v3647 = vpop.f32.mrb[0].mxu0
      %v3648 = vadd.f32 %v3550, %v3647
      %v3649 = vpop.f32.mrb[0].mxu0
      %v3650 = vpop.f32.mrb[0].mxu0
      %v3651 = vadd.f32 %v3555, %v3650
      %v3652 = vpop.f32.mrb[0].mxu0
      %3653 = vdwg.mxu0
      %v3654 = vmax.f32 %v3624, 0.0
      %v3655 = vmax.f32 %v3627, 0.0
      %v3656 = vmax.f32 %v3632, 0.0
      %v3657 = vmax.f32 %v3635, 0.0
      %v3658 = vmax.f32 %v3640, 0.0
      %v3659 = vmax.f32 %v3643, 0.0
      %v3660 = vmax.f32 %v3648, 0.0
      %v3661 = vmax.f32 %v3651, 0.0
      %v3662 = vpack.c.bf16 %v3655, %v3654
      %v3663 = vpack.c.bf16 %v3657, %v3656
      %v3664 = vpack.c.bf16 %v3659, %v3658
      %v3665 = vpack.c.bf16 %v3661, %v3660
      %v3666 = vld [vmem:[%s1 + $0x248] sm:$0xf]
      %v3667 = vld [vmem:[%s1 + $0x24c] sm:$0xf]
      %v3668 = vld [vmem:[%s1 + $0x250] sm:$0xf]
      %v3669 = vld [vmem:[%s1 + $0x254] sm:$0xf]
      %v3670 = vld [vmem:[%s1 + $0x258] sm:$0xf]
      %v3671 = vld [vmem:[%s1 + $0x25c] sm:$0xf]
      %v3672 = vld [vmem:[%s1 + $0x260] sm:$0xf]
      %v3673 = vld [vmem:[%s1 + $0x264] sm:$0xf]
      %v3674 = vld [vmem:[%s2 + $0x490] sm:$0xff]
      %v3675 = vld [vmem:[%s2 + $0x498] sm:$0xff]
      %v3676 = vld [vmem:[%s2 + $0x4a0] sm:$0xff]
      %v3677 = vld [vmem:[%s2 + $0x4a8] sm:$0xff]
      %v3678 = vld [vmem:[%s2 + $0x4b0] sm:$0xff]
      %v3679 = vld [vmem:[%s2 + $0x4b8] sm:$0xff]
      %v3680 = vld [vmem:[%s2 + $0x4c0] sm:$0xff]
      %v3681 = vld [vmem:[%s2 + $0x4c8] sm:$0xff]
      %3683 = vset.pattern.permute.xlu0 0
      %3684 = vperm.xlu0 %3683, %v3674
      %v3685 = vpop.permute.xlu0 %3684
      %3688 = vset.pattern.permute.xlu0 0
      %3689 = vperm.xlu0 %3688, %v3675
      %v3690 = vpop.permute.xlu0 %3689
      %3693 = vset.pattern.permute.xlu0 0
      %3694 = vperm.xlu0 %3693, %v3676
      %v3695 = vpop.permute.xlu0 %3694
      %3698 = vset.pattern.permute.xlu0 0
      %3699 = vperm.xlu0 %3698, %v3677
      %v3700 = vpop.permute.xlu0 %3699
      %3703 = vset.pattern.permute.xlu0 0
      %3704 = vperm.xlu0 %3703, %v3678
      %v3705 = vpop.permute.xlu0 %3704
      %3708 = vset.pattern.permute.xlu0 0
      %3709 = vperm.xlu0 %3708, %v3679
      %v3710 = vpop.permute.xlu0 %3709
      %3713 = vset.pattern.permute.xlu0 0
      %3714 = vperm.xlu0 %3713, %v3680
      %v3715 = vpop.permute.xlu0 %3714
      %3718 = vset.pattern.permute.xlu0 0
      %3719 = vperm.xlu0 %3718, %v3681
      %v3720 = vpop.permute.xlu0 %3719
      %v3730 = vunpack.c.l.b16 %v3666
      %v3731 = vunpack.c.l.b16 %v3667
      %v3732 = vunpack.c.l.b16 %v3668
      %v3733 = vunpack.c.l.b16 %v3669
      %v3734 = vunpack.c.l.b16 %v3670
      %v3735 = vunpack.c.l.b16 %v3671
      %v3736 = vunpack.c.l.b16 %v3672
      %v3737 = vunpack.c.l.b16 %v3673
      %v3738 = vpack.c.b16 %v3731, %v3730
      %v3739 = vpack.c.b16 %v3733, %v3732
      %v3740 = vpack.c.b16 %v3735, %v3734
      %v3741 = vpack.c.b16 %v3737, %v3736
      %v3743 = vsel %vm388, %v3738, 0
      %v3746 = vsel %vm388, %v3739, 0
      %v3749 = vsel %vm388, %v3740, 0
      %v3752 = vsel %vm388, %v3741, 0
      %3754 = vmatprep.subr.bf16.mxu0 0
      %3755 = vmatpush1.bf16.msra.mxu0 %v3662
      %3756 = vmatprep.subr.bf16.mxu0 0
      %3757 = vmatpush1.bf16.msra.mxu0 %v3663
      %3758 = vmatprep.subr.bf16.mxu0 0
      %3759 = vmatpush1.bf16.msra.mxu0 %v3664
      %3760 = vmatprep.subr.bf16.mxu0 0
      %3761 = vmatpush1.bf16.msra.mxu0 %v3665
      %3762 = vmatprep.subr.bf16.mxu0 0
      %3763 = vmatpush1.bf16.msra.mxu0 0
      %3764 = vmatprep.subr.bf16.mxu0 0
      %3765 = vmatpush1.bf16.msra.mxu0 0
      %3766 = vmatprep.subr.bf16.mxu0 0
      %3767 = vmatpush1.bf16.msra.mxu0 0
      %3768 = vmatprep.subr.bf16.mxu0 0
      %3769 = vmatpush1.bf16.msra.mxu0 0
      %3770 = vmatprep.subr.bf16.mxu0 0
      %3771 = vmatpush1.bf16.msra.mxu0 0
      %3772 = vmatprep.subr.bf16.mxu0 0
      %3773 = vmatpush1.bf16.msra.mxu0 0
      %3774 = vmatprep.subr.bf16.mxu0 0
      %3775 = vmatpush1.bf16.msra.mxu0 0
      %3776 = vmatprep.subr.bf16.mxu0 0
      %3777 = vmatpush1.bf16.msra.mxu0 0
      %3778 = vmatprep.subr.bf16.mxu0 0
      %3779 = vmatpush1.bf16.msra.mxu0 0
      %3780 = vmatprep.subr.bf16.mxu0 0
      %3781 = vmatpush1.bf16.msra.mxu0 0
      %3782 = vmatprep.subr.bf16.mxu0 0
      %3783 = vmatpush1.bf16.msra.mxu0 0
      %3784 = vmatprep.subr.bf16.mxu0 0
      %3785 = vmatpush1.bf16.msra.mxu0 0
      %3786 = vmatprep.mubr.bf16.mxu0 0
      %3787 = vmatmul.mubr.bf16.gmra.mrb[0].mxu0 %v3743
      %v3788 = vpop.f32.mrb[0].mxu0
      %v3789 = vadd.f32 %v3685, %v3788
      %v3790 = vpop.f32.mrb[0].mxu0
      %v3791 = vpop.f32.mrb[0].mxu0
      %v3792 = vadd.f32 %v3690, %v3791
      %v3793 = vpop.f32.mrb[0].mxu0
      %3794 = vmatprep.mubr.bf16.mxu0 0
      %3795 = vmatmul.mubr.bf16.gmra.mrb[0].mxu0 %v3746
      %v3796 = vpop.f32.mrb[0].mxu0
      %v3797 = vadd.f32 %v3695, %v3796
      %v3798 = vpop.f32.mrb[0].mxu0
      %v3799 = vpop.f32.mrb[0].mxu0
      %v3800 = vadd.f32 %v3700, %v3799
      %v3801 = vpop.f32.mrb[0].mxu0
      %3802 = vmatprep.mubr.bf16.mxu0 0
      %3803 = vmatmul.mubr.bf16.gmra.mrb[0].mxu0 %v3749
      %v3804 = vpop.f32.mrb[0].mxu0
      %v3805 = vadd.f32 %v3705, %v3804
      %v3806 = vpop.f32.mrb[0].mxu0
      %v3807 = vpop.f32.mrb[0].mxu0
      %v3808 = vadd.f32 %v3710, %v3807
      %v3809 = vpop.f32.mrb[0].mxu0
      %3810 = vmatprep.mubr.bf16.mxu0 0
      %3811 = vmatmul.mubr.bf16.gmra.mrb[0].mxu0 %v3752
      %v3812 = vpop.f32.mrb[0].mxu0
      %v3813 = vadd.f32 %v3715, %v3812
      %v3814 = vpop.f32.mrb[0].mxu0
      %v3815 = vpop.f32.mrb[0].mxu0
      %v3816 = vadd.f32 %v3720, %v3815
      %v3817 = vpop.f32.mrb[0].mxu0
      %3818 = vdwg.mxu0
      %v3819 = vmax.f32 %v3789, 0.0
      %v3820 = vmax.f32 %v3792, 0.0
      %v3821 = vmax.f32 %v3797, 0.0
      %v3822 = vmax.f32 %v3800, 0.0
      %v3823 = vmax.f32 %v3805, 0.0
      %v3824 = vmax.f32 %v3808, 0.0
      %v3825 = vmax.f32 %v3813, 0.0
      %v3826 = vmax.f32 %v3816, 0.0
      %v3827 = vpack.c.bf16 %v3820, %v3819
      %v3828 = vpack.c.bf16 %v3822, %v3821
      %v3829 = vpack.c.bf16 %v3824, %v3823
      %v3830 = vpack.c.bf16 %v3826, %v3825
      %v3831 = vld [vmem:[%s1 + $0x268] sm:$0xf]
      %v3832 = vld [vmem:[%s1 + $0x26c] sm:$0xf]
      %v3833 = vld [vmem:[%s1 + $0x270] sm:$0xf]
      %v3834 = vld [vmem:[%s1 + $0x274] sm:$0xf]
      %v3835 = vld [vmem:[%s2 + $0x4d0] sm:$0xff]
      %v3836 = vld [vmem:[%s2 + $0x4d8] sm:$0xff]
      %v3837 = vld [vmem:[%s2 + $0x4e0] sm:$0xff]
      %v3838 = vld [vmem:[%s2 + $0x4e8] sm:$0xff]
      %3840 = vset.pattern.permute.xlu0 0
      %3841 = vperm.xlu0 %3840, %v3835
      %v3842 = vpop.permute.xlu0 %3841
      %3845 = vset.pattern.permute.xlu0 0
      %3846 = vperm.xlu0 %3845, %v3836
      %v3847 = vpop.permute.xlu0 %3846
      %3850 = vset.pattern.permute.xlu0 0
      %3851 = vperm.xlu0 %3850, %v3837
      %v3852 = vpop.permute.xlu0 %3851
      %3855 = vset.pattern.permute.xlu0 0
      %3856 = vperm.xlu0 %3855, %v3838
      %v3857 = vpop.permute.xlu0 %3856
      %v3863 = vunpack.c.l.b16 %v3831
      %v3864 = vunpack.c.l.b16 %v3832
      %v3865 = vunpack.c.l.b16 %v3833
      %v3866 = vunpack.c.l.b16 %v3834
      %v3867 = vpack.c.b16 %v3864, %v3863
      %v3868 = vpack.c.b16 %v3866, %v3865
      %v3870 = vsel %vm388, %v3867, 0
      %v3873 = vsel %vm388, %v3868, 0
      %3875 = vmatprep.subr.bf16.mxu0 0
      %3876 = vmatpush1.bf16.msra.mxu0 %v3827
      %3877 = vmatprep.subr.bf16.mxu0 0
      %3878 = vmatpush1.bf16.msra.mxu0 %v3828
      %3879 = vmatprep.subr.bf16.mxu0 0
      %3880 = vmatpush1.bf16.msra.mxu0 %v3829
      %3881 = vmatprep.subr.bf16.mxu0 0
      %3882 = vmatpush1.bf16.msra.mxu0 %v3830
      %3883 = vmatprep.subr.bf16.mxu0 0
      %3884 = vmatpush1.bf16.msra.mxu0 0
      %3885 = vmatprep.subr.bf16.mxu0 0
      %3886 = vmatpush1.bf16.msra.mxu0 0
      %3887 = vmatprep.subr.bf16.mxu0 0
      %3888 = vmatpush1.bf16.msra.mxu0 0
      %3889 = vmatprep.subr.bf16.mxu0 0
      %3890 = vmatpush1.bf16.msra.mxu0 0
      %3891 = vmatprep.subr.bf16.mxu0 0
      %3892 = vmatpush1.bf16.msra.mxu0 0
      %3893 = vmatprep.subr.bf16.mxu0 0
      %3894 = vmatpush1.bf16.msra.mxu0 0
      %3895 = vmatprep.subr.bf16.mxu0 0
      %3896 = vmatpush1.bf16.msra.mxu0 0
      %3897 = vmatprep.subr.bf16.mxu0 0
      %3898 = vmatpush1.bf16.msra.mxu0 0
      %3899 = vmatprep.subr.bf16.mxu0 0
      %3900 = vmatpush1.bf16.msra.mxu0 0
      %3901 = vmatprep.subr.bf16.mxu0 0
      %3902 = vmatpush1.bf16.msra.mxu0 0
      %3903 = vmatprep.subr.bf16.mxu0 0
      %3904 = vmatpush1.bf16.msra.mxu0 0
      %3905 = vmatprep.subr.bf16.mxu0 0
      %3906 = vmatpush1.bf16.msra.mxu0 0
      %3907 = vmatprep.mubr.bf16.mxu0 0
      %3908 = vmatmul.mubr.bf16.gmra.mrb[0].mxu0 %v3870
      %v3909 = vpop.f32.mrb[0].mxu0
      %v3910 = vadd.f32 %v3842, %v3909
      %v3911 = vpop.f32.mrb[0].mxu0
      %v3912 = vpop.f32.mrb[0].mxu0
      %v3913 = vadd.f32 %v3847, %v3912
      %v3914 = vpop.f32.mrb[0].mxu0
      %3915 = vmatprep.mubr.bf16.mxu0 0
      %3916 = vmatmul.mubr.bf16.gmra.mrb[0].mxu0 %v3873
      %v3917 = vpop.f32.mrb[0].mxu0
      %v3918 = vadd.f32 %v3852, %v3917
      %v3919 = vpop.f32.mrb[0].mxu0
      %v3920 = vpop.f32.mrb[0].mxu0
      %v3921 = vadd.f32 %v3857, %v3920
      %v3922 = vpop.f32.mrb[0].mxu0
      %3923 = vdwg.mxu0
      %v3924 = vmin.f32 %v3918, 0.0
      %v3925 = vmin.f32 %v3921, 0.0
      %v3926 = vand.u32 2147483647, %v3918
      %v3927 = vand.u32 2147483647, %v3921
      %v3928 = vsub.f32 0.0, %v3926
      %v3929 = vsub.f32 0.0, %v3927
      %v3930 = vmul.f32 %v3928, 1.442695
      %v3931 = vpow.pop %v3930
      %v3932 = vmul.f32 %v3929, 1.442695
      %v3933 = vpow.pop %v3932
      %v3934 = vadd.f32 %v3931, 1.0
      %v3935 = vlog2.pop %v3934
      %v3936 = vmul.f32 %v3935, 0.6931472
      %v3937 = vmul.f32 -0.5, %v3931
      %v3938 = vadd.f32 %v3937, 1.0
      %v3939 = vmul.f32 %v3938, %v3931
      %v3940 = vand.u32 2147483647, %v3931
      %vm3941 = vcmp.lt.f32.partialorder %v3940, 0.0004427343
      %v3942 = vsel %vm3941, %v3939, %v3936
      %v3943 = vadd.f32 %v3933, 1.0
      %v3944 = vlog2.pop %v3943
      %v3945 = vmul.f32 %v3944, 0.6931472
      %v3946 = vmul.f32 -0.5, %v3933
      %v3947 = vadd.f32 %v3946, 1.0
      %v3948 = vmul.f32 %v3947, %v3933
      %v3949 = vand.u32 2147483647, %v3933
      %vm3950 = vcmp.lt.f32.partialorder %v3949, 0.0004427343
      %v3951 = vsel %vm3950, %v3948, %v3945
      %v3952 = vsub.f32 %v3924, %v3942
      %v3953 = vsub.f32 %v3925, %v3951
      %v3954 = vadd.f32 %v3491, %v3910
      %v3955 = vadd.f32 %v3494, %v3913
      %v3956 = vmul.f32 %v3952, 1.442695
      %v3957 = vpow.pop %v3956
      %v3958 = vmul.f32 %v3953, 1.442695
      %v3959 = vpow.pop %v3958
      %v3960 = vmul.f32 %v3954, %v3957
      %v3961 = vmul.f32 %v3955, %v3959
      %v3962 = vadd.f32 %v3952, 0.0
      %v3963 = vadd.f32 %v3953, 0.0
      %v3964 = vpack.c.bf16 %v3961, %v3960
      %v3965 = vld [vmem:[%s1 + $0x278] sm:$0xf]
      %v3966 = vld [vmem:[%s1 + $0x27c] sm:$0xf]
      %v3967 = vld [vmem:[%s1 + $0x280] sm:$0xf]
      %v3968 = vld [vmem:[%s1 + $0x284] sm:$0xf]
      %v3969 = vld [vmem:[%s2 + $0x4f0] sm:$0xff]
      %v3970 = vld [vmem:[%s2 + $0x4f8] sm:$0xff]
      %v3971 = vld [vmem:[%s2 + $0x500] sm:$0xff]
      %v3972 = vld [vmem:[%s2 + $0x508] sm:$0xff]
      %3974 = vset.pattern.permute.xlu0 0
      %3975 = vperm.xlu0 %3974, %v3969
      %v3976 = vpop.permute.xlu0 %3975
      %3979 = vset.pattern.permute.xlu0 0
      %3980 = vperm.xlu0 %3979, %v3970
      %v3981 = vpop.permute.xlu0 %3980
      %3984 = vset.pattern.permute.xlu0 0
      %3985 = vperm.xlu0 %3984, %v3971
      %v3986 = vpop.permute.xlu0 %3985
      %3989 = vset.pattern.permute.xlu0 0
      %3990 = vperm.xlu0 %3989, %v3972
      %v3991 = vpop.permute.xlu0 %3990
      %v3997 = vunpack.c.l.b16 %v3965
      %v3998 = vunpack.c.l.b16 %v3966
      %v3999 = vunpack.c.l.b16 %v3967
      %v4000 = vunpack.c.l.b16 %v3968
      %v4001 = vpack.c.b16 %v3998, %v3997
      %v4002 = vpack.c.b16 %v4000, %v3999
      %v4004 = vsel %vm544, %v4001, 0
      %v4007 = vsel %vm544, %v4002, 0
      %4009 = vmatprep.subr.bf16.mxu0 0
      %4010 = vmatpush1.bf16.msra.mxu0 %v3497
      %4011 = vmatprep.subr.bf16.mxu0 0
      %4012 = vmatpush1.bf16.msra.mxu0 %v3964
      %4013 = vmatprep.subr.bf16.mxu0 0
      %4014 = vmatpush1.bf16.msra.mxu0 0
      %4015 = vmatprep.subr.bf16.mxu0 0
      %4016 = vmatpush1.bf16.msra.mxu0 0
      %4017 = vmatprep.subr.bf16.mxu0 0
      %4018 = vmatpush1.bf16.msra.mxu0 0
      %4019 = vmatprep.subr.bf16.mxu0 0
      %4020 = vmatpush1.bf16.msra.mxu0 0
      %4021 = vmatprep.subr.bf16.mxu0 0
      %4022 = vmatpush1.bf16.msra.mxu0 0
      %4023 = vmatprep.subr.bf16.mxu0 0
      %4024 = vmatpush1.bf16.msra.mxu0 0
      %4025 = vmatprep.subr.bf16.mxu0 0
      %4026 = vmatpush1.bf16.msra.mxu0 0
      %4027 = vmatprep.subr.bf16.mxu0 0
      %4028 = vmatpush1.bf16.msra.mxu0 0
      %4029 = vmatprep.subr.bf16.mxu0 0
      %4030 = vmatpush1.bf16.msra.mxu0 0
      %4031 = vmatprep.subr.bf16.mxu0 0
      %4032 = vmatpush1.bf16.msra.mxu0 0
      %4033 = vmatprep.subr.bf16.mxu0 0
      %4034 = vmatpush1.bf16.msra.mxu0 0
      %4035 = vmatprep.subr.bf16.mxu0 0
      %4036 = vmatpush1.bf16.msra.mxu0 0
      %4037 = vmatprep.subr.bf16.mxu0 0
      %4038 = vmatpush1.bf16.msra.mxu0 0
      %4039 = vmatprep.subr.bf16.mxu0 0
      %4040 = vmatpush1.bf16.msra.mxu0 0
      %4041 = vmatprep.mubr.bf16.mxu0 0
      %4042 = vmatmul.mubr.bf16.gmra.mrb[0].mxu0 %v4004
      %v4043 = vpop.f32.mrb[0].mxu0
      %v4044 = vadd.f32 %v3976, %v4043
      %v4045 = vpop.f32.mrb[0].mxu0
      %v4046 = vpop.f32.mrb[0].mxu0
      %v4047 = vadd.f32 %v3981, %v4046
      %v4048 = vpop.f32.mrb[0].mxu0
      %4049 = vmatprep.mubr.bf16.mxu0 0
      %4050 = vmatmul.mubr.bf16.gmra.mrb[0].mxu0 %v4007
      %v4051 = vpop.f32.mrb[0].mxu0
      %v4052 = vadd.f32 %v3986, %v4051
      %v4053 = vpop.f32.mrb[0].mxu0
      %v4054 = vpop.f32.mrb[0].mxu0
      %v4055 = vadd.f32 %v3991, %v4054
      %v4056 = vpop.f32.mrb[0].mxu0
      %4057 = vdwg.mxu0
      %v4058 = vpack.c.bf16 %v4047, %v4044
      %4059 = vst [vmem:[#allocation2] sm:$0xff] %v4058
      %v4060 = vld [vmem:[#allocation2] sm:$0xff]
      %v4061 = vld [vmem:[#allocation2 + $0x8] sm:$0xff]
      %v4062 = vld [vmem:[%s1 + $0x288] sm:$0xf]
      %v4063 = vld [vmem:[%s1 + $0x28c] sm:$0xf]
      %v4064 = vld [vmem:[%s1 + $0x290] sm:$0xf]
      %v4065 = vld [vmem:[%s1 + $0x294] sm:$0xf]
      %v4066 = vld [vmem:[%s1 + $0x298] sm:$0xf]
      %v4067 = vld [vmem:[%s1 + $0x29c] sm:$0xf]
      %v4068 = vld [vmem:[%s1 + $0x2a0] sm:$0xf]
      %v4069 = vld [vmem:[%s1 + $0x2a4] sm:$0xf]
      %v4070 = vld [vmem:[%s2 + $0x510] sm:$0xff]
      %v4071 = vld [vmem:[%s2 + $0x518] sm:$0xff]
      %v4072 = vld [vmem:[%s2 + $0x520] sm:$0xff]
      %v4073 = vld [vmem:[%s2 + $0x528] sm:$0xff]
      %v4074 = vld [vmem:[%s2 + $0x530] sm:$0xff]
      %v4075 = vld [vmem:[%s2 + $0x538] sm:$0xff]
      %v4076 = vld [vmem:[%s2 + $0x540] sm:$0xff]
      %v4077 = vld [vmem:[%s2 + $0x548] sm:$0xff]
      %4079 = vset.pattern.permute.xlu0 0
      %4080 = vperm.xlu0 %4079, %v4070
      %v4081 = vpop.permute.xlu0 %4080
      %4084 = vset.pattern.permute.xlu0 0
      %4085 = vperm.xlu0 %4084, %v4071
      %v4086 = vpop.permute.xlu0 %4085
      %4089 = vset.pattern.permute.xlu0 0
      %4090 = vperm.xlu0 %4089, %v4072
      %v4091 = vpop.permute.xlu0 %4090
      %4094 = vset.pattern.permute.xlu0 0
      %4095 = vperm.xlu0 %4094, %v4073
      %v4096 = vpop.permute.xlu0 %4095
      %4099 = vset.pattern.permute.xlu0 0
      %4100 = vperm.xlu0 %4099, %v4074
      %v4101 = vpop.permute.xlu0 %4100
      %4104 = vset.pattern.permute.xlu0 0
      %4105 = vperm.xlu0 %4104, %v4075
      %v4106 = vpop.permute.xlu0 %4105
      %4109 = vset.pattern.permute.xlu0 0
      %4110 = vperm.xlu0 %4109, %v4076
      %v4111 = vpop.permute.xlu0 %4110
      %4114 = vset.pattern.permute.xlu0 0
      %4115 = vperm.xlu0 %4114, %v4077
      %v4116 = vpop.permute.xlu0 %4115
      %v4126 = vunpack.c.l.b16 %v4062
      %v4127 = vunpack.c.l.b16 %v4063
      %v4128 = vunpack.c.l.b16 %v4064
      %v4129 = vunpack.c.l.b16 %v4065
      %v4130 = vunpack.c.l.b16 %v4066
      %v4131 = vunpack.c.l.b16 %v4067
      %v4132 = vunpack.c.l.b16 %v4068
      %v4133 = vunpack.c.l.b16 %v4069
      %v4134 = vpack.c.b16 %v4127, %v4126
      %v4135 = vpack.c.b16 %v4129, %v4128
      %v4136 = vpack.c.b16 %v4131, %v4130
      %v4137 = vpack.c.b16 %v4133, %v4132
      %v4139 = vsel %vm544, %v4134, 0
      %v4142 = vsel %vm544, %v4135, 0
      %v4145 = vsel %vm544, %v4136, 0
      %v4148 = vsel %vm544, %v4137, 0
      %4150 = vmatprep.subr.bf16.mxu0 0
      %4151 = vmatpush1.bf16.msra.mxu0 %v4060
      %4152 = vmatprep.subr.bf16.mxu0 0
      %4153 = vmatpush1.bf16.msra.mxu0 %v4061
      %4154 = vmatprep.subr.bf16.mxu0 0
      %4155 = vmatpush1.bf16.msra.mxu0 0
      %4156 = vmatprep.subr.bf16.mxu0 0
      %4157 = vmatpush1.bf16.msra.mxu0 0
      %4158 = vmatprep.subr.bf16.mxu0 0
      %4159 = vmatpush1.bf16.msra.mxu0 0
      %4160 = vmatprep.subr.bf16.mxu0 0
      %4161 = vmatpush1.bf16.msra.mxu0 0
      %4162 = vmatprep.subr.bf16.mxu0 0
      %4163 = vmatpush1.bf16.msra.mxu0 0
      %4164 = vmatprep.subr.bf16.mxu0 0
      %4165 = vmatpush1.bf16.msra.mxu0 0
      %4166 = vmatprep.subr.bf16.mxu0 0
      %4167 = vmatpush1.bf16.msra.mxu0 0
      %4168 = vmatprep.subr.bf16.mxu0 0
      %4169 = vmatpush1.bf16.msra.mxu0 0
      %4170 = vmatprep.subr.bf16.mxu0 0
      %4171 = vmatpush1.bf16.msra.mxu0 0
      %4172 = vmatprep.subr.bf16.mxu0 0
      %4173 = vmatpush1.bf16.msra.mxu0 0
      %4174 = vmatprep.subr.bf16.mxu0 0
      %4175 = vmatpush1.bf16.msra.mxu0 0
      %4176 = vmatprep.subr.bf16.mxu0 0
      %4177 = vmatpush1.bf16.msra.mxu0 0
      %4178 = vmatprep.subr.bf16.mxu0 0
      %4179 = vmatpush1.bf16.msra.mxu0 0
      %4180 = vmatprep.subr.bf16.mxu0 0
      %4181 = vmatpush1.bf16.msra.mxu0 0
      %4182 = vmatprep.mubr.bf16.mxu0 0
      %4183 = vmatmul.mubr.bf16.gmra.mrb[0].mxu0 %v4139
      %v4184 = vpop.f32.mrb[0].mxu0
      %v4185 = vadd.f32 %v4081, %v4184
      %v4186 = vpop.f32.mrb[0].mxu0
      %v4187 = vpop.f32.mrb[0].mxu0
      %v4188 = vadd.f32 %v4086, %v4187
      %v4189 = vpop.f32.mrb[0].mxu0
      %4190 = vmatprep.mubr.bf16.mxu0 0
      %4191 = vmatmul.mubr.bf16.gmra.mrb[0].mxu0 %v4142
      %v4192 = vpop.f32.mrb[0].mxu0
      %v4193 = vadd.f32 %v4091, %v4192
      %v4194 = vpop.f32.mrb[0].mxu0
      %v4195 = vpop.f32.mrb[0].mxu0
      %v4196 = vadd.f32 %v4096, %v4195
      %v4197 = vpop.f32.mrb[0].mxu0
      %4198 = vmatprep.mubr.bf16.mxu0 0
      %4199 = vmatmul.mubr.bf16.gmra.mrb[0].mxu0 %v4145
      %v4200 = vpop.f32.mrb[0].mxu0
      %v4201 = vadd.f32 %v4101, %v4200
      %v4202 = vpop.f32.mrb[0].mxu0
      %v4203 = vpop.f32.mrb[0].mxu0
      %v4204 = vadd.f32 %v4106, %v4203
      %v4205 = vpop.f32.mrb[0].mxu0
      %4206 = vmatprep.mubr.bf16.mxu0 0
      %4207 = vmatmul.mubr.bf16.gmra.mrb[0].mxu0 %v4148
      %v4208 = vpop.f32.mrb[0].mxu0
      %v4209 = vadd.f32 %v4111, %v4208
      %v4210 = vpop.f32.mrb[0].mxu0
      %v4211 = vpop.f32.mrb[0].mxu0
      %v4212 = vadd.f32 %v4116, %v4211
      %v4213 = vpop.f32.mrb[0].mxu0
      %4214 = vdwg.mxu0
      %v4215 = vmax.f32 %v4185, 0.0
      %v4216 = vmax.f32 %v4188, 0.0
      %v4217 = vmax.f32 %v4193, 0.0
      %v4218 = vmax.f32 %v4196, 0.0
      %v4219 = vmax.f32 %v4201, 0.0
      %v4220 = vmax.f32 %v4204, 0.0
      %v4221 = vmax.f32 %v4209, 0.0
      %v4222 = vmax.f32 %v4212, 0.0
      %v4223 = vpack.c.bf16 %v4216, %v4215
      %v4224 = vpack.c.bf16 %v4218, %v4217
      %v4225 = vpack.c.bf16 %v4220, %v4219
      %v4226 = vpack.c.bf16 %v4222, %v4221
      %v4227 = vld [vmem:[%s1 + $0x2a8] sm:$0xf]
      %v4228 = vld [vmem:[%s1 + $0x2ac] sm:$0xf]
      %v4229 = vld [vmem:[%s1 + $0x2b0] sm:$0xf]
      %v4230 = vld [vmem:[%s1 + $0x2b4] sm:$0xf]
      %v4231 = vld [vmem:[%s1 + $0x2b8] sm:$0xf]
      %v4232 = vld [vmem:[%s1 + $0x2bc] sm:$0xf]
      %v4233 = vld [vmem:[%s1 + $0x2c0] sm:$0xf]
      %v4234 = vld [vmem:[%s1 + $0x2c4] sm:$0xf]
      %v4235 = vld [vmem:[%s2 + $0x550] sm:$0xff]
      %v4236 = vld [vmem:[%s2 + $0x558] sm:$0xff]
      %v4237 = vld [vmem:[%s2 + $0x560] sm:$0xff]
      %v4238 = vld [vmem:[%s2 + $0x568] sm:$0xff]
      %v4239 = vld [vmem:[%s2 + $0x570] sm:$0xff]
      %v4240 = vld [vmem:[%s2 + $0x578] sm:$0xff]
      %v4241 = vld [vmem:[%s2 + $0x580] sm:$0xff]
      %v4242 = vld [vmem:[%s2 + $0x588] sm:$0xff]
      %4244 = vset.pattern.permute.xlu0 0
      %4245 = vperm.xlu0 %4244, %v4235
      %v4246 = vpop.permute.xlu0 %4245
      %4249 = vset.pattern.permute.xlu0 0
      %4250 = vperm.xlu0 %4249, %v4236
      %v4251 = vpop.permute.xlu0 %4250
      %4254 = vset.pattern.permute.xlu0 0
      %4255 = vperm.xlu0 %4254, %v4237
      %v4256 = vpop.permute.xlu0 %4255
      %4259 = vset.pattern.permute.xlu0 0
      %4260 = vperm.xlu0 %4259, %v4238
      %v4261 = vpop.permute.xlu0 %4260
      %4264 = vset.pattern.permute.xlu0 0
      %4265 = vperm.xlu0 %4264, %v4239
      %v4266 = vpop.permute.xlu0 %4265
      %4269 = vset.pattern.permute.xlu0 0
      %4270 = vperm.xlu0 %4269, %v4240
      %v4271 = vpop.permute.xlu0 %4270
      %4274 = vset.pattern.permute.xlu0 0
      %4275 = vperm.xlu0 %4274, %v4241
      %v4276 = vpop.permute.xlu0 %4275
      %4279 = vset.pattern.permute.xlu0 0
      %4280 = vperm.xlu0 %4279, %v4242
      %v4281 = vpop.permute.xlu0 %4280
      %v4291 = vunpack.c.l.b16 %v4227
      %v4292 = vunpack.c.l.b16 %v4228
      %v4293 = vunpack.c.l.b16 %v4229
      %v4294 = vunpack.c.l.b16 %v4230
      %v4295 = vunpack.c.l.b16 %v4231
      %v4296 = vunpack.c.l.b16 %v4232
      %v4297 = vunpack.c.l.b16 %v4233
      %v4298 = vunpack.c.l.b16 %v4234
      %v4299 = vpack.c.b16 %v4292, %v4291
      %v4300 = vpack.c.b16 %v4294, %v4293
      %v4301 = vpack.c.b16 %v4296, %v4295
      %v4302 = vpack.c.b16 %v4298, %v4297
      %v4304 = vsel %vm388, %v4299, 0
      %v4307 = vsel %vm388, %v4300, 0
      %v4310 = vsel %vm388, %v4301, 0
      %v4313 = vsel %vm388, %v4302, 0
      %4315 = vmatprep.subr.bf16.mxu0 0
      %4316 = vmatpush1.bf16.msra.mxu0 %v4223
      %4317 = vmatprep.subr.bf16.mxu0 0
      %4318 = vmatpush1.bf16.msra.mxu0 %v4224
      %4319 = vmatprep.subr.bf16.mxu0 0
      %4320 = vmatpush1.bf16.msra.mxu0 %v4225
      %4321 = vmatprep.subr.bf16.mxu0 0
      %4322 = vmatpush1.bf16.msra.mxu0 %v4226
      %4323 = vmatprep.subr.bf16.mxu0 0
      %4324 = vmatpush1.bf16.msra.mxu0 0
      %4325 = vmatprep.subr.bf16.mxu0 0
      %4326 = vmatpush1.bf16.msra.mxu0 0
      %4327 = vmatprep.subr.bf16.mxu0 0
      %4328 = vmatpush1.bf16.msra.mxu0 0
      %4329 = vmatprep.subr.bf16.mxu0 0
      %4330 = vmatpush1.bf16.msra.mxu0 0
      %4331 = vmatprep.subr.bf16.mxu0 0
      %4332 = vmatpush1.bf16.msra.mxu0 0
      %4333 = vmatprep.subr.bf16.mxu0 0
      %4334 = vmatpush1.bf16.msra.mxu0 0
      %4335 = vmatprep.subr.bf16.mxu0 0
      %4336 = vmatpush1.bf16.msra.mxu0 0
      %4337 = vmatprep.subr.bf16.mxu0 0
      %4338 = vmatpush1.bf16.msra.mxu0 0
      %4339 = vmatprep.subr.bf16.mxu0 0
      %4340 = vmatpush1.bf16.msra.mxu0 0
      %4341 = vmatprep.subr.bf16.mxu0 0
      %4342 = vmatpush1.bf16.msra.mxu0 0
      %4343 = vmatprep.subr.bf16.mxu0 0
      %4344 = vmatpush1.bf16.msra.mxu0 0
      %4345 = vmatprep.subr.bf16.mxu0 0
      %4346 = vmatpush1.bf16.msra.mxu0 0
      %4347 = vmatprep.mubr.bf16.mxu0 0
      %4348 = vmatmul.mubr.bf16.gmra.mrb[0].mxu0 %v4304
      %v4349 = vpop.f32.mrb[0].mxu0
      %v4350 = vadd.f32 %v4246, %v4349
      %v4351 = vpop.f32.mrb[0].mxu0
      %v4352 = vpop.f32.mrb[0].mxu0
      %v4353 = vadd.f32 %v4251, %v4352
      %v4354 = vpop.f32.mrb[0].mxu0
      %4355 = vmatprep.mubr.bf16.mxu0 0
      %4356 = vmatmul.mubr.bf16.gmra.mrb[0].mxu0 %v4307
      %v4357 = vpop.f32.mrb[0].mxu0
      %v4358 = vadd.f32 %v4256, %v4357
      %v4359 = vpop.f32.mrb[0].mxu0
      %v4360 = vpop.f32.mrb[0].mxu0
      %v4361 = vadd.f32 %v4261, %v4360
      %v4362 = vpop.f32.mrb[0].mxu0
      %4363 = vmatprep.mubr.bf16.mxu0 0
      %4364 = vmatmul.mubr.bf16.gmra.mrb[0].mxu0 %v4310
      %v4365 = vpop.f32.mrb[0].mxu0
      %v4366 = vadd.f32 %v4266, %v4365
      %v4367 = vpop.f32.mrb[0].mxu0
      %v4368 = vpop.f32.mrb[0].mxu0
      %v4369 = vadd.f32 %v4271, %v4368
      %v4370 = vpop.f32.mrb[0].mxu0
      %4371 = vmatprep.mubr.bf16.mxu0 0
      %4372 = vmatmul.mubr.bf16.gmra.mrb[0].mxu0 %v4313
      %v4373 = vpop.f32.mrb[0].mxu0
      %v4374 = vadd.f32 %v4276, %v4373
      %v4375 = vpop.f32.mrb[0].mxu0
      %v4376 = vpop.f32.mrb[0].mxu0
      %v4377 = vadd.f32 %v4281, %v4376
      %v4378 = vpop.f32.mrb[0].mxu0
      %4379 = vdwg.mxu0
      %v4380 = vmax.f32 %v4350, 0.0
      %v4381 = vmax.f32 %v4353, 0.0
      %v4382 = vmax.f32 %v4358, 0.0
      %v4383 = vmax.f32 %v4361, 0.0
      %v4384 = vmax.f32 %v4366, 0.0
      %v4385 = vmax.f32 %v4369, 0.0
      %v4386 = vmax.f32 %v4374, 0.0
      %v4387 = vmax.f32 %v4377, 0.0
      %v4388 = vpack.c.bf16 %v4381, %v4380
      %v4389 = vpack.c.bf16 %v4383, %v4382
      %v4390 = vpack.c.bf16 %v4385, %v4384
      %v4391 = vpack.c.bf16 %v4387, %v4386
      %v4392 = vld [vmem:[%s1 + $0x2c8] sm:$0xf]
      %v4393 = vld [vmem:[%s1 + $0x2cc] sm:$0xf]
      %v4394 = vld [vmem:[%s1 + $0x2d0] sm:$0xf]
      %v4395 = vld [vmem:[%s1 + $0x2d4] sm:$0xf]
      %v4396 = vld [vmem:[%s2 + $0x590] sm:$0xff]
      %v4397 = vld [vmem:[%s2 + $0x598] sm:$0xff]
      %v4398 = vld [vmem:[%s2 + $0x5a0] sm:$0xff]
      %v4399 = vld [vmem:[%s2 + $0x5a8] sm:$0xff]
      %4401 = vset.pattern.permute.xlu0 0
      %4402 = vperm.xlu0 %4401, %v4396
      %v4403 = vpop.permute.xlu0 %4402
      %4406 = vset.pattern.permute.xlu0 0
      %4407 = vperm.xlu0 %4406, %v4397
      %v4408 = vpop.permute.xlu0 %4407
      %4411 = vset.pattern.permute.xlu0 0
      %4412 = vperm.xlu0 %4411, %v4398
      %v4413 = vpop.permute.xlu0 %4412
      %4416 = vset.pattern.permute.xlu0 0
      %4417 = vperm.xlu0 %4416, %v4399
      %v4418 = vpop.permute.xlu0 %4417
      %v4424 = vunpack.c.l.b16 %v4392
      %v4425 = vunpack.c.l.b16 %v4393
      %v4426 = vunpack.c.l.b16 %v4394
      %v4427 = vunpack.c.l.b16 %v4395
      %v4428 = vpack.c.b16 %v4425, %v4424
      %v4429 = vpack.c.b16 %v4427, %v4426
      %v4431 = vsel %vm388, %v4428, 0
      %v4434 = vsel %vm388, %v4429, 0
      %4436 = vmatprep.subr.bf16.mxu0 0
      %4437 = vmatpush1.bf16.msra.mxu0 %v4388
      %4438 = vmatprep.subr.bf16.mxu0 0
      %4439 = vmatpush1.bf16.msra.mxu0 %v4389
      %4440 = vmatprep.subr.bf16.mxu0 0
      %4441 = vmatpush1.bf16.msra.mxu0 %v4390
      %4442 = vmatprep.subr.bf16.mxu0 0
      %4443 = vmatpush1.bf16.msra.mxu0 %v4391
      %4444 = vmatprep.subr.bf16.mxu0 0
      %4445 = vmatpush1.bf16.msra.mxu0 0
      %4446 = vmatprep.subr.bf16.mxu0 0
      %4447 = vmatpush1.bf16.msra.mxu0 0
      %4448 = vmatprep.subr.bf16.mxu0 0
      %4449 = vmatpush1.bf16.msra.mxu0 0
      %4450 = vmatprep.subr.bf16.mxu0 0
      %4451 = vmatpush1.bf16.msra.mxu0 0
      %4452 = vmatprep.subr.bf16.mxu0 0
      %4453 = vmatpush1.bf16.msra.mxu0 0
      %4454 = vmatprep.subr.bf16.mxu0 0
      %4455 = vmatpush1.bf16.msra.mxu0 0
      %4456 = vmatprep.subr.bf16.mxu0 0
      %4457 = vmatpush1.bf16.msra.mxu0 0
      %4458 = vmatprep.subr.bf16.mxu0 0
      %4459 = vmatpush1.bf16.msra.mxu0 0
      %4460 = vmatprep.subr.bf16.mxu0 0
      %4461 = vmatpush1.bf16.msra.mxu0 0
      %4462 = vmatprep.subr.bf16.mxu0 0
      %4463 = vmatpush1.bf16.msra.mxu0 0
      %4464 = vmatprep.subr.bf16.mxu0 0
      %4465 = vmatpush1.bf16.msra.mxu0 0
      %4466 = vmatprep.subr.bf16.mxu0 0
      %4467 = vmatpush1.bf16.msra.mxu0 0
      %4468 = vmatprep.mubr.bf16.mxu0 0
      %4469 = vmatmul.mubr.bf16.gmra.mrb[0].mxu0 %v4431
      %v4470 = vpop.f32.mrb[0].mxu0
      %v4471 = vadd.f32 %v4403, %v4470
      %v4472 = vpop.f32.mrb[0].mxu0
      %v4473 = vpop.f32.mrb[0].mxu0
      %v4474 = vadd.f32 %v4408, %v4473
      %v4475 = vpop.f32.mrb[0].mxu0
      %4476 = vmatprep.mubr.bf16.mxu0 0
      %4477 = vmatmul.mubr.bf16.gmra.mrb[0].mxu0 %v4434
      %v4478 = vpop.f32.mrb[0].mxu0
      %v4479 = vadd.f32 %v4413, %v4478
      %v4480 = vpop.f32.mrb[0].mxu0
      %v4481 = vpop.f32.mrb[0].mxu0
      %v4482 = vadd.f32 %v4418, %v4481
      %v4483 = vpop.f32.mrb[0].mxu0
      %4484 = vdwg.mxu0
      %v4485 = vmin.f32 %v4479, 0.0
      %v4486 = vmin.f32 %v4482, 0.0
      %v4487 = vand.u32 2147483647, %v4479
      %v4488 = vand.u32 2147483647, %v4482
      %v4489 = vsub.f32 0.0, %v4487
      %v4490 = vsub.f32 0.0, %v4488
      %v4491 = vmul.f32 %v4489, 1.442695
      %v4492 = vpow.pop %v4491
      %v4493 = vmul.f32 %v4490, 1.442695
      %v4494 = vpow.pop %v4493
      %v4495 = vadd.f32 %v4492, 1.0
      %v4496 = vlog2.pop %v4495
      %v4497 = vmul.f32 %v4496, 0.6931472
      %v4498 = vmul.f32 -0.5, %v4492
      %v4499 = vadd.f32 %v4498, 1.0
      %v4500 = vmul.f32 %v4499, %v4492
      %v4501 = vand.u32 2147483647, %v4492
      %vm4502 = vcmp.lt.f32.partialorder %v4501, 0.0004427343
      %v4503 = vsel %vm4502, %v4500, %v4497
      %v4504 = vadd.f32 %v4494, 1.0
      %v4505 = vlog2.pop %v4504
      %v4506 = vmul.f32 %v4505, 0.6931472
      %v4507 = vmul.f32 -0.5, %v4494
      %v4508 = vadd.f32 %v4507, 1.0
      %v4509 = vmul.f32 %v4508, %v4494
      %v4510 = vand.u32 2147483647, %v4494
      %vm4511 = vcmp.lt.f32.partialorder %v4510, 0.0004427343
      %v4512 = vsel %vm4511, %v4509, %v4506
      %v4513 = vsub.f32 %v4485, %v4503
      %v4514 = vsub.f32 %v4486, %v4512
      %v4515 = vadd.f32 %v4052, %v4471
      %v4516 = vadd.f32 %v4055, %v4474
      %v4517 = vmul.f32 %v4513, 1.442695
      %v4518 = vpow.pop %v4517
      %v4519 = vmul.f32 %v4514, 1.442695
      %v4520 = vpow.pop %v4519
      %v4521 = vmul.f32 %v4515, %v4518
      %v4522 = vmul.f32 %v4516, %v4520
      %v4523 = vadd.f32 %v3962, %v4513
      %v4524 = vadd.f32 %v3963, %v4514
      %v4525 = vpack.c.bf16 %v4522, %v4521
      %v4526 = vld [vmem:[%s1 + $0x2d8] sm:$0xf]
      %v4527 = vld [vmem:[%s1 + $0x2dc] sm:$0xf]
      %v4528 = vld [vmem:[%s1 + $0x2e0] sm:$0xf]
      %v4529 = vld [vmem:[%s1 + $0x2e4] sm:$0xf]
      %v4530 = vld [vmem:[%s2 + $0x5b0] sm:$0xff]
      %v4531 = vld [vmem:[%s2 + $0x5b8] sm:$0xff]
      %v4532 = vld [vmem:[%s2 + $0x5c0] sm:$0xff]
      %v4533 = vld [vmem:[%s2 + $0x5c8] sm:$0xff]
      %4535 = vset.pattern.permute.xlu0 0
      %4536 = vperm.xlu0 %4535, %v4530
      %v4537 = vpop.permute.xlu0 %4536
      %4540 = vset.pattern.permute.xlu0 0
      %4541 = vperm.xlu0 %4540, %v4531
      %v4542 = vpop.permute.xlu0 %4541
      %4545 = vset.pattern.permute.xlu0 0
      %4546 = vperm.xlu0 %4545, %v4532
      %v4547 = vpop.permute.xlu0 %4546
      %4550 = vset.pattern.permute.xlu0 0
      %4551 = vperm.xlu0 %4550, %v4533
      %v4552 = vpop.permute.xlu0 %4551
      %v4558 = vunpack.c.l.b16 %v4526
      %v4559 = vunpack.c.l.b16 %v4527
      %v4560 = vunpack.c.l.b16 %v4528
      %v4561 = vunpack.c.l.b16 %v4529
      %v4562 = vpack.c.b16 %v4559, %v4558
      %v4563 = vpack.c.b16 %v4561, %v4560
      %v4565 = vsel %vm544, %v4562, 0
      %v4568 = vsel %vm544, %v4563, 0
      %4570 = vmatprep.subr.bf16.mxu0 0
      %4571 = vmatpush1.bf16.msra.mxu0 %v4058
      %4572 = vmatprep.subr.bf16.mxu0 0
      %4573 = vmatpush1.bf16.msra.mxu0 %v4525
      %4574 = vmatprep.subr.bf16.mxu0 0
      %4575 = vmatpush1.bf16.msra.mxu0 0
      %4576 = vmatprep.subr.bf16.mxu0 0
      %4577 = vmatpush1.bf16.msra.mxu0 0
      %4578 = vmatprep.subr.bf16.mxu0 0
      %4579 = vmatpush1.bf16.msra.mxu0 0
      %4580 = vmatprep.subr.bf16.mxu0 0
      %4581 = vmatpush1.bf16.msra.mxu0 0
      %4582 = vmatprep.subr.bf16.mxu0 0
      %4583 = vmatpush1.bf16.msra.mxu0 0
      %4584 = vmatprep.subr.bf16.mxu0 0
      %4585 = vmatpush1.bf16.msra.mxu0 0
      %4586 = vmatprep.subr.bf16.mxu0 0
      %4587 = vmatpush1.bf16.msra.mxu0 0
      %4588 = vmatprep.subr.bf16.mxu0 0
      %4589 = vmatpush1.bf16.msra.mxu0 0
      %4590 = vmatprep.subr.bf16.mxu0 0
      %4591 = vmatpush1.bf16.msra.mxu0 0
      %4592 = vmatprep.subr.bf16.mxu0 0
      %4593 = vmatpush1.bf16.msra.mxu0 0
      %4594 = vmatprep.subr.bf16.mxu0 0
      %4595 = vmatpush1.bf16.msra.mxu0 0
      %4596 = vmatprep.subr.bf16.mxu0 0
      %4597 = vmatpush1.bf16.msra.mxu0 0
      %4598 = vmatprep.subr.bf16.mxu0 0
      %4599 = vmatpush1.bf16.msra.mxu0 0
      %4600 = vmatprep.subr.bf16.mxu0 0
      %4601 = vmatpush1.bf16.msra.mxu0 0
      %4602 = vmatprep.mubr.bf16.mxu0 0
      %4603 = vmatmul.mubr.bf16.gmra.mrb[0].mxu0 %v4565
      %v4604 = vpop.f32.mrb[0].mxu0
      %v4605 = vadd.f32 %v4537, %v4604
      %v4606 = vpop.f32.mrb[0].mxu0
      %v4607 = vpop.f32.mrb[0].mxu0
      %v4608 = vadd.f32 %v4542, %v4607
      %v4609 = vpop.f32.mrb[0].mxu0
      %4610 = vmatprep.mubr.bf16.mxu0 0
      %4611 = vmatmul.mubr.bf16.gmra.mrb[0].mxu0 %v4568
      %v4612 = vpop.f32.mrb[0].mxu0
      %v4613 = vadd.f32 %v4547, %v4612
      %v4614 = vpop.f32.mrb[0].mxu0
      %v4615 = vpop.f32.mrb[0].mxu0
      %v4616 = vadd.f32 %v4552, %v4615
      %v4617 = vpop.f32.mrb[0].mxu0
      %4618 = vdwg.mxu0
      %v4619 = vpack.c.bf16 %v4608, %v4605
      %4620 = vst [vmem:[#allocation2] sm:$0xff] %v4619
      %v4621 = vld [vmem:[#allocation2] sm:$0xff]
      %v4622 = vld [vmem:[#allocation2 + $0x8] sm:$0xff]
      %v4623 = vld [vmem:[%s1 + $0x2e8] sm:$0xf]
      %v4624 = vld [vmem:[%s1 + $0x2ec] sm:$0xf]
      %v4625 = vld [vmem:[%s1 + $0x2f0] sm:$0xf]
      %v4626 = vld [vmem:[%s1 + $0x2f4] sm:$0xf]
      %v4627 = vld [vmem:[%s1 + $0x2f8] sm:$0xf]
      %v4628 = vld [vmem:[%s1 + $0x2fc] sm:$0xf]
      %v4629 = vld [vmem:[%s1 + $0x300] sm:$0xf]
      %v4630 = vld [vmem:[%s1 + $0x304] sm:$0xf]
      %v4631 = vld [vmem:[%s2 + $0x5d0] sm:$0xff]
      %v4632 = vld [vmem:[%s2 + $0x5d8] sm:$0xff]
      %v4633 = vld [vmem:[%s2 + $0x5e0] sm:$0xff]
      %v4634 = vld [vmem:[%s2 + $0x5e8] sm:$0xff]
      %v4635 = vld [vmem:[%s2 + $0x5f0] sm:$0xff]
      %v4636 = vld [vmem:[%s2 + $0x5f8] sm:$0xff]
      %v4637 = vld [vmem:[%s2 + $0x600] sm:$0xff]
      %v4638 = vld [vmem:[%s2 + $0x608] sm:$0xff]
      %4640 = vset.pattern.permute.xlu0 0
      %4641 = vperm.xlu0 %4640, %v4631
      %v4642 = vpop.permute.xlu0 %4641
      %4645 = vset.pattern.permute.xlu0 0
      %4646 = vperm.xlu0 %4645, %v4632
      %v4647 = vpop.permute.xlu0 %4646
      %4650 = vset.pattern.permute.xlu0 0
      %4651 = vperm.xlu0 %4650, %v4633
      %v4652 = vpop.permute.xlu0 %4651
      %4655 = vset.pattern.permute.xlu0 0
      %4656 = vperm.xlu0 %4655, %v4634
      %v4657 = vpop.permute.xlu0 %4656
      %4660 = vset.pattern.permute.xlu0 0
      %4661 = vperm.xlu0 %4660, %v4635
      %v4662 = vpop.permute.xlu0 %4661
      %4665 = vset.pattern.permute.xlu0 0
      %4666 = vperm.xlu0 %4665, %v4636
      %v4667 = vpop.permute.xlu0 %4666
      %4670 = vset.pattern.permute.xlu0 0
      %4671 = vperm.xlu0 %4670, %v4637
      %v4672 = vpop.permute.xlu0 %4671
      %4675 = vset.pattern.permute.xlu0 0
      %4676 = vperm.xlu0 %4675, %v4638
      %v4677 = vpop.permute.xlu0 %4676
      %v4687 = vunpack.c.l.b16 %v4623
      %v4688 = vunpack.c.l.b16 %v4624
      %v4689 = vunpack.c.l.b16 %v4625
      %v4690 = vunpack.c.l.b16 %v4626
      %v4691 = vunpack.c.l.b16 %v4627
      %v4692 = vunpack.c.l.b16 %v4628
      %v4693 = vunpack.c.l.b16 %v4629
      %v4694 = vunpack.c.l.b16 %v4630
      %v4695 = vpack.c.b16 %v4688, %v4687
      %v4696 = vpack.c.b16 %v4690, %v4689
      %v4697 = vpack.c.b16 %v4692, %v4691
      %v4698 = vpack.c.b16 %v4694, %v4693
      %v4700 = vsel %vm544, %v4695, 0
      %v4703 = vsel %vm544, %v4696, 0
      %v4706 = vsel %vm544, %v4697, 0
      %v4709 = vsel %vm544, %v4698, 0
      %4711 = vmatprep.subr.bf16.mxu0 0
      %4712 = vmatpush1.bf16.msra.mxu0 %v4621
      %4713 = vmatprep.subr.bf16.mxu0 0
      %4714 = vmatpush1.bf16.msra.mxu0 %v4622
      %4715 = vmatprep.subr.bf16.mxu0 0
      %4716 = vmatpush1.bf16.msra.mxu0 0
      %4717 = vmatprep.subr.bf16.mxu0 0
      %4718 = vmatpush1.bf16.msra.mxu0 0
      %4719 = vmatprep.subr.bf16.mxu0 0
      %4720 = vmatpush1.bf16.msra.mxu0 0
      %4721 = vmatprep.subr.bf16.mxu0 0
      %4722 = vmatpush1.bf16.msra.mxu0 0
      %4723 = vmatprep.subr.bf16.mxu0 0
      %4724 = vmatpush1.bf16.msra.mxu0 0
      %4725 = vmatprep.subr.bf16.mxu0 0
      %4726 = vmatpush1.bf16.msra.mxu0 0
      %4727 = vmatprep.subr.bf16.mxu0 0
      %4728 = vmatpush1.bf16.msra.mxu0 0
      %4729 = vmatprep.subr.bf16.mxu0 0
      %4730 = vmatpush1.bf16.msra.mxu0 0
      %4731 = vmatprep.subr.bf16.mxu0 0
      %4732 = vmatpush1.bf16.msra.mxu0 0
      %4733 = vmatprep.subr.bf16.mxu0 0
      %4734 = vmatpush1.bf16.msra.mxu0 0
      %4735 = vmatprep.subr.bf16.mxu0 0
      %4736 = vmatpush1.bf16.msra.mxu0 0
      %4737 = vmatprep.subr.bf16.mxu0 0
      %4738 = vmatpush1.bf16.msra.mxu0 0
      %4739 = vmatprep.subr.bf16.mxu0 0
      %4740 = vmatpush1.bf16.msra.mxu0 0
      %4741 = vmatprep.subr.bf16.mxu0 0
      %4742 = vmatpush1.bf16.msra.mxu0 0
      %4743 = vmatprep.mubr.bf16.mxu0 0
      %4744 = vmatmul.mubr.bf16.gmra.mrb[0].mxu0 %v4700
      %v4745 = vpop.f32.mrb[0].mxu0
      %v4746 = vadd.f32 %v4642, %v4745
      %v4747 = vpop.f32.mrb[0].mxu0
      %v4748 = vpop.f32.mrb[0].mxu0
      %v4749 = vadd.f32 %v4647, %v4748
      %v4750 = vpop.f32.mrb[0].mxu0
      %4751 = vmatprep.mubr.bf16.mxu0 0
      %4752 = vmatmul.mubr.bf16.gmra.mrb[0].mxu0 %v4703
      %v4753 = vpop.f32.mrb[0].mxu0
      %v4754 = vadd.f32 %v4652, %v4753
      %v4755 = vpop.f32.mrb[0].mxu0
      %v4756 = vpop.f32.mrb[0].mxu0
      %v4757 = vadd.f32 %v4657, %v4756
      %v4758 = vpop.f32.mrb[0].mxu0
      %4759 = vmatprep.mubr.bf16.mxu0 0
      %4760 = vmatmul.mubr.bf16.gmra.mrb[0].mxu0 %v4706
      %v4761 = vpop.f32.mrb[0].mxu0
      %v4762 = vadd.f32 %v4662, %v4761
      %v4763 = vpop.f32.mrb[0].mxu0
      %v4764 = vpop.f32.mrb[0].mxu0
      %v4765 = vadd.f32 %v4667, %v4764
      %v4766 = vpop.f32.mrb[0].mxu0
      %4767 = vmatprep.mubr.bf16.mxu0 0
      %4768 = vmatmul.mubr.bf16.gmra.mrb[0].mxu0 %v4709
      %v4769 = vpop.f32.mrb[0].mxu0
      %v4770 = vadd.f32 %v4672, %v4769
      %v4771 = vpop.f32.mrb[0].mxu0
      %v4772 = vpop.f32.mrb[0].mxu0
      %v4773 = vadd.f32 %v4677, %v4772
      %v4774 = vpop.f32.mrb[0].mxu0
      %4775 = vdwg.mxu0
      %v4776 = vmax.f32 %v4746, 0.0
      %v4777 = vmax.f32 %v4749, 0.0
      %v4778 = vmax.f32 %v4754, 0.0
      %v4779 = vmax.f32 %v4757, 0.0
      %v4780 = vmax.f32 %v4762, 0.0
      %v4781 = vmax.f32 %v4765, 0.0
      %v4782 = vmax.f32 %v4770, 0.0
      %v4783 = vmax.f32 %v4773, 0.0
      %v4784 = vpack.c.bf16 %v4777, %v4776
      %v4785 = vpack.c.bf16 %v4779, %v4778
      %v4786 = vpack.c.bf16 %v4781, %v4780
      %v4787 = vpack.c.bf16 %v4783, %v4782
      %v4788 = vld [vmem:[%s1 + $0x308] sm:$0xf]
      %v4789 = vld [vmem:[%s1 + $0x30c] sm:$0xf]
      %v4790 = vld [vmem:[%s1 + $0x310] sm:$0xf]
      %v4791 = vld [vmem:[%s1 + $0x314] sm:$0xf]
      %v4792 = vld [vmem:[%s1 + $0x318] sm:$0xf]
      %v4793 = vld [vmem:[%s1 + $0x31c] sm:$0xf]
      %v4794 = vld [vmem:[%s1 + $0x320] sm:$0xf]
      %v4795 = vld [vmem:[%s1 + $0x324] sm:$0xf]
      %v4796 = vld [vmem:[%s2 + $0x610] sm:$0xff]
      %v4797 = vld [vmem:[%s2 + $0x618] sm:$0xff]
      %v4798 = vld [vmem:[%s2 + $0x620] sm:$0xff]
      %v4799 = vld [vmem:[%s2 + $0x628] sm:$0xff]
      %v4800 = vld [vmem:[%s2 + $0x630] sm:$0xff]
      %v4801 = vld [vmem:[%s2 + $0x638] sm:$0xff]
      %v4802 = vld [vmem:[%s2 + $0x640] sm:$0xff]
      %v4803 = vld [vmem:[%s2 + $0x648] sm:$0xff]
      %4805 = vset.pattern.permute.xlu0 0
      %4806 = vperm.xlu0 %4805, %v4796
      %v4807 = vpop.permute.xlu0 %4806
      %4810 = vset.pattern.permute.xlu0 0
      %4811 = vperm.xlu0 %4810, %v4797
      %v4812 = vpop.permute.xlu0 %4811
      %4815 = vset.pattern.permute.xlu0 0
      %4816 = vperm.xlu0 %4815, %v4798
      %v4817 = vpop.permute.xlu0 %4816
      %4820 = vset.pattern.permute.xlu0 0
      %4821 = vperm.xlu0 %4820, %v4799
      %v4822 = vpop.permute.xlu0 %4821
      %4825 = vset.pattern.permute.xlu0 0
      %4826 = vperm.xlu0 %4825, %v4800
      %v4827 = vpop.permute.xlu0 %4826
      %4830 = vset.pattern.permute.xlu0 0
      %4831 = vperm.xlu0 %4830, %v4801
      %v4832 = vpop.permute.xlu0 %4831
      %4835 = vset.pattern.permute.xlu0 0
      %4836 = vperm.xlu0 %4835, %v4802
      %v4837 = vpop.permute.xlu0 %4836
      %4840 = vset.pattern.permute.xlu0 0
      %4841 = vperm.xlu0 %4840, %v4803
      %v4842 = vpop.permute.xlu0 %4841
      %v4852 = vunpack.c.l.b16 %v4788
      %v4853 = vunpack.c.l.b16 %v4789
      %v4854 = vunpack.c.l.b16 %v4790
      %v4855 = vunpack.c.l.b16 %v4791
      %v4856 = vunpack.c.l.b16 %v4792
      %v4857 = vunpack.c.l.b16 %v4793
      %v4858 = vunpack.c.l.b16 %v4794
      %v4859 = vunpack.c.l.b16 %v4795
      %v4860 = vpack.c.b16 %v4853, %v4852
      %v4861 = vpack.c.b16 %v4855, %v4854
      %v4862 = vpack.c.b16 %v4857, %v4856
      %v4863 = vpack.c.b16 %v4859, %v4858
      %v4865 = vsel %vm388, %v4860, 0
      %v4868 = vsel %vm388, %v4861, 0
      %v4871 = vsel %vm388, %v4862, 0
      %v4874 = vsel %vm388, %v4863, 0
      %4876 = vmatprep.subr.bf16.mxu0 0
      %4877 = vmatpush1.bf16.msra.mxu0 %v4784
      %4878 = vmatprep.subr.bf16.mxu0 0
      %4879 = vmatpush1.bf16.msra.mxu0 %v4785
      %4880 = vmatprep.subr.bf16.mxu0 0
      %4881 = vmatpush1.bf16.msra.mxu0 %v4786
      %4882 = vmatprep.subr.bf16.mxu0 0
      %4883 = vmatpush1.bf16.msra.mxu0 %v4787
      %4884 = vmatprep.subr.bf16.mxu0 0
      %4885 = vmatpush1.bf16.msra.mxu0 0
      %4886 = vmatprep.subr.bf16.mxu0 0
      %4887 = vmatpush1.bf16.msra.mxu0 0
      %4888 = vmatprep.subr.bf16.mxu0 0
      %4889 = vmatpush1.bf16.msra.mxu0 0
      %4890 = vmatprep.subr.bf16.mxu0 0
      %4891 = vmatpush1.bf16.msra.mxu0 0
      %4892 = vmatprep.subr.bf16.mxu0 0
      %4893 = vmatpush1.bf16.msra.mxu0 0
      %4894 = vmatprep.subr.bf16.mxu0 0
      %4895 = vmatpush1.bf16.msra.mxu0 0
      %4896 = vmatprep.subr.bf16.mxu0 0
      %4897 = vmatpush1.bf16.msra.mxu0 0
      %4898 = vmatprep.subr.bf16.mxu0 0
      %4899 = vmatpush1.bf16.msra.mxu0 0
      %4900 = vmatprep.subr.bf16.mxu0 0
      %4901 = vmatpush1.bf16.msra.mxu0 0
      %4902 = vmatprep.subr.bf16.mxu0 0
      %4903 = vmatpush1.bf16.msra.mxu0 0
      %4904 = vmatprep.subr.bf16.mxu0 0
      %4905 = vmatpush1.bf16.msra.mxu0 0
      %4906 = vmatprep.subr.bf16.mxu0 0
      %4907 = vmatpush1.bf16.msra.mxu0 0
      %4908 = vmatprep.mubr.bf16.mxu0 0
      %4909 = vmatmul.mubr.bf16.gmra.mrb[0].mxu0 %v4865
      %v4910 = vpop.f32.mrb[0].mxu0
      %v4911 = vadd.f32 %v4807, %v4910
      %v4912 = vpop.f32.mrb[0].mxu0
      %v4913 = vpop.f32.mrb[0].mxu0
      %v4914 = vadd.f32 %v4812, %v4913
      %v4915 = vpop.f32.mrb[0].mxu0
      %4916 = vmatprep.mubr.bf16.mxu0 0
      %4917 = vmatmul.mubr.bf16.gmra.mrb[0].mxu0 %v4868
      %v4918 = vpop.f32.mrb[0].mxu0
      %v4919 = vadd.f32 %v4817, %v4918
      %v4920 = vpop.f32.mrb[0].mxu0
      %v4921 = vpop.f32.mrb[0].mxu0
      %v4922 = vadd.f32 %v4822, %v4921
      %v4923 = vpop.f32.mrb[0].mxu0
      %4924 = vmatprep.mubr.bf16.mxu0 0
      %4925 = vmatmul.mubr.bf16.gmra.mrb[0].mxu0 %v4871
      %v4926 = vpop.f32.mrb[0].mxu0
      %v4927 = vadd.f32 %v4827, %v4926
      %v4928 = vpop.f32.mrb[0].mxu0
      %v4929 = vpop.f32.mrb[0].mxu0
      %v4930 = vadd.f32 %v4832, %v4929
      %v4931 = vpop.f32.mrb[0].mxu0
      %4932 = vmatprep.mubr.bf16.mxu0 0
      %4933 = vmatmul.mubr.bf16.gmra.mrb[0].mxu0 %v4874
      %v4934 = vpop.f32.mrb[0].mxu0
      %v4935 = vadd.f32 %v4837, %v4934
      %v4936 = vpop.f32.mrb[0].mxu0
      %v4937 = vpop.f32.mrb[0].mxu0
      %v4938 = vadd.f32 %v4842, %v4937
      %v4939 = vpop.f32.mrb[0].mxu0
      %4940 = vdwg.mxu0
      %v4941 = vmax.f32 %v4911, 0.0
      %v4942 = vmax.f32 %v4914, 0.0
      %v4943 = vmax.f32 %v4919, 0.0
      %v4944 = vmax.f32 %v4922, 0.0
      %v4945 = vmax.f32 %v4927, 0.0
      %v4946 = vmax.f32 %v4930, 0.0
      %v4947 = vmax.f32 %v4935, 0.0
      %v4948 = vmax.f32 %v4938, 0.0
      %v4949 = vpack.c.bf16 %v4942, %v4941
      %v4950 = vpack.c.bf16 %v4944, %v4943
      %v4951 = vpack.c.bf16 %v4946, %v4945
      %v4952 = vpack.c.bf16 %v4948, %v4947
      %v4953 = vld [vmem:[%s1 + $0x328] sm:$0xf]
      %v4954 = vld [vmem:[%s1 + $0x32c] sm:$0xf]
      %v4955 = vld [vmem:[%s1 + $0x330] sm:$0xf]
      %v4956 = vld [vmem:[%s1 + $0x334] sm:$0xf]
      %v4957 = vld [vmem:[%s2 + $0x650] sm:$0xff]
      %v4958 = vld [vmem:[%s2 + $0x658] sm:$0xff]
      %v4959 = vld [vmem:[%s2 + $0x660] sm:$0xff]
      %v4960 = vld [vmem:[%s2 + $0x668] sm:$0xff]
      %4962 = vset.pattern.permute.xlu0 0
      %4963 = vperm.xlu0 %4962, %v4957
      %v4964 = vpop.permute.xlu0 %4963
      %4967 = vset.pattern.permute.xlu0 0
      %4968 = vperm.xlu0 %4967, %v4958
      %v4969 = vpop.permute.xlu0 %4968
      %4972 = vset.pattern.permute.xlu0 0
      %4973 = vperm.xlu0 %4972, %v4959
      %v4974 = vpop.permute.xlu0 %4973
      %4977 = vset.pattern.permute.xlu0 0
      %4978 = vperm.xlu0 %4977, %v4960
      %v4979 = vpop.permute.xlu0 %4978
      %v4985 = vunpack.c.l.b16 %v4953
      %v4986 = vunpack.c.l.b16 %v4954
      %v4987 = vunpack.c.l.b16 %v4955
      %v4988 = vunpack.c.l.b16 %v4956
      %v4989 = vpack.c.b16 %v4986, %v4985
      %v4990 = vpack.c.b16 %v4988, %v4987
      %v4992 = vsel %vm388, %v4989, 0
      %v4995 = vsel %vm388, %v4990, 0
      %4997 = vmatprep.subr.bf16.mxu0 0
      %4998 = vmatpush1.bf16.msra.mxu0 %v4949
      %4999 = vmatprep.subr.bf16.mxu0 0
      %5000 = vmatpush1.bf16.msra.mxu0 %v4950
      %5001 = vmatprep.subr.bf16.mxu0 0
      %5002 = vmatpush1.bf16.msra.mxu0 %v4951
      %5003 = vmatprep.subr.bf16.mxu0 0
      %5004 = vmatpush1.bf16.msra.mxu0 %v4952
      %5005 = vmatprep.subr.bf16.mxu0 0
      %5006 = vmatpush1.bf16.msra.mxu0 0
      %5007 = vmatprep.subr.bf16.mxu0 0
      %5008 = vmatpush1.bf16.msra.mxu0 0
      %5009 = vmatprep.subr.bf16.mxu0 0
      %5010 = vmatpush1.bf16.msra.mxu0 0
      %5011 = vmatprep.subr.bf16.mxu0 0
      %5012 = vmatpush1.bf16.msra.mxu0 0
      %5013 = vmatprep.subr.bf16.mxu0 0
      %5014 = vmatpush1.bf16.msra.mxu0 0
      %5015 = vmatprep.subr.bf16.mxu0 0
      %5016 = vmatpush1.bf16.msra.mxu0 0
      %5017 = vmatprep.subr.bf16.mxu0 0
      %5018 = vmatpush1.bf16.msra.mxu0 0
      %5019 = vmatprep.subr.bf16.mxu0 0
      %5020 = vmatpush1.bf16.msra.mxu0 0
      %5021 = vmatprep.subr.bf16.mxu0 0
      %5022 = vmatpush1.bf16.msra.mxu0 0
      %5023 = vmatprep.subr.bf16.mxu0 0
      %5024 = vmatpush1.bf16.msra.mxu0 0
      %5025 = vmatprep.subr.bf16.mxu0 0
      %5026 = vmatpush1.bf16.msra.mxu0 0
      %5027 = vmatprep.subr.bf16.mxu0 0
      %5028 = vmatpush1.bf16.msra.mxu0 0
      %5029 = vmatprep.mubr.bf16.mxu0 0
      %5030 = vmatmul.mubr.bf16.gmra.mrb[0].mxu0 %v4992
      %v5031 = vpop.f32.mrb[0].mxu0
      %v5032 = vadd.f32 %v4964, %v5031
      %v5033 = vpop.f32.mrb[0].mxu0
      %v5034 = vpop.f32.mrb[0].mxu0
      %v5035 = vadd.f32 %v4969, %v5034
      %v5036 = vpop.f32.mrb[0].mxu0
      %5037 = vmatprep.mubr.bf16.mxu0 0
      %5038 = vmatmul.mubr.bf16.gmra.mrb[0].mxu0 %v4995
      %v5039 = vpop.f32.mrb[0].mxu0
      %v5040 = vadd.f32 %v4974, %v5039
      %v5041 = vpop.f32.mrb[0].mxu0
      %v5042 = vpop.f32.mrb[0].mxu0
      %v5043 = vadd.f32 %v4979, %v5042
      %v5044 = vpop.f32.mrb[0].mxu0
      %5045 = vdwg.mxu0
      %v5046 = vmin.f32 %v5040, 0.0
      %v5047 = vmin.f32 %v5043, 0.0
      %v5048 = vand.u32 2147483647, %v5040
      %v5049 = vand.u32 2147483647, %v5043
      %v5050 = vsub.f32 0.0, %v5048
      %v5051 = vsub.f32 0.0, %v5049
      %v5052 = vmul.f32 %v5050, 1.442695
      %v5053 = vpow.pop %v5052
      %v5054 = vmul.f32 %v5051, 1.442695
      %v5055 = vpow.pop %v5054
      %v5056 = vadd.f32 %v5053, 1.0
      %v5057 = vlog2.pop %v5056
      %v5058 = vmul.f32 %v5057, 0.6931472
      %v5059 = vmul.f32 -0.5, %v5053
      %v5060 = vadd.f32 %v5059, 1.0
      %v5061 = vmul.f32 %v5060, %v5053
      %v5062 = vand.u32 2147483647, %v5053
      %vm5063 = vcmp.lt.f32.partialorder %v5062, 0.0004427343
      %v5064 = vsel %vm5063, %v5061, %v5058
      %v5065 = vadd.f32 %v5055, 1.0
      %v5066 = vlog2.pop %v5065
      %v5067 = vmul.f32 %v5066, 0.6931472
      %v5068 = vmul.f32 -0.5, %v5055
      %v5069 = vadd.f32 %v5068, 1.0
      %v5070 = vmul.f32 %v5069, %v5055
      %v5071 = vand.u32 2147483647, %v5055
      %vm5072 = vcmp.lt.f32.partialorder %v5071, 0.0004427343
      %v5073 = vsel %vm5072, %v5070, %v5067
      %v5074 = vsub.f32 %v5046, %v5064
      %v5075 = vsub.f32 %v5047, %v5073
      %v5076 = vadd.f32 %v4613, %v5032
      %v5077 = vadd.f32 %v4616, %v5035
      %v5078 = vmul.f32 %v5074, 1.442695
      %v5079 = vpow.pop %v5078
      %v5080 = vmul.f32 %v5075, 1.442695
      %v5081 = vpow.pop %v5080
      %v5082 = vmul.f32 %v5076, %v5079
      %v5083 = vmul.f32 %v5077, %v5081
      %v5084 = vadd.f32 %v4523, %v5074
      %v5085 = vadd.f32 %v4524, %v5075
      %v5086 = vpack.c.bf16 %v5083, %v5082
      %v5087 = vld [vmem:[%s1 + $0x338] sm:$0xf]
      %v5088 = vld [vmem:[%s1 + $0x33c] sm:$0xf]
      %v5089 = vld [vmem:[%s1 + $0x340] sm:$0xf]
      %v5090 = vld [vmem:[%s1 + $0x344] sm:$0xf]
      %v5091 = vld [vmem:[%s2 + $0x670] sm:$0xff]
      %v5092 = vld [vmem:[%s2 + $0x678] sm:$0xff]
      %v5093 = vld [vmem:[%s2 + $0x680] sm:$0xff]
      %v5094 = vld [vmem:[%s2 + $0x688] sm:$0xff]
      %5096 = vset.pattern.permute.xlu0 0
      %5097 = vperm.xlu0 %5096, %v5091
      %v5098 = vpop.permute.xlu0 %5097
      %5101 = vset.pattern.permute.xlu0 0
      %5102 = vperm.xlu0 %5101, %v5092
      %v5103 = vpop.permute.xlu0 %5102
      %5106 = vset.pattern.permute.xlu0 0
      %5107 = vperm.xlu0 %5106, %v5093
      %v5108 = vpop.permute.xlu0 %5107
      %5111 = vset.pattern.permute.xlu0 0
      %5112 = vperm.xlu0 %5111, %v5094
      %v5113 = vpop.permute.xlu0 %5112
      %v5119 = vunpack.c.l.b16 %v5087
      %v5120 = vunpack.c.l.b16 %v5088
      %v5121 = vunpack.c.l.b16 %v5089
      %v5122 = vunpack.c.l.b16 %v5090
      %v5123 = vpack.c.b16 %v5120, %v5119
      %v5124 = vpack.c.b16 %v5122, %v5121
      %v5126 = vsel %vm544, %v5123, 0
      %v5129 = vsel %vm544, %v5124, 0
      %5131 = vmatprep.subr.bf16.mxu0 0
      %5132 = vmatpush1.bf16.msra.mxu0 %v4619
      %5133 = vmatprep.subr.bf16.mxu0 0
      %5134 = vmatpush1.bf16.msra.mxu0 %v5086
      %5135 = vmatprep.subr.bf16.mxu0 0
      %5136 = vmatpush1.bf16.msra.mxu0 0
      %5137 = vmatprep.subr.bf16.mxu0 0
      %5138 = vmatpush1.bf16.msra.mxu0 0
      %5139 = vmatprep.subr.bf16.mxu0 0
      %5140 = vmatpush1.bf16.msra.mxu0 0
      %5141 = vmatprep.subr.bf16.mxu0 0
      %5142 = vmatpush1.bf16.msra.mxu0 0
      %5143 = vmatprep.subr.bf16.mxu0 0
      %5144 = vmatpush1.bf16.msra.mxu0 0
      %5145 = vmatprep.subr.bf16.mxu0 0
      %5146 = vmatpush1.bf16.msra.mxu0 0
      %5147 = vmatprep.subr.bf16.mxu0 0
      %5148 = vmatpush1.bf16.msra.mxu0 0
      %5149 = vmatprep.subr.bf16.mxu0 0
      %5150 = vmatpush1.bf16.msra.mxu0 0
      %5151 = vmatprep.subr.bf16.mxu0 0
      %5152 = vmatpush1.bf16.msra.mxu0 0
      %5153 = vmatprep.subr.bf16.mxu0 0
      %5154 = vmatpush1.bf16.msra.mxu0 0
      %5155 = vmatprep.subr.bf16.mxu0 0
      %5156 = vmatpush1.bf16.msra.mxu0 0
      %5157 = vmatprep.subr.bf16.mxu0 0
      %5158 = vmatpush1.bf16.msra.mxu0 0
      %5159 = vmatprep.subr.bf16.mxu0 0
      %5160 = vmatpush1.bf16.msra.mxu0 0
      %5161 = vmatprep.subr.bf16.mxu0 0
      %5162 = vmatpush1.bf16.msra.mxu0 0
      %5163 = vmatprep.mubr.bf16.mxu0 0
      %5164 = vmatmul.mubr.bf16.gmra.mrb[0].mxu0 %v5126
      %v5165 = vpop.f32.mrb[0].mxu0
      %v5166 = vadd.f32 %v5098, %v5165
      %v5167 = vpop.f32.mrb[0].mxu0
      %v5168 = vpop.f32.mrb[0].mxu0
      %v5169 = vadd.f32 %v5103, %v5168
      %v5170 = vpop.f32.mrb[0].mxu0
      %5171 = vmatprep.mubr.bf16.mxu0 0
      %5172 = vmatmul.mubr.bf16.gmra.mrb[0].mxu0 %v5129
      %v5173 = vpop.f32.mrb[0].mxu0
      %v5174 = vadd.f32 %v5108, %v5173
      %v5175 = vpop.f32.mrb[0].mxu0
      %v5176 = vpop.f32.mrb[0].mxu0
      %v5177 = vadd.f32 %v5113, %v5176
      %v5178 = vpop.f32.mrb[0].mxu0
      %5179 = vdwg.mxu0
      %v5180 = vpack.c.bf16 %v5169, %v5166
      %5181 = vst [vmem:[#allocation2] sm:$0xff] %v5180
      %v5182 = vld [vmem:[#allocation2] sm:$0xff]
      %v5183 = vld [vmem:[#allocation2 + $0x8] sm:$0xff]
      %v5184 = vld [vmem:[%s1 + $0x348] sm:$0xf]
      %v5185 = vld [vmem:[%s1 + $0x34c] sm:$0xf]
      %v5186 = vld [vmem:[%s1 + $0x350] sm:$0xf]
      %v5187 = vld [vmem:[%s1 + $0x354] sm:$0xf]
      %v5188 = vld [vmem:[%s1 + $0x358] sm:$0xf]
      %v5189 = vld [vmem:[%s1 + $0x35c] sm:$0xf]
      %v5190 = vld [vmem:[%s1 + $0x360] sm:$0xf]
      %v5191 = vld [vmem:[%s1 + $0x364] sm:$0xf]
      %v5192 = vld [vmem:[%s2 + $0x690] sm:$0xff]
      %v5193 = vld [vmem:[%s2 + $0x698] sm:$0xff]
      %v5194 = vld [vmem:[%s2 + $0x6a0] sm:$0xff]
      %v5195 = vld [vmem:[%s2 + $0x6a8] sm:$0xff]
      %v5196 = vld [vmem:[%s2 + $0x6b0] sm:$0xff]
      %v5197 = vld [vmem:[%s2 + $0x6b8] sm:$0xff]
      %v5198 = vld [vmem:[%s2 + $0x6c0] sm:$0xff]
      %v5199 = vld [vmem:[%s2 + $0x6c8] sm:$0xff]
      %5201 = vset.pattern.permute.xlu0 0
      %5202 = vperm.xlu0 %5201, %v5192
      %v5203 = vpop.permute.xlu0 %5202
      %5206 = vset.pattern.permute.xlu0 0
      %5207 = vperm.xlu0 %5206, %v5193
      %v5208 = vpop.permute.xlu0 %5207
      %5211 = vset.pattern.permute.xlu0 0
      %5212 = vperm.xlu0 %5211, %v5194
      %v5213 = vpop.permute.xlu0 %5212
      %5216 = vset.pattern.permute.xlu0 0
      %5217 = vperm.xlu0 %5216, %v5195
      %v5218 = vpop.permute.xlu0 %5217
      %5221 = vset.pattern.permute.xlu0 0
      %5222 = vperm.xlu0 %5221, %v5196
      %v5223 = vpop.permute.xlu0 %5222
      %5226 = vset.pattern.permute.xlu0 0
      %5227 = vperm.xlu0 %5226, %v5197
      %v5228 = vpop.permute.xlu0 %5227
      %5231 = vset.pattern.permute.xlu0 0
      %5232 = vperm.xlu0 %5231, %v5198
      %v5233 = vpop.permute.xlu0 %5232
      %5236 = vset.pattern.permute.xlu0 0
      %5237 = vperm.xlu0 %5236, %v5199
      %v5238 = vpop.permute.xlu0 %5237
      %v5248 = vunpack.c.l.b16 %v5184
      %v5249 = vunpack.c.l.b16 %v5185
      %v5250 = vunpack.c.l.b16 %v5186
      %v5251 = vunpack.c.l.b16 %v5187
      %v5252 = vunpack.c.l.b16 %v5188
      %v5253 = vunpack.c.l.b16 %v5189
      %v5254 = vunpack.c.l.b16 %v5190
      %v5255 = vunpack.c.l.b16 %v5191
      %v5256 = vpack.c.b16 %v5249, %v5248
      %v5257 = vpack.c.b16 %v5251, %v5250
      %v5258 = vpack.c.b16 %v5253, %v5252
      %v5259 = vpack.c.b16 %v5255, %v5254
      %v5261 = vsel %vm544, %v5256, 0
      %v5264 = vsel %vm544, %v5257, 0
      %v5267 = vsel %vm544, %v5258, 0
      %v5270 = vsel %vm544, %v5259, 0
      %5272 = vmatprep.subr.bf16.mxu0 0
      %5273 = vmatpush1.bf16.msra.mxu0 %v5182
      %5274 = vmatprep.subr.bf16.mxu0 0
      %5275 = vmatpush1.bf16.msra.mxu0 %v5183
      %5276 = vmatprep.subr.bf16.mxu0 0
      %5277 = vmatpush1.bf16.msra.mxu0 0
      %5278 = vmatprep.subr.bf16.mxu0 0
      %5279 = vmatpush1.bf16.msra.mxu0 0
      %5280 = vmatprep.subr.bf16.mxu0 0
      %5281 = vmatpush1.bf16.msra.mxu0 0
      %5282 = vmatprep.subr.bf16.mxu0 0
      %5283 = vmatpush1.bf16.msra.mxu0 0
      %5284 = vmatprep.subr.bf16.mxu0 0
      %5285 = vmatpush1.bf16.msra.mxu0 0
      %5286 = vmatprep.subr.bf16.mxu0 0
      %5287 = vmatpush1.bf16.msra.mxu0 0
      %5288 = vmatprep.subr.bf16.mxu0 0
      %5289 = vmatpush1.bf16.msra.mxu0 0
      %5290 = vmatprep.subr.bf16.mxu0 0
      %5291 = vmatpush1.bf16.msra.mxu0 0
      %5292 = vmatprep.subr.bf16.mxu0 0
      %5293 = vmatpush1.bf16.msra.mxu0 0
      %5294 = vmatprep.subr.bf16.mxu0 0
      %5295 = vmatpush1.bf16.msra.mxu0 0
      %5296 = vmatprep.subr.bf16.mxu0 0
      %5297 = vmatpush1.bf16.msra.mxu0 0
      %5298 = vmatprep.subr.bf16.mxu0 0
      %5299 = vmatpush1.bf16.msra.mxu0 0
      %5300 = vmatprep.subr.bf16.mxu0 0
      %5301 = vmatpush1.bf16.msra.mxu0 0
      %5302 = vmatprep.subr.bf16.mxu0 0
      %5303 = vmatpush1.bf16.msra.mxu0 0
      %5304 = vmatprep.mubr.bf16.mxu0 0
      %5305 = vmatmul.mubr.bf16.gmra.mrb[0].mxu0 %v5261
      %v5306 = vpop.f32.mrb[0].mxu0
      %v5307 = vadd.f32 %v5203, %v5306
      %v5308 = vpop.f32.mrb[0].mxu0
      %v5309 = vpop.f32.mrb[0].mxu0
      %v5310 = vadd.f32 %v5208, %v5309
      %v5311 = vpop.f32.mrb[0].mxu0
      %5312 = vmatprep.mubr.bf16.mxu0 0
      %5313 = vmatmul.mubr.bf16.gmra.mrb[0].mxu0 %v5264
      %v5314 = vpop.f32.mrb[0].mxu0
      %v5315 = vadd.f32 %v5213, %v5314
      %v5316 = vpop.f32.mrb[0].mxu0
      %v5317 = vpop.f32.mrb[0].mxu0
      %v5318 = vadd.f32 %v5218, %v5317
      %v5319 = vpop.f32.mrb[0].mxu0
      %5320 = vmatprep.mubr.bf16.mxu0 0
      %5321 = vmatmul.mubr.bf16.gmra.mrb[0].mxu0 %v5267
      %v5322 = vpop.f32.mrb[0].mxu0
      %v5323 = vadd.f32 %v5223, %v5322
      %v5324 = vpop.f32.mrb[0].mxu0
      %v5325 = vpop.f32.mrb[0].mxu0
      %v5326 = vadd.f32 %v5228, %v5325
      %v5327 = vpop.f32.mrb[0].mxu0
      %5328 = vmatprep.mubr.bf16.mxu0 0
      %5329 = vmatmul.mubr.bf16.gmra.mrb[0].mxu0 %v5270
      %v5330 = vpop.f32.mrb[0].mxu0
      %v5331 = vadd.f32 %v5233, %v5330
      %v5332 = vpop.f32.mrb[0].mxu0
      %v5333 = vpop.f32.mrb[0].mxu0
      %v5334 = vadd.f32 %v5238, %v5333
      %v5335 = vpop.f32.mrb[0].mxu0
      %5336 = vdwg.mxu0
      %v5337 = vmax.f32 %v5307, 0.0
      %v5338 = vmax.f32 %v5310, 0.0
      %v5339 = vmax.f32 %v5315, 0.0
      %v5340 = vmax.f32 %v5318, 0.0
      %v5341 = vmax.f32 %v5323, 0.0
      %v5342 = vmax.f32 %v5326, 0.0
      %v5343 = vmax.f32 %v5331, 0.0
      %v5344 = vmax.f32 %v5334, 0.0
      %v5345 = vpack.c.bf16 %v5338, %v5337
      %v5346 = vpack.c.bf16 %v5340, %v5339
      %v5347 = vpack.c.bf16 %v5342, %v5341
      %v5348 = vpack.c.bf16 %v5344, %v5343
      %v5349 = vld [vmem:[%s1 + $0x368] sm:$0xf]
      %v5350 = vld [vmem:[%s1 + $0x36c] sm:$0xf]
      %v5351 = vld [vmem:[%s1 + $0x370] sm:$0xf]
      %v5352 = vld [vmem:[%s1 + $0x374] sm:$0xf]
      %v5353 = vld [vmem:[%s1 + $0x378] sm:$0xf]
      %v5354 = vld [vmem:[%s1 + $0x37c] sm:$0xf]
      %v5355 = vld [vmem:[%s1 + $0x380] sm:$0xf]
      %v5356 = vld [vmem:[%s1 + $0x384] sm:$0xf]
      %v5357 = vld [vmem:[%s2 + $0x6d0] sm:$0xff]
      %v5358 = vld [vmem:[%s2 + $0x6d8] sm:$0xff]
      %v5359 = vld [vmem:[%s2 + $0x6e0] sm:$0xff]
      %v5360 = vld [vmem:[%s2 + $0x6e8] sm:$0xff]
      %v5361 = vld [vmem:[%s2 + $0x6f0] sm:$0xff]
      %v5362 = vld [vmem:[%s2 + $0x6f8] sm:$0xff]
      %v5363 = vld [vmem:[%s2 + $0x700] sm:$0xff]
      %v5364 = vld [vmem:[%s2 + $0x708] sm:$0xff]
      %5366 = vset.pattern.permute.xlu0 0
      %5367 = vperm.xlu0 %5366, %v5357
      %v5368 = vpop.permute.xlu0 %5367
      %5371 = vset.pattern.permute.xlu0 0
      %5372 = vperm.xlu0 %5371, %v5358
      %v5373 = vpop.permute.xlu0 %5372
      %5376 = vset.pattern.permute.xlu0 0
      %5377 = vperm.xlu0 %5376, %v5359
      %v5378 = vpop.permute.xlu0 %5377
      %5381 = vset.pattern.permute.xlu0 0
      %5382 = vperm.xlu0 %5381, %v5360
      %v5383 = vpop.permute.xlu0 %5382
      %5386 = vset.pattern.permute.xlu0 0
      %5387 = vperm.xlu0 %5386, %v5361
      %v5388 = vpop.permute.xlu0 %5387
      %5391 = vset.pattern.permute.xlu0 0
      %5392 = vperm.xlu0 %5391, %v5362
      %v5393 = vpop.permute.xlu0 %5392
      %5396 = vset.pattern.permute.xlu0 0
      %5397 = vperm.xlu0 %5396, %v5363
      %v5398 = vpop.permute.xlu0 %5397
      %5401 = vset.pattern.permute.xlu0 0
      %5402 = vperm.xlu0 %5401, %v5364
      %v5403 = vpop.permute.xlu0 %5402
      %v5413 = vunpack.c.l.b16 %v5349
      %v5414 = vunpack.c.l.b16 %v5350
      %v5415 = vunpack.c.l.b16 %v5351
      %v5416 = vunpack.c.l.b16 %v5352
      %v5417 = vunpack.c.l.b16 %v5353
      %v5418 = vunpack.c.l.b16 %v5354
      %v5419 = vunpack.c.l.b16 %v5355
      %v5420 = vunpack.c.l.b16 %v5356
      %v5421 = vpack.c.b16 %v5414, %v5413
      %v5422 = vpack.c.b16 %v5416, %v5415
      %v5423 = vpack.c.b16 %v5418, %v5417
      %v5424 = vpack.c.b16 %v5420, %v5419
      %v5426 = vsel %vm388, %v5421, 0
      %v5429 = vsel %vm388, %v5422, 0
      %v5432 = vsel %vm388, %v5423, 0
      %v5435 = vsel %vm388, %v5424, 0
      %5437 = vmatprep.subr.bf16.mxu0 0
      %5438 = vmatpush1.bf16.msra.mxu0 %v5345
      %5439 = vmatprep.subr.bf16.mxu0 0
      %5440 = vmatpush1.bf16.msra.mxu0 %v5346
      %5441 = vmatprep.subr.bf16.mxu0 0
      %5442 = vmatpush1.bf16.msra.mxu0 %v5347
      %5443 = vmatprep.subr.bf16.mxu0 0
      %5444 = vmatpush1.bf16.msra.mxu0 %v5348
      %5445 = vmatprep.subr.bf16.mxu0 0
      %5446 = vmatpush1.bf16.msra.mxu0 0
      %5447 = vmatprep.subr.bf16.mxu0 0
      %5448 = vmatpush1.bf16.msra.mxu0 0
      %5449 = vmatprep.subr.bf16.mxu0 0
      %5450 = vmatpush1.bf16.msra.mxu0 0
      %5451 = vmatprep.subr.bf16.mxu0 0
      %5452 = vmatpush1.bf16.msra.mxu0 0
      %5453 = vmatprep.subr.bf16.mxu0 0
      %5454 = vmatpush1.bf16.msra.mxu0 0
      %5455 = vmatprep.subr.bf16.mxu0 0
      %5456 = vmatpush1.bf16.msra.mxu0 0
      %5457 = vmatprep.subr.bf16.mxu0 0
      %5458 = vmatpush1.bf16.msra.mxu0 0
      %5459 = vmatprep.subr.bf16.mxu0 0
      %5460 = vmatpush1.bf16.msra.mxu0 0
      %5461 = vmatprep.subr.bf16.mxu0 0
      %5462 = vmatpush1.bf16.msra.mxu0 0
      %5463 = vmatprep.subr.bf16.mxu0 0
      %5464 = vmatpush1.bf16.msra.mxu0 0
      %5465 = vmatprep.subr.bf16.mxu0 0
      %5466 = vmatpush1.bf16.msra.mxu0 0
      %5467 = vmatprep.subr.bf16.mxu0 0
      %5468 = vmatpush1.bf16.msra.mxu0 0
      %5469 = vmatprep.mubr.bf16.mxu0 0
      %5470 = vmatmul.mubr.bf16.gmra.mrb[0].mxu0 %v5426
      %v5471 = vpop.f32.mrb[0].mxu0
      %v5472 = vadd.f32 %v5368, %v5471
      %v5473 = vpop.f32.mrb[0].mxu0
      %v5474 = vpop.f32.mrb[0].mxu0
      %v5475 = vadd.f32 %v5373, %v5474
      %v5476 = vpop.f32.mrb[0].mxu0
      %5477 = vmatprep.mubr.bf16.mxu0 0
      %5478 = vmatmul.mubr.bf16.gmra.mrb[0].mxu0 %v5429
      %v5479 = vpop.f32.mrb[0].mxu0
      %v5480 = vadd.f32 %v5378, %v5479
      %v5481 = vpop.f32.mrb[0].mxu0
      %v5482 = vpop.f32.mrb[0].mxu0
      %v5483 = vadd.f32 %v5383, %v5482
      %v5484 = vpop.f32.mrb[0].mxu0
      %5485 = vmatprep.mubr.bf16.mxu0 0
      %5486 = vmatmul.mubr.bf16.gmra.mrb[0].mxu0 %v5432
      %v5487 = vpop.f32.mrb[0].mxu0
      %v5488 = vadd.f32 %v5388, %v5487
      %v5489 = vpop.f32.mrb[0].mxu0
      %v5490 = vpop.f32.mrb[0].mxu0
      %v5491 = vadd.f32 %v5393, %v5490
      %v5492 = vpop.f32.mrb[0].mxu0
      %5493 = vmatprep.mubr.bf16.mxu0 0
      %5494 = vmatmul.mubr.bf16.gmra.mrb[0].mxu0 %v5435
      %v5495 = vpop.f32.mrb[0].mxu0
      %v5496 = vadd.f32 %v5398, %v5495
      %v5497 = vpop.f32.mrb[0].mxu0
      %v5498 = vpop.f32.mrb[0].mxu0
      %v5499 = vadd.f32 %v5403, %v5498
      %v5500 = vpop.f32.mrb[0].mxu0
      %5501 = vdwg.mxu0
      %v5502 = vmax.f32 %v5472, 0.0
      %v5503 = vmax.f32 %v5475, 0.0
      %v5504 = vmax.f32 %v5480, 0.0
      %v5505 = vmax.f32 %v5483, 0.0
      %v5506 = vmax.f32 %v5488, 0.0
      %v5507 = vmax.f32 %v5491, 0.0
      %v5508 = vmax.f32 %v5496, 0.0
      %v5509 = vmax.f32 %v5499, 0.0
      %v5510 = vpack.c.bf16 %v5503, %v5502
      %v5511 = vpack.c.bf16 %v5505, %v5504
      %v5512 = vpack.c.bf16 %v5507, %v5506
      %v5513 = vpack.c.bf16 %v5509, %v5508
      %v5514 = vld [vmem:[%s1 + $0x388] sm:$0xf]
      %v5515 = vld [vmem:[%s1 + $0x38c] sm:$0xf]
      %v5516 = vld [vmem:[%s1 + $0x390] sm:$0xf]
      %v5517 = vld [vmem:[%s1 + $0x394] sm:$0xf]
      %v5518 = vld [vmem:[%s2 + $0x710] sm:$0xff]
      %v5519 = vld [vmem:[%s2 + $0x718] sm:$0xff]
      %v5520 = vld [vmem:[%s2 + $0x720] sm:$0xff]
      %v5521 = vld [vmem:[%s2 + $0x728] sm:$0xff]
      %5523 = vset.pattern.permute.xlu0 0
      %5524 = vperm.xlu0 %5523, %v5518
      %v5525 = vpop.permute.xlu0 %5524
      %5528 = vset.pattern.permute.xlu0 0
      %5529 = vperm.xlu0 %5528, %v5519
      %v5530 = vpop.permute.xlu0 %5529
      %5533 = vset.pattern.permute.xlu0 0
      %5534 = vperm.xlu0 %5533, %v5520
      %v5535 = vpop.permute.xlu0 %5534
      %5538 = vset.pattern.permute.xlu0 0
      %5539 = vperm.xlu0 %5538, %v5521
      %v5540 = vpop.permute.xlu0 %5539
      %v5546 = vunpack.c.l.b16 %v5514
      %v5547 = vunpack.c.l.b16 %v5515
      %v5548 = vunpack.c.l.b16 %v5516
      %v5549 = vunpack.c.l.b16 %v5517
      %v5550 = vpack.c.b16 %v5547, %v5546
      %v5551 = vpack.c.b16 %v5549, %v5548
      %v5553 = vsel %vm388, %v5550, 0
      %v5556 = vsel %vm388, %v5551, 0
      %5558 = vmatprep.subr.bf16.mxu0 0
      %5559 = vmatpush1.bf16.msra.mxu0 %v5510
      %5560 = vmatprep.subr.bf16.mxu0 0
      %5561 = vmatpush1.bf16.msra.mxu0 %v5511
      %5562 = vmatprep.subr.bf16.mxu0 0
      %5563 = vmatpush1.bf16.msra.mxu0 %v5512
      %5564 = vmatprep.subr.bf16.mxu0 0
      %5565 = vmatpush1.bf16.msra.mxu0 %v5513
      %5566 = vmatprep.subr.bf16.mxu0 0
      %5567 = vmatpush1.bf16.msra.mxu0 0
      %5568 = vmatprep.subr.bf16.mxu0 0
      %5569 = vmatpush1.bf16.msra.mxu0 0
      %5570 = vmatprep.subr.bf16.mxu0 0
      %5571 = vmatpush1.bf16.msra.mxu0 0
      %5572 = vmatprep.subr.bf16.mxu0 0
      %5573 = vmatpush1.bf16.msra.mxu0 0
      %5574 = vmatprep.subr.bf16.mxu0 0
      %5575 = vmatpush1.bf16.msra.mxu0 0
      %5576 = vmatprep.subr.bf16.mxu0 0
      %5577 = vmatpush1.bf16.msra.mxu0 0
      %5578 = vmatprep.subr.bf16.mxu0 0
      %5579 = vmatpush1.bf16.msra.mxu0 0
      %5580 = vmatprep.subr.bf16.mxu0 0
      %5581 = vmatpush1.bf16.msra.mxu0 0
      %5582 = vmatprep.subr.bf16.mxu0 0
      %5583 = vmatpush1.bf16.msra.mxu0 0
      %5584 = vmatprep.subr.bf16.mxu0 0
      %5585 = vmatpush1.bf16.msra.mxu0 0
      %5586 = vmatprep.subr.bf16.mxu0 0
      %5587 = vmatpush1.bf16.msra.mxu0 0
      %5588 = vmatprep.subr.bf16.mxu0 0
      %5589 = vmatpush1.bf16.msra.mxu0 0
      %5590 = vmatprep.mubr.bf16.mxu0 0
      %5591 = vmatmul.mubr.bf16.gmra.mrb[0].mxu0 %v5553
      %v5592 = vpop.f32.mrb[0].mxu0
      %v5593 = vadd.f32 %v5525, %v5592
      %v5594 = vpop.f32.mrb[0].mxu0
      %v5595 = vpop.f32.mrb[0].mxu0
      %v5596 = vadd.f32 %v5530, %v5595
      %v5597 = vpop.f32.mrb[0].mxu0
      %5598 = vmatprep.mubr.bf16.mxu0 0
      %5599 = vmatmul.mubr.bf16.gmra.mrb[0].mxu0 %v5556
      %v5600 = vpop.f32.mrb[0].mxu0
      %v5601 = vadd.f32 %v5535, %v5600
      %v5602 = vpop.f32.mrb[0].mxu0
      %v5603 = vpop.f32.mrb[0].mxu0
      %v5604 = vadd.f32 %v5540, %v5603
      %v5605 = vpop.f32.mrb[0].mxu0
      %5606 = vdwg.mxu0
      %v5607 = vmin.f32 %v5601, 0.0
      %v5608 = vmin.f32 %v5604, 0.0
      %v5609 = vand.u32 2147483647, %v5601
      %v5610 = vand.u32 2147483647, %v5604
      %v5611 = vsub.f32 0.0, %v5609
      %v5612 = vsub.f32 0.0, %v5610
      %v5613 = vmul.f32 %v5611, 1.442695
      %v5614 = vpow.pop %v5613
      %v5615 = vmul.f32 %v5612, 1.442695
      %v5616 = vpow.pop %v5615
      %v5617 = vadd.f32 %v5614, 1.0
      %v5618 = vlog2.pop %v5617
      %v5619 = vmul.f32 %v5618, 0.6931472
      %v5620 = vmul.f32 -0.5, %v5614
      %v5621 = vadd.f32 %v5620, 1.0
      %v5622 = vmul.f32 %v5621, %v5614
      %v5623 = vand.u32 2147483647, %v5614
      %vm5624 = vcmp.lt.f32.partialorder %v5623, 0.0004427343
      %v5625 = vsel %vm5624, %v5622, %v5619
      %v5626 = vadd.f32 %v5616, 1.0
      %v5627 = vlog2.pop %v5626
      %v5628 = vmul.f32 %v5627, 0.6931472
      %v5629 = vmul.f32 -0.5, %v5616
      %v5630 = vadd.f32 %v5629, 1.0
      %v5631 = vmul.f32 %v5630, %v5616
      %v5632 = vand.u32 2147483647, %v5616
      %vm5633 = vcmp.lt.f32.partialorder %v5632, 0.0004427343
      %v5634 = vsel %vm5633, %v5631, %v5628
      %v5635 = vsub.f32 %v5607, %v5625
      %v5636 = vsub.f32 %v5608, %v5634
      %v5637 = vadd.f32 %v5174, %v5593
      %v5638 = vadd.f32 %v5177, %v5596
      %v5639 = vmul.f32 %v5635, 1.442695
      %v5640 = vpow.pop %v5639
      %v5641 = vmul.f32 %v5636, 1.442695
      %v5642 = vpow.pop %v5641
      %v5643 = vmul.f32 %v5637, %v5640
      %v5644 = vmul.f32 %v5638, %v5642
      %v5645 = vadd.f32 %v5084, %v5635
      %v5646 = vadd.f32 %v5085, %v5636
      %v5647 = vld [vmem:[%s1 + $0x398] sm:$0xf]
      %v5648 = vld [vmem:[%s1 + $0x39c] sm:$0xf]
      %v5649 = vld [vmem:[%s1 + $0x3a0] sm:$0xf]
      %v5650 = vld [vmem:[%s1 + $0x3a4] sm:$0xf]
      %v5651 = vld [vmem:[%s1 + $0x3a8] sm:$0xf]
      %v5652 = vld [vmem:[%s1 + $0x3ac] sm:$0xf]
      %v5653 = vld [vmem:[%s1 + $0x3b0] sm:$0xf]
      %v5654 = vld [vmem:[%s1 + $0x3b4] sm:$0xf]
      %v5655 = vld [vmem:[%s2 + $0x730] sm:$0xff]
      %v5656 = vld [vmem:[%s2 + $0x738] sm:$0xff]
      %v5657 = vld [vmem:[%s2 + $0x740] sm:$0xff]
      %v5658 = vld [vmem:[%s2 + $0x748] sm:$0xff]
      %v5659 = vld [vmem:[%s2 + $0x750] sm:$0xff]
      %v5660 = vld [vmem:[%s2 + $0x758] sm:$0xff]
      %v5661 = vld [vmem:[%s2 + $0x760] sm:$0xff]
      %v5662 = vld [vmem:[%s2 + $0x768] sm:$0xff]
      %5664 = vset.pattern.permute.xlu0 0
      %5665 = vperm.xlu0 %5664, %v5655
      %v5666 = vpop.permute.xlu0 %5665
      %5669 = vset.pattern.permute.xlu0 0
      %5670 = vperm.xlu0 %5669, %v5656
      %v5671 = vpop.permute.xlu0 %5670
      %5674 = vset.pattern.permute.xlu0 0
      %5675 = vperm.xlu0 %5674, %v5657
      %v5676 = vpop.permute.xlu0 %5675
      %5679 = vset.pattern.permute.xlu0 0
      %5680 = vperm.xlu0 %5679, %v5658
      %v5681 = vpop.permute.xlu0 %5680
      %5684 = vset.pattern.permute.xlu0 0
      %5685 = vperm.xlu0 %5684, %v5659
      %v5686 = vpop.permute.xlu0 %5685
      %5689 = vset.pattern.permute.xlu0 0
      %5690 = vperm.xlu0 %5689, %v5660
      %v5691 = vpop.permute.xlu0 %5690
      %5694 = vset.pattern.permute.xlu0 0
      %5695 = vperm.xlu0 %5694, %v5661
      %v5696 = vpop.permute.xlu0 %5695
      %5699 = vset.pattern.permute.xlu0 0
      %5700 = vperm.xlu0 %5699, %v5662
      %v5701 = vpop.permute.xlu0 %5700
      %v5711 = vunpack.c.l.b16 %v5647
      %v5712 = vunpack.c.l.b16 %v5648
      %v5713 = vunpack.c.l.b16 %v5649
      %v5714 = vunpack.c.l.b16 %v5650
      %v5715 = vunpack.c.l.b16 %v5651
      %v5716 = vunpack.c.l.b16 %v5652
      %v5717 = vunpack.c.l.b16 %v5653
      %v5718 = vunpack.c.l.b16 %v5654
      %v5719 = vpack.c.b16 %v5712, %v5711
      %v5720 = vpack.c.b16 %v5714, %v5713
      %v5721 = vpack.c.b16 %v5716, %v5715
      %v5722 = vpack.c.b16 %v5718, %v5717
      %v5724 = vsel %vm3285, %v5719, 0
      %v5727 = vsel %vm3285, %v5720, 0
      %v5730 = vsel %vm3285, %v5721, 0
      %v5733 = vsel %vm3285, %v5722, 0
      %5735 = vmatprep.subr.bf16.mxu0 0
      %5736 = vmatpush1.bf16.msra.mxu0 %v5183
      %5737 = vmatprep.subr.bf16.mxu0 0
      %5738 = vmatpush1.bf16.msra.mxu0 0
      %5739 = vmatprep.subr.bf16.mxu0 0
      %5740 = vmatpush1.bf16.msra.mxu0 0
      %5741 = vmatprep.subr.bf16.mxu0 0
      %5742 = vmatpush1.bf16.msra.mxu0 0
      %5743 = vmatprep.subr.bf16.mxu0 0
      %5744 = vmatpush1.bf16.msra.mxu0 0
      %5745 = vmatprep.subr.bf16.mxu0 0
      %5746 = vmatpush1.bf16.msra.mxu0 0
      %5747 = vmatprep.subr.bf16.mxu0 0
      %5748 = vmatpush1.bf16.msra.mxu0 0
      %5749 = vmatprep.subr.bf16.mxu0 0
      %5750 = vmatpush1.bf16.msra.mxu0 0
      %5751 = vmatprep.subr.bf16.mxu0 0
      %5752 = vmatpush1.bf16.msra.mxu0 0
      %5753 = vmatprep.subr.bf16.mxu0 0
      %5754 = vmatpush1.bf16.msra.mxu0 0
      %5755 = vmatprep.subr.bf16.mxu0 0
      %5756 = vmatpush1.bf16.msra.mxu0 0
      %5757 = vmatprep.subr.bf16.mxu0 0
      %5758 = vmatpush1.bf16.msra.mxu0 0
      %5759 = vmatprep.subr.bf16.mxu0 0
      %5760 = vmatpush1.bf16.msra.mxu0 0
      %5761 = vmatprep.subr.bf16.mxu0 0
      %5762 = vmatpush1.bf16.msra.mxu0 0
      %5763 = vmatprep.subr.bf16.mxu0 0
      %5764 = vmatpush1.bf16.msra.mxu0 0
      %5765 = vmatprep.subr.bf16.mxu0 0
      %5766 = vmatpush1.bf16.msra.mxu0 0
      %5767 = vmatprep.mubr.bf16.mxu0 0
      %5768 = vmatmul.mubr.bf16.gmra.mrb[0].mxu0 %v5724
      %v5769 = vpop.f32.mrb[0].mxu0
      %v5770 = vadd.f32 %v5666, %v5769
      %v5771 = vpop.f32.mrb[0].mxu0
      %v5772 = vpop.f32.mrb[0].mxu0
      %v5773 = vadd.f32 %v5671, %v5772
      %v5774 = vpop.f32.mrb[0].mxu0
      %5775 = vmatprep.mubr.bf16.mxu0 0
      %5776 = vmatmul.mubr.bf16.gmra.mrb[0].mxu0 %v5727
      %v5777 = vpop.f32.mrb[0].mxu0
      %v5778 = vadd.f32 %v5676, %v5777
      %v5779 = vpop.f32.mrb[0].mxu0
      %v5780 = vpop.f32.mrb[0].mxu0
      %v5781 = vadd.f32 %v5681, %v5780
      %v5782 = vpop.f32.mrb[0].mxu0
      %5783 = vmatprep.mubr.bf16.mxu0 0
      %5784 = vmatmul.mubr.bf16.gmra.mrb[0].mxu0 %v5730
      %v5785 = vpop.f32.mrb[0].mxu0
      %v5786 = vadd.f32 %v5686, %v5785
      %v5787 = vpop.f32.mrb[0].mxu0
      %v5788 = vpop.f32.mrb[0].mxu0
      %v5789 = vadd.f32 %v5691, %v5788
      %v5790 = vpop.f32.mrb[0].mxu0
      %5791 = vmatprep.mubr.bf16.mxu0 0
      %5792 = vmatmul.mubr.bf16.gmra.mrb[0].mxu0 %v5733
      %v5793 = vpop.f32.mrb[0].mxu0
      %v5794 = vadd.f32 %v5696, %v5793
      %v5795 = vpop.f32.mrb[0].mxu0
      %v5796 = vpop.f32.mrb[0].mxu0
      %v5797 = vadd.f32 %v5701, %v5796
      %v5798 = vpop.f32.mrb[0].mxu0
      %5799 = vdwg.mxu0
      %v5800 = vmax.f32 %v5786, -20.0
      %v5801 = vmax.f32 %v5789, -20.0
      %v5802 = vmax.f32 %v5794, -20.0
      %v5803 = vmax.f32 %v5797, -20.0
      %v5804 = vmin.f32 %v5800, 20.0
      %v5805 = vmin.f32 %v5801, 20.0
      %v5806 = vmin.f32 %v5802, 20.0
      %v5807 = vmin.f32 %v5803, 20.0
      %v5808 = vmul.f32 %v5804, 2.0
      %v5809 = vmul.f32 %v5805, 2.0
      %v5810 = vmul.f32 %v5806, 2.0
      %v5811 = vmul.f32 %v5807, 2.0
      %v5812 = vadd.f32 %v5808, 1.837877
      %v5813 = vadd.f32 %v5809, 1.837877
      %v5814 = vadd.f32 %v5810, 1.837877
      %v5815 = vadd.f32 %v5811, 1.837877
      %v5816 = vsub.f32 %v5166, %v5770
      %v5817 = vsub.f32 %v5169, %v5773
      %v5818 = vsub.f32 %v5643, %v5778
      %v5819 = vsub.f32 %v5644, %v5781
      %v5820 = vmul.f32 %v5816, %v5816
      %v5821 = vmul.f32 %v5817, %v5817
      %v5822 = vmul.f32 %v5818, %v5818
      %v5823 = vmul.f32 %v5819, %v5819
      %v5824 = vmul.f32 %v5804, -2.0
      %v5825 = vmul.f32 %v5805, -2.0
      %v5826 = vmul.f32 %v5806, -2.0
      %v5827 = vmul.f32 %v5807, -2.0
      %v5828 = vmul.f32 %v5824, 1.442695
      %v5829 = vpow.pop %v5828
      %v5830 = vmul.f32 %v5825, 1.442695
      %v5831 = vpow.pop %v5830
      %v5832 = vmul.f32 %v5826, 1.442695
      %v5833 = vpow.pop %v5832
      %v5834 = vmul.f32 %v5827, 1.442695
      %v5835 = vpow.pop %v5834
      %v5836 = vmul.f32 %v5820, %v5829
      %v5837 = vmul.f32 %v5821, %v5831
      %v5838 = vmul.f32 %v5822, %v5833
      %v5839 = vmul.f32 %v5823, %v5835
      %v5840 = vadd.f32 %v5812, %v5836
      %v5841 = vadd.f32 %v5813, %v5837
      %v5842 = vadd.f32 %v5814, %v5838
      %v5843 = vadd.f32 %v5815, %v5839
      %v5844 = vmul.f32 %v5840, -0.5
      %v5845 = vmul.f32 %v5841, -0.5
      %v5846 = vmul.f32 %v5842, -0.5
      %v5847 = vmul.f32 %v5843, -0.5
      %v5848 = vadd.f32 %v3188, %v5844
      %v5849 = vadd.f32 %v3189, %v5845
      %v5850 = vadd.f32 %v3190, %v5846
      %v5851 = vadd.f32 %v3191, %v5847
      %5852 = vst [vmem:[%s286] sm:$0xff] %v5166
      %5853 = vst [vmem:[%s286 + $0x8] sm:$0xff] %v5169
      %5854 = vst [vmem:[%s286 + $0x10] sm:$0xff] %v5643
      %5855 = vst [vmem:[%s286 + $0x18] sm:$0xff] %v5644
      %v5856 = vsel %vm299, 1, 0
      %vm5857 = vcmp.eq.s32.totalorder %v5856, 1
      %v5858 = vsel %vm5857, %v5848, 0.0
      %v5859 = vsel %vm5857, %v5849, 0.0
      %v5860 = vsel %vm5857, %v5850, 0.0
      %v5861 = vsel %vm5857, %v5851, 0.0
      %v5862 = vadd.f32 %v5858, %v5859
      %v5863 = vadd.f32 %v5862, %v5860
      %v5864 = vadd.f32 %v5863, %v5861
      %5865 = vadd.xlane.f32.xlu0 %v5864
      %v5866 = vpop.xlane.xlu0 %5865
      %v5867 = vrot.slane %v5866, 4
      %v5868 = vadd.f32 %v5866, %v5867
      %v5869 = vrot.slane %v5868, 2
      %v5870 = vadd.f32 %v5868, %v5869
      %v5871 = vrot.slane %v5870, 1
      %v5872 = vadd.f32 %v5870, %v5871
      %s5873 = vtos %v5872
      %v5874 = vsel %vm5857, %v5645, 0.0
      %v5875 = vsel %vm5857, %v5646, 0.0
      %v5876 = vadd.f32 %v5874, %v5875
      %5877 = vadd.xlane.f32.xlu0 %v5876
      %v5878 = vpop.xlane.xlu0 %5877
      %v5879 = vrot.slane %v5878, 4
      %v5880 = vadd.f32 %v5878, %v5879
      %v5881 = vrot.slane %v5880, 2
      %v5882 = vadd.f32 %v5880, %v5881
      %v5883 = vrot.slane %v5882, 1
      %v5884 = vadd.f32 %v5882, %v5883
      %s5885 = vtos %v5884
      %s5886 = sadd.f32 %s5873, %s5885
      %v5887 = vstv %s5886
      %5888 = vst [vmem:[%s292] sm:$0x1] %v5887
      %p5889 = scmp.lt.s32.totalorder %s21, 1
      %s5890 = scalar_select %p5889, %s21, 1
      %p5891 = scmp.lt.s32.totalorder %s22, 0
      %s5892 = scalar_select %p5891, %s22, 0
      %s5893 = smul.addr %s5890, 4
      %s5894 = sadd.s32 %s5892, %s5893
      %s5895 = smul.addr %s5894, 8
      %s5896 = scalar_lea.vmem %s3, %s5895
      %p5897 = scmp.lt.s32.totalorder %s21, 1
      %s5898 = scalar_select %p5897, %s21, 1
      %p5899 = scmp.lt.s32.totalorder %s22, 0
      %s5900 = scalar_select %p5899, %s22, 0
      %s5901 = smul.addr %s5898, 4
      %s5902 = sadd.s32 %s5900, %s5901
      %s5903 = smul.addr %s5902, 8
      %s5904 = scalar_lea.vmem %s4, %s5903
      %p5905 = scmp.lt.s32.totalorder %s21, 1
      %s5906 = scalar_select %p5905, %s21, 1
      %p5907 = scmp.lt.s32.totalorder %s22, 0
      %s5908 = scalar_select %p5907, %s22, 0
      %s5909 = sadd.s32 %s5908, %s5906
      %s5910 = scalar_lea.vmem %s5, %s5909
      // Predicated region
      $region33: #{flownet_forward.1} parent=31 // pred_check
        %p5911 = pneg %p119
      $region34: #{flownet_forward.1} parent=31 // pred_check_branch
        %5913 = sbr.rel (%p5911) target = $region36
      $region35: #{flownet_forward.1} parent=31 // pred_region
        _
      $region36: #{flownet_forward.1} parent=31 // pred_fallthru
        _
      // Predicated region
      $region37: #{flownet_forward.1} parent=31 // pred_check
        %p5914 = pneg %p147
      $region38: #{flownet_forward.1} parent=31 // pred_check_branch
        %5916 = sbr.rel (%p5914) target = $region40
      $region39: #{flownet_forward.1} parent=31 // pred_region
        _
      $region40: #{flownet_forward.1} parent=31 // pred_fallthru
        _
      // Predicated region
      $region41: #{flownet_forward.1} parent=31 // pred_check
        %p5917 = pneg %p175
      $region42: #{flownet_forward.1} parent=31 // pred_check_branch
        %5919 = sbr.rel (%p5917) target = $region44
      $region43: #{flownet_forward.1} parent=31 // pred_region
        _
      $region44: #{flownet_forward.1} parent=31 // pred_fallthru
        _
    $region32: #{flownet_forward.1} parent=5 // pred_fallthru
      _
    %p5920 = scmp.le.s32.totalorder 2, %s12
    // Predicated region
    $region45: #{flownet_forward.1} parent=5 // pred_check
      %p5921 = pneg %p5920
    $region46: #{flownet_forward.1} parent=5 // pred_check_branch
      %5923 = sbr.rel (%p5921) target = $region48
    $region47: #{flownet_forward.1} parent=5 // pred_region
      %s5924 = ssub.s32 %s12, 2
      // Predicated region
      $region49: #{flownet_forward.1} parent=47 // pred_check
        %p5925 = pneg %p125
      $region50: #{flownet_forward.1} parent=47 // pred_check_branch
        %5927 = sbr.rel (%p5925) target = $region52
      $region51: #{flownet_forward.1} parent=47 // pred_region
        %p5928 = scmp.lt.s32.totalorder %s23, 1
        %s5929 = scalar_select %p5928, %s23, 1
        %p5930 = scmp.lt.s32.totalorder %s24, 0
        %s5931 = scalar_select %p5930, %s24, 0
        %s5932 = smul.addr %s5929, 4
        %s5933 = sadd.s32 %s5931, %s5932
        %s5934 = smul.addr %s5933, 8
        %s5935 = scalar_lea.vmem %s3, %s5934
      $region52: #{flownet_forward.1} parent=47 // pred_fallthru
        _
      // Predicated region
      $region53: #{flownet_forward.1} parent=47 // pred_check
        %p5936 = pneg %p153
      $region54: #{flownet_forward.1} parent=47 // pred_check_branch
        %5938 = sbr.rel (%p5936) target = $region56
      $region55: #{flownet_forward.1} parent=47 // pred_region
        %p5939 = scmp.lt.s32.totalorder %s23, 1
        %s5940 = scalar_select %p5939, %s23, 1
        %p5941 = scmp.lt.s32.totalorder %s24, 0
        %s5942 = scalar_select %p5941, %s24, 0
        %s5943 = smul.addr %s5940, 4
        %s5944 = sadd.s32 %s5942, %s5943
        %s5945 = smul.addr %s5944, 8
        %s5946 = scalar_lea.vmem %s4, %s5945
      $region56: #{flownet_forward.1} parent=47 // pred_fallthru
        _
      // Predicated region
      $region57: #{flownet_forward.1} parent=47 // pred_check
        %p5947 = pneg %p181
      $region58: #{flownet_forward.1} parent=47 // pred_check_branch
        %5949 = sbr.rel (%p5947) target = $region60
      $region59: #{flownet_forward.1} parent=47 // pred_region
        %p5950 = scmp.lt.s32.totalorder %s23, 1
        %s5951 = scalar_select %p5950, %s23, 1
        %p5952 = scmp.lt.s32.totalorder %s24, 0
        %s5953 = scalar_select %p5952, %s24, 0
        %s5954 = sadd.s32 %s5953, %s5951
        %s5955 = scalar_lea.vmem %s5, %s5954
      $region60: #{flownet_forward.1} parent=47 // pred_fallthru
        _
    $region48: #{flownet_forward.1} parent=5 // pred_fallthru
      _
  $region6: #{flownet_forward.1} parent=0 // loop_footer
    %s16 = sadd.s32 1, %s12
  $region7: #{flownet_forward.1} parent=0 // loop_footer_branch
    %11 = sbr.rel target = $region3
  $region8: #{flownet_forward.1} parent=0 // loop_exit
    _

</llo_original>
